<compile_context>
chip_gen: v6e
topology: v6e:2x2x1
jax: 0.10.0
libtpu: 0.0.40
codegen_flags: <defaults>
</compile_context>

<pallas_src>
from functools import partial

import jax
import jax.numpy as jnp
from jax import lax
from jax.experimental import pallas as pl
from jax.experimental.pallas import tpu as pltpu


# ----------------------------------------------------------------------------
# Fused matmul kernel: out = A @ W + bias (+ residual), bf16 in / f32 accumulate.
# Whole K and N per block (single K tile), grid only over rows.
# ----------------------------------------------------------------------------
def _mm_bias_kernel(a_ref, w_ref, b_ref, o_ref):
    acc = jnp.dot(a_ref[...], w_ref[...], preferred_element_type=jnp.float32)
    o_ref[...] = (acc + b_ref[...]).astype(o_ref.dtype)


def _mm_bias_res_kernel(a_ref, w_ref, b_ref, r_ref, o_ref):
    acc = jnp.dot(a_ref[...], w_ref[...], preferred_element_type=jnp.float32)
    o_ref[...] = (acc + b_ref[...] + r_ref[...]).astype(o_ref.dtype)


def _choose_row_tile(m, cap=256):
    """Row tile: fill the MXU, but give the grid >=2 steps (megacore) when M allows."""
    if m <= 64:
        return m
    for cand in (256, 128, 64):
        if cand <= cap and m % cand == 0 and m // cand >= 2:
            return cand
    return m if m <= cap else cap


def fused_matmul(a, w_bf16, bias, residual=None, row_tile_cap=256):
    """a: (M, K); w_bf16: (K, N) (bf16, matmul layout); bias: (N,); residual: (M, N)."""
    M, K = a.shape
    Kw, N = w_bf16.shape
    assert K == Kw
    a_bf = a.astype(jnp.bfloat16)
    w_bf = w_bf16.astype(jnp.bfloat16)
    b2 = bias.reshape(1, N).astype(jnp.float32)

    Mt = _choose_row_tile(M, row_tile_cap)
    pad = (-M) % Mt
    if pad:  # not hit for the shapes in this script
        a_bf = jnp.pad(a_bf, ((0, pad), (0, 0)))
        if residual is not None:
            residual = jnp.pad(residual, ((0, pad), (0, 0)))
    Mp = M + pad

    in_specs = [
        pl.BlockSpec((Mt, K), lambda i: (i, 0)),
        pl.BlockSpec((K, N), lambda i: (0, 0)),   # grid-invariant -> fetched once
        pl.BlockSpec((1, N), lambda i: (0, 0)),
    ]
    operands = [a_bf, w_bf, b2]
    if residual is None:
        kernel = _mm_bias_kernel
    else:
        kernel = _mm_bias_res_kernel
        in_specs.append(pl.BlockSpec((Mt, N), lambda i: (i, 0)))
        operands.append(residual.astype(jnp.float32))

    out = pl.pallas_call(
        kernel,
        out_shape=jax.ShapeDtypeStruct((Mp, N), jnp.float32),
        grid=(Mp // Mt,),
        in_specs=in_specs,
        out_specs=pl.BlockSpec((Mt, N), lambda i: (i, 0)),
        compiler_params=pltpu.CompilerParams(dimension_semantics=("parallel",)),
    )(*operands)
    return out[:M] if pad else out


# ----------------------------------------------------------------------------
# GroupNorm (+ Sigmoid) kernel, lane-dense channels-last: one (HW, C) tile per
# batch element. Group stats via tiny one-hot matmuls. Optional fused
# per-(batch, channel) add (ResBlock time embedding) applied before the stats.
# ----------------------------------------------------------------------------
def _gn_core(x, g, b, gm, gmt, inv_n, eps, apply_sigmoid):
    s1 = jnp.sum(x, axis=0, keepdims=True)                                  # (1, C)
    s2 = jnp.sum(x * x, axis=0, keepdims=True)                              # (1, C)
    mean_g = jnp.dot(s1, gm, preferred_element_type=jnp.float32) * inv_n    # (1, G)
    ex2_g = jnp.dot(s2, gm, preferred_element_type=jnp.float32) * inv_n     # (1, G)
    var_g = ex2_g - mean_g * mean_g
    inv_g = lax.rsqrt(var_g + eps)
    mean_c = jnp.dot(mean_g, gmt, preferred_element_type=jnp.float32)       # (1, C)
    inv_c = jnp.dot(inv_g, gmt, preferred_element_type=jnp.float32)         # (1, C)
    scale = inv_c * g
    shift = b - mean_c * scale
    y = x * scale + shift
    if apply_sigmoid:
        y = jax.nn.sigmoid(y)
    return y


def _gn_kernel(x_ref, g_ref, b_ref, gm_ref, gmt_ref, o_ref, *, inv_n, eps, apply_sigmoid):
    x = x_ref[0].astype(jnp.float32)                                         # (HW, C)
    y = _gn_core(x, g_ref[...], b_ref[...], gm_ref[...], gmt_ref[...],
                 inv_n, eps, apply_sigmoid)
    o_ref[0] = y.astype(o_ref.dtype)


def _gn_add_kernel(x_ref, add_ref, g_ref, b_ref, gm_ref, gmt_ref, o_ref, *,
                   inv_n, eps, apply_sigmoid):
    x = x_ref[0].astype(jnp.float32) + add_ref[0]                            # + time emb
    y = _gn_core(x, g_ref[...], b_ref[...], gm_ref[...], gmt_ref[...],
                 inv_n, eps, apply_sigmoid)
    o_ref[0] = y.astype(o_ref.dtype)


def group_norm_sigmoid(x, gamma, beta, *, num_groups=32, eps=1e-5,
                       channel_add=None, apply_sigmoid=True):
    """x: (B, HW, C) channels-last. channel_add: optional (B, C) added before the norm."""
    B, HW, C = x.shape
    G = num_groups
    Cg = C // G
    gids = jnp.arange(C, dtype=jnp.int32) // Cg
    gm = (gids[:, None] == jnp.arange(G, dtype=jnp.int32)[None, :]).astype(jnp.float32)
    gmt = gm.T
    g2 = gamma.reshape(1, C).astype(jnp.float32)
    b2 = beta.reshape(1, C).astype(jnp.float32)
    inv_n = 1.0 / float(HW * Cg)

    x_spec = pl.BlockSpec((1, HW, C), lambda i: (i, 0, 0))
    tail_specs = [
        pl.BlockSpec((1, C), lambda i: (0, 0)),
        pl.BlockSpec((1, C), lambda i: (0, 0)),
        pl.BlockSpec((C, G), lambda i: (0, 0)),
        pl.BlockSpec((G, C), lambda i: (0, 0)),
    ]
    if channel_add is None:
        kernel = partial(_gn_kernel, inv_n=inv_n, eps=eps, apply_sigmoid=apply_sigmoid)
        operands = (x, g2, b2, gm, gmt)
        in_specs = [x_spec] + tail_specs
    else:
        add3 = channel_add.reshape(B, 1, C).astype(jnp.float32)
        kernel = partial(_gn_add_kernel, inv_n=inv_n, eps=eps, apply_sigmoid=apply_sigmoid)
        operands = (x, add3, g2, b2, gm, gmt)
        in_specs = [x_spec, pl.BlockSpec((1, 1, C), lambda i: (i, 0, 0))] + tail_specs

    return pl.pallas_call(
        kernel,
        out_shape=jax.ShapeDtypeStruct((B, HW, C), jnp.float32),
        grid=(B,),
        in_specs=in_specs,
        out_specs=x_spec,
        compiler_params=pltpu.CompilerParams(dimension_semantics=("parallel",)),
    )(*operands)


# ----------------------------------------------------------------------------
# Batched single-head attention kernel: per-batch QK^T -> softmax -> PV in VMEM.
# ----------------------------------------------------------------------------
def _attn_kernel(q_ref, k_ref, v_ref, o_ref, *, scale):
    q = q_ref[...].astype(jnp.bfloat16)                       # (1, HW, C)
    k = k_ref[...].astype(jnp.bfloat16)
    s = jnp.einsum('bqd,bkd->bqk', q, k,
                   preferred_element_type=jnp.float32) * scale
    s = s - jnp.max(s, axis=-1, keepdims=True)
    p = jnp.exp(s)
    p = p / jnp.sum(p, axis=-1, keepdims=True)
    o = jnp.einsum('bqk,bkd->bqd', p.astype(jnp.bfloat16),
                   v_ref[...].astype(jnp.bfloat16),
                   preferred_element_type=jnp.float32)
    o_ref[...] = o.astype(o_ref.dtype)


def attn_block(p, x):
    """x: (B, HW, C) channels-last (== PyTorch's view+permute). Returns same layout.
    Note: the module's self.norm is defined but unused in forward -> not applied."""
    B, HW, C = x.shape
    xf = x.reshape(B * HW, C)
    qkv = fused_matmul(xf, p['proj_w'], p['proj_b']).reshape(B, HW, 3 * C)
    q = qkv[:, :, :C]
    k = qkv[:, :, C:2 * C]
    v = qkv[:, :, 2 * C:]
    scale = float(C) ** -0.5                                  # d_k = n_channels

    attn = pl.pallas_call(
        partial(_attn_kernel, scale=scale),
        out_shape=jax.ShapeDtypeStruct((B, HW, C), jnp.float32),
        grid=(B,),
        in_specs=[pl.BlockSpec((1, HW, C), lambda b: (b, 0, 0)),
                  pl.BlockSpec((1, HW, C), lambda b: (b, 0, 0)),
                  pl.BlockSpec((1, HW, C), lambda b: (b, 0, 0))],
        out_specs=pl.BlockSpec((1, HW, C), lambda b: (b, 0, 0)),
        compiler_params=pltpu.CompilerParams(dimension_semantics=("parallel",)),
    )(q, k, v)

    # out projection with the residual (attn += x) fused into the epilogue.
    out = fused_matmul(attn.reshape(B * HW, C), p['out_w'], p['out_b'], residual=xf)
    return out.reshape(B, HW, C)


# ----------------------------------------------------------------------------
# Conv 3x3 (pad 1) on channels-last activations: im2col (plain JAX glue, tiny at
# 8x8) + fused Pallas matmul with bias (+ optional fused residual).
# ----------------------------------------------------------------------------
def conv3x3(x, H, W, wmat_bf16, bias, residual=None):
    """x: (B, HW, Cin); wmat_bf16: (9*Cin, Cout) pre-reshaped; returns (B, HW, Cout)."""
    B, HW, C = x.shape
    Cout = wmat_bf16.shape[1]
    xi = x.reshape(B, H, W, C)
    xp = jnp.pad(xi, ((0, 0), (1, 1), (1, 1), (0, 0)))
    taps = [xp[:, di:di + H, dj:dj + W, :] for di in range(3) for dj in range(3)]
    patches = jnp.concatenate(taps, axis=-1).reshape(B * HW, 9 * C)
    y = fused_matmul(patches, wmat_bf16, bias, residual=residual)
    return y.reshape(B, HW, Cout)


# ----------------------------------------------------------------------------
# ResBlock / BottleNeck forward (channels-last internally)
# ----------------------------------------------------------------------------
def res_block(p, x, temb, H, W):
    B, HW, C = x.shape
    h = group_norm_sigmoid(x, p['norm1_g'], p['norm1_b'])                 # norm1 + act1
    h = conv3x3(h, H, W, p['conv1_w'], p['conv1_b'])                      # conv1 (+bias)
    te = fused_matmul(temb, p['time_w'], p['time_b'])                     # (B, C)
    # h += time_emb(t)[:, None, :]  is fused into the norm2 kernel (added pre-stats).
    h = group_norm_sigmoid(h, p['norm2_g'], p['norm2_b'], channel_add=te)  # norm2 + act2
    # TODO(synk): Dropout(p=0.1) is identity here (inference/eval semantics).
    h = conv3x3(h, H, W, p['conv2_w'], p['conv2_b'],
                residual=x.reshape(B * HW, C))   # shortcut = Identity (in==out), fused
    return h


def bottleneck_forward(P, x_nchw, t):
    B, C, H, W = x_nchw.shape
    HW = H * W
    # Convert NCHW -> channels-last once; everything inside stays (B, HW, C).
    h = jnp.transpose(x_nchw, (0, 2, 3, 1)).reshape(B, HW, C)
    h = res_block(P['resDown'], h, t, H, W)
    h = attn_block(P['attn'], h)
    h = res_block(P['resUp'], h, t, H, W)
    return jnp.transpose(h.reshape(B, H, W, C), (0, 3, 1, 2))


# ----------------------------------------------------------------------------
# Deterministic synthetic parameters (weights pre-reshaped to matmul layout, bf16)
# ----------------------------------------------------------------------------
def init_bottleneck(key, n_channels, time_channels):
    C, T = n_channels, time_channels
    keys = iter(jax.random.split(key, 16))

    def conv_w(cout, cin):
        k1, k2 = jax.random.split(next(keys))
        w = 0.05 * jax.random.normal(k1, (cout, cin, 3, 3), jnp.float32)
        b = 0.05 * jax.random.normal(k2, (cout,), jnp.float32)
        wmat = jnp.transpose(w, (2, 3, 1, 0)).reshape(9 * cin, cout).astype(jnp.bfloat16)
        return wmat, b

    def linear_w(out_f, in_f):
        k1, k2 = jax.random.split(next(keys))
        w = 0.05 * jax.random.normal(k1, (out_f, in_f), jnp.float32)
        b = 0.05 * jax.random.normal(k2, (out_f,), jnp.float32)
        return w.T.astype(jnp.bfloat16), b           # stored as (in, out) bf16

    def resblock():
        c1w, c1b = conv_w(C, C)
        c2w, c2b = conv_w(C, C)
        tw, tb = linear_w(C, T)
        return {'norm1_g': jnp.ones((C,), jnp.float32),
                'norm1_b': jnp.zeros((C,), jnp.float32),
                'conv1_w': c1w, 'conv1_b': c1b,
                'norm2_g': jnp.ones((C,), jnp.float32),
                'norm2_b': jnp.zeros((C,), jnp.float32),
                'conv2_w': c2w, 'conv2_b': c2b,
                'time_w': tw, 'time_b': tb}

    pw, pb = linear_w(3 * C, C)
    ow, ob = linear_w(C, C)
    return {'resDown': resblock(),
            # AttnBlock.norm is defined in the module but unused in forward -> omitted.
            'attn': {'proj_w': pw, 'proj_b': pb, 'out_w': ow, 'out_b': ob},
            'resUp': resblock()}


# ----------------------------------------------------------------------------
if __name__ == "__main__":
    key = jax.random.PRNGKey(0)
    kp, kx, kt = jax.random.split(key, 3)

    # GroupNorm(32, C) requires C % 32 == 0; C=128 keeps every lane dim 128-dense.
    B, C, H, W = 2, 128, 8, 8
    T = 128  # time_channels

    params = init_bottleneck(kp, C, T)
    x = jax.random.normal(kx, (B, C, H, W), jnp.float32)   # NCHW, like PyTorch
    t = jax.random.normal(kt, (B, T), jnp.float32)         # already-embedded time vector

    fwd = jax.jit(lambda x, t: bottleneck_forward(params, x, t))
    y = fwd(x, t)
    jax.block_until_ready(y)
    assert y.shape == (B, C, H, W), y.shape
    assert bool(jnp.all(jnp.isfinite(y)))
    print("KERNEL_OK")
</pallas_src>

<mosaic_0001>
module attributes {stable_mosaic.version = 11 : i64} {
  func.func @_mm_bias_kernel(%arg0: i32, %arg1: memref<2x128xbf16, #tpu.memory_space<vmem>>, %arg2: memref<128x128xbf16, #tpu.memory_space<vmem>>, %arg3: memref<1x128xf32, #tpu.memory_space<vmem>>, %arg4: memref<2x128xf32, #tpu.memory_space<vmem>>) attributes {dimension_semantics = [#tpu.dimension_semantics<parallel>], iteration_bounds = array<i64: 1>, scalar_prefetch = 0 : i64, scratch_operands = 0 : i64, tpu.core_type = #tpu.core_type<tc>, window_params = [{transform_indices = @transform_0, window_bounds = array<i64: 2, 128>}, {pipeline_mode = #tpu.pipeline_mode<synchronous>, transform_indices = @transform_1, window_bounds = array<i64: 128, 128>}, {pipeline_mode = #tpu.pipeline_mode<synchronous>, transform_indices = @transform_2, window_bounds = array<i64: 1, 128>}, {transform_indices = @transform_3, window_bounds = array<i64: 2, 128>}]} {
    %c0 = arith.constant 0 : index
    %c0_0 = arith.constant 0 : index
    %0 = vector.load %arg1[%c0, %c0_0] : memref<2x128xbf16, #tpu.memory_space<vmem>>, vector<2x128xbf16>
    %c0_1 = arith.constant 0 : index
    %c0_2 = arith.constant 0 : index
    %1 = vector.load %arg2[%c0_1, %c0_2] : memref<128x128xbf16, #tpu.memory_space<vmem>>, vector<128x128xbf16>
    %cst = arith.constant dense<0.000000e+00> : vector<2x128xf32>
    %2 = tpu.matmul %0, %1, %cst {dimension_numbers = #tpu.dot_dimension_numbers<[1], [0], [0], [1], [0, 0, 1, 1], [], []>} : vector<2x128xbf16>, vector<128x128xbf16>, vector<2x128xf32> -> vector<2x128xf32>
    %c0_3 = arith.constant 0 : index
    %c0_4 = arith.constant 0 : index
    %3 = vector.load %arg3[%c0_3, %c0_4] : memref<1x128xf32, #tpu.memory_space<vmem>>, vector<1x128xf32>
    %4 = vector.broadcast %3 : vector<1x128xf32> to vector<2x128xf32>
    %5 = arith.addf %2, %4 : vector<2x128xf32>
    %c0_5 = arith.constant 0 : index
    %c0_6 = arith.constant 0 : index
    %6 = vector.load %arg4[%c0_5, %c0_6] : memref<2x128xf32, #tpu.memory_space<vmem>>, vector<2x128xf32>
    tpu.vector_store %arg4[%c0_5, %c0_6], %5 {strides = array<i32>} : memref<2x128xf32, #tpu.memory_space<vmem>>, vector<2x128xf32>,
    return
  }
  func.func @transform_0(%arg0: i32) -> (i32, i32) {
    %c0_i32 = arith.constant 0 : i32
    %c0_i32_0 = arith.constant 0 : i32
    return %arg0, %c0_i32 : i32, i32
  }
  func.func @transform_1(%arg0: i32) -> (i32, i32) {
    %c0_i32 = arith.constant 0 : i32
    %c0_i32_0 = arith.constant 0 : i32
    %c0_i32_1 = arith.constant 0 : i32
    return %c0_i32, %c0_i32_0 : i32, i32
  }
  func.func @transform_2(%arg0: i32) -> (i32, i32) {
    %c0_i32 = arith.constant 0 : i32
    %c0_i32_0 = arith.constant 0 : i32
    %c0_i32_1 = arith.constant 0 : i32
    return %c0_i32, %c0_i32_0 : i32, i32
  }
  func.func @transform_3(%arg0: i32) -> (i32, i32) {
    %c0_i32 = arith.constant 0 : i32
    %c0_i32_0 = arith.constant 0 : i32
    return %arg0, %c0_i32 : i32, i32
  }
}

module attributes {stable_mosaic.version = 11 : i64} {
  func.func @_mm_bias_kernel(%arg0: i32, %arg1: memref<2x128xbf16, #tpu.memory_space<vmem>>, %arg2: memref<128x128xbf16, #tpu.memory_space<vmem>>, %arg3: memref<1x128xf32, #tpu.memory_space<vmem>>, %arg4: memref<2x128xf32, #tpu.memory_space<vmem>>) attributes {dimension_semantics = [#tpu.dimension_semantics<parallel>], iteration_bounds = array<i64: 1>, scalar_prefetch = 0 : i64, scratch_operands = 0 : i64, tpu.core_type = #tpu.core_type<tc>, window_params = [{transform_indices = @transform_0, window_bounds = array<i64: 2, 128>}, {pipeline_mode = #tpu.pipeline_mode<synchronous>, transform_indices = @transform_1, window_bounds = array<i64: 128, 128>}, {pipeline_mode = #tpu.pipeline_mode<synchronous>, transform_indices = @transform_2, window_bounds = array<i64: 1, 128>}, {transform_indices = @transform_3, window_bounds = array<i64: 2, 128>}]} {
    %c0 = arith.constant 0 : index
    %c0_0 = arith.constant 0 : index
    %0 = vector.load %arg1[%c0, %c0_0] : memref<2x128xbf16, #tpu.memory_space<vmem>>, vector<2x128xbf16>
    %c0_1 = arith.constant 0 : index
    %c0_2 = arith.constant 0 : index
    %1 = vector.load %arg2[%c0_1, %c0_2] : memref<128x128xbf16, #tpu.memory_space<vmem>>, vector<128x128xbf16>
    %cst = arith.constant dense<0.000000e+00> : vector<2x128xf32>
    %2 = tpu.matmul %0, %1, %cst {dimension_numbers = #tpu.dot_dimension_numbers<[1], [0], [0], [1], [0, 0, 1, 1], [], []>} : vector<2x128xbf16>, vector<128x128xbf16>, vector<2x128xf32> -> vector<2x128xf32>
    %c0_3 = arith.constant 0 : index
    %c0_4 = arith.constant 0 : index
    %3 = vector.load %arg3[%c0_3, %c0_4] : memref<1x128xf32, #tpu.memory_space<vmem>>, vector<1x128xf32>
    %4 = vector.broadcast %3 : vector<1x128xf32> to vector<2x128xf32>
    %5 = arith.addf %2, %4 : vector<2x128xf32>
    %c0_5 = arith.constant 0 : index
    %c0_6 = arith.constant 0 : index
    %6 = vector.load %arg4[%c0_5, %c0_6] : memref<2x128xf32, #tpu.memory_space<vmem>>, vector<2x128xf32>
    tpu.vector_store %arg4[%c0_5, %c0_6], %5 {strides = array<i32>} : memref<2x128xf32, #tpu.memory_space<vmem>>, vector<2x128xf32>,
    return
  }
  func.func @transform_0(%arg0: i32) -> (i32, i32) {
    %c0_i32 = arith.constant 0 : i32
    %c0_i32_0 = arith.constant 0 : i32
    return %arg0, %c0_i32 : i32, i32
  }
  func.func @transform_1(%arg0: i32) -> (i32, i32) {
    %c0_i32 = arith.constant 0 : i32
    %c0_i32_0 = arith.constant 0 : i32
    %c0_i32_1 = arith.constant 0 : i32
    return %c0_i32, %c0_i32_0 : i32, i32
  }
  func.func @transform_2(%arg0: i32) -> (i32, i32) {
    %c0_i32 = arith.constant 0 : i32
    %c0_i32_0 = arith.constant 0 : i32
    %c0_i32_1 = arith.constant 0 : i32
    return %c0_i32, %c0_i32_0 : i32, i32
  }
  func.func @transform_3(%arg0: i32) -> (i32, i32) {
    %c0_i32 = arith.constant 0 : i32
    %c0_i32_0 = arith.constant 0 : i32
    return %arg0, %c0_i32 : i32, i32
  }
}

module attributes {stable_mosaic.version = 11 : i64} {
  func.func @_gn_kernel(%arg0: i32, %arg1: memref<1x64x128xf32, #tpu.memory_space<vmem>>, %arg2: memref<1x128xf32, #tpu.memory_space<vmem>>, %arg3: memref<1x128xf32, #tpu.memory_space<vmem>>, %arg4: memref<128x32xf32, #tpu.memory_space<vmem>>, %arg5: memref<32x128xf32, #tpu.memory_space<vmem>>, %arg6: memref<1x64x128xf32, #tpu.memory_space<vmem>>) attributes {dimension_semantics = [#tpu.dimension_semantics<parallel>], iteration_bounds = array<i64: 2>, scalar_prefetch = 0 : i64, scratch_operands = 0 : i64, tpu.core_type = #tpu.core_type<tc>, window_params = [{transform_indices = @transform_0, window_bounds = array<i64: 1, 64, 128>}, {pipeline_mode = #tpu.pipeline_mode<synchronous>, transform_indices = @transform_1, window_bounds = array<i64: 1, 128>}, {pipeline_mode = #tpu.pipeline_mode<synchronous>, transform_indices = @transform_2, window_bounds = array<i64: 1, 128>}, {pipeline_mode = #tpu.pipeline_mode<synchronous>, transform_indices = @transform_3, window_bounds = array<i64: 128, 32>}, {pipeline_mode = #tpu.pipeline_mode<synchronous>, transform_indices = @transform_4, window_bounds = array<i64: 32, 128>}, {transform_indices = @transform_5, window_bounds = array<i64: 1, 64, 128>}]} {
    %c0 = arith.constant 0 : index
    %c0_0 = arith.constant 0 : index
    %c0_1 = arith.constant 0 : index
    %0 = vector.load %arg1[%c0, %c0_0, %c0_1] : memref<1x64x128xf32, #tpu.memory_space<vmem>>, vector<1x64x128xf32>
    %1 = vector.shape_cast %0 : vector<1x64x128xf32> to vector<64x128xf32>
    %c0_2 = arith.constant 0 : index
    %c0_3 = arith.constant 0 : index
    %2 = vector.load %arg2[%c0_2, %c0_3] : memref<1x128xf32, #tpu.memory_space<vmem>>, vector<1x128xf32>
    %c0_4 = arith.constant 0 : index
    %c0_5 = arith.constant 0 : index
    %3 = vector.load %arg3[%c0_4, %c0_5] : memref<1x128xf32, #tpu.memory_space<vmem>>, vector<1x128xf32>
    %c0_6 = arith.constant 0 : index
    %c0_7 = arith.constant 0 : index
    %4 = vector.load %arg4[%c0_6, %c0_7] : memref<128x32xf32, #tpu.memory_space<vmem>>, vector<128x32xf32>
    %c0_8 = arith.constant 0 : index
    %c0_9 = arith.constant 0 : index
    %5 = vector.load %arg5[%c0_8, %c0_9] : memref<32x128xf32, #tpu.memory_space<vmem>>, vector<32x128xf32>
    %cst = arith.constant dense<0.000000e+00> : vector<128xf32>
    %6 = vector.multi_reduction <add>, %1, %cst [0] : vector<64x128xf32> to vector<128xf32>
    %7 = vector.shape_cast %6 : vector<128xf32> to vector<1x128xf32>
    %8 = arith.mulf %1, %1 : vector<64x128xf32>
    %cst_10 = arith.constant dense<0.000000e+00> : vector<128xf32>
    %9 = vector.multi_reduction <add>, %8, %cst_10 [0] : vector<64x128xf32> to vector<128xf32>
    %10 = vector.shape_cast %9 : vector<128xf32> to vector<1x128xf32>
    %cst_11 = arith.constant dense<0.000000e+00> : vector<1x32xf32>
    %11 = tpu.matmul %7, %4, %cst_11 {dimension_numbers = #tpu.dot_dimension_numbers<[1], [0], [0], [1], [0, 0, 1, 1], [], []>} : vector<1x128xf32>, vector<128x32xf32>, vector<1x32xf32> -> vector<1x32xf32>
    %cst_12 = arith.constant 3.906250e-03 : f32
    %12 = vector.broadcast %cst_12 : f32 to vector<1x32xf32>
    %13 = arith.mulf %11, %12 : vector<1x32xf32>
    %cst_13 = arith.constant dense<0.000000e+00> : vector<1x32xf32>
    %14 = tpu.matmul %10, %4, %cst_13 {dimension_numbers = #tpu.dot_dimension_numbers<[1], [0], [0], [1], [0, 0, 1, 1], [], []>} : vector<1x128xf32>, vector<128x32xf32>, vector<1x32xf32> -> vector<1x32xf32>
    %cst_14 = arith.constant 3.906250e-03 : f32
    %15 = vector.broadcast %cst_14 : f32 to vector<1x32xf32>
    %16 = arith.mulf %14, %15 : vector<1x32xf32>
    %17 = arith.mulf %13, %13 : vector<1x32xf32>
    %18 = arith.subf %16, %17 : vector<1x32xf32>
    %cst_15 = arith.constant 9.99999974E-6 : f32
    %19 = vector.broadcast %cst_15 : f32 to vector<1x32xf32>
    %20 = arith.addf %18, %19 : vector<1x32xf32>
    %21 = math.rsqrt %20 : vector<1x32xf32>
    %cst_16 = arith.constant dense<0.000000e+00> : vector<1x128xf32>
    %22 = tpu.matmul %13, %5, %cst_16 {dimension_numbers = #tpu.dot_dimension_numbers<[1], [0], [0], [1], [0, 0, 1, 1], [], []>} : vector<1x32xf32>, vector<32x128xf32>, vector<1x128xf32> -> vector<1x128xf32>
    %cst_17 = arith.constant dense<0.000000e+00> : vector<1x128xf32>
    %23 = tpu.matmul %21, %5, %cst_17 {dimension_numbers = #tpu.dot_dimension_numbers<[1], [0], [0], [1], [0, 0, 1, 1], [], []>} : vector<1x32xf32>, vector<32x128xf32>, vector<1x128xf32> -> vector<1x128xf32>
    %24 = arith.mulf %23, %2 : vector<1x128xf32>
    %25 = arith.mulf %22, %24 : vector<1x128xf32>
    %26 = arith.subf %3, %25 : vector<1x128xf32>
    %27 = vector.broadcast %24 : vector<1x128xf32> to vector<64x128xf32>
    %28 = arith.mulf %1, %27 : vector<64x128xf32>
    %29 = vector.broadcast %26 : vector<1x128xf32> to vector<64x128xf32>
    %30 = arith.addf %28, %29 : vector<64x128xf32>
    %31 = arith.negf %30 : vector<64x128xf32>
    %32 = math.exp %31 : vector<64x128xf32>
    %cst_18 = arith.constant 1.000000e+00 : f32
    %33 = vector.broadcast %cst_18 : f32 to vector<64x128xf32>
    %34 = arith.addf %33, %32 : vector<64x128xf32>
    %35 = arith.divf %33, %34 : vector<64x128xf32>
    %c0_19 = arith.constant 0 : index
    %c0_20 = arith.constant 0 : index
    %c0_21 = arith.constant 0 : index
    %36 = vector.load %arg6[%c0_19, %c0_20, %c0_21] : memref<1x64x128xf32, #tpu.memory_space<vmem>>, vector<1x64x128xf32>
    %37 = vector.shape_cast %36 : vector<1x64x128xf32> to vector<64x128xf32>
    %38 = vector.shape_cast %35 : vector<64x128xf32> to vector<1x64x128xf32>
    tpu.vector_store %arg6[%c0_19, %c0_20, %c0_21], %38 {strides = array<i32>} : memref<1x64x128xf32, #tpu.memory_space<vmem>>, vector<1x64x128xf32>,
    return
  }
  func.func @transform_0(%arg0: i32) -> (i32, i32, i32) {
    %c0_i32 = arith.constant 0 : i32
    %c0_i32_0 = arith.constant 0 : i32
    %c0_i32_1 = arith.constant 0 : i32
    return %arg0, %c0_i32, %c0_i32_0 : i32, i32, i32
  }
  func.func @transform_1(%arg0: i32) -> (i32, i32) {
    %c0_i32 = arith.constant 0 : i32
    %c0_i32_0 = arith.constant 0 : i32
    %c0_i32_1 = arith.constant 0 : i32
    return %c0_i32, %c0_i32_0 : i32, i32
  }
  func.func @transform_2(%arg0: i32) -> (i32, i32) {
    %c0_i32 = arith.constant 0 : i32
    %c0_i32_0 = arith.constant 0 : i32
    %c0_i32_1 = arith.constant 0 : i32
    return %c0_i32, %c0_i32_0 : i32, i32
  }
  func.func @transform_3(%arg0: i32) -> (i32, i32) {
    %c0_i32 = arith.constant 0 : i32
    %c0_i32_0 = arith.constant 0 : i32
    %c0_i32_1 = arith.constant 0 : i32
    return %c0_i32, %c0_i32_0 : i32, i32
  }
  func.func @transform_4(%arg0: i32) -> (i32, i32) {
    %c0_i32 = arith.constant 0 : i32
    %c0_i32_0 = arith.constant 0 : i32
    %c0_i32_1 = arith.constant 0 : i32
    return %c0_i32, %c0_i32_0 : i32, i32
  }
  func.func @transform_5(%arg0: i32) -> (i32, i32, i32) {
    %c0_i32 = arith.constant 0 : i32
    %c0_i32_0 = arith.constant 0 : i32
    %c0_i32_1 = arith.constant 0 : i32
    return %arg0, %c0_i32, %c0_i32_0 : i32, i32, i32
  }
}

module attributes {stable_mosaic.version = 11 : i64} {
  func.func @_mm_bias_kernel(%arg0: i32, %arg1: memref<64x1152xbf16, #tpu.memory_space<vmem>>, %arg2: memref<1152x128xbf16, #tpu.memory_space<vmem>>, %arg3: memref<1x128xf32, #tpu.memory_space<vmem>>, %arg4: memref<64x128xf32, #tpu.memory_space<vmem>>) attributes {dimension_semantics = [#tpu.dimension_semantics<parallel>], iteration_bounds = array<i64: 2>, scalar_prefetch = 0 : i64, scratch_operands = 0 : i64, tpu.core_type = #tpu.core_type<tc>, window_params = [{transform_indices = @transform_0, window_bounds = array<i64: 64, 1152>}, {pipeline_mode = #tpu.pipeline_mode<synchronous>, transform_indices = @transform_1, window_bounds = array<i64: 1152, 128>}, {pipeline_mode = #tpu.pipeline_mode<synchronous>, transform_indices = @transform_2, window_bounds = array<i64: 1, 128>}, {transform_indices = @transform_3, window_bounds = array<i64: 64, 128>}]} {
    %c0 = arith.constant 0 : index
    %c0_0 = arith.constant 0 : index
    %0 = vector.load %arg1[%c0, %c0_0] : memref<64x1152xbf16, #tpu.memory_space<vmem>>, vector<64x1152xbf16>
    %c0_1 = arith.constant 0 : index
    %c0_2 = arith.constant 0 : index
    %1 = vector.load %arg2[%c0_1, %c0_2] : memref<1152x128xbf16, #tpu.memory_space<vmem>>, vector<1152x128xbf16>
    %cst = arith.constant dense<0.000000e+00> : vector<64x128xf32>
    %2 = tpu.matmul %0, %1, %cst {dimension_numbers = #tpu.dot_dimension_numbers<[1], [0], [0], [1], [0, 0, 1, 1], [], []>} : vector<64x1152xbf16>, vector<1152x128xbf16>, vector<64x128xf32> -> vector<64x128xf32>
    %c0_3 = arith.constant 0 : index
    %c0_4 = arith.constant 0 : index
    %3 = vector.load %arg3[%c0_3, %c0_4] : memref<1x128xf32, #tpu.memory_space<vmem>>, vector<1x128xf32>
    %4 = vector.broadcast %3 : vector<1x128xf32> to vector<64x128xf32>
    %5 = arith.addf %2, %4 : vector<64x128xf32>
    %c0_5 = arith.constant 0 : index
    %c0_6 = arith.constant 0 : index
    %6 = vector.load %arg4[%c0_5, %c0_6] : memref<64x128xf32, #tpu.memory_space<vmem>>, vector<64x128xf32>
    tpu.vector_store %arg4[%c0_5, %c0_6], %5 {strides = array<i32>} : memref<64x128xf32, #tpu.memory_space<vmem>>, vector<64x128xf32>,
    return
  }
  func.func @transform_0(%arg0: i32) -> (i32, i32) {
    %c0_i32 = arith.constant 0 : i32
    %c0_i32_0 = arith.constant 0 : i32
    return %arg0, %c0_i32 : i32, i32
  }
  func.func @transform_1(%arg0: i32) -> (i32, i32) {
    %c0_i32 = arith.constant 0 : i32
    %c0_i32_0 = arith.constant 0 : i32
    %c0_i32_1 = arith.constant 0 : i32
    return %c0_i32, %c0_i32_0 : i32, i32
  }
  func.func @transform_2(%arg0: i32) -> (i32, i32) {
    %c0_i32 = arith.constant 0 : i32
    %c0_i32_0 = arith.constant 0 : i32
    %c0_i32_1 = arith.constant 0 : i32
    return %c0_i32, %c0_i32_0 : i32, i32
  }
  func.func @transform_3(%arg0: i32) -> (i32, i32) {
    %c0_i32 = arith.constant 0 : i32
    %c0_i32_0 = arith.constant 0 : i32
    return %arg0, %c0_i32 : i32, i32
  }
}

module attributes {stable_mosaic.version = 11 : i64} {
  func.func @_mm_bias_res_kernel(%arg0: i32, %arg1: memref<64x1152xbf16, #tpu.memory_space<vmem>>, %arg2: memref<1152x128xbf16, #tpu.memory_space<vmem>>, %arg3: memref<1x128xf32, #tpu.memory_space<vmem>>, %arg4: memref<64x128xf32, #tpu.memory_space<vmem>>, %arg5: memref<64x128xf32, #tpu.memory_space<vmem>>) attributes {dimension_semantics = [#tpu.dimension_semantics<parallel>], iteration_bounds = array<i64: 2>, scalar_prefetch = 0 : i64, scratch_operands = 0 : i64, tpu.core_type = #tpu.core_type<tc>, window_params = [{transform_indices = @transform_0, window_bounds = array<i64: 64, 1152>}, {pipeline_mode = #tpu.pipeline_mode<synchronous>, transform_indices = @transform_1, window_bounds = array<i64: 1152, 128>}, {pipeline_mode = #tpu.pipeline_mode<synchronous>, transform_indices = @transform_2, window_bounds = array<i64: 1, 128>}, {transform_indices = @transform_3, window_bounds = array<i64: 64, 128>}, {transform_indices = @transform_4, window_bounds = array<i64: 64, 128>}]} {
    %c0 = arith.constant 0 : index
    %c0_0 = arith.constant 0 : index
    %0 = vector.load %arg1[%c0, %c0_0] : memref<64x1152xbf16, #tpu.memory_space<vmem>>, vector<64x1152xbf16>
    %c0_1 = arith.constant 0 : index
    %c0_2 = arith.constant 0 : index
    %1 = vector.load %arg2[%c0_1, %c0_2] : memref<1152x128xbf16, #tpu.memory_space<vmem>>, vector<1152x128xbf16>
    %cst = arith.constant dense<0.000000e+00> : vector<64x128xf32>
    %2 = tpu.matmul %0, %1, %cst {dimension_numbers = #tpu.dot_dimension_numbers<[1], [0], [0], [1], [0, 0, 1, 1], [], []>} : vector<64x1152xbf16>, vector<1152x128xbf16>, vector<64x128xf32> -> vector<64x128xf32>
    %c0_3 = arith.constant 0 : index
    %c0_4 = arith.constant 0 : index
    %3 = vector.load %arg3[%c0_3, %c0_4] : memref<1x128xf32, #tpu.memory_space<vmem>>, vector<1x128xf32>
    %4 = vector.broadcast %3 : vector<1x128xf32> to vector<64x128xf32>
    %5 = arith.addf %2, %4 : vector<64x128xf32>
    %c0_5 = arith.constant 0 : index
    %c0_6 = arith.constant 0 : index
    %6 = vector.load %arg4[%c0_5, %c0_6] : memref<64x128xf32, #tpu.memory_space<vmem>>, vector<64x128xf32>
    %7 = arith.addf %5, %6 : vector<64x128xf32>
    %c0_7 = arith.constant 0 : index
    %c0_8 = arith.constant 0 : index
    %8 = vector.load %arg5[%c0_7, %c0_8] : memref<64x128xf32, #tpu.memory_space<vmem>>, vector<64x128xf32>
    tpu.vector_store %arg5[%c0_7, %c0_8], %7 {strides = array<i32>} : memref<64x128xf32, #tpu.memory_space<vmem>>, vector<64x128xf32>,
    return
  }
  func.func @transform_0(%arg0: i32) -> (i32, i32) {
    %c0_i32 = arith.constant 0 : i32
    %c0_i32_0 = arith.constant 0 : i32
    return %arg0, %c0_i32 : i32, i32
  }
  func.func @transform_1(%arg0: i32) -> (i32, i32) {
    %c0_i32 = arith.constant 0 : i32
    %c0_i32_0 = arith.constant 0 : i32
    %c0_i32_1 = arith.constant 0 : i32
    return %c0_i32, %c0_i32_0 : i32, i32
  }
  func.func @transform_2(%arg0: i32) -> (i32, i32) {
    %c0_i32 = arith.constant 0 : i32
    %c0_i32_0 = arith.constant 0 : i32
    %c0_i32_1 = arith.constant 0 : i32
    return %c0_i32, %c0_i32_0 : i32, i32
  }
  func.func @transform_3(%arg0: i32) -> (i32, i32) {
    %c0_i32 = arith.constant 0 : i32
    %c0_i32_0 = arith.constant 0 : i32
    return %arg0, %c0_i32 : i32, i32
  }
  func.func @transform_4(%arg0: i32) -> (i32, i32) {
    %c0_i32 = arith.constant 0 : i32
    %c0_i32_0 = arith.constant 0 : i32
    return %arg0, %c0_i32 : i32, i32
  }
}

module attributes {stable_mosaic.version = 11 : i64} {
  func.func @_gn_add_kernel(%arg0: i32, %arg1: memref<1x64x128xf32, #tpu.memory_space<vmem>>, %arg2: memref<1x1x128xf32, #tpu.memory_space<vmem>>, %arg3: memref<1x128xf32, #tpu.memory_space<vmem>>, %arg4: memref<1x128xf32, #tpu.memory_space<vmem>>, %arg5: memref<128x32xf32, #tpu.memory_space<vmem>>, %arg6: memref<32x128xf32, #tpu.memory_space<vmem>>, %arg7: memref<1x64x128xf32, #tpu.memory_space<vmem>>) attributes {dimension_semantics = [#tpu.dimension_semantics<parallel>], iteration_bounds = array<i64: 2>, scalar_prefetch = 0 : i64, scratch_operands = 0 : i64, tpu.core_type = #tpu.core_type<tc>, window_params = [{transform_indices = @transform_0, window_bounds = array<i64: 1, 64, 128>}, {transform_indices = @transform_1, window_bounds = array<i64: 1, 1, 128>}, {pipeline_mode = #tpu.pipeline_mode<synchronous>, transform_indices = @transform_2, window_bounds = array<i64: 1, 128>}, {pipeline_mode = #tpu.pipeline_mode<synchronous>, transform_indices = @transform_3, window_bounds = array<i64: 1, 128>}, {pipeline_mode = #tpu.pipeline_mode<synchronous>, transform_indices = @transform_4, window_bounds = array<i64: 128, 32>}, {pipeline_mode = #tpu.pipeline_mode<synchronous>, transform_indices = @transform_5, window_bounds = array<i64: 32, 128>}, {transform_indices = @transform_6, window_bounds = array<i64: 1, 64, 128>}]} {
    %c0 = arith.constant 0 : index
    %c0_0 = arith.constant 0 : index
    %c0_1 = arith.constant 0 : index
    %0 = vector.load %arg1[%c0, %c0_0, %c0_1] : memref<1x64x128xf32, #tpu.memory_space<vmem>>, vector<1x64x128xf32>
    %1 = vector.shape_cast %0 : vector<1x64x128xf32> to vector<64x128xf32>
    %c0_2 = arith.constant 0 : index
    %c0_3 = arith.constant 0 : index
    %c0_4 = arith.constant 0 : index
    %2 = vector.load %arg2[%c0_2, %c0_3, %c0_4] : memref<1x1x128xf32, #tpu.memory_space<vmem>>, vector<1x1x128xf32>
    %3 = vector.shape_cast %2 : vector<1x1x128xf32> to vector<1x128xf32>
    %4 = vector.broadcast %3 : vector<1x128xf32> to vector<64x128xf32>
    %5 = arith.addf %1, %4 : vector<64x128xf32>
    %c0_5 = arith.constant 0 : index
    %c0_6 = arith.constant 0 : index
    %6 = vector.load %arg3[%c0_5, %c0_6] : memref<1x128xf32, #tpu.memory_space<vmem>>, vector<1x128xf32>
    %c0_7 = arith.constant 0 : index
    %c0_8 = arith.constant 0 : index
    %7 = vector.load %arg4[%c0_7, %c0_8] : memref<1x128xf32, #tpu.memory_space<vmem>>, vector<1x128xf32>
    %c0_9 = arith.constant 0 : index
    %c0_10 = arith.constant 0 : index
    %8 = vector.load %arg5[%c0_9, %c0_10] : memref<128x32xf32, #tpu.memory_space<vmem>>, vector<128x32xf32>
    %c0_11 = arith.constant 0 : index
    %c0_12 = arith.constant 0 : index
    %9 = vector.load %arg6[%c0_11, %c0_12] : memref<32x128xf32, #tpu.memory_space<vmem>>, vector<32x128xf32>
    %cst = arith.constant dense<0.000000e+00> : vector<128xf32>
    %10 = vector.multi_reduction <add>, %5, %cst [0] : vector<64x128xf32> to vector<128xf32>
    %11 = vector.shape_cast %10 : vector<128xf32> to vector<1x128xf32>
    %12 = arith.mulf %5, %5 : vector<64x128xf32>
    %cst_13 = arith.constant dense<0.000000e+00> : vector<128xf32>
    %13 = vector.multi_reduction <add>, %12, %cst_13 [0] : vector<64x128xf32> to vector<128xf32>
    %14 = vector.shape_cast %13 : vector<128xf32> to vector<1x128xf32>
    %cst_14 = arith.constant dense<0.000000e+00> : vector<1x32xf32>
    %15 = tpu.matmul %11, %8, %cst_14 {dimension_numbers = #tpu.dot_dimension_numbers<[1], [0], [0], [1], [0, 0, 1, 1], [], []>} : vector<1x128xf32>, vector<128x32xf32>, vector<1x32xf32> -> vector<1x32xf32>
    %cst_15 = arith.constant 3.906250e-03 : f32
    %16 = vector.broadcast %cst_15 : f32 to vector<1x32xf32>
    %17 = arith.mulf %15, %16 : vector<1x32xf32>
    %cst_16 = arith.constant dense<0.000000e+00> : vector<1x32xf32>
    %18 = tpu.matmul %14, %8, %cst_16 {dimension_numbers = #tpu.dot_dimension_numbers<[1], [0], [0], [1], [0, 0, 1, 1], [], []>} : vector<1x128xf32>, vector<128x32xf32>, vector<1x32xf32> -> vector<1x32xf32>
    %cst_17 = arith.constant 3.906250e-03 : f32
    %19 = vector.broadcast %cst_17 : f32 to vector<1x32xf32>
    %20 = arith.mulf %18, %19 : vector<1x32xf32>
    %21 = arith.mulf %17, %17 : vector<1x32xf32>
    %22 = arith.subf %20, %21 : vector<1x32xf32>
    %cst_18 = arith.constant 9.99999974E-6 : f32
    %23 = vector.broadcast %cst_18 : f32 to vector<1x32xf32>
    %24 = arith.addf %22, %23 : vector<1x32xf32>
    %25 = math.rsqrt %24 : vector<1x32xf32>
    %cst_19 = arith.constant dense<0.000000e+00> : vector<1x128xf32>
    %26 = tpu.matmul %17, %9, %cst_19 {dimension_numbers = #tpu.dot_dimension_numbers<[1], [0], [0], [1], [0, 0, 1, 1], [], []>} : vector<1x32xf32>, vector<32x128xf32>, vector<1x128xf32> -> vector<1x128xf32>
    %cst_20 = arith.constant dense<0.000000e+00> : vector<1x128xf32>
    %27 = tpu.matmul %25, %9, %cst_20 {dimension_numbers = #tpu.dot_dimension_numbers<[1], [0], [0], [1], [0, 0, 1, 1], [], []>} : vector<1x32xf32>, vector<32x128xf32>, vector<1x128xf32> -> vector<1x128xf32>
    %28 = arith.mulf %27, %6 : vector<1x128xf32>
    %29 = arith.mulf %26, %28 : vector<1x128xf32>
    %30 = arith.subf %7, %29 : vector<1x128xf32>
    %31 = vector.broadcast %28 : vector<1x128xf32> to vector<64x128xf32>
    %32 = arith.mulf %5, %31 : vector<64x128xf32>
    %33 = vector.broadcast %30 : vector<1x128xf32> to vector<64x128xf32>
    %34 = arith.addf %32, %33 : vector<64x128xf32>
    %35 = arith.negf %34 : vector<64x128xf32>
    %36 = math.exp %35 : vector<64x128xf32>
    %cst_21 = arith.constant 1.000000e+00 : f32
    %37 = vector.broadcast %cst_21 : f32 to vector<64x128xf32>
    %38 = arith.addf %37, %36 : vector<64x128xf32>
    %39 = arith.divf %37, %38 : vector<64x128xf32>
    %c0_22 = arith.constant 0 : index
    %c0_23 = arith.constant 0 : index
    %c0_24 = arith.constant 0 : index
    %40 = vector.load %arg7[%c0_22, %c0_23, %c0_24] : memref<1x64x128xf32, #tpu.memory_space<vmem>>, vector<1x64x128xf32>
    %41 = vector.shape_cast %40 : vector<1x64x128xf32> to vector<64x128xf32>
    %42 = vector.shape_cast %39 : vector<64x128xf32> to vector<1x64x128xf32>
    tpu.vector_store %arg7[%c0_22, %c0_23, %c0_24], %42 {strides = array<i32>} : memref<1x64x128xf32, #tpu.memory_space<vmem>>, vector<1x64x128xf32>,
    return
  }
  func.func @transform_0(%arg0: i32) -> (i32, i32, i32) {
    %c0_i32 = arith.constant 0 : i32
    %c0_i32_0 = arith.constant 0 : i32
    %c0_i32_1 = arith.constant 0 : i32
    return %arg0, %c0_i32, %c0_i32_0 : i32, i32, i32
  }
  func.func @transform_1(%arg0: i32) -> (i32, i32, i32) {
    %c0_i32 = arith.constant 0 : i32
    %c0_i32_0 = arith.constant 0 : i32
    %c0_i32_1 = arith.constant 0 : i32
    return %arg0, %c0_i32, %c0_i32_0 : i32, i32, i32
  }
  func.func @transform_2(%arg0: i32) -> (i32, i32) {
    %c0_i32 = arith.constant 0 : i32
    %c0_i32_0 = arith.constant 0 : i32
    %c0_i32_1 = arith.constant 0 : i32
    return %c0_i32, %c0_i32_0 : i32, i32
  }
  func.func @transform_3(%arg0: i32) -> (i32, i32) {
    %c0_i32 = arith.constant 0 : i32
    %c0_i32_0 = arith.constant 0 : i32
    %c0_i32_1 = arith.constant 0 : i32
    return %c0_i32, %c0_i32_0 : i32, i32
  }
  func.func @transform_4(%arg0: i32) -> (i32, i32) {
    %c0_i32 = arith.constant 0 : i32
    %c0_i32_0 = arith.constant 0 : i32
    %c0_i32_1 = arith.constant 0 : i32
    return %c0_i32, %c0_i32_0 : i32, i32
  }
  func.func @transform_5(%arg0: i32) -> (i32, i32) {
    %c0_i32 = arith.constant 0 : i32
    %c0_i32_0 = arith.constant 0 : i32
    %c0_i32_1 = arith.constant 0 : i32
    return %c0_i32, %c0_i32_0 : i32, i32
  }
  func.func @transform_6(%arg0: i32) -> (i32, i32, i32) {
    %c0_i32 = arith.constant 0 : i32
    %c0_i32_0 = arith.constant 0 : i32
    %c0_i32_1 = arith.constant 0 : i32
    return %arg0, %c0_i32, %c0_i32_0 : i32, i32, i32
  }
}

module attributes {stable_mosaic.version = 11 : i64} {
  func.func @_mm_bias_kernel(%arg0: i32, %arg1: memref<64x128xbf16, #tpu.memory_space<vmem>>, %arg2: memref<128x384xbf16, #tpu.memory_space<vmem>>, %arg3: memref<1x384xf32, #tpu.memory_space<vmem>>, %arg4: memref<64x384xf32, #tpu.memory_space<vmem>>) attributes {dimension_semantics = [#tpu.dimension_semantics<parallel>], iteration_bounds = array<i64: 2>, scalar_prefetch = 0 : i64, scratch_operands = 0 : i64, tpu.core_type = #tpu.core_type<tc>, window_params = [{transform_indices = @transform_0, window_bounds = array<i64: 64, 128>}, {pipeline_mode = #tpu.pipeline_mode<synchronous>, transform_indices = @transform_1, window_bounds = array<i64: 128, 384>}, {pipeline_mode = #tpu.pipeline_mode<synchronous>, transform_indices = @transform_2, window_bounds = array<i64: 1, 384>}, {transform_indices = @transform_3, window_bounds = array<i64: 64, 384>}]} {
    %c0 = arith.constant 0 : index
    %c0_0 = arith.constant 0 : index
    %0 = vector.load %arg1[%c0, %c0_0] : memref<64x128xbf16, #tpu.memory_space<vmem>>, vector<64x128xbf16>
    %c0_1 = arith.constant 0 : index
    %c0_2 = arith.constant 0 : index
    %1 = vector.load %arg2[%c0_1, %c0_2] : memref<128x384xbf16, #tpu.memory_space<vmem>>, vector<128x384xbf16>
    %cst = arith.constant dense<0.000000e+00> : vector<64x384xf32>
    %2 = tpu.matmul %0, %1, %cst {dimension_numbers = #tpu.dot_dimension_numbers<[1], [0], [0], [1], [0, 0, 1, 1], [], []>} : vector<64x128xbf16>, vector<128x384xbf16>, vector<64x384xf32> -> vector<64x384xf32>
    %c0_3 = arith.constant 0 : index
    %c0_4 = arith.constant 0 : index
    %3 = vector.load %arg3[%c0_3, %c0_4] : memref<1x384xf32, #tpu.memory_space<vmem>>, vector<1x384xf32>
    %4 = vector.broadcast %3 : vector<1x384xf32> to vector<64x384xf32>
    %5 = arith.addf %2, %4 : vector<64x384xf32>
    %c0_5 = arith.constant 0 : index
    %c0_6 = arith.constant 0 : index
    %6 = vector.load %arg4[%c0_5, %c0_6] : memref<64x384xf32, #tpu.memory_space<vmem>>, vector<64x384xf32>
    tpu.vector_store %arg4[%c0_5, %c0_6], %5 {strides = array<i32>} : memref<64x384xf32, #tpu.memory_space<vmem>>, vector<64x384xf32>,
    return
  }
  func.func @transform_0(%arg0: i32) -> (i32, i32) {
    %c0_i32 = arith.constant 0 : i32
    %c0_i32_0 = arith.constant 0 : i32
    return %arg0, %c0_i32 : i32, i32
  }
  func.func @transform_1(%arg0: i32) -> (i32, i32) {
    %c0_i32 = arith.constant 0 : i32
    %c0_i32_0 = arith.constant 0 : i32
    %c0_i32_1 = arith.constant 0 : i32
    return %c0_i32, %c0_i32_0 : i32, i32
  }
  func.func @transform_2(%arg0: i32) -> (i32, i32) {
    %c0_i32 = arith.constant 0 : i32
    %c0_i32_0 = arith.constant 0 : i32
    %c0_i32_1 = arith.constant 0 : i32
    return %c0_i32, %c0_i32_0 : i32, i32
  }
  func.func @transform_3(%arg0: i32) -> (i32, i32) {
    %c0_i32 = arith.constant 0 : i32
    %c0_i32_0 = arith.constant 0 : i32
    return %arg0, %c0_i32 : i32, i32
  }
}

module attributes {stable_mosaic.version = 11 : i64} {
  func.func @_attn_kernel(%arg0: i32, %arg1: memref<1x64x128xf32, #tpu.memory_space<vmem>>, %arg2: memref<1x64x128xf32, #tpu.memory_space<vmem>>, %arg3: memref<1x64x128xf32, #tpu.memory_space<vmem>>, %arg4: memref<1x64x128xf32, #tpu.memory_space<vmem>>) attributes {dimension_semantics = [#tpu.dimension_semantics<parallel>], iteration_bounds = array<i64: 2>, scalar_prefetch = 0 : i64, scratch_operands = 0 : i64, tpu.core_type = #tpu.core_type<tc>, window_params = [{transform_indices = @transform_0, window_bounds = array<i64: 1, 64, 128>}, {transform_indices = @transform_1, window_bounds = array<i64: 1, 64, 128>}, {transform_indices = @transform_2, window_bounds = array<i64: 1, 64, 128>}, {transform_indices = @transform_3, window_bounds = array<i64: 1, 64, 128>}]} {
    %c0 = arith.constant 0 : index
    %c0_0 = arith.constant 0 : index
    %c0_1 = arith.constant 0 : index
    %0 = vector.load %arg1[%c0, %c0_0, %c0_1] : memref<1x64x128xf32, #tpu.memory_space<vmem>>, vector<1x64x128xf32>
    %1 = arith.truncf %0 : vector<1x64x128xf32> to vector<1x64x128xbf16>
    %c0_2 = arith.constant 0 : index
    %c0_3 = arith.constant 0 : index
    %c0_4 = arith.constant 0 : index
    %2 = vector.load %arg2[%c0_2, %c0_3, %c0_4] : memref<1x64x128xf32, #tpu.memory_space<vmem>>, vector<1x64x128xf32>
    %3 = arith.truncf %2 : vector<1x64x128xf32> to vector<1x64x128xbf16>
    "tpu.trace_start"() <{level = 10 : i32, message = "bqd,bkd->bqk"}> : () -> ()
    %cst = arith.constant dense<0.000000e+00> : vector<1x64x64xf32>
    %4 = tpu.matmul %1, %3, %cst {dimension_numbers = #tpu.dot_dimension_numbers<[2], [2], [1], [1], [0, 0, 0, 1, 1, 1], [0], [0]>} : vector<1x64x128xbf16>, vector<1x64x128xbf16>, vector<1x64x64xf32> -> vector<1x64x64xf32>
    "tpu.trace_stop"() : () -> ()
    %cst_5 = arith.constant 0.0883883461 : f32
    %5 = vector.broadcast %cst_5 : f32 to vector<1x64x64xf32>
    %6 = arith.mulf %4, %5 : vector<1x64x64xf32>
    %cst_6 = arith.constant dense<0xFF800000> : vector<1x64xf32>
    %7 = vector.multi_reduction <maximumf>, %6, %cst_6 [2] : vector<1x64x64xf32> to vector<1x64xf32>
    %8 = vector.shape_cast %7 : vector<1x64xf32> to vector<1x64x1xf32>
    %9 = vector.broadcast %8 : vector<1x64x1xf32> to vector<1x64x64xf32>
    %10 = arith.subf %6, %9 : vector<1x64x64xf32>
    %11 = math.exp %10 : vector<1x64x64xf32>
    %cst_7 = arith.constant dense<0.000000e+00> : vector<1x64xf32>
    %12 = vector.multi_reduction <add>, %11, %cst_7 [2] : vector<1x64x64xf32> to vector<1x64xf32>
    %13 = vector.shape_cast %12 : vector<1x64xf32> to vector<1x64x1xf32>
    %14 = vector.broadcast %13 : vector<1x64x1xf32> to vector<1x64x64xf32>
    %15 = arith.divf %11, %14 : vector<1x64x64xf32>
    %16 = arith.truncf %15 : vector<1x64x64xf32> to vector<1x64x64xbf16>
    %c0_8 = arith.constant 0 : index
    %c0_9 = arith.constant 0 : index
    %c0_10 = arith.constant 0 : index
    %17 = vector.load %arg3[%c0_8, %c0_9, %c0_10] : memref<1x64x128xf32, #tpu.memory_space<vmem>>, vector<1x64x128xf32>
    %18 = arith.truncf %17 : vector<1x64x128xf32> to vector<1x64x128xbf16>
    "tpu.trace_start"() <{level = 10 : i32, message = "bqk,bkd->bqd"}> : () -> ()
    %cst_11 = arith.constant dense<0.000000e+00> : vector<1x64x128xf32>
    %19 = tpu.matmul %16, %18, %cst_11 {dimension_numbers = #tpu.dot_dimension_numbers<[2], [1], [1], [2], [0, 0, 0, 1, 1, 2], [0], [0]>} : vector<1x64x64xbf16>, vector<1x64x128xbf16>, vector<1x64x128xf32> -> vector<1x64x128xf32>
    "tpu.trace_stop"() : () -> ()
    %c0_12 = arith.constant 0 : index
    %c0_13 = arith.constant 0 : index
    %c0_14 = arith.constant 0 : index
    %20 = vector.load %arg4[%c0_12, %c0_13, %c0_14] : memref<1x64x128xf32, #tpu.memory_space<vmem>>, vector<1x64x128xf32>
    tpu.vector_store %arg4[%c0_12, %c0_13, %c0_14], %19 {strides = array<i32>} : memref<1x64x128xf32, #tpu.memory_space<vmem>>, vector<1x64x128xf32>,
    return
  }
  func.func @transform_0(%arg0: i32) -> (i32, i32, i32) {
    %c0_i32 = arith.constant 0 : i32
    %c0_i32_0 = arith.constant 0 : i32
    %c0_i32_1 = arith.constant 0 : i32
    return %arg0, %c0_i32, %c0_i32_0 : i32, i32, i32
  }
  func.func @transform_1(%arg0: i32) -> (i32, i32, i32) {
    %c0_i32 = arith.constant 0 : i32
    %c0_i32_0 = arith.constant 0 : i32
    %c0_i32_1 = arith.constant 0 : i32
    return %arg0, %c0_i32, %c0_i32_0 : i32, i32, i32
  }
  func.func @transform_2(%arg0: i32) -> (i32, i32, i32) {
    %c0_i32 = arith.constant 0 : i32
    %c0_i32_0 = arith.constant 0 : i32
    %c0_i32_1 = arith.constant 0 : i32
    return %arg0, %c0_i32, %c0_i32_0 : i32, i32, i32
  }
  func.func @transform_3(%arg0: i32) -> (i32, i32, i32) {
    %c0_i32 = arith.constant 0 : i32
    %c0_i32_0 = arith.constant 0 : i32
    %c0_i32_1 = arith.constant 0 : i32
    return %arg0, %c0_i32, %c0_i32_0 : i32, i32, i32
  }
}

module attributes {stable_mosaic.version = 11 : i64} {
  func.func @_mm_bias_res_kernel(%arg0: i32, %arg1: memref<64x128xbf16, #tpu.memory_space<vmem>>, %arg2: memref<128x128xbf16, #tpu.memory_space<vmem>>, %arg3: memref<1x128xf32, #tpu.memory_space<vmem>>, %arg4: memref<64x128xf32, #tpu.memory_space<vmem>>, %arg5: memref<64x128xf32, #tpu.memory_space<vmem>>) attributes {dimension_semantics = [#tpu.dimension_semantics<parallel>], iteration_bounds = array<i64: 2>, scalar_prefetch = 0 : i64, scratch_operands = 0 : i64, tpu.core_type = #tpu.core_type<tc>, window_params = [{transform_indices = @transform_0, window_bounds = array<i64: 64, 128>}, {pipeline_mode = #tpu.pipeline_mode<synchronous>, transform_indices = @transform_1, window_bounds = array<i64: 128, 128>}, {pipeline_mode = #tpu.pipeline_mode<synchronous>, transform_indices = @transform_2, window_bounds = array<i64: 1, 128>}, {transform_indices = @transform_3, window_bounds = array<i64: 64, 128>}, {transform_indices = @transform_4, window_bounds = array<i64: 64, 128>}]} {
    %c0 = arith.constant 0 : index
    %c0_0 = arith.constant 0 : index
    %0 = vector.load %arg1[%c0, %c0_0] : memref<64x128xbf16, #tpu.memory_space<vmem>>, vector<64x128xbf16>
    %c0_1 = arith.constant 0 : index
    %c0_2 = arith.constant 0 : index
    %1 = vector.load %arg2[%c0_1, %c0_2] : memref<128x128xbf16, #tpu.memory_space<vmem>>, vector<128x128xbf16>
    %cst = arith.constant dense<0.000000e+00> : vector<64x128xf32>
    %2 = tpu.matmul %0, %1, %cst {dimension_numbers = #tpu.dot_dimension_numbers<[1], [0], [0], [1], [0, 0, 1, 1], [], []>} : vector<64x128xbf16>, vector<128x128xbf16>, vector<64x128xf32> -> vector<64x128xf32>
    %c0_3 = arith.constant 0 : index
    %c0_4 = arith.constant 0 : index
    %3 = vector.load %arg3[%c0_3, %c0_4] : memref<1x128xf32, #tpu.memory_space<vmem>>, vector<1x128xf32>
    %4 = vector.broadcast %3 : vector<1x128xf32> to vector<64x128xf32>
    %5 = arith.addf %2, %4 : vector<64x128xf32>
    %c0_5 = arith.constant 0 : index
    %c0_6 = arith.constant 0 : index
    %6 = vector.load %arg4[%c0_5, %c0_6] : memref<64x128xf32, #tpu.memory_space<vmem>>, vector<64x128xf32>
    %7 = arith.addf %5, %6 : vector<64x128xf32>
    %c0_7 = arith.constant 0 : index
    %c0_8 = arith.constant 0 : index
    %8 = vector.load %arg5[%c0_7, %c0_8] : memref<64x128xf32, #tpu.memory_space<vmem>>, vector<64x128xf32>
    tpu.vector_store %arg5[%c0_7, %c0_8], %7 {strides = array<i32>} : memref<64x128xf32, #tpu.memory_space<vmem>>, vector<64x128xf32>,
    return
  }
  func.func @transform_0(%arg0: i32) -> (i32, i32) {
    %c0_i32 = arith.constant 0 : i32
    %c0_i32_0 = arith.constant 0 : i32
    return %arg0, %c0_i32 : i32, i32
  }
  func.func @transform_1(%arg0: i32) -> (i32, i32) {
    %c0_i32 = arith.constant 0 : i32
    %c0_i32_0 = arith.constant 0 : i32
    %c0_i32_1 = arith.constant 0 : i32
    return %c0_i32, %c0_i32_0 : i32, i32
  }
  func.func @transform_2(%arg0: i32) -> (i32, i32) {
    %c0_i32 = arith.constant 0 : i32
    %c0_i32_0 = arith.constant 0 : i32
    %c0_i32_1 = arith.constant 0 : i32
    return %c0_i32, %c0_i32_0 : i32, i32
  }
  func.func @transform_3(%arg0: i32) -> (i32, i32) {
    %c0_i32 = arith.constant 0 : i32
    %c0_i32_0 = arith.constant 0 : i32
    return %arg0, %c0_i32 : i32, i32
  }
  func.func @transform_4(%arg0: i32) -> (i32, i32) {
    %c0_i32 = arith.constant 0 : i32
    %c0_i32_0 = arith.constant 0 : i32
    return %arg0, %c0_i32 : i32, i32
  }
}

module attributes {stable_mosaic.version = 11 : i64} {
  func.func @_mm_bias_res_kernel(%arg0: i32, %arg1: memref<64x1152xbf16, #tpu.memory_space<vmem>>, %arg2: memref<1152x128xbf16, #tpu.memory_space<vmem>>, %arg3: memref<1x128xf32, #tpu.memory_space<vmem>>, %arg4: memref<64x128xf32, #tpu.memory_space<vmem>>, %arg5: memref<64x128xf32, #tpu.memory_space<vmem>>) attributes {dimension_semantics = [#tpu.dimension_semantics<parallel>], iteration_bounds = array<i64: 2>, scalar_prefetch = 0 : i64, scratch_operands = 0 : i64, tpu.core_type = #tpu.core_type<tc>, window_params = [{transform_indices = @transform_0, window_bounds = array<i64: 64, 1152>}, {pipeline_mode = #tpu.pipeline_mode<synchronous>, transform_indices = @transform_1, window_bounds = array<i64: 1152, 128>}, {pipeline_mode = #tpu.pipeline_mode<synchronous>, transform_indices = @transform_2, window_bounds = array<i64: 1, 128>}, {transform_indices = @transform_3, window_bounds = array<i64: 64, 128>}, {transform_indices = @transform_4, window_bounds = array<i64: 64, 128>}]} {
    %c0 = arith.constant 0 : index
    %c0_0 = arith.constant 0 : index
    %0 = vector.load %arg1[%c0, %c0_0] : memref<64x1152xbf16, #tpu.memory_space<vmem>>, vector<64x1152xbf16>
    %c0_1 = arith.constant 0 : index
    %c0_2 = arith.constant 0 : index
    %1 = vector.load %arg2[%c0_1, %c0_2] : memref<1152x128xbf16, #tpu.memory_space<vmem>>, vector<1152x128xbf16>
    %cst = arith.constant dense<0.000000e+00> : vector<64x128xf32>
    %2 = tpu.matmul %0, %1, %cst {dimension_numbers = #tpu.dot_dimension_numbers<[1], [0], [0], [1], [0, 0, 1, 1], [], []>} : vector<64x1152xbf16>, vector<1152x128xbf16>, vector<64x128xf32> -> vector<64x128xf32>
    %c0_3 = arith.constant 0 : index
    %c0_4 = arith.constant 0 : index
    %3 = vector.load %arg3[%c0_3, %c0_4] : memref<1x128xf32, #tpu.memory_space<vmem>>, vector<1x128xf32>
    %4 = vector.broadcast %3 : vector<1x128xf32> to vector<64x128xf32>
    %5 = arith.addf %2, %4 : vector<64x128xf32>
    %c0_5 = arith.constant 0 : index
    %c0_6 = arith.constant 0 : index
    %6 = vector.load %arg4[%c0_5, %c0_6] : memref<64x128xf32, #tpu.memory_space<vmem>>, vector<64x128xf32>
    %7 = arith.addf %5, %6 : vector<64x128xf32>
    %c0_7 = arith.constant 0 : index
    %c0_8 = arith.constant 0 : index
    %8 = vector.load %arg5[%c0_7, %c0_8] : memref<64x128xf32, #tpu.memory_space<vmem>>, vector<64x128xf32>
    tpu.vector_store %arg5[%c0_7, %c0_8], %7 {strides = array<i32>} : memref<64x128xf32, #tpu.memory_space<vmem>>, vector<64x128xf32>,
    return
  }
  func.func @transform_0(%arg0: i32) -> (i32, i32) {
    %c0_i32 = arith.constant 0 : i32
    %c0_i32_0 = arith.constant 0 : i32
    return %arg0, %c0_i32 : i32, i32
  }
  func.func @transform_1(%arg0: i32) -> (i32, i32) {
    %c0_i32 = arith.constant 0 : i32
    %c0_i32_0 = arith.constant 0 : i32
    %c0_i32_1 = arith.constant 0 : i32
    return %c0_i32, %c0_i32_0 : i32, i32
  }
  func.func @transform_2(%arg0: i32) -> (i32, i32) {
    %c0_i32 = arith.constant 0 : i32
    %c0_i32_0 = arith.constant 0 : i32
    %c0_i32_1 = arith.constant 0 : i32
    return %c0_i32, %c0_i32_0 : i32, i32
  }
  func.func @transform_3(%arg0: i32) -> (i32, i32) {
    %c0_i32 = arith.constant 0 : i32
    %c0_i32_0 = arith.constant 0 : i32
    return %arg0, %c0_i32 : i32, i32
  }
  func.func @transform_4(%arg0: i32) -> (i32, i32) {
    %c0_i32 = arith.constant 0 : i32
    %c0_i32_0 = arith.constant 0 : i32
    return %arg0, %c0_i32 : i32, i32
  }
}

</mosaic_0001>

<llo_original>
// kernel: _lambda_.15
$region0: #{_lambda_.15}
  #allocation0 [shape = 'u32[]', space=smem, size = 0x4, offset = 0x4, fixed_abs, tag = 'smem constant byte address 0x4 - core index']
  #allocation1 [shape = 'u32[144,128]{1,0:T(1,128)}', space=vmem, size = 0x12000, scoped, tag = 'internal scratch']
  %s0 = inlined_call_operand.vmem [shape: bf16[2,128], index: 0, kind: input, shape index: {}]
  %s1 = inlined_call_operand.vmem [shape: bf16[128,128], index: 1, kind: input, shape index: {}]
  %s2 = inlined_call_operand.vmem [shape: f32[1,128], index: 2, kind: input, shape index: {}]
  %s3 = inlined_call_operand.vmem [shape: f32[2,128], index: 3, kind: output, shape index: {}]
  %s4 = sld [smem:[#allocation0]]
  $region22: #{_lambda_.15} parent=0
    _
  %s6 = ssub.s32 1, %s4
  %s7 = scalar_select 0, %s6, %s4
  // Predicated region
  $region2: #{_lambda_.15} parent=0 // pred_check
    _
  $region3: #{_lambda_.15} parent=0 // pred_check_branch
    %9 = sbr.rel (0) target = $region5
  $region4: #{_lambda_.15} parent=0 // pred_region
    _
  $region5: #{_lambda_.15} parent=0 // pred_fallthru
    _
  // Predicated region
  $region6: #{_lambda_.15} parent=0 // pred_check
    _
  $region7: #{_lambda_.15} parent=0 // pred_check_branch
    %11 = sbr.rel (0) target = $region9
  $region8: #{_lambda_.15} parent=0 // pred_region
    _
  $region9: #{_lambda_.15} parent=0 // pred_fallthru
    _
  // Predicated region
  $region10: #{_lambda_.15} parent=0 // pred_check
    _
  $region11: #{_lambda_.15} parent=0 // pred_check_branch
    %13 = sbr.rel (0) target = $region13
  $region12: #{_lambda_.15} parent=0 // pred_region
    _
  $region13: #{_lambda_.15} parent=0 // pred_fallthru
    _
  %v15 = vld [vmem:[%s0] sm:$0x1]
  %v16 = vld [vmem:[%s1] sm:$0xf]
  %v17 = vld [vmem:[%s1 + $0x4] sm:$0xf]
  %v18 = vld [vmem:[%s1 + $0x8] sm:$0xf]
  %v19 = vld [vmem:[%s1 + $0xc] sm:$0xf]
  %v20 = vld [vmem:[%s1 + $0x10] sm:$0xf]
  %v21 = vld [vmem:[%s1 + $0x14] sm:$0xf]
  %v22 = vld [vmem:[%s1 + $0x18] sm:$0xf]
  %v23 = vld [vmem:[%s1 + $0x1c] sm:$0xf]
  %v24 = vld [vmem:[%s1 + $0x20] sm:$0xf]
  %v25 = vld [vmem:[%s1 + $0x24] sm:$0xf]
  %v26 = vld [vmem:[%s1 + $0x28] sm:$0xf]
  %v27 = vld [vmem:[%s1 + $0x2c] sm:$0xf]
  %v28 = vld [vmem:[%s1 + $0x30] sm:$0xf]
  %v29 = vld [vmem:[%s1 + $0x34] sm:$0xf]
  %v30 = vld [vmem:[%s1 + $0x38] sm:$0xf]
  %v31 = vld [vmem:[%s1 + $0x3c] sm:$0xf]
  %v32 = vld [vmem:[%s2] sm:$0x1]
  %v34 = vlaneseq
  %v35 = vshrl.u32 %v34, 7
  %v36 = vsub.s32 0, %v35
  %v37 = vrot.slane %v32, %v36
  %v55 = vunpack.c.l.b16 %v16
  %v56 = vunpack.c.l.b16 %v17
  %v57 = vunpack.c.l.b16 %v18
  %v58 = vunpack.c.l.b16 %v19
  %v59 = vunpack.c.l.b16 %v20
  %v60 = vunpack.c.l.b16 %v21
  %v61 = vunpack.c.l.b16 %v22
  %v62 = vunpack.c.l.b16 %v23
  %v63 = vunpack.c.l.b16 %v24
  %v64 = vunpack.c.l.b16 %v25
  %v65 = vunpack.c.l.b16 %v26
  %v66 = vunpack.c.l.b16 %v27
  %v67 = vunpack.c.l.b16 %v28
  %v68 = vunpack.c.l.b16 %v29
  %v69 = vunpack.c.l.b16 %v30
  %v70 = vunpack.c.l.b16 %v31
  %v71 = vpack.c.b16 %v56, %v55
  %v72 = vpack.c.b16 %v58, %v57
  %v73 = vpack.c.b16 %v60, %v59
  %v74 = vpack.c.b16 %v62, %v61
  %v75 = vpack.c.b16 %v64, %v63
  %v76 = vpack.c.b16 %v66, %v65
  %v77 = vpack.c.b16 %v68, %v67
  %v78 = vpack.c.b16 %v70, %v69
  %87 = vmatprep.subr.bf16.mxu0 0
  %88 = vmatpush1.bf16.msra.mxu0 %v78
  %89 = vmatprep.subr.bf16.mxu0 0
  %90 = vmatpush1.bf16.msra.mxu0 %v77
  %91 = vmatprep.subr.bf16.mxu0 0
  %92 = vmatpush1.bf16.msra.mxu0 %v76
  %93 = vmatprep.subr.bf16.mxu0 0
  %94 = vmatpush1.bf16.msra.mxu0 %v75
  %95 = vmatprep.subr.bf16.mxu0 0
  %96 = vmatpush1.bf16.msra.mxu0 %v74
  %97 = vmatprep.subr.bf16.mxu0 0
  %98 = vmatpush1.bf16.msra.mxu0 %v73
  %99 = vmatprep.subr.bf16.mxu0 0
  %100 = vmatpush1.bf16.msra.mxu0 %v72
  %101 = vmatprep.subr.bf16.mxu0 0
  %102 = vmatpush1.bf16.msra.mxu0 %v71
  %103 = vmatprep.subr.bf16.mxu0 0
  %104 = vmatpush2.bf16.msra.mxu0 0
  %105 = vmatprep.subr.bf16.mxu0 0
  %106 = vmatpush2.bf16.msra.mxu0 0
  %107 = vmatprep.subr.bf16.mxu0 0
  %108 = vmatpush2.bf16.msra.mxu0 0
  %109 = vmatprep.subr.bf16.mxu0 0
  %110 = vmatpush2.bf16.msra.mxu0 0
  %111 = vmatprep.subr.bf16.mxu0 0
  %112 = vmatpush2.bf16.msra.mxu0 0
  %113 = vmatprep.subr.bf16.mxu0 0
  %114 = vmatpush2.bf16.msra.mxu0 0
  %115 = vmatprep.subr.bf16.mxu0 0
  %116 = vmatpush2.bf16.msra.mxu0 0
  %117 = vmatprep.subr.bf16.mxu0 0
  %118 = vmatpush2.bf16.msra.mxu0 0
  %119 = vmatprep.mubr.bf16.mxu0 0
  %120 = vmatmul.mubr.bf16.gmra.mxu0 %v15
  %v121 = vpop.f32.mrf.mxu0
  %v122 = vadd.f32 %v37, %v121
  %v123 = vpop.f32.mrf.mxu0
  %v124 = vpop.f32.mrf.mxu0
  %v125 = vpop.f32.mrf.mxu0
  %126 = vdwg.mxu0
  %127 = vst [vmem:[%s3] sm:$0x3] %v122
  // Predicated region
  $region14: #{_lambda_.15} parent=0 // pred_check
    _
  $region15: #{_lambda_.15} parent=0 // pred_check_branch
    %129 = sbr.rel (0) target = $region17
  $region16: #{_lambda_.15} parent=0 // pred_region
    _
  $region17: #{_lambda_.15} parent=0 // pred_fallthru
    _
  // Predicated region
  $region18: #{_lambda_.15} parent=0 // pred_check
    _
  $region19: #{_lambda_.15} parent=0 // pred_check_branch
    %131 = sbr.rel (0) target = $region21
  $region20: #{_lambda_.15} parent=0 // pred_region
    _
  $region21: #{_lambda_.15} parent=0 // pred_fallthru
    _

// kernel: _lambda_.23
$region0: #{_lambda_.23}
  #allocation0 [shape = 'u32[]', space=smem, size = 0x4, offset = 0x4, fixed_abs, tag = 'smem constant byte address 0x4 - core index']
  #allocation1 [shape = 'u32[144,128]{1,0:T(1,128)}', space=vmem, size = 0x12000, scoped, tag = 'internal scratch']
  %s0 = inlined_call_operand.vmem [shape: bf16[2,128], index: 0, kind: input, shape index: {}]
  %s1 = inlined_call_operand.hbm [shape: bf16[128,128], index: 1, kind: input, shape index: {}]
  %s2 = inlined_call_operand.vmem [shape: f32[1,128], index: 2, kind: input, shape index: {}]
  %s3 = inlined_call_operand.vmem [shape: f32[2,128], index: 3, kind: output, shape index: {}]
  %s4 = sld [smem:[#allocation0]]
  $region26: #{_lambda_.23} parent=0
    _
  %s6 = ssub.s32 1, %s4
  %s7 = scalar_select 0, %s6, %s4
  $region1: #{_lambda_.23} parent=0
    #allocation2 [shape = 'u8[32768]{0}', space=vmem, size = 0x8000, scoped, tag = 'input window, operand 1, single buffered']
    #allocation3 [shape = 's32[1]{0}', space=sflag, size = 0x4, scoped, tag = 'scoped memory for _lambda_.23']
    %8 = vsyncpa [#allocation3], 0
    // Predicated region
    $region2: #{_lambda_.23} parent=1 // pred_check
      _
    $region3: #{_lambda_.23} parent=1 // pred_check_branch
      %10 = sbr.rel (0) target = $region5
    $region4: #{_lambda_.23} parent=1 // pred_region
      _
    $region5: #{_lambda_.23} parent=1 // pred_fallthru
      _
    // Predicated region
    $region6: #{_lambda_.23} parent=1 // pred_check
      _
    $region7: #{_lambda_.23} parent=1 // pred_check_branch
      %12 = sbr.rel (0) target = $region9
    $region8: #{_lambda_.23} parent=1 // pred_region
      %s14 = ssub.s32 1024, 1024
      %15 = vsyncadd [#allocation3], %s14
      %s16 = sshll.u32 [#allocation2], 4
      %s17 = int_to_ptr.vmem [resolvable:$true] %s16
      %22 = dma.hbm_to_vmem [thread:$0]  %s1, 1024, %s17, [#allocation3], 64, 64, 4
    $region9: #{_lambda_.23} parent=1 // pred_fallthru
      _
    // Predicated region
    $region10: #{_lambda_.23} parent=1 // pred_check
      _
    $region11: #{_lambda_.23} parent=1 // pred_check_branch
      %24 = sbr.rel (0) target = $region13
    $region12: #{_lambda_.23} parent=1 // pred_region
      _
    $region13: #{_lambda_.23} parent=1 // pred_fallthru
      _
    // Predicated region
    $region14: #{_lambda_.23} parent=1 // pred_check
      _
    $region15: #{_lambda_.23} parent=1 // pred_check_branch
      %26 = sbr.rel (0) target = $region17
    $region16: #{_lambda_.23} parent=1 // pred_region
      %27 = dma.done [#allocation3], 1024
    $region17: #{_lambda_.23} parent=1 // pred_fallthru
      _
    %v29 = vld [vmem:[%s0] sm:$0x1]
    %v30 = vld [vmem:[#allocation2] sm:$0xf]
    %v31 = vld [vmem:[#allocation2 + $0x4] sm:$0xf]
    %v32 = vld [vmem:[#allocation2 + $0x8] sm:$0xf]
    %v33 = vld [vmem:[#allocation2 + $0xc] sm:$0xf]
    %v34 = vld [vmem:[#allocation2 + $0x10] sm:$0xf]
    %v35 = vld [vmem:[#allocation2 + $0x14] sm:$0xf]
    %v36 = vld [vmem:[#allocation2 + $0x18] sm:$0xf]
    %v37 = vld [vmem:[#allocation2 + $0x1c] sm:$0xf]
    %v38 = vld [vmem:[#allocation2 + $0x20] sm:$0xf]
    %v39 = vld [vmem:[#allocation2 + $0x24] sm:$0xf]
    %v40 = vld [vmem:[#allocation2 + $0x28] sm:$0xf]
    %v41 = vld [vmem:[#allocation2 + $0x2c] sm:$0xf]
    %v42 = vld [vmem:[#allocation2 + $0x30] sm:$0xf]
    %v43 = vld [vmem:[#allocation2 + $0x34] sm:$0xf]
    %v44 = vld [vmem:[#allocation2 + $0x38] sm:$0xf]
    %v45 = vld [vmem:[#allocation2 + $0x3c] sm:$0xf]
    %v46 = vld [vmem:[%s2] sm:$0x1]
    %v48 = vlaneseq
    %v49 = vshrl.u32 %v48, 7
    %v50 = vsub.s32 0, %v49
    %v51 = vrot.slane %v46, %v50
    %v69 = vunpack.c.l.b16 %v30
    %v70 = vunpack.c.l.b16 %v31
    %v71 = vunpack.c.l.b16 %v32
    %v72 = vunpack.c.l.b16 %v33
    %v73 = vunpack.c.l.b16 %v34
    %v74 = vunpack.c.l.b16 %v35
    %v75 = vunpack.c.l.b16 %v36
    %v76 = vunpack.c.l.b16 %v37
    %v77 = vunpack.c.l.b16 %v38
    %v78 = vunpack.c.l.b16 %v39
    %v79 = vunpack.c.l.b16 %v40
    %v80 = vunpack.c.l.b16 %v41
    %v81 = vunpack.c.l.b16 %v42
    %v82 = vunpack.c.l.b16 %v43
    %v83 = vunpack.c.l.b16 %v44
    %v84 = vunpack.c.l.b16 %v45
    %v85 = vpack.c.b16 %v70, %v69
    %v86 = vpack.c.b16 %v72, %v71
    %v87 = vpack.c.b16 %v74, %v73
    %v88 = vpack.c.b16 %v76, %v75
    %v89 = vpack.c.b16 %v78, %v77
    %v90 = vpack.c.b16 %v80, %v79
    %v91 = vpack.c.b16 %v82, %v81
    %v92 = vpack.c.b16 %v84, %v83
    %101 = vmatprep.subr.bf16.mxu0 0
    %102 = vmatpush1.bf16.msra.mxu0 %v92
    %103 = vmatprep.subr.bf16.mxu0 0
    %104 = vmatpush1.bf16.msra.mxu0 %v91
    %105 = vmatprep.subr.bf16.mxu0 0
    %106 = vmatpush1.bf16.msra.mxu0 %v90
    %107 = vmatprep.subr.bf16.mxu0 0
    %108 = vmatpush1.bf16.msra.mxu0 %v89
    %109 = vmatprep.subr.bf16.mxu0 0
    %110 = vmatpush1.bf16.msra.mxu0 %v88
    %111 = vmatprep.subr.bf16.mxu0 0
    %112 = vmatpush1.bf16.msra.mxu0 %v87
    %113 = vmatprep.subr.bf16.mxu0 0
    %114 = vmatpush1.bf16.msra.mxu0 %v86
    %115 = vmatprep.subr.bf16.mxu0 0
    %116 = vmatpush1.bf16.msra.mxu0 %v85
    %117 = vmatprep.subr.bf16.mxu0 0
    %118 = vmatpush2.bf16.msra.mxu0 0
    %119 = vmatprep.subr.bf16.mxu0 0
    %120 = vmatpush2.bf16.msra.mxu0 0
    %121 = vmatprep.subr.bf16.mxu0 0
    %122 = vmatpush2.bf16.msra.mxu0 0
    %123 = vmatprep.subr.bf16.mxu0 0
    %124 = vmatpush2.bf16.msra.mxu0 0
    %125 = vmatprep.subr.bf16.mxu0 0
    %126 = vmatpush2.bf16.msra.mxu0 0
    %127 = vmatprep.subr.bf16.mxu0 0
    %128 = vmatpush2.bf16.msra.mxu0 0
    %129 = vmatprep.subr.bf16.mxu0 0
    %130 = vmatpush2.bf16.msra.mxu0 0
    %131 = vmatprep.subr.bf16.mxu0 0
    %132 = vmatpush2.bf16.msra.mxu0 0
    %133 = vmatprep.mubr.bf16.mxu0 0
    %134 = vmatmul.mubr.bf16.gmra.mxu0 %v29
    %v135 = vpop.f32.mrf.mxu0
    %v136 = vadd.f32 %v51, %v135
    %v137 = vpop.f32.mrf.mxu0
    %v138 = vpop.f32.mrf.mxu0
    %v139 = vpop.f32.mrf.mxu0
    %140 = vdwg.mxu0
    %141 = vst [vmem:[%s3] sm:$0x3] %v136
    // Predicated region
    $region18: #{_lambda_.23} parent=1 // pred_check
      _
    $region19: #{_lambda_.23} parent=1 // pred_check_branch
      %143 = sbr.rel (0) target = $region21
    $region20: #{_lambda_.23} parent=1 // pred_region
      _
    $region21: #{_lambda_.23} parent=1 // pred_fallthru
      _
    // Predicated region
    $region22: #{_lambda_.23} parent=1 // pred_check
      _
    $region23: #{_lambda_.23} parent=1 // pred_check_branch
      %145 = sbr.rel (0) target = $region25
    $region24: #{_lambda_.23} parent=1 // pred_region
      _
    $region25: #{_lambda_.23} parent=1 // pred_fallthru
      _
    %146 = vsyncpa [#allocation3], 1

// kernel: _lambda_.13
$region0: #{_lambda_.13}
  #allocation0 [shape = 'u32[]', space=smem, size = 0x4, offset = 0x4, fixed_abs, tag = 'smem constant byte address 0x4 - core index']
  #allocation1 [shape = 'u32[144,128]{1,0:T(1,128)}', space=vmem, size = 0x12000, scoped, tag = 'internal scratch']
  %s0 = inlined_call_operand.vmem [shape: f32[2,64,128], index: 0, kind: input, shape index: {}]
  %s1 = inlined_call_operand.vmem [shape: f32[1,128], index: 1, kind: input, shape index: {}]
  %s2 = inlined_call_operand.vmem [shape: f32[1,128], index: 2, kind: input, shape index: {}]
  %s3 = inlined_call_operand.vmem [shape: f32[128,32], index: 3, kind: input, shape index: {}]
  %s4 = inlined_call_operand.vmem [shape: f32[32,128], index: 4, kind: input, shape index: {}]
  %s5 = inlined_call_operand.vmem [shape: f32[2,64,128], index: 5, kind: output, shape index: {}]
  %s6 = sld [smem:[#allocation0]]
  $region53: #{_lambda_.13} parent=0
    _
  %s8 = ssub.s32 1, %s6
  %s9 = scalar_select 0, %s8, %s6
  loop: start=0, step=1, limit=4
  $region2: #{_lambda_.13} parent=0 // loop_pre_header
    _
  $region3: #{_lambda_.13} parent=0 // loop_header
    %s11 = sphi 0, %s15
    %p12 = scmp.ge.s32.totalorder %s11, 4
    %s21 = sphi 0, %s23
    %s24 = sphi 0, %s21
    %s25 = sphi 0, %s24
    %s41 = sphi 0, %s25
    %s45 = sphi 0, %s45
    %s47 = sphi 0, %s45
    %s48 = sphi 0, %s47
    %s62 = sphi 0, %s48
    %s66 = sphi 0, %s66
    %s68 = sphi 0, %s66
    %s69 = sphi 0, %s68
    %s83 = sphi 0, %s69
    %s87 = sphi 0, %s87
    %s89 = sphi 0, %s87
    %s90 = sphi 0, %s89
    %s104 = sphi 0, %s90
    %s108 = sphi 0, %s108
    %s110 = sphi 0, %s108
    %s111 = sphi 0, %s110
    %s125 = sphi 0, %s111
    %s131 = sphi 0, %s133
    %s134 = sphi 0, %s131
    %s135 = sphi 0, %s134
    %s151 = sphi 0, %s135
  $region4: #{_lambda_.13} parent=0 // loop_header_branch
    %14 = sbr.rel (%p12) target = $region8
  $region5: #{_lambda_.13} parent=0 // loop_body
    %s16 = ssub.s32 %s11, 1
    %s17 = ssub.s32 %s11, 2
    %s18 = sadd.s32 %s11, 1
    %s19 = ssub.s32 %s11, %s18
    %p20 = scmp.eq.s32.totalorder %s19, 0
    %s22 = sadd.s32 %s21, 1
    %s23 = scalar_select %p20, %s21, %s22
    %p26 = pneg %p20
    %p27 = scmp.eq.s32.totalorder %s11, 1
    %p28 = por %p26, %p27
    %p29 = scmp.ne.s32.totalorder %s21, %s24
    %p30 = scmp.eq.s32.totalorder %s11, 0
    %p31 = por %p29, %p30
    %p32 = scmp.ne.s32.totalorder %s21, %s24
    %p33 = scmp.eq.s32.totalorder %s16, 1
    %p34 = por %p32, %p33
    %p35 = scmp.ne.s32.totalorder %s24, %s25
    %p36 = scmp.eq.s32.totalorder %s16, 0
    %p37 = por %p35, %p36
    %p38 = scmp.ne.s32.totalorder %s24, %s25
    %p39 = scmp.eq.s32.totalorder %s17, 1
    %p40 = por %p38, %p39
    %p42 = scmp.ne.s32.totalorder %s25, %s41
    %p43 = scmp.eq.s32.totalorder %s17, 0
    %p44 = por %p42, %p43
    %s46 = sadd.s32 %s45, 1
    %p49 = scmp.eq.s32.totalorder %s11, 1
    %p50 = scmp.ne.s32.totalorder %s45, %s47
    %p51 = scmp.eq.s32.totalorder %s11, 0
    %p52 = por %p50, %p51
    %p53 = scmp.ne.s32.totalorder %s45, %s47
    %p54 = scmp.eq.s32.totalorder %s16, 1
    %p55 = por %p53, %p54
    %p56 = scmp.ne.s32.totalorder %s47, %s48
    %p57 = scmp.eq.s32.totalorder %s16, 0
    %p58 = por %p56, %p57
    %p59 = scmp.ne.s32.totalorder %s47, %s48
    %p60 = scmp.eq.s32.totalorder %s17, 1
    %p61 = por %p59, %p60
    %p63 = scmp.ne.s32.totalorder %s48, %s62
    %p64 = scmp.eq.s32.totalorder %s17, 0
    %p65 = por %p63, %p64
    %s67 = sadd.s32 %s66, 1
    %p70 = scmp.eq.s32.totalorder %s11, 1
    %p71 = scmp.ne.s32.totalorder %s66, %s68
    %p72 = scmp.eq.s32.totalorder %s11, 0
    %p73 = por %p71, %p72
    %p74 = scmp.ne.s32.totalorder %s66, %s68
    %p75 = scmp.eq.s32.totalorder %s16, 1
    %p76 = por %p74, %p75
    %p77 = scmp.ne.s32.totalorder %s68, %s69
    %p78 = scmp.eq.s32.totalorder %s16, 0
    %p79 = por %p77, %p78
    %p80 = scmp.ne.s32.totalorder %s68, %s69
    %p81 = scmp.eq.s32.totalorder %s17, 1
    %p82 = por %p80, %p81
    %p84 = scmp.ne.s32.totalorder %s69, %s83
    %p85 = scmp.eq.s32.totalorder %s17, 0
    %p86 = por %p84, %p85
    %s88 = sadd.s32 %s87, 1
    %p91 = scmp.eq.s32.totalorder %s11, 1
    %p92 = scmp.ne.s32.totalorder %s87, %s89
    %p93 = scmp.eq.s32.totalorder %s11, 0
    %p94 = por %p92, %p93
    %p95 = scmp.ne.s32.totalorder %s87, %s89
    %p96 = scmp.eq.s32.totalorder %s16, 1
    %p97 = por %p95, %p96
    %p98 = scmp.ne.s32.totalorder %s89, %s90
    %p99 = scmp.eq.s32.totalorder %s16, 0
    %p100 = por %p98, %p99
    %p101 = scmp.ne.s32.totalorder %s89, %s90
    %p102 = scmp.eq.s32.totalorder %s17, 1
    %p103 = por %p101, %p102
    %p105 = scmp.ne.s32.totalorder %s90, %s104
    %p106 = scmp.eq.s32.totalorder %s17, 0
    %p107 = por %p105, %p106
    %s109 = sadd.s32 %s108, 1
    %p112 = scmp.eq.s32.totalorder %s11, 1
    %p113 = scmp.ne.s32.totalorder %s108, %s110
    %p114 = scmp.eq.s32.totalorder %s11, 0
    %p115 = por %p113, %p114
    %p116 = scmp.ne.s32.totalorder %s108, %s110
    %p117 = scmp.eq.s32.totalorder %s16, 1
    %p118 = por %p116, %p117
    %p119 = scmp.ne.s32.totalorder %s110, %s111
    %p120 = scmp.eq.s32.totalorder %s16, 0
    %p121 = por %p119, %p120
    %p122 = scmp.ne.s32.totalorder %s110, %s111
    %p123 = scmp.eq.s32.totalorder %s17, 1
    %p124 = por %p122, %p123
    %p126 = scmp.ne.s32.totalorder %s111, %s125
    %p127 = scmp.eq.s32.totalorder %s17, 0
    %p128 = por %p126, %p127
    %s129 = ssub.s32 %s11, %s18
    %p130 = scmp.eq.s32.totalorder %s129, 0
    %s132 = sadd.s32 %s131, 1
    %s133 = scalar_select %p130, %s131, %s132
    %p136 = pneg %p130
    %p137 = scmp.eq.s32.totalorder %s11, 1
    %p138 = por %p136, %p137
    %p139 = scmp.ne.s32.totalorder %s131, %s134
    %p140 = scmp.eq.s32.totalorder %s11, 0
    %p141 = por %p139, %p140
    %p142 = scmp.ne.s32.totalorder %s131, %s134
    %p143 = scmp.eq.s32.totalorder %s16, 1
    %p144 = por %p142, %p143
    %p145 = scmp.ne.s32.totalorder %s134, %s135
    %p146 = scmp.eq.s32.totalorder %s16, 0
    %p147 = por %p145, %p146
    %p148 = scmp.ne.s32.totalorder %s134, %s135
    %p149 = scmp.eq.s32.totalorder %s17, 1
    %p150 = por %p148, %p149
    %p152 = scmp.ne.s32.totalorder %s135, %s151
    %p153 = scmp.eq.s32.totalorder %s17, 0
    %p154 = por %p152, %p153
    %p155 = scmp.le.s32.totalorder 1, %s11
    %p156 = scmp.lt.s32.totalorder %s11, 3
    %p157 = pnand %p155, %p156
    %p158 = pneg %p157
    // Predicated region
    $region9: #{_lambda_.13} parent=5 // pred_check
      _
    $region10: #{_lambda_.13} parent=5 // pred_check_branch
      %160 = sbr.rel (%p157) target = $region12
    $region11: #{_lambda_.13} parent=5 // pred_region
      %s161 = ssub.s32 %s11, 1
      // Predicated region
      $region13: #{_lambda_.13} parent=11 // pred_check
        %p162 = pneg %p58
      $region14: #{_lambda_.13} parent=11 // pred_check_branch
        %164 = sbr.rel (%p162) target = $region16
      $region15: #{_lambda_.13} parent=11 // pred_region
        _
      $region16: #{_lambda_.13} parent=11 // pred_fallthru
        _
      // Predicated region
      $region17: #{_lambda_.13} parent=11 // pred_check
        %p165 = pneg %p79
      $region18: #{_lambda_.13} parent=11 // pred_check_branch
        %167 = sbr.rel (%p165) target = $region20
      $region19: #{_lambda_.13} parent=11 // pred_region
        _
      $region20: #{_lambda_.13} parent=11 // pred_fallthru
        _
      // Predicated region
      $region21: #{_lambda_.13} parent=11 // pred_check
        %p168 = pneg %p100
      $region22: #{_lambda_.13} parent=11 // pred_check_branch
        %170 = sbr.rel (%p168) target = $region24
      $region23: #{_lambda_.13} parent=11 // pred_region
        _
      $region24: #{_lambda_.13} parent=11 // pred_fallthru
        _
      // Predicated region
      $region25: #{_lambda_.13} parent=11 // pred_check
        %p171 = pneg %p121
      $region26: #{_lambda_.13} parent=11 // pred_check_branch
        %173 = sbr.rel (%p171) target = $region28
      $region27: #{_lambda_.13} parent=11 // pred_region
        _
      $region28: #{_lambda_.13} parent=11 // pred_fallthru
        _
    $region12: #{_lambda_.13} parent=5 // pred_fallthru
      _
    %p174 = scmp.lt.s32.totalorder %s11, 2
    // Predicated region
    $region29: #{_lambda_.13} parent=5 // pred_check
      %p175 = pneg %p174
    $region30: #{_lambda_.13} parent=5 // pred_check_branch
      %177 = sbr.rel (%p175) target = $region32
    $region31: #{_lambda_.13} parent=5 // pred_region
      // Predicated region
      $region33: #{_lambda_.13} parent=31 // pred_check
        %p178 = pneg %p31
      $region34: #{_lambda_.13} parent=31 // pred_check_branch
        %180 = sbr.rel (%p178) target = $region36
      $region35: #{_lambda_.13} parent=31 // pred_region
        %p181 = scmp.lt.s32.totalorder %s11, 1
        %s182 = scalar_select %p181, %s11, 1
        %s183 = smul.addr %s182, 8
        %s184 = smul.addr %s183, 8
        %s185 = scalar_lea.vmem %s0, %s184
      $region36: #{_lambda_.13} parent=31 // pred_fallthru
        _
    $region32: #{_lambda_.13} parent=5 // pred_fallthru
      _
    %p186 = scmp.le.s32.totalorder 1, %s11
    %p187 = scmp.lt.s32.totalorder %s11, 3
    %p188 = pnand %p186, %p187
    %p189 = pneg %p188
    // Predicated region
    $region37: #{_lambda_.13} parent=5 // pred_check
      _
    $region38: #{_lambda_.13} parent=5 // pred_check_branch
      %191 = sbr.rel (%p188) target = $region40
    $region39: #{_lambda_.13} parent=5 // pred_region
      %s192 = ssub.s32 %s11, 1
      %p193 = scmp.lt.s32.totalorder %s16, 1
      %s194 = scalar_select %p193, %s16, 1
      %s195 = smul.addr %s194, 8
      %s196 = smul.addr %s195, 8
      %s197 = scalar_lea.vmem %s0, %s196
      %p198 = pneg %p37
      %p199 = pneg %p34
      %p200 = pneg %p58
      %p201 = pneg %p55
      %p202 = pneg %p79
      %p203 = pneg %p76
      %p204 = pneg %p100
      %p205 = pneg %p97
      %p206 = pneg %p121
      %p207 = pneg %p118
      %p208 = pneg %p147
      %p209 = pneg %p144
      %p210 = scmp.lt.s32.totalorder %s16, 1
      %s211 = scalar_select %p210, %s16, 1
      %s212 = smul.addr %s211, 8
      %s213 = smul.addr %s212, 8
      %s214 = scalar_lea.vmem %s5, %s213
      %p215 = scmp.lt.s32.totalorder %s16, 1
      %s216 = scalar_select %p215, %s16, 1
      %s217 = smul.addr %s216, 8
      %s218 = smul.addr %s217, 8
      %s219 = scalar_lea.vmem %s0, %s218
      %p220 = scmp.lt.s32.totalorder %s16, 1
      %s221 = scalar_select %p220, %s16, 1
      %s222 = smul.addr %s221, 8
      %s223 = smul.addr %s222, 8
      %s224 = scalar_lea.vmem %s5, %s223
      %v225 = vld [vmem:[%s219] sm:$0xff]
      %v226 = vld [vmem:[%s219 + $0x8] sm:$0xff]
      %v227 = vld [vmem:[%s219 + $0x10] sm:$0xff]
      %v228 = vld [vmem:[%s219 + $0x18] sm:$0xff]
      %v229 = vld [vmem:[%s219 + $0x20] sm:$0xff]
      %v230 = vld [vmem:[%s219 + $0x28] sm:$0xff]
      %v231 = vld [vmem:[%s219 + $0x30] sm:$0xff]
      %v232 = vld [vmem:[%s219 + $0x38] sm:$0xff]
      %v233 = vld [vmem:[%s1] sm:$0x1]
      %v234 = vld [vmem:[%s2] sm:$0x1]
      %v235 = vld [vmem:[%s3] sm:$0xff]
      %v236 = vld [vmem:[%s3 + $0x8] sm:$0xff]
      %v237 = vld [vmem:[%s3 + $0x10] sm:$0xff]
      %v238 = vld [vmem:[%s3 + $0x18] sm:$0xff]
      %v239 = vld [vmem:[%s3 + $0x20] sm:$0xff]
      %v240 = vld [vmem:[%s3 + $0x28] sm:$0xff]
      %v241 = vld [vmem:[%s3 + $0x30] sm:$0xff]
      %v242 = vld [vmem:[%s3 + $0x38] sm:$0xff]
      %v243 = vld [vmem:[%s3 + $0x40] sm:$0xff]
      %v244 = vld [vmem:[%s3 + $0x48] sm:$0xff]
      %v245 = vld [vmem:[%s3 + $0x50] sm:$0xff]
      %v246 = vld [vmem:[%s3 + $0x58] sm:$0xff]
      %v247 = vld [vmem:[%s3 + $0x60] sm:$0xff]
      %v248 = vld [vmem:[%s3 + $0x68] sm:$0xff]
      %v249 = vld [vmem:[%s3 + $0x70] sm:$0xff]
      %v250 = vld [vmem:[%s3 + $0x78] sm:$0xff]
      %v251 = vld [vmem:[%s4] sm:$0xff]
      %v252 = vld [vmem:[%s4 + $0x8] sm:$0xff]
      %v253 = vld [vmem:[%s4 + $0x10] sm:$0xff]
      %v254 = vld [vmem:[%s4 + $0x18] sm:$0xff]
      %v255 = vadd.f32 %v225, %v226
      %v256 = vadd.f32 %v255, %v227
      %v257 = vadd.f32 %v256, %v228
      %v258 = vadd.f32 %v257, %v229
      %v259 = vadd.f32 %v258, %v230
      %v260 = vadd.f32 %v259, %v231
      %v261 = vadd.f32 %v260, %v232
      %v262 = vrot.slane %v261, 4
      %v263 = vadd.f32 %v261, %v262
      %v264 = vrot.slane %v263, 2
      %v265 = vadd.f32 %v263, %v264
      %v266 = vrot.slane %v265, 1
      %v267 = vadd.f32 %v265, %v266
      %v268 = vmul.f32 %v225, %v225
      %v269 = vmul.f32 %v226, %v226
      %v270 = vmul.f32 %v227, %v227
      %v271 = vmul.f32 %v228, %v228
      %v272 = vmul.f32 %v229, %v229
      %v273 = vmul.f32 %v230, %v230
      %v274 = vmul.f32 %v231, %v231
      %v275 = vmul.f32 %v232, %v232
      %v276 = vadd.f32 %v268, %v269
      %v277 = vadd.f32 %v276, %v270
      %v278 = vadd.f32 %v277, %v271
      %v279 = vadd.f32 %v278, %v272
      %v280 = vadd.f32 %v279, %v273
      %v281 = vadd.f32 %v280, %v274
      %v282 = vadd.f32 %v281, %v275
      %v283 = vrot.slane %v282, 4
      %v284 = vadd.f32 %v282, %v283
      %v285 = vrot.slane %v284, 2
      %v286 = vadd.f32 %v284, %v285
      %v287 = vrot.slane %v286, 1
      %v288 = vadd.f32 %v286, %v287
      %289 = vmatprep.subr.mxu0 0.0
      %290 = vmatpush1.msra.mxu0 %v250
      %291 = vmatprep.subr.mxu0 0.0
      %292 = vmatpush1.msra.mxu0 %v249
      %293 = vmatprep.subr.mxu0 0.0
      %294 = vmatpush1.msra.mxu0 %v248
      %295 = vmatprep.subr.mxu0 0.0
      %296 = vmatpush1.msra.mxu0 %v247
      %297 = vmatprep.subr.mxu0 0.0
      %298 = vmatpush1.msra.mxu0 %v246
      %299 = vmatprep.subr.mxu0 0.0
      %300 = vmatpush1.msra.mxu0 %v245
      %301 = vmatprep.subr.mxu0 0.0
      %302 = vmatpush1.msra.mxu0 %v244
      %303 = vmatprep.subr.mxu0 0.0
      %304 = vmatpush1.msra.mxu0 %v243
      %305 = vmatprep.subr.mxu0 0.0
      %306 = vmatpush1.msra.mxu0 %v242
      %307 = vmatprep.subr.mxu0 0.0
      %308 = vmatpush1.msra.mxu0 %v241
      %309 = vmatprep.subr.mxu0 0.0
      %310 = vmatpush1.msra.mxu0 %v240
      %311 = vmatprep.subr.mxu0 0.0
      %312 = vmatpush1.msra.mxu0 %v239
      %313 = vmatprep.subr.mxu0 0.0
      %314 = vmatpush1.msra.mxu0 %v238
      %315 = vmatprep.subr.mxu0 0.0
      %316 = vmatpush1.msra.mxu0 %v237
      %317 = vmatprep.subr.mxu0 0.0
      %318 = vmatpush1.msra.mxu0 %v236
      %319 = vmatprep.subr.mxu0 0.0
      %320 = vmatpush1.msra.mxu0 %v235
      %321 = vmatprep.subr.mxu0 0.0
      %322 = vmatpush2.msra.mxu0 0.0
      %323 = vmatprep.subr.mxu0 0.0
      %324 = vmatpush2.msra.mxu0 0.0
      %325 = vmatprep.subr.mxu0 0.0
      %326 = vmatpush2.msra.mxu0 0.0
      %327 = vmatprep.subr.mxu0 0.0
      %328 = vmatpush2.msra.mxu0 0.0
      %329 = vmatprep.subr.mxu0 0.0
      %330 = vmatpush2.msra.mxu0 0.0
      %331 = vmatprep.subr.mxu0 0.0
      %332 = vmatpush2.msra.mxu0 0.0
      %333 = vmatprep.subr.mxu0 0.0
      %334 = vmatpush2.msra.mxu0 0.0
      %335 = vmatprep.subr.mxu0 0.0
      %336 = vmatpush2.msra.mxu0 0.0
      %337 = vmatprep.subr.mxu0 0.0
      %338 = vmatpush2.msra.mxu0 0.0
      %339 = vmatprep.subr.mxu0 0.0
      %340 = vmatpush2.msra.mxu0 0.0
      %341 = vmatprep.subr.mxu0 0.0
      %342 = vmatpush2.msra.mxu0 0.0
      %343 = vmatprep.subr.mxu0 0.0
      %344 = vmatpush2.msra.mxu0 0.0
      %345 = vmatprep.subr.mxu0 0.0
      %346 = vmatpush2.msra.mxu0 0.0
      %347 = vmatprep.subr.mxu0 0.0
      %348 = vmatpush2.msra.mxu0 0.0
      %349 = vmatprep.subr.mxu0 0.0
      %350 = vmatpush2.msra.mxu0 0.0
      %351 = vmatprep.subr.mxu0 0.0
      %352 = vmatpush2.msra.mxu0 0.0
      %353 = vmatprep.mubr.f32.mxu0 0.0
      %354 = vmatmul.mubr.f32.gmra.mxu0 %v267
      %v355 = vpop.f32.mrf.mxu0
      %v356 = vadd.f32 0.0, %v355
      %v357 = vpop.f32.mrf.mxu0
      %358 = vdwg.mxu0
      %v359 = vmul.f32 %v356, 0.00390625
      %360 = vmatprep.subr.mxu0 0.0
      %361 = vmatpush1.msra.mxu0 %v250
      %362 = vmatprep.subr.mxu0 0.0
      %363 = vmatpush1.msra.mxu0 %v249
      %364 = vmatprep.subr.mxu0 0.0
      %365 = vmatpush1.msra.mxu0 %v248
      %366 = vmatprep.subr.mxu0 0.0
      %367 = vmatpush1.msra.mxu0 %v247
      %368 = vmatprep.subr.mxu0 0.0
      %369 = vmatpush1.msra.mxu0 %v246
      %370 = vmatprep.subr.mxu0 0.0
      %371 = vmatpush1.msra.mxu0 %v245
      %372 = vmatprep.subr.mxu0 0.0
      %373 = vmatpush1.msra.mxu0 %v244
      %374 = vmatprep.subr.mxu0 0.0
      %375 = vmatpush1.msra.mxu0 %v243
      %376 = vmatprep.subr.mxu0 0.0
      %377 = vmatpush1.msra.mxu0 %v242
      %378 = vmatprep.subr.mxu0 0.0
      %379 = vmatpush1.msra.mxu0 %v241
      %380 = vmatprep.subr.mxu0 0.0
      %381 = vmatpush1.msra.mxu0 %v240
      %382 = vmatprep.subr.mxu0 0.0
      %383 = vmatpush1.msra.mxu0 %v239
      %384 = vmatprep.subr.mxu0 0.0
      %385 = vmatpush1.msra.mxu0 %v238
      %386 = vmatprep.subr.mxu0 0.0
      %387 = vmatpush1.msra.mxu0 %v237
      %388 = vmatprep.subr.mxu0 0.0
      %389 = vmatpush1.msra.mxu0 %v236
      %390 = vmatprep.subr.mxu0 0.0
      %391 = vmatpush1.msra.mxu0 %v235
      %392 = vmatprep.subr.mxu0 0.0
      %393 = vmatpush2.msra.mxu0 0.0
      %394 = vmatprep.subr.mxu0 0.0
      %395 = vmatpush2.msra.mxu0 0.0
      %396 = vmatprep.subr.mxu0 0.0
      %397 = vmatpush2.msra.mxu0 0.0
      %398 = vmatprep.subr.mxu0 0.0
      %399 = vmatpush2.msra.mxu0 0.0
      %400 = vmatprep.subr.mxu0 0.0
      %401 = vmatpush2.msra.mxu0 0.0
      %402 = vmatprep.subr.mxu0 0.0
      %403 = vmatpush2.msra.mxu0 0.0
      %404 = vmatprep.subr.mxu0 0.0
      %405 = vmatpush2.msra.mxu0 0.0
      %406 = vmatprep.subr.mxu0 0.0
      %407 = vmatpush2.msra.mxu0 0.0
      %408 = vmatprep.subr.mxu0 0.0
      %409 = vmatpush2.msra.mxu0 0.0
      %410 = vmatprep.subr.mxu0 0.0
      %411 = vmatpush2.msra.mxu0 0.0
      %412 = vmatprep.subr.mxu0 0.0
      %413 = vmatpush2.msra.mxu0 0.0
      %414 = vmatprep.subr.mxu0 0.0
      %415 = vmatpush2.msra.mxu0 0.0
      %416 = vmatprep.subr.mxu0 0.0
      %417 = vmatpush2.msra.mxu0 0.0
      %418 = vmatprep.subr.mxu0 0.0
      %419 = vmatpush2.msra.mxu0 0.0
      %420 = vmatprep.subr.mxu0 0.0
      %421 = vmatpush2.msra.mxu0 0.0
      %422 = vmatprep.subr.mxu0 0.0
      %423 = vmatpush2.msra.mxu0 0.0
      %424 = vmatprep.mubr.f32.mxu0 0.0
      %425 = vmatmul.mubr.f32.gmra.mxu0 %v288
      %v426 = vpop.f32.mrf.mxu0
      %v427 = vadd.f32 0.0, %v426
      %v428 = vpop.f32.mrf.mxu0
      %429 = vdwg.mxu0
      %v430 = vmul.f32 %v427, 0.00390625
      %v431 = vmul.f32 %v359, %v359
      %v432 = vsub.f32 %v430, %v431
      %v433 = vadd.f32 %v432, 1e-05
      %v434 = vrsqrt.pop %v433
      %vm435 = vcmask 261120
      %v437 = vsel %vm435, %v359, 0
      %439 = vmatprep.subr.mxu0 0.0
      %440 = vmatpush1.msra.mxu0 0.0
      %441 = vmatprep.subr.mxu0 0.0
      %442 = vmatpush1.msra.mxu0 0.0
      %443 = vmatprep.subr.mxu0 0.0
      %444 = vmatpush1.msra.mxu0 0.0
      %445 = vmatprep.subr.mxu0 0.0
      %446 = vmatpush1.msra.mxu0 0.0
      %447 = vmatprep.subr.mxu0 0.0
      %448 = vmatpush1.msra.mxu0 0.0
      %449 = vmatprep.subr.mxu0 0.0
      %450 = vmatpush1.msra.mxu0 0.0
      %451 = vmatprep.subr.mxu0 0.0
      %452 = vmatpush1.msra.mxu0 0.0
      %453 = vmatprep.subr.mxu0 0.0
      %454 = vmatpush1.msra.mxu0 0.0
      %455 = vmatprep.subr.mxu0 0.0
      %456 = vmatpush1.msra.mxu0 0.0
      %457 = vmatprep.subr.mxu0 0.0
      %458 = vmatpush1.msra.mxu0 0.0
      %459 = vmatprep.subr.mxu0 0.0
      %460 = vmatpush1.msra.mxu0 0.0
      %461 = vmatprep.subr.mxu0 0.0
      %462 = vmatpush1.msra.mxu0 0.0
      %463 = vmatprep.subr.mxu0 0.0
      %464 = vmatpush1.msra.mxu0 %v254
      %465 = vmatprep.subr.mxu0 0.0
      %466 = vmatpush1.msra.mxu0 %v253
      %467 = vmatprep.subr.mxu0 0.0
      %468 = vmatpush1.msra.mxu0 %v252
      %469 = vmatprep.subr.mxu0 0.0
      %470 = vmatpush1.msra.mxu0 %v251
      %471 = vmatprep.subr.mxu0 0.0
      %472 = vmatpush2.msra.mxu0 0.0
      %473 = vmatprep.subr.mxu0 0.0
      %474 = vmatpush2.msra.mxu0 0.0
      %475 = vmatprep.subr.mxu0 0.0
      %476 = vmatpush2.msra.mxu0 0.0
      %477 = vmatprep.subr.mxu0 0.0
      %478 = vmatpush2.msra.mxu0 0.0
      %479 = vmatprep.subr.mxu0 0.0
      %480 = vmatpush2.msra.mxu0 0.0
      %481 = vmatprep.subr.mxu0 0.0
      %482 = vmatpush2.msra.mxu0 0.0
      %483 = vmatprep.subr.mxu0 0.0
      %484 = vmatpush2.msra.mxu0 0.0
      %485 = vmatprep.subr.mxu0 0.0
      %486 = vmatpush2.msra.mxu0 0.0
      %487 = vmatprep.subr.mxu0 0.0
      %488 = vmatpush2.msra.mxu0 0.0
      %489 = vmatprep.subr.mxu0 0.0
      %490 = vmatpush2.msra.mxu0 0.0
      %491 = vmatprep.subr.mxu0 0.0
      %492 = vmatpush2.msra.mxu0 0.0
      %493 = vmatprep.subr.mxu0 0.0
      %494 = vmatpush2.msra.mxu0 0.0
      %495 = vmatprep.subr.mxu0 0.0
      %496 = vmatpush2.msra.mxu0 0.0
      %497 = vmatprep.subr.mxu0 0.0
      %498 = vmatpush2.msra.mxu0 0.0
      %499 = vmatprep.subr.mxu0 0.0
      %500 = vmatpush2.msra.mxu0 0.0
      %501 = vmatprep.subr.mxu0 0.0
      %502 = vmatpush2.msra.mxu0 0.0
      %503 = vmatprep.mubr.f32.mxu0 0.0
      %504 = vmatmul.mubr.f32.gmra.mxu0 %v437
      %v505 = vpop.f32.mrf.mxu0
      %v506 = vadd.f32 0.0, %v505
      %v507 = vpop.f32.mrf.mxu0
      %508 = vdwg.mxu0
      %v510 = vsel %vm435, %v434, 0
      %512 = vmatprep.subr.mxu0 0.0
      %513 = vmatpush1.msra.mxu0 0.0
      %514 = vmatprep.subr.mxu0 0.0
      %515 = vmatpush1.msra.mxu0 0.0
      %516 = vmatprep.subr.mxu0 0.0
      %517 = vmatpush1.msra.mxu0 0.0
      %518 = vmatprep.subr.mxu0 0.0
      %519 = vmatpush1.msra.mxu0 0.0
      %520 = vmatprep.subr.mxu0 0.0
      %521 = vmatpush1.msra.mxu0 0.0
      %522 = vmatprep.subr.mxu0 0.0
      %523 = vmatpush1.msra.mxu0 0.0
      %524 = vmatprep.subr.mxu0 0.0
      %525 = vmatpush1.msra.mxu0 0.0
      %526 = vmatprep.subr.mxu0 0.0
      %527 = vmatpush1.msra.mxu0 0.0
      %528 = vmatprep.subr.mxu0 0.0
      %529 = vmatpush1.msra.mxu0 0.0
      %530 = vmatprep.subr.mxu0 0.0
      %531 = vmatpush1.msra.mxu0 0.0
      %532 = vmatprep.subr.mxu0 0.0
      %533 = vmatpush1.msra.mxu0 0.0
      %534 = vmatprep.subr.mxu0 0.0
      %535 = vmatpush1.msra.mxu0 0.0
      %536 = vmatprep.subr.mxu0 0.0
      %537 = vmatpush1.msra.mxu0 %v254
      %538 = vmatprep.subr.mxu0 0.0
      %539 = vmatpush1.msra.mxu0 %v253
      %540 = vmatprep.subr.mxu0 0.0
      %541 = vmatpush1.msra.mxu0 %v252
      %542 = vmatprep.subr.mxu0 0.0
      %543 = vmatpush1.msra.mxu0 %v251
      %544 = vmatprep.subr.mxu0 0.0
      %545 = vmatpush2.msra.mxu0 0.0
      %546 = vmatprep.subr.mxu0 0.0
      %547 = vmatpush2.msra.mxu0 0.0
      %548 = vmatprep.subr.mxu0 0.0
      %549 = vmatpush2.msra.mxu0 0.0
      %550 = vmatprep.subr.mxu0 0.0
      %551 = vmatpush2.msra.mxu0 0.0
      %552 = vmatprep.subr.mxu0 0.0
      %553 = vmatpush2.msra.mxu0 0.0
      %554 = vmatprep.subr.mxu0 0.0
      %555 = vmatpush2.msra.mxu0 0.0
      %556 = vmatprep.subr.mxu0 0.0
      %557 = vmatpush2.msra.mxu0 0.0
      %558 = vmatprep.subr.mxu0 0.0
      %559 = vmatpush2.msra.mxu0 0.0
      %560 = vmatprep.subr.mxu0 0.0
      %561 = vmatpush2.msra.mxu0 0.0
      %562 = vmatprep.subr.mxu0 0.0
      %563 = vmatpush2.msra.mxu0 0.0
      %564 = vmatprep.subr.mxu0 0.0
      %565 = vmatpush2.msra.mxu0 0.0
      %566 = vmatprep.subr.mxu0 0.0
      %567 = vmatpush2.msra.mxu0 0.0
      %568 = vmatprep.subr.mxu0 0.0
      %569 = vmatpush2.msra.mxu0 0.0
      %570 = vmatprep.subr.mxu0 0.0
      %571 = vmatpush2.msra.mxu0 0.0
      %572 = vmatprep.subr.mxu0 0.0
      %573 = vmatpush2.msra.mxu0 0.0
      %574 = vmatprep.subr.mxu0 0.0
      %575 = vmatpush2.msra.mxu0 0.0
      %576 = vmatprep.mubr.f32.mxu0 0.0
      %577 = vmatmul.mubr.f32.gmra.mxu0 %v510
      %v578 = vpop.f32.mrf.mxu0
      %v579 = vadd.f32 0.0, %v578
      %v580 = vpop.f32.mrf.mxu0
      %581 = vdwg.mxu0
      %v582 = vmul.f32 %v579, %v233
      %v583 = vmul.f32 %v506, %v582
      %v584 = vsub.f32 %v234, %v583
      %v585 = vlaneseq
      %v586 = vshrl.u32 %v585, 7
      %v587 = vsub.s32 0, %v586
      %v588 = vrot.slane %v582, %v587
      %v589 = vmul.f32 %v225, %v588
      %v590 = vmul.f32 %v226, %v588
      %v591 = vmul.f32 %v227, %v588
      %v592 = vmul.f32 %v228, %v588
      %v593 = vmul.f32 %v229, %v588
      %v594 = vmul.f32 %v230, %v588
      %v595 = vmul.f32 %v231, %v588
      %v596 = vmul.f32 %v232, %v588
      %v598 = vlaneseq
      %v599 = vshrl.u32 %v598, 7
      %v600 = vsub.s32 0, %v599
      %v601 = vrot.slane %v584, %v600
      %v603 = vadd.f32 %v589, %v601
      %v604 = vadd.f32 %v590, %v601
      %v605 = vadd.f32 %v591, %v601
      %v606 = vadd.f32 %v592, %v601
      %v607 = vadd.f32 %v593, %v601
      %v608 = vadd.f32 %v594, %v601
      %v609 = vadd.f32 %v595, %v601
      %v610 = vadd.f32 %v596, %v601
      %v611 = vxor.u32 %v603, 2147483648
      %v612 = vxor.u32 %v604, 2147483648
      %v613 = vxor.u32 %v605, 2147483648
      %v614 = vxor.u32 %v606, 2147483648
      %v615 = vxor.u32 %v607, 2147483648
      %v616 = vxor.u32 %v608, 2147483648
      %v617 = vxor.u32 %v609, 2147483648
      %v618 = vxor.u32 %v610, 2147483648
      %v619 = vmul.f32 %v611, 1.442695
      %v620 = vpow.pop %v619
      %v621 = vmul.f32 %v612, 1.442695
      %v622 = vpow.pop %v621
      %v623 = vmul.f32 %v613, 1.442695
      %v624 = vpow.pop %v623
      %v625 = vmul.f32 %v614, 1.442695
      %v626 = vpow.pop %v625
      %v627 = vmul.f32 %v615, 1.442695
      %v628 = vpow.pop %v627
      %v629 = vmul.f32 %v616, 1.442695
      %v630 = vpow.pop %v629
      %v631 = vmul.f32 %v617, 1.442695
      %v632 = vpow.pop %v631
      %v633 = vmul.f32 %v618, 1.442695
      %v634 = vpow.pop %v633
      %v635 = vadd.f32 %v620, 1.0
      %v636 = vadd.f32 %v622, 1.0
      %v637 = vadd.f32 %v624, 1.0
      %v638 = vadd.f32 %v626, 1.0
      %v639 = vadd.f32 %v628, 1.0
      %v640 = vadd.f32 %v630, 1.0
      %v641 = vadd.f32 %v632, 1.0
      %v642 = vadd.f32 %v634, 1.0
      %v643 = vrcp.pop %v635
      %v644 = vmul.f32 1.0, %v643
      %v645 = vrcp.pop %v636
      %v646 = vmul.f32 1.0, %v645
      %v647 = vrcp.pop %v637
      %v648 = vmul.f32 1.0, %v647
      %v649 = vrcp.pop %v638
      %v650 = vmul.f32 1.0, %v649
      %v651 = vrcp.pop %v639
      %v652 = vmul.f32 1.0, %v651
      %v653 = vrcp.pop %v640
      %v654 = vmul.f32 1.0, %v653
      %v655 = vrcp.pop %v641
      %v656 = vmul.f32 1.0, %v655
      %v657 = vrcp.pop %v642
      %v658 = vmul.f32 1.0, %v657
      %659 = vst [vmem:[%s224] sm:$0xff] %v644
      %660 = vst [vmem:[%s224 + $0x8] sm:$0xff] %v646
      %661 = vst [vmem:[%s224 + $0x10] sm:$0xff] %v648
      %662 = vst [vmem:[%s224 + $0x18] sm:$0xff] %v650
      %663 = vst [vmem:[%s224 + $0x20] sm:$0xff] %v652
      %664 = vst [vmem:[%s224 + $0x28] sm:$0xff] %v654
      %665 = vst [vmem:[%s224 + $0x30] sm:$0xff] %v656
      %666 = vst [vmem:[%s224 + $0x38] sm:$0xff] %v658
      %p667 = scmp.lt.s32.totalorder %s16, 1
      %s668 = scalar_select %p667, %s16, 1
      %s669 = smul.addr %s668, 8
      %s670 = smul.addr %s669, 8
      %s671 = scalar_lea.vmem %s5, %s670
      // Predicated region
      $region41: #{_lambda_.13} parent=39 // pred_check
        %p672 = pneg %p144
      $region42: #{_lambda_.13} parent=39 // pred_check_branch
        %674 = sbr.rel (%p672) target = $region44
      $region43: #{_lambda_.13} parent=39 // pred_region
        _
      $region44: #{_lambda_.13} parent=39 // pred_fallthru
        _
    $region40: #{_lambda_.13} parent=5 // pred_fallthru
      _
    %p675 = scmp.le.s32.totalorder 2, %s11
    // Predicated region
    $region45: #{_lambda_.13} parent=5 // pred_check
      %p676 = pneg %p675
    $region46: #{_lambda_.13} parent=5 // pred_check_branch
      %678 = sbr.rel (%p676) target = $region48
    $region47: #{_lambda_.13} parent=5 // pred_region
      %s679 = ssub.s32 %s11, 2
      // Predicated region
      $region49: #{_lambda_.13} parent=47 // pred_check
        %p680 = pneg %p150
      $region50: #{_lambda_.13} parent=47 // pred_check_branch
        %682 = sbr.rel (%p680) target = $region52
      $region51: #{_lambda_.13} parent=47 // pred_region
        %p683 = scmp.lt.s32.totalorder %s17, 1
        %s684 = scalar_select %p683, %s17, 1
        %s685 = smul.addr %s684, 8
        %s686 = smul.addr %s685, 8
        %s687 = scalar_lea.vmem %s5, %s686
      $region52: #{_lambda_.13} parent=47 // pred_fallthru
        _
    $region48: #{_lambda_.13} parent=5 // pred_fallthru
      _
  $region6: #{_lambda_.13} parent=0 // loop_footer
    %s15 = sadd.s32 1, %s11
  $region7: #{_lambda_.13} parent=0 // loop_footer_branch
    %10 = sbr.rel target = $region3
  $region8: #{_lambda_.13} parent=0 // loop_exit
    _

// kernel: _lambda_.16
$region0: #{_lambda_.16}
  #allocation0 [shape = 'u32[]', space=smem, size = 0x4, offset = 0x4, fixed_abs, tag = 'smem constant byte address 0x4 - core index']
  #allocation1 [shape = 'u32[144,128]{1,0:T(1,128)}', space=vmem, size = 0x12000, scoped, tag = 'internal scratch']
  %s0 = inlined_call_operand.vmem [shape: f32[2,64,128], index: 0, kind: input, shape index: {}]
  %s1 = inlined_call_operand.vmem [shape: f32[2,1,128], index: 1, kind: input, shape index: {}]
  %s2 = inlined_call_operand.vmem [shape: f32[1,128], index: 2, kind: input, shape index: {}]
  %s3 = inlined_call_operand.vmem [shape: f32[1,128], index: 3, kind: input, shape index: {}]
  %s4 = inlined_call_operand.vmem [shape: f32[128,32], index: 4, kind: input, shape index: {}]
  %s5 = inlined_call_operand.vmem [shape: f32[32,128], index: 5, kind: input, shape index: {}]
  %s6 = inlined_call_operand.vmem [shape: f32[2,64,128], index: 6, kind: output, shape index: {}]
  %s7 = sld [smem:[#allocation0]]
  $region57: #{_lambda_.16} parent=0
    _
  %s9 = ssub.s32 1, %s7
  %s10 = scalar_select 0, %s9, %s7
  loop: start=0, step=1, limit=4
  $region2: #{_lambda_.16} parent=0 // loop_pre_header
    _
  $region3: #{_lambda_.16} parent=0 // loop_header
    %s12 = sphi 0, %s16
    %p13 = scmp.ge.s32.totalorder %s12, 4
    %s22 = sphi 0, %s24
    %s25 = sphi 0, %s22
    %s26 = sphi 0, %s25
    %s42 = sphi 0, %s26
    %s48 = sphi 0, %s50
    %s51 = sphi 0, %s48
    %s52 = sphi 0, %s51
    %s68 = sphi 0, %s52
    %s72 = sphi 0, %s72
    %s74 = sphi 0, %s72
    %s75 = sphi 0, %s74
    %s89 = sphi 0, %s75
    %s93 = sphi 0, %s93
    %s95 = sphi 0, %s93
    %s96 = sphi 0, %s95
    %s110 = sphi 0, %s96
    %s114 = sphi 0, %s114
    %s116 = sphi 0, %s114
    %s117 = sphi 0, %s116
    %s131 = sphi 0, %s117
    %s135 = sphi 0, %s135
    %s137 = sphi 0, %s135
    %s138 = sphi 0, %s137
    %s152 = sphi 0, %s138
    %s158 = sphi 0, %s160
    %s161 = sphi 0, %s158
    %s162 = sphi 0, %s161
    %s178 = sphi 0, %s162
  $region4: #{_lambda_.16} parent=0 // loop_header_branch
    %15 = sbr.rel (%p13) target = $region8
  $region5: #{_lambda_.16} parent=0 // loop_body
    %s17 = ssub.s32 %s12, 1
    %s18 = ssub.s32 %s12, 2
    %s19 = sadd.s32 %s12, 1
    %s20 = ssub.s32 %s12, %s19
    %p21 = scmp.eq.s32.totalorder %s20, 0
    %s23 = sadd.s32 %s22, 1
    %s24 = scalar_select %p21, %s22, %s23
    %p27 = pneg %p21
    %p28 = scmp.eq.s32.totalorder %s12, 1
    %p29 = por %p27, %p28
    %p30 = scmp.ne.s32.totalorder %s22, %s25
    %p31 = scmp.eq.s32.totalorder %s12, 0
    %p32 = por %p30, %p31
    %p33 = scmp.ne.s32.totalorder %s22, %s25
    %p34 = scmp.eq.s32.totalorder %s17, 1
    %p35 = por %p33, %p34
    %p36 = scmp.ne.s32.totalorder %s25, %s26
    %p37 = scmp.eq.s32.totalorder %s17, 0
    %p38 = por %p36, %p37
    %p39 = scmp.ne.s32.totalorder %s25, %s26
    %p40 = scmp.eq.s32.totalorder %s18, 1
    %p41 = por %p39, %p40
    %p43 = scmp.ne.s32.totalorder %s26, %s42
    %p44 = scmp.eq.s32.totalorder %s18, 0
    %p45 = por %p43, %p44
    %s46 = ssub.s32 %s12, %s19
    %p47 = scmp.eq.s32.totalorder %s46, 0
    %s49 = sadd.s32 %s48, 1
    %s50 = scalar_select %p47, %s48, %s49
    %p53 = pneg %p47
    %p54 = scmp.eq.s32.totalorder %s12, 1
    %p55 = por %p53, %p54
    %p56 = scmp.ne.s32.totalorder %s48, %s51
    %p57 = scmp.eq.s32.totalorder %s12, 0
    %p58 = por %p56, %p57
    %p59 = scmp.ne.s32.totalorder %s48, %s51
    %p60 = scmp.eq.s32.totalorder %s17, 1
    %p61 = por %p59, %p60
    %p62 = scmp.ne.s32.totalorder %s51, %s52
    %p63 = scmp.eq.s32.totalorder %s17, 0
    %p64 = por %p62, %p63
    %p65 = scmp.ne.s32.totalorder %s51, %s52
    %p66 = scmp.eq.s32.totalorder %s18, 1
    %p67 = por %p65, %p66
    %p69 = scmp.ne.s32.totalorder %s52, %s68
    %p70 = scmp.eq.s32.totalorder %s18, 0
    %p71 = por %p69, %p70
    %s73 = sadd.s32 %s72, 1
    %p76 = scmp.eq.s32.totalorder %s12, 1
    %p77 = scmp.ne.s32.totalorder %s72, %s74
    %p78 = scmp.eq.s32.totalorder %s12, 0
    %p79 = por %p77, %p78
    %p80 = scmp.ne.s32.totalorder %s72, %s74
    %p81 = scmp.eq.s32.totalorder %s17, 1
    %p82 = por %p80, %p81
    %p83 = scmp.ne.s32.totalorder %s74, %s75
    %p84 = scmp.eq.s32.totalorder %s17, 0
    %p85 = por %p83, %p84
    %p86 = scmp.ne.s32.totalorder %s74, %s75
    %p87 = scmp.eq.s32.totalorder %s18, 1
    %p88 = por %p86, %p87
    %p90 = scmp.ne.s32.totalorder %s75, %s89
    %p91 = scmp.eq.s32.totalorder %s18, 0
    %p92 = por %p90, %p91
    %s94 = sadd.s32 %s93, 1
    %p97 = scmp.eq.s32.totalorder %s12, 1
    %p98 = scmp.ne.s32.totalorder %s93, %s95
    %p99 = scmp.eq.s32.totalorder %s12, 0
    %p100 = por %p98, %p99
    %p101 = scmp.ne.s32.totalorder %s93, %s95
    %p102 = scmp.eq.s32.totalorder %s17, 1
    %p103 = por %p101, %p102
    %p104 = scmp.ne.s32.totalorder %s95, %s96
    %p105 = scmp.eq.s32.totalorder %s17, 0
    %p106 = por %p104, %p105
    %p107 = scmp.ne.s32.totalorder %s95, %s96
    %p108 = scmp.eq.s32.totalorder %s18, 1
    %p109 = por %p107, %p108
    %p111 = scmp.ne.s32.totalorder %s96, %s110
    %p112 = scmp.eq.s32.totalorder %s18, 0
    %p113 = por %p111, %p112
    %s115 = sadd.s32 %s114, 1
    %p118 = scmp.eq.s32.totalorder %s12, 1
    %p119 = scmp.ne.s32.totalorder %s114, %s116
    %p120 = scmp.eq.s32.totalorder %s12, 0
    %p121 = por %p119, %p120
    %p122 = scmp.ne.s32.totalorder %s114, %s116
    %p123 = scmp.eq.s32.totalorder %s17, 1
    %p124 = por %p122, %p123
    %p125 = scmp.ne.s32.totalorder %s116, %s117
    %p126 = scmp.eq.s32.totalorder %s17, 0
    %p127 = por %p125, %p126
    %p128 = scmp.ne.s32.totalorder %s116, %s117
    %p129 = scmp.eq.s32.totalorder %s18, 1
    %p130 = por %p128, %p129
    %p132 = scmp.ne.s32.totalorder %s117, %s131
    %p133 = scmp.eq.s32.totalorder %s18, 0
    %p134 = por %p132, %p133
    %s136 = sadd.s32 %s135, 1
    %p139 = scmp.eq.s32.totalorder %s12, 1
    %p140 = scmp.ne.s32.totalorder %s135, %s137
    %p141 = scmp.eq.s32.totalorder %s12, 0
    %p142 = por %p140, %p141
    %p143 = scmp.ne.s32.totalorder %s135, %s137
    %p144 = scmp.eq.s32.totalorder %s17, 1
    %p145 = por %p143, %p144
    %p146 = scmp.ne.s32.totalorder %s137, %s138
    %p147 = scmp.eq.s32.totalorder %s17, 0
    %p148 = por %p146, %p147
    %p149 = scmp.ne.s32.totalorder %s137, %s138
    %p150 = scmp.eq.s32.totalorder %s18, 1
    %p151 = por %p149, %p150
    %p153 = scmp.ne.s32.totalorder %s138, %s152
    %p154 = scmp.eq.s32.totalorder %s18, 0
    %p155 = por %p153, %p154
    %s156 = ssub.s32 %s12, %s19
    %p157 = scmp.eq.s32.totalorder %s156, 0
    %s159 = sadd.s32 %s158, 1
    %s160 = scalar_select %p157, %s158, %s159
    %p163 = pneg %p157
    %p164 = scmp.eq.s32.totalorder %s12, 1
    %p165 = por %p163, %p164
    %p166 = scmp.ne.s32.totalorder %s158, %s161
    %p167 = scmp.eq.s32.totalorder %s12, 0
    %p168 = por %p166, %p167
    %p169 = scmp.ne.s32.totalorder %s158, %s161
    %p170 = scmp.eq.s32.totalorder %s17, 1
    %p171 = por %p169, %p170
    %p172 = scmp.ne.s32.totalorder %s161, %s162
    %p173 = scmp.eq.s32.totalorder %s17, 0
    %p174 = por %p172, %p173
    %p175 = scmp.ne.s32.totalorder %s161, %s162
    %p176 = scmp.eq.s32.totalorder %s18, 1
    %p177 = por %p175, %p176
    %p179 = scmp.ne.s32.totalorder %s162, %s178
    %p180 = scmp.eq.s32.totalorder %s18, 0
    %p181 = por %p179, %p180
    %p182 = scmp.le.s32.totalorder 1, %s12
    %p183 = scmp.lt.s32.totalorder %s12, 3
    %p184 = pnand %p182, %p183
    %p185 = pneg %p184
    // Predicated region
    $region9: #{_lambda_.16} parent=5 // pred_check
      _
    $region10: #{_lambda_.16} parent=5 // pred_check_branch
      %187 = sbr.rel (%p184) target = $region12
    $region11: #{_lambda_.16} parent=5 // pred_region
      %s188 = ssub.s32 %s12, 1
      // Predicated region
      $region13: #{_lambda_.16} parent=11 // pred_check
        %p189 = pneg %p85
      $region14: #{_lambda_.16} parent=11 // pred_check_branch
        %191 = sbr.rel (%p189) target = $region16
      $region15: #{_lambda_.16} parent=11 // pred_region
        _
      $region16: #{_lambda_.16} parent=11 // pred_fallthru
        _
      // Predicated region
      $region17: #{_lambda_.16} parent=11 // pred_check
        %p192 = pneg %p106
      $region18: #{_lambda_.16} parent=11 // pred_check_branch
        %194 = sbr.rel (%p192) target = $region20
      $region19: #{_lambda_.16} parent=11 // pred_region
        _
      $region20: #{_lambda_.16} parent=11 // pred_fallthru
        _
      // Predicated region
      $region21: #{_lambda_.16} parent=11 // pred_check
        %p195 = pneg %p127
      $region22: #{_lambda_.16} parent=11 // pred_check_branch
        %197 = sbr.rel (%p195) target = $region24
      $region23: #{_lambda_.16} parent=11 // pred_region
        _
      $region24: #{_lambda_.16} parent=11 // pred_fallthru
        _
      // Predicated region
      $region25: #{_lambda_.16} parent=11 // pred_check
        %p198 = pneg %p148
      $region26: #{_lambda_.16} parent=11 // pred_check_branch
        %200 = sbr.rel (%p198) target = $region28
      $region27: #{_lambda_.16} parent=11 // pred_region
        _
      $region28: #{_lambda_.16} parent=11 // pred_fallthru
        _
    $region12: #{_lambda_.16} parent=5 // pred_fallthru
      _
    %p201 = scmp.lt.s32.totalorder %s12, 2
    // Predicated region
    $region29: #{_lambda_.16} parent=5 // pred_check
      %p202 = pneg %p201
    $region30: #{_lambda_.16} parent=5 // pred_check_branch
      %204 = sbr.rel (%p202) target = $region32
    $region31: #{_lambda_.16} parent=5 // pred_region
      // Predicated region
      $region33: #{_lambda_.16} parent=31 // pred_check
        %p205 = pneg %p32
      $region34: #{_lambda_.16} parent=31 // pred_check_branch
        %207 = sbr.rel (%p205) target = $region36
      $region35: #{_lambda_.16} parent=31 // pred_region
        %p208 = scmp.lt.s32.totalorder %s12, 1
        %s209 = scalar_select %p208, %s12, 1
        %s210 = smul.addr %s209, 8
        %s211 = smul.addr %s210, 8
        %s212 = scalar_lea.vmem %s0, %s211
      $region36: #{_lambda_.16} parent=31 // pred_fallthru
        _
      // Predicated region
      $region37: #{_lambda_.16} parent=31 // pred_check
        %p213 = pneg %p58
      $region38: #{_lambda_.16} parent=31 // pred_check_branch
        %215 = sbr.rel (%p213) target = $region40
      $region39: #{_lambda_.16} parent=31 // pred_region
        %p216 = scmp.lt.s32.totalorder %s12, 1
        %s217 = scalar_select %p216, %s12, 1
        %s218 = scalar_lea.vmem %s1, %s217
      $region40: #{_lambda_.16} parent=31 // pred_fallthru
        _
    $region32: #{_lambda_.16} parent=5 // pred_fallthru
      _
    %p219 = scmp.le.s32.totalorder 1, %s12
    %p220 = scmp.lt.s32.totalorder %s12, 3
    %p221 = pnand %p219, %p220
    %p222 = pneg %p221
    // Predicated region
    $region41: #{_lambda_.16} parent=5 // pred_check
      _
    $region42: #{_lambda_.16} parent=5 // pred_check_branch
      %224 = sbr.rel (%p221) target = $region44
    $region43: #{_lambda_.16} parent=5 // pred_region
      %s225 = ssub.s32 %s12, 1
      %p226 = scmp.lt.s32.totalorder %s17, 1
      %s227 = scalar_select %p226, %s17, 1
      %s228 = smul.addr %s227, 8
      %s229 = smul.addr %s228, 8
      %s230 = scalar_lea.vmem %s0, %s229
      %p231 = pneg %p38
      %p232 = pneg %p35
      %p233 = scmp.lt.s32.totalorder %s17, 1
      %s234 = scalar_select %p233, %s17, 1
      %s235 = scalar_lea.vmem %s1, %s234
      %p236 = pneg %p64
      %p237 = pneg %p61
      %p238 = pneg %p85
      %p239 = pneg %p82
      %p240 = pneg %p106
      %p241 = pneg %p103
      %p242 = pneg %p127
      %p243 = pneg %p124
      %p244 = pneg %p148
      %p245 = pneg %p145
      %p246 = pneg %p174
      %p247 = pneg %p171
      %p248 = scmp.lt.s32.totalorder %s17, 1
      %s249 = scalar_select %p248, %s17, 1
      %s250 = smul.addr %s249, 8
      %s251 = smul.addr %s250, 8
      %s252 = scalar_lea.vmem %s6, %s251
      %p253 = scmp.lt.s32.totalorder %s17, 1
      %s254 = scalar_select %p253, %s17, 1
      %s255 = smul.addr %s254, 8
      %s256 = smul.addr %s255, 8
      %s257 = scalar_lea.vmem %s0, %s256
      %p258 = scmp.lt.s32.totalorder %s17, 1
      %s259 = scalar_select %p258, %s17, 1
      %s260 = scalar_lea.vmem %s1, %s259
      %p261 = scmp.lt.s32.totalorder %s17, 1
      %s262 = scalar_select %p261, %s17, 1
      %s263 = smul.addr %s262, 8
      %s264 = smul.addr %s263, 8
      %s265 = scalar_lea.vmem %s6, %s264
      %v266 = vld [vmem:[%s257] sm:$0xff]
      %v267 = vld [vmem:[%s257 + $0x8] sm:$0xff]
      %v268 = vld [vmem:[%s257 + $0x10] sm:$0xff]
      %v269 = vld [vmem:[%s257 + $0x18] sm:$0xff]
      %v270 = vld [vmem:[%s257 + $0x20] sm:$0xff]
      %v271 = vld [vmem:[%s257 + $0x28] sm:$0xff]
      %v272 = vld [vmem:[%s257 + $0x30] sm:$0xff]
      %v273 = vld [vmem:[%s257 + $0x38] sm:$0xff]
      %v274 = vld [vmem:[%s260] sm:$0x1]
      %v276 = vlaneseq
      %v277 = vshrl.u32 %v276, 7
      %v278 = vsub.s32 0, %v277
      %v279 = vrot.slane %v274, %v278
      %v281 = vadd.f32 %v266, %v279
      %v282 = vadd.f32 %v267, %v279
      %v283 = vadd.f32 %v268, %v279
      %v284 = vadd.f32 %v269, %v279
      %v285 = vadd.f32 %v270, %v279
      %v286 = vadd.f32 %v271, %v279
      %v287 = vadd.f32 %v272, %v279
      %v288 = vadd.f32 %v273, %v279
      %v289 = vld [vmem:[%s2] sm:$0x1]
      %v290 = vld [vmem:[%s3] sm:$0x1]
      %v291 = vld [vmem:[%s4] sm:$0xff]
      %v292 = vld [vmem:[%s4 + $0x8] sm:$0xff]
      %v293 = vld [vmem:[%s4 + $0x10] sm:$0xff]
      %v294 = vld [vmem:[%s4 + $0x18] sm:$0xff]
      %v295 = vld [vmem:[%s4 + $0x20] sm:$0xff]
      %v296 = vld [vmem:[%s4 + $0x28] sm:$0xff]
      %v297 = vld [vmem:[%s4 + $0x30] sm:$0xff]
      %v298 = vld [vmem:[%s4 + $0x38] sm:$0xff]
      %v299 = vld [vmem:[%s4 + $0x40] sm:$0xff]
      %v300 = vld [vmem:[%s4 + $0x48] sm:$0xff]
      %v301 = vld [vmem:[%s4 + $0x50] sm:$0xff]
      %v302 = vld [vmem:[%s4 + $0x58] sm:$0xff]
      %v303 = vld [vmem:[%s4 + $0x60] sm:$0xff]
      %v304 = vld [vmem:[%s4 + $0x68] sm:$0xff]
      %v305 = vld [vmem:[%s4 + $0x70] sm:$0xff]
      %v306 = vld [vmem:[%s4 + $0x78] sm:$0xff]
      %v307 = vld [vmem:[%s5] sm:$0xff]
      %v308 = vld [vmem:[%s5 + $0x8] sm:$0xff]
      %v309 = vld [vmem:[%s5 + $0x10] sm:$0xff]
      %v310 = vld [vmem:[%s5 + $0x18] sm:$0xff]
      %v311 = vadd.f32 %v281, %v282
      %v312 = vadd.f32 %v311, %v283
      %v313 = vadd.f32 %v312, %v284
      %v314 = vadd.f32 %v313, %v285
      %v315 = vadd.f32 %v314, %v286
      %v316 = vadd.f32 %v315, %v287
      %v317 = vadd.f32 %v316, %v288
      %v318 = vrot.slane %v317, 4
      %v319 = vadd.f32 %v317, %v318
      %v320 = vrot.slane %v319, 2
      %v321 = vadd.f32 %v319, %v320
      %v322 = vrot.slane %v321, 1
      %v323 = vadd.f32 %v321, %v322
      %v324 = vmul.f32 %v281, %v281
      %v325 = vmul.f32 %v282, %v282
      %v326 = vmul.f32 %v283, %v283
      %v327 = vmul.f32 %v284, %v284
      %v328 = vmul.f32 %v285, %v285
      %v329 = vmul.f32 %v286, %v286
      %v330 = vmul.f32 %v287, %v287
      %v331 = vmul.f32 %v288, %v288
      %v332 = vadd.f32 %v324, %v325
      %v333 = vadd.f32 %v332, %v326
      %v334 = vadd.f32 %v333, %v327
      %v335 = vadd.f32 %v334, %v328
      %v336 = vadd.f32 %v335, %v329
      %v337 = vadd.f32 %v336, %v330
      %v338 = vadd.f32 %v337, %v331
      %v339 = vrot.slane %v338, 4
      %v340 = vadd.f32 %v338, %v339
      %v341 = vrot.slane %v340, 2
      %v342 = vadd.f32 %v340, %v341
      %v343 = vrot.slane %v342, 1
      %v344 = vadd.f32 %v342, %v343
      %345 = vmatprep.subr.mxu0 0.0
      %346 = vmatpush1.msra.mxu0 %v306
      %347 = vmatprep.subr.mxu0 0.0
      %348 = vmatpush1.msra.mxu0 %v305
      %349 = vmatprep.subr.mxu0 0.0
      %350 = vmatpush1.msra.mxu0 %v304
      %351 = vmatprep.subr.mxu0 0.0
      %352 = vmatpush1.msra.mxu0 %v303
      %353 = vmatprep.subr.mxu0 0.0
      %354 = vmatpush1.msra.mxu0 %v302
      %355 = vmatprep.subr.mxu0 0.0
      %356 = vmatpush1.msra.mxu0 %v301
      %357 = vmatprep.subr.mxu0 0.0
      %358 = vmatpush1.msra.mxu0 %v300
      %359 = vmatprep.subr.mxu0 0.0
      %360 = vmatpush1.msra.mxu0 %v299
      %361 = vmatprep.subr.mxu0 0.0
      %362 = vmatpush1.msra.mxu0 %v298
      %363 = vmatprep.subr.mxu0 0.0
      %364 = vmatpush1.msra.mxu0 %v297
      %365 = vmatprep.subr.mxu0 0.0
      %366 = vmatpush1.msra.mxu0 %v296
      %367 = vmatprep.subr.mxu0 0.0
      %368 = vmatpush1.msra.mxu0 %v295
      %369 = vmatprep.subr.mxu0 0.0
      %370 = vmatpush1.msra.mxu0 %v294
      %371 = vmatprep.subr.mxu0 0.0
      %372 = vmatpush1.msra.mxu0 %v293
      %373 = vmatprep.subr.mxu0 0.0
      %374 = vmatpush1.msra.mxu0 %v292
      %375 = vmatprep.subr.mxu0 0.0
      %376 = vmatpush1.msra.mxu0 %v291
      %377 = vmatprep.subr.mxu0 0.0
      %378 = vmatpush2.msra.mxu0 0.0
      %379 = vmatprep.subr.mxu0 0.0
      %380 = vmatpush2.msra.mxu0 0.0
      %381 = vmatprep.subr.mxu0 0.0
      %382 = vmatpush2.msra.mxu0 0.0
      %383 = vmatprep.subr.mxu0 0.0
      %384 = vmatpush2.msra.mxu0 0.0
      %385 = vmatprep.subr.mxu0 0.0
      %386 = vmatpush2.msra.mxu0 0.0
      %387 = vmatprep.subr.mxu0 0.0
      %388 = vmatpush2.msra.mxu0 0.0
      %389 = vmatprep.subr.mxu0 0.0
      %390 = vmatpush2.msra.mxu0 0.0
      %391 = vmatprep.subr.mxu0 0.0
      %392 = vmatpush2.msra.mxu0 0.0
      %393 = vmatprep.subr.mxu0 0.0
      %394 = vmatpush2.msra.mxu0 0.0
      %395 = vmatprep.subr.mxu0 0.0
      %396 = vmatpush2.msra.mxu0 0.0
      %397 = vmatprep.subr.mxu0 0.0
      %398 = vmatpush2.msra.mxu0 0.0
      %399 = vmatprep.subr.mxu0 0.0
      %400 = vmatpush2.msra.mxu0 0.0
      %401 = vmatprep.subr.mxu0 0.0
      %402 = vmatpush2.msra.mxu0 0.0
      %403 = vmatprep.subr.mxu0 0.0
      %404 = vmatpush2.msra.mxu0 0.0
      %405 = vmatprep.subr.mxu0 0.0
      %406 = vmatpush2.msra.mxu0 0.0
      %407 = vmatprep.subr.mxu0 0.0
      %408 = vmatpush2.msra.mxu0 0.0
      %409 = vmatprep.mubr.f32.mxu0 0.0
      %410 = vmatmul.mubr.f32.gmra.mxu0 %v323
      %v411 = vpop.f32.mrf.mxu0
      %v412 = vadd.f32 0.0, %v411
      %v413 = vpop.f32.mrf.mxu0
      %414 = vdwg.mxu0
      %v415 = vmul.f32 %v412, 0.00390625
      %416 = vmatprep.subr.mxu0 0.0
      %417 = vmatpush1.msra.mxu0 %v306
      %418 = vmatprep.subr.mxu0 0.0
      %419 = vmatpush1.msra.mxu0 %v305
      %420 = vmatprep.subr.mxu0 0.0
      %421 = vmatpush1.msra.mxu0 %v304
      %422 = vmatprep.subr.mxu0 0.0
      %423 = vmatpush1.msra.mxu0 %v303
      %424 = vmatprep.subr.mxu0 0.0
      %425 = vmatpush1.msra.mxu0 %v302
      %426 = vmatprep.subr.mxu0 0.0
      %427 = vmatpush1.msra.mxu0 %v301
      %428 = vmatprep.subr.mxu0 0.0
      %429 = vmatpush1.msra.mxu0 %v300
      %430 = vmatprep.subr.mxu0 0.0
      %431 = vmatpush1.msra.mxu0 %v299
      %432 = vmatprep.subr.mxu0 0.0
      %433 = vmatpush1.msra.mxu0 %v298
      %434 = vmatprep.subr.mxu0 0.0
      %435 = vmatpush1.msra.mxu0 %v297
      %436 = vmatprep.subr.mxu0 0.0
      %437 = vmatpush1.msra.mxu0 %v296
      %438 = vmatprep.subr.mxu0 0.0
      %439 = vmatpush1.msra.mxu0 %v295
      %440 = vmatprep.subr.mxu0 0.0
      %441 = vmatpush1.msra.mxu0 %v294
      %442 = vmatprep.subr.mxu0 0.0
      %443 = vmatpush1.msra.mxu0 %v293
      %444 = vmatprep.subr.mxu0 0.0
      %445 = vmatpush1.msra.mxu0 %v292
      %446 = vmatprep.subr.mxu0 0.0
      %447 = vmatpush1.msra.mxu0 %v291
      %448 = vmatprep.subr.mxu0 0.0
      %449 = vmatpush2.msra.mxu0 0.0
      %450 = vmatprep.subr.mxu0 0.0
      %451 = vmatpush2.msra.mxu0 0.0
      %452 = vmatprep.subr.mxu0 0.0
      %453 = vmatpush2.msra.mxu0 0.0
      %454 = vmatprep.subr.mxu0 0.0
      %455 = vmatpush2.msra.mxu0 0.0
      %456 = vmatprep.subr.mxu0 0.0
      %457 = vmatpush2.msra.mxu0 0.0
      %458 = vmatprep.subr.mxu0 0.0
      %459 = vmatpush2.msra.mxu0 0.0
      %460 = vmatprep.subr.mxu0 0.0
      %461 = vmatpush2.msra.mxu0 0.0
      %462 = vmatprep.subr.mxu0 0.0
      %463 = vmatpush2.msra.mxu0 0.0
      %464 = vmatprep.subr.mxu0 0.0
      %465 = vmatpush2.msra.mxu0 0.0
      %466 = vmatprep.subr.mxu0 0.0
      %467 = vmatpush2.msra.mxu0 0.0
      %468 = vmatprep.subr.mxu0 0.0
      %469 = vmatpush2.msra.mxu0 0.0
      %470 = vmatprep.subr.mxu0 0.0
      %471 = vmatpush2.msra.mxu0 0.0
      %472 = vmatprep.subr.mxu0 0.0
      %473 = vmatpush2.msra.mxu0 0.0
      %474 = vmatprep.subr.mxu0 0.0
      %475 = vmatpush2.msra.mxu0 0.0
      %476 = vmatprep.subr.mxu0 0.0
      %477 = vmatpush2.msra.mxu0 0.0
      %478 = vmatprep.subr.mxu0 0.0
      %479 = vmatpush2.msra.mxu0 0.0
      %480 = vmatprep.mubr.f32.mxu0 0.0
      %481 = vmatmul.mubr.f32.gmra.mxu0 %v344
      %v482 = vpop.f32.mrf.mxu0
      %v483 = vadd.f32 0.0, %v482
      %v484 = vpop.f32.mrf.mxu0
      %485 = vdwg.mxu0
      %v486 = vmul.f32 %v483, 0.00390625
      %v487 = vmul.f32 %v415, %v415
      %v488 = vsub.f32 %v486, %v487
      %v489 = vadd.f32 %v488, 1e-05
      %v490 = vrsqrt.pop %v489
      %vm491 = vcmask 261120
      %v493 = vsel %vm491, %v415, 0
      %495 = vmatprep.subr.mxu0 0.0
      %496 = vmatpush1.msra.mxu0 0.0
      %497 = vmatprep.subr.mxu0 0.0
      %498 = vmatpush1.msra.mxu0 0.0
      %499 = vmatprep.subr.mxu0 0.0
      %500 = vmatpush1.msra.mxu0 0.0
      %501 = vmatprep.subr.mxu0 0.0
      %502 = vmatpush1.msra.mxu0 0.0
      %503 = vmatprep.subr.mxu0 0.0
      %504 = vmatpush1.msra.mxu0 0.0
      %505 = vmatprep.subr.mxu0 0.0
      %506 = vmatpush1.msra.mxu0 0.0
      %507 = vmatprep.subr.mxu0 0.0
      %508 = vmatpush1.msra.mxu0 0.0
      %509 = vmatprep.subr.mxu0 0.0
      %510 = vmatpush1.msra.mxu0 0.0
      %511 = vmatprep.subr.mxu0 0.0
      %512 = vmatpush1.msra.mxu0 0.0
      %513 = vmatprep.subr.mxu0 0.0
      %514 = vmatpush1.msra.mxu0 0.0
      %515 = vmatprep.subr.mxu0 0.0
      %516 = vmatpush1.msra.mxu0 0.0
      %517 = vmatprep.subr.mxu0 0.0
      %518 = vmatpush1.msra.mxu0 0.0
      %519 = vmatprep.subr.mxu0 0.0
      %520 = vmatpush1.msra.mxu0 %v310
      %521 = vmatprep.subr.mxu0 0.0
      %522 = vmatpush1.msra.mxu0 %v309
      %523 = vmatprep.subr.mxu0 0.0
      %524 = vmatpush1.msra.mxu0 %v308
      %525 = vmatprep.subr.mxu0 0.0
      %526 = vmatpush1.msra.mxu0 %v307
      %527 = vmatprep.subr.mxu0 0.0
      %528 = vmatpush2.msra.mxu0 0.0
      %529 = vmatprep.subr.mxu0 0.0
      %530 = vmatpush2.msra.mxu0 0.0
      %531 = vmatprep.subr.mxu0 0.0
      %532 = vmatpush2.msra.mxu0 0.0
      %533 = vmatprep.subr.mxu0 0.0
      %534 = vmatpush2.msra.mxu0 0.0
      %535 = vmatprep.subr.mxu0 0.0
      %536 = vmatpush2.msra.mxu0 0.0
      %537 = vmatprep.subr.mxu0 0.0
      %538 = vmatpush2.msra.mxu0 0.0
      %539 = vmatprep.subr.mxu0 0.0
      %540 = vmatpush2.msra.mxu0 0.0
      %541 = vmatprep.subr.mxu0 0.0
      %542 = vmatpush2.msra.mxu0 0.0
      %543 = vmatprep.subr.mxu0 0.0
      %544 = vmatpush2.msra.mxu0 0.0
      %545 = vmatprep.subr.mxu0 0.0
      %546 = vmatpush2.msra.mxu0 0.0
      %547 = vmatprep.subr.mxu0 0.0
      %548 = vmatpush2.msra.mxu0 0.0
      %549 = vmatprep.subr.mxu0 0.0
      %550 = vmatpush2.msra.mxu0 0.0
      %551 = vmatprep.subr.mxu0 0.0
      %552 = vmatpush2.msra.mxu0 0.0
      %553 = vmatprep.subr.mxu0 0.0
      %554 = vmatpush2.msra.mxu0 0.0
      %555 = vmatprep.subr.mxu0 0.0
      %556 = vmatpush2.msra.mxu0 0.0
      %557 = vmatprep.subr.mxu0 0.0
      %558 = vmatpush2.msra.mxu0 0.0
      %559 = vmatprep.mubr.f32.mxu0 0.0
      %560 = vmatmul.mubr.f32.gmra.mxu0 %v493
      %v561 = vpop.f32.mrf.mxu0
      %v562 = vadd.f32 0.0, %v561
      %v563 = vpop.f32.mrf.mxu0
      %564 = vdwg.mxu0
      %v566 = vsel %vm491, %v490, 0
      %568 = vmatprep.subr.mxu0 0.0
      %569 = vmatpush1.msra.mxu0 0.0
      %570 = vmatprep.subr.mxu0 0.0
      %571 = vmatpush1.msra.mxu0 0.0
      %572 = vmatprep.subr.mxu0 0.0
      %573 = vmatpush1.msra.mxu0 0.0
      %574 = vmatprep.subr.mxu0 0.0
      %575 = vmatpush1.msra.mxu0 0.0
      %576 = vmatprep.subr.mxu0 0.0
      %577 = vmatpush1.msra.mxu0 0.0
      %578 = vmatprep.subr.mxu0 0.0
      %579 = vmatpush1.msra.mxu0 0.0
      %580 = vmatprep.subr.mxu0 0.0
      %581 = vmatpush1.msra.mxu0 0.0
      %582 = vmatprep.subr.mxu0 0.0
      %583 = vmatpush1.msra.mxu0 0.0
      %584 = vmatprep.subr.mxu0 0.0
      %585 = vmatpush1.msra.mxu0 0.0
      %586 = vmatprep.subr.mxu0 0.0
      %587 = vmatpush1.msra.mxu0 0.0
      %588 = vmatprep.subr.mxu0 0.0
      %589 = vmatpush1.msra.mxu0 0.0
      %590 = vmatprep.subr.mxu0 0.0
      %591 = vmatpush1.msra.mxu0 0.0
      %592 = vmatprep.subr.mxu0 0.0
      %593 = vmatpush1.msra.mxu0 %v310
      %594 = vmatprep.subr.mxu0 0.0
      %595 = vmatpush1.msra.mxu0 %v309
      %596 = vmatprep.subr.mxu0 0.0
      %597 = vmatpush1.msra.mxu0 %v308
      %598 = vmatprep.subr.mxu0 0.0
      %599 = vmatpush1.msra.mxu0 %v307
      %600 = vmatprep.subr.mxu0 0.0
      %601 = vmatpush2.msra.mxu0 0.0
      %602 = vmatprep.subr.mxu0 0.0
      %603 = vmatpush2.msra.mxu0 0.0
      %604 = vmatprep.subr.mxu0 0.0
      %605 = vmatpush2.msra.mxu0 0.0
      %606 = vmatprep.subr.mxu0 0.0
      %607 = vmatpush2.msra.mxu0 0.0
      %608 = vmatprep.subr.mxu0 0.0
      %609 = vmatpush2.msra.mxu0 0.0
      %610 = vmatprep.subr.mxu0 0.0
      %611 = vmatpush2.msra.mxu0 0.0
      %612 = vmatprep.subr.mxu0 0.0
      %613 = vmatpush2.msra.mxu0 0.0
      %614 = vmatprep.subr.mxu0 0.0
      %615 = vmatpush2.msra.mxu0 0.0
      %616 = vmatprep.subr.mxu0 0.0
      %617 = vmatpush2.msra.mxu0 0.0
      %618 = vmatprep.subr.mxu0 0.0
      %619 = vmatpush2.msra.mxu0 0.0
      %620 = vmatprep.subr.mxu0 0.0
      %621 = vmatpush2.msra.mxu0 0.0
      %622 = vmatprep.subr.mxu0 0.0
      %623 = vmatpush2.msra.mxu0 0.0
      %624 = vmatprep.subr.mxu0 0.0
      %625 = vmatpush2.msra.mxu0 0.0
      %626 = vmatprep.subr.mxu0 0.0
      %627 = vmatpush2.msra.mxu0 0.0
      %628 = vmatprep.subr.mxu0 0.0
      %629 = vmatpush2.msra.mxu0 0.0
      %630 = vmatprep.subr.mxu0 0.0
      %631 = vmatpush2.msra.mxu0 0.0
      %632 = vmatprep.mubr.f32.mxu0 0.0
      %633 = vmatmul.mubr.f32.gmra.mxu0 %v566
      %v634 = vpop.f32.mrf.mxu0
      %v635 = vadd.f32 0.0, %v634
      %v636 = vpop.f32.mrf.mxu0
      %637 = vdwg.mxu0
      %v638 = vmul.f32 %v635, %v289
      %v639 = vmul.f32 %v562, %v638
      %v640 = vsub.f32 %v290, %v639
      %v641 = vlaneseq
      %v642 = vshrl.u32 %v641, 7
      %v643 = vsub.s32 0, %v642
      %v644 = vrot.slane %v638, %v643
      %v645 = vmul.f32 %v281, %v644
      %v646 = vmul.f32 %v282, %v644
      %v647 = vmul.f32 %v283, %v644
      %v648 = vmul.f32 %v284, %v644
      %v649 = vmul.f32 %v285, %v644
      %v650 = vmul.f32 %v286, %v644
      %v651 = vmul.f32 %v287, %v644
      %v652 = vmul.f32 %v288, %v644
      %v654 = vlaneseq
      %v655 = vshrl.u32 %v654, 7
      %v656 = vsub.s32 0, %v655
      %v657 = vrot.slane %v640, %v656
      %v659 = vadd.f32 %v645, %v657
      %v660 = vadd.f32 %v646, %v657
      %v661 = vadd.f32 %v647, %v657
      %v662 = vadd.f32 %v648, %v657
      %v663 = vadd.f32 %v649, %v657
      %v664 = vadd.f32 %v650, %v657
      %v665 = vadd.f32 %v651, %v657
      %v666 = vadd.f32 %v652, %v657
      %v667 = vxor.u32 %v659, 2147483648
      %v668 = vxor.u32 %v660, 2147483648
      %v669 = vxor.u32 %v661, 2147483648
      %v670 = vxor.u32 %v662, 2147483648
      %v671 = vxor.u32 %v663, 2147483648
      %v672 = vxor.u32 %v664, 2147483648
      %v673 = vxor.u32 %v665, 2147483648
      %v674 = vxor.u32 %v666, 2147483648
      %v675 = vmul.f32 %v667, 1.442695
      %v676 = vpow.pop %v675
      %v677 = vmul.f32 %v668, 1.442695
      %v678 = vpow.pop %v677
      %v679 = vmul.f32 %v669, 1.442695
      %v680 = vpow.pop %v679
      %v681 = vmul.f32 %v670, 1.442695
      %v682 = vpow.pop %v681
      %v683 = vmul.f32 %v671, 1.442695
      %v684 = vpow.pop %v683
      %v685 = vmul.f32 %v672, 1.442695
      %v686 = vpow.pop %v685
      %v687 = vmul.f32 %v673, 1.442695
      %v688 = vpow.pop %v687
      %v689 = vmul.f32 %v674, 1.442695
      %v690 = vpow.pop %v689
      %v691 = vadd.f32 %v676, 1.0
      %v692 = vadd.f32 %v678, 1.0
      %v693 = vadd.f32 %v680, 1.0
      %v694 = vadd.f32 %v682, 1.0
      %v695 = vadd.f32 %v684, 1.0
      %v696 = vadd.f32 %v686, 1.0
      %v697 = vadd.f32 %v688, 1.0
      %v698 = vadd.f32 %v690, 1.0
      %v699 = vrcp.pop %v691
      %v700 = vmul.f32 1.0, %v699
      %v701 = vrcp.pop %v692
      %v702 = vmul.f32 1.0, %v701
      %v703 = vrcp.pop %v693
      %v704 = vmul.f32 1.0, %v703
      %v705 = vrcp.pop %v694
      %v706 = vmul.f32 1.0, %v705
      %v707 = vrcp.pop %v695
      %v708 = vmul.f32 1.0, %v707
      %v709 = vrcp.pop %v696
      %v710 = vmul.f32 1.0, %v709
      %v711 = vrcp.pop %v697
      %v712 = vmul.f32 1.0, %v711
      %v713 = vrcp.pop %v698
      %v714 = vmul.f32 1.0, %v713
      %715 = vst [vmem:[%s265] sm:$0xff] %v700
      %716 = vst [vmem:[%s265 + $0x8] sm:$0xff] %v702
      %717 = vst [vmem:[%s265 + $0x10] sm:$0xff] %v704
      %718 = vst [vmem:[%s265 + $0x18] sm:$0xff] %v706
      %719 = vst [vmem:[%s265 + $0x20] sm:$0xff] %v708
      %720 = vst [vmem:[%s265 + $0x28] sm:$0xff] %v710
      %721 = vst [vmem:[%s265 + $0x30] sm:$0xff] %v712
      %722 = vst [vmem:[%s265 + $0x38] sm:$0xff] %v714
      %p723 = scmp.lt.s32.totalorder %s17, 1
      %s724 = scalar_select %p723, %s17, 1
      %s725 = smul.addr %s724, 8
      %s726 = smul.addr %s725, 8
      %s727 = scalar_lea.vmem %s6, %s726
      // Predicated region
      $region45: #{_lambda_.16} parent=43 // pred_check
        %p728 = pneg %p171
      $region46: #{_lambda_.16} parent=43 // pred_check_branch
        %730 = sbr.rel (%p728) target = $region48
      $region47: #{_lambda_.16} parent=43 // pred_region
        _
      $region48: #{_lambda_.16} parent=43 // pred_fallthru
        _
    $region44: #{_lambda_.16} parent=5 // pred_fallthru
      _
    %p731 = scmp.le.s32.totalorder 2, %s12
    // Predicated region
    $region49: #{_lambda_.16} parent=5 // pred_check
      %p732 = pneg %p731
    $region50: #{_lambda_.16} parent=5 // pred_check_branch
      %734 = sbr.rel (%p732) target = $region52
    $region51: #{_lambda_.16} parent=5 // pred_region
      %s735 = ssub.s32 %s12, 2
      // Predicated region
      $region53: #{_lambda_.16} parent=51 // pred_check
        %p736 = pneg %p177
      $region54: #{_lambda_.16} parent=51 // pred_check_branch
        %738 = sbr.rel (%p736) target = $region56
      $region55: #{_lambda_.16} parent=51 // pred_region
        %p739 = scmp.lt.s32.totalorder %s18, 1
        %s740 = scalar_select %p739, %s18, 1
        %s741 = smul.addr %s740, 8
        %s742 = smul.addr %s741, 8
        %s743 = scalar_lea.vmem %s6, %s742
      $region56: #{_lambda_.16} parent=51 // pred_fallthru
        _
    $region52: #{_lambda_.16} parent=5 // pred_fallthru
      _
  $region6: #{_lambda_.16} parent=0 // loop_footer
    %s16 = sadd.s32 1, %s12
  $region7: #{_lambda_.16} parent=0 // loop_footer_branch
    %11 = sbr.rel target = $region3
  $region8: #{_lambda_.16} parent=0 // loop_exit
    _

// kernel: _lambda_.18
$region0: #{_lambda_.18}
  #allocation0 [shape = 'u32[]', space=smem, size = 0x4, offset = 0x4, fixed_abs, tag = 'smem constant byte address 0x4 - core index']
  #allocation1 [shape = 'u32[144,128]{1,0:T(1,128)}', space=vmem, size = 0x12000, scoped, tag = 'internal scratch']
  %s0 = inlined_call_operand.vmem [shape: bf16[128,128], index: 0, kind: input, shape index: {}]
  %s1 = inlined_call_operand.vmem [shape: bf16[128,384], index: 1, kind: input, shape index: {}]
  %s2 = inlined_call_operand.vmem [shape: f32[1,384], index: 2, kind: input, shape index: {}]
  %s3 = inlined_call_operand.vmem [shape: f32[128,384], index: 3, kind: output, shape index: {}]
  %s4 = sld [smem:[#allocation0]]
  $region45: #{_lambda_.18} parent=0
    _
  %s6 = ssub.s32 1, %s4
  %s7 = scalar_select 0, %s6, %s4
  loop: start=0, step=1, limit=4
  $region2: #{_lambda_.18} parent=0 // loop_pre_header
    _
  $region3: #{_lambda_.18} parent=0 // loop_header
    %s9 = sphi 0, %s13
    %p10 = scmp.ge.s32.totalorder %s9, 4
    %s19 = sphi 0, %s21
    %s22 = sphi 0, %s19
    %s23 = sphi 0, %s22
    %s39 = sphi 0, %s23
    %s43 = sphi 0, %s43
    %s45 = sphi 0, %s43
    %s46 = sphi 0, %s45
    %s60 = sphi 0, %s46
    %s64 = sphi 0, %s64
    %s66 = sphi 0, %s64
    %s67 = sphi 0, %s66
    %s81 = sphi 0, %s67
    %s87 = sphi 0, %s89
    %s90 = sphi 0, %s87
    %s91 = sphi 0, %s90
    %s107 = sphi 0, %s91
  $region4: #{_lambda_.18} parent=0 // loop_header_branch
    %12 = sbr.rel (%p10) target = $region8
  $region5: #{_lambda_.18} parent=0 // loop_body
    %s14 = ssub.s32 %s9, 1
    %s15 = ssub.s32 %s9, 2
    %s16 = sadd.s32 %s9, 1
    %s17 = ssub.s32 %s9, %s16
    %p18 = scmp.eq.s32.totalorder %s17, 0
    %s20 = sadd.s32 %s19, 1
    %s21 = scalar_select %p18, %s19, %s20
    %p24 = pneg %p18
    %p25 = scmp.eq.s32.totalorder %s9, 1
    %p26 = por %p24, %p25
    %p27 = scmp.ne.s32.totalorder %s19, %s22
    %p28 = scmp.eq.s32.totalorder %s9, 0
    %p29 = por %p27, %p28
    %p30 = scmp.ne.s32.totalorder %s19, %s22
    %p31 = scmp.eq.s32.totalorder %s14, 1
    %p32 = por %p30, %p31
    %p33 = scmp.ne.s32.totalorder %s22, %s23
    %p34 = scmp.eq.s32.totalorder %s14, 0
    %p35 = por %p33, %p34
    %p36 = scmp.ne.s32.totalorder %s22, %s23
    %p37 = scmp.eq.s32.totalorder %s15, 1
    %p38 = por %p36, %p37
    %p40 = scmp.ne.s32.totalorder %s23, %s39
    %p41 = scmp.eq.s32.totalorder %s15, 0
    %p42 = por %p40, %p41
    %s44 = sadd.s32 %s43, 1
    %p47 = scmp.eq.s32.totalorder %s9, 1
    %p48 = scmp.ne.s32.totalorder %s43, %s45
    %p49 = scmp.eq.s32.totalorder %s9, 0
    %p50 = por %p48, %p49
    %p51 = scmp.ne.s32.totalorder %s43, %s45
    %p52 = scmp.eq.s32.totalorder %s14, 1
    %p53 = por %p51, %p52
    %p54 = scmp.ne.s32.totalorder %s45, %s46
    %p55 = scmp.eq.s32.totalorder %s14, 0
    %p56 = por %p54, %p55
    %p57 = scmp.ne.s32.totalorder %s45, %s46
    %p58 = scmp.eq.s32.totalorder %s15, 1
    %p59 = por %p57, %p58
    %p61 = scmp.ne.s32.totalorder %s46, %s60
    %p62 = scmp.eq.s32.totalorder %s15, 0
    %p63 = por %p61, %p62
    %s65 = sadd.s32 %s64, 1
    %p68 = scmp.eq.s32.totalorder %s9, 1
    %p69 = scmp.ne.s32.totalorder %s64, %s66
    %p70 = scmp.eq.s32.totalorder %s9, 0
    %p71 = por %p69, %p70
    %p72 = scmp.ne.s32.totalorder %s64, %s66
    %p73 = scmp.eq.s32.totalorder %s14, 1
    %p74 = por %p72, %p73
    %p75 = scmp.ne.s32.totalorder %s66, %s67
    %p76 = scmp.eq.s32.totalorder %s14, 0
    %p77 = por %p75, %p76
    %p78 = scmp.ne.s32.totalorder %s66, %s67
    %p79 = scmp.eq.s32.totalorder %s15, 1
    %p80 = por %p78, %p79
    %p82 = scmp.ne.s32.totalorder %s67, %s81
    %p83 = scmp.eq.s32.totalorder %s15, 0
    %p84 = por %p82, %p83
    %s85 = ssub.s32 %s9, %s16
    %p86 = scmp.eq.s32.totalorder %s85, 0
    %s88 = sadd.s32 %s87, 1
    %s89 = scalar_select %p86, %s87, %s88
    %p92 = pneg %p86
    %p93 = scmp.eq.s32.totalorder %s9, 1
    %p94 = por %p92, %p93
    %p95 = scmp.ne.s32.totalorder %s87, %s90
    %p96 = scmp.eq.s32.totalorder %s9, 0
    %p97 = por %p95, %p96
    %p98 = scmp.ne.s32.totalorder %s87, %s90
    %p99 = scmp.eq.s32.totalorder %s14, 1
    %p100 = por %p98, %p99
    %p101 = scmp.ne.s32.totalorder %s90, %s91
    %p102 = scmp.eq.s32.totalorder %s14, 0
    %p103 = por %p101, %p102
    %p104 = scmp.ne.s32.totalorder %s90, %s91
    %p105 = scmp.eq.s32.totalorder %s15, 1
    %p106 = por %p104, %p105
    %p108 = scmp.ne.s32.totalorder %s91, %s107
    %p109 = scmp.eq.s32.totalorder %s15, 0
    %p110 = por %p108, %p109
    %p111 = scmp.le.s32.totalorder 1, %s9
    %p112 = scmp.lt.s32.totalorder %s9, 3
    %p113 = pnand %p111, %p112
    %p114 = pneg %p113
    // Predicated region
    $region9: #{_lambda_.18} parent=5 // pred_check
      _
    $region10: #{_lambda_.18} parent=5 // pred_check_branch
      %116 = sbr.rel (%p113) target = $region12
    $region11: #{_lambda_.18} parent=5 // pred_region
      %s117 = ssub.s32 %s9, 1
      // Predicated region
      $region13: #{_lambda_.18} parent=11 // pred_check
        %p118 = pneg %p56
      $region14: #{_lambda_.18} parent=11 // pred_check_branch
        %120 = sbr.rel (%p118) target = $region16
      $region15: #{_lambda_.18} parent=11 // pred_region
        _
      $region16: #{_lambda_.18} parent=11 // pred_fallthru
        _
      // Predicated region
      $region17: #{_lambda_.18} parent=11 // pred_check
        %p121 = pneg %p77
      $region18: #{_lambda_.18} parent=11 // pred_check_branch
        %123 = sbr.rel (%p121) target = $region20
      $region19: #{_lambda_.18} parent=11 // pred_region
        _
      $region20: #{_lambda_.18} parent=11 // pred_fallthru
        _
    $region12: #{_lambda_.18} parent=5 // pred_fallthru
      _
    %p124 = scmp.lt.s32.totalorder %s9, 2
    // Predicated region
    $region21: #{_lambda_.18} parent=5 // pred_check
      %p125 = pneg %p124
    $region22: #{_lambda_.18} parent=5 // pred_check_branch
      %127 = sbr.rel (%p125) target = $region24
    $region23: #{_lambda_.18} parent=5 // pred_region
      // Predicated region
      $region25: #{_lambda_.18} parent=23 // pred_check
        %p128 = pneg %p29
      $region26: #{_lambda_.18} parent=23 // pred_check_branch
        %130 = sbr.rel (%p128) target = $region28
      $region27: #{_lambda_.18} parent=23 // pred_region
        %s131 = smul.u32 8, %s9
        %p132 = scmp.lt.s32.totalorder %s131, 15
        %s133 = scalar_select %p132, %s131, 15
        %s134 = smul.addr %s133, 4
        %s135 = scalar_lea.vmem %s0, %s134
        %s136 = smul.u32 8, %s9
      $region28: #{_lambda_.18} parent=23 // pred_fallthru
        _
    $region24: #{_lambda_.18} parent=5 // pred_fallthru
      _
    %p137 = scmp.le.s32.totalorder 1, %s9
    %p138 = scmp.lt.s32.totalorder %s9, 3
    %p139 = pnand %p137, %p138
    %p140 = pneg %p139
    // Predicated region
    $region29: #{_lambda_.18} parent=5 // pred_check
      _
    $region30: #{_lambda_.18} parent=5 // pred_check_branch
      %142 = sbr.rel (%p139) target = $region32
    $region31: #{_lambda_.18} parent=5 // pred_region
      %s143 = ssub.s32 %s9, 1
      %s144 = smul.u32 8, %s14
      %p145 = scmp.lt.s32.totalorder %s144, 15
      %s146 = scalar_select %p145, %s144, 15
      %s147 = smul.addr %s146, 4
      %s148 = scalar_lea.vmem %s0, %s147
      %p149 = pneg %p35
      %p150 = pneg %p32
      %p151 = pneg %p56
      %p152 = pneg %p53
      %p153 = pneg %p77
      %p154 = pneg %p74
      %p155 = pneg %p103
      %p156 = pneg %p100
      %s157 = smul.u32 8, %s14
      %p158 = scmp.lt.s32.totalorder %s157, 15
      %s159 = scalar_select %p158, %s157, 15
      %s160 = smul.addr %s159, 3
      %s161 = smul.addr %s160, 8
      %s162 = scalar_lea.vmem %s3, %s161
      %s163 = smul.u32 8, %s14
      %p164 = scmp.lt.s32.totalorder %s163, 15
      %s165 = scalar_select %p164, %s163, 15
      %s166 = smul.addr %s165, 4
      %s167 = scalar_lea.vmem %s0, %s166
      %s168 = smul.u32 8, %s14
      %s169 = smul.u32 8, %s14
      %p170 = scmp.lt.s32.totalorder %s169, 15
      %s171 = scalar_select %p170, %s169, 15
      %s172 = smul.addr %s171, 3
      %s173 = smul.addr %s172, 8
      %s174 = scalar_lea.vmem %s3, %s173
      %s175 = smul.u32 8, %s14
      %v177 = vld [vmem:[%s167] sm:$0xf]
      %v178 = vld [vmem:[%s167 + $0x4] sm:$0xf]
      %v179 = vld [vmem:[%s167 + $0x8] sm:$0xf]
      %v180 = vld [vmem:[%s167 + $0xc] sm:$0xf]
      %v181 = vld [vmem:[%s167 + $0x10] sm:$0xf]
      %v182 = vld [vmem:[%s167 + $0x14] sm:$0xf]
      %v183 = vld [vmem:[%s167 + $0x18] sm:$0xf]
      %v184 = vld [vmem:[%s167 + $0x1c] sm:$0xf]
      %v185 = vld [vmem:[%s1] sm:$0xff]
      %v186 = vld [vmem:[%s1 + $0x8] sm:$0xf]
      %v187 = vld [vmem:[%s1 + $0xc] sm:$0xff]
      %v188 = vld [vmem:[%s1 + $0x14] sm:$0xf]
      %v189 = vld [vmem:[%s1 + $0x18] sm:$0xff]
      %v190 = vld [vmem:[%s1 + $0x20] sm:$0xf]
      %v191 = vld [vmem:[%s1 + $0x24] sm:$0xff]
      %v192 = vld [vmem:[%s1 + $0x2c] sm:$0xf]
      %v193 = vld [vmem:[%s1 + $0x30] sm:$0xff]
      %v194 = vld [vmem:[%s1 + $0x38] sm:$0xf]
      %v195 = vld [vmem:[%s1 + $0x3c] sm:$0xff]
      %v196 = vld [vmem:[%s1 + $0x44] sm:$0xf]
      %v197 = vld [vmem:[%s1 + $0x48] sm:$0xff]
      %v198 = vld [vmem:[%s1 + $0x50] sm:$0xf]
      %v199 = vld [vmem:[%s1 + $0x54] sm:$0xff]
      %v200 = vld [vmem:[%s1 + $0x5c] sm:$0xf]
      %v201 = vld [vmem:[%s1 + $0x60] sm:$0xff]
      %v202 = vld [vmem:[%s1 + $0x68] sm:$0xf]
      %v203 = vld [vmem:[%s1 + $0x6c] sm:$0xff]
      %v204 = vld [vmem:[%s1 + $0x74] sm:$0xf]
      %v205 = vld [vmem:[%s1 + $0x78] sm:$0xff]
      %v206 = vld [vmem:[%s1 + $0x80] sm:$0xf]
      %v207 = vld [vmem:[%s1 + $0x84] sm:$0xff]
      %v208 = vld [vmem:[%s1 + $0x8c] sm:$0xf]
      %v209 = vld [vmem:[%s1 + $0x90] sm:$0xff]
      %v210 = vld [vmem:[%s1 + $0x98] sm:$0xf]
      %v211 = vld [vmem:[%s1 + $0x9c] sm:$0xff]
      %v212 = vld [vmem:[%s1 + $0xa4] sm:$0xf]
      %v213 = vld [vmem:[%s1 + $0xa8] sm:$0xff]
      %v214 = vld [vmem:[%s1 + $0xb0] sm:$0xf]
      %v215 = vld [vmem:[%s1 + $0xb4] sm:$0xff]
      %v216 = vld [vmem:[%s1 + $0xbc] sm:$0xf]
      %v217 = vld [vmem:[%s2] sm:$0x7]
      %v219 = vlaneseq
      %v220 = vshrl.u32 %v219, 7
      %v221 = vsub.s32 0, %v220
      %v222 = vrot.slane %v217, %v221
      %v223 = vlaneseq
      %v224 = vshrl.u32 %v223, 7
      %v225 = vsub.s32 1, %v224
      %v226 = vrot.slane %v217, %v225
      %v227 = vlaneseq
      %v228 = vshrl.u32 %v227, 7
      %v229 = vsub.s32 2, %v228
      %v230 = vrot.slane %v217, %v229
      %v242 = vunpack.c.l.b16 %v177
      %v243 = vunpack.c.l.b16 %v178
      %v244 = vunpack.c.l.b16 %v179
      %v245 = vunpack.c.l.b16 %v180
      %v246 = vunpack.c.l.b16 %v181
      %v247 = vunpack.c.l.b16 %v182
      %v248 = vunpack.c.l.b16 %v183
      %v249 = vunpack.c.l.b16 %v184
      %v250 = vpack.c.b16 %v243, %v242
      %v251 = vpack.c.b16 %v245, %v244
      %v252 = vpack.c.b16 %v247, %v246
      %v253 = vpack.c.b16 %v249, %v248
      %v290 = vunpack.c.l.b16 %v185
      %v291 = vunpack.c.h.b16 %v185
      %v292 = vunpack.c.l.b16 %v186
      %v293 = vunpack.c.l.b16 %v187
      %v294 = vunpack.c.h.b16 %v187
      %v295 = vunpack.c.l.b16 %v188
      %v296 = vunpack.c.l.b16 %v189
      %v297 = vunpack.c.h.b16 %v189
      %v298 = vunpack.c.l.b16 %v190
      %v299 = vunpack.c.l.b16 %v191
      %v300 = vunpack.c.h.b16 %v191
      %v301 = vunpack.c.l.b16 %v192
      %v302 = vunpack.c.l.b16 %v193
      %v303 = vunpack.c.h.b16 %v193
      %v304 = vunpack.c.l.b16 %v194
      %v305 = vunpack.c.l.b16 %v195
      %v306 = vunpack.c.h.b16 %v195
      %v307 = vunpack.c.l.b16 %v196
      %v308 = vunpack.c.l.b16 %v197
      %v309 = vunpack.c.h.b16 %v197
      %v310 = vunpack.c.l.b16 %v198
      %v311 = vunpack.c.l.b16 %v199
      %v312 = vunpack.c.h.b16 %v199
      %v313 = vunpack.c.l.b16 %v200
      %v314 = vunpack.c.l.b16 %v201
      %v315 = vunpack.c.h.b16 %v201
      %v316 = vunpack.c.l.b16 %v202
      %v317 = vunpack.c.l.b16 %v203
      %v318 = vunpack.c.h.b16 %v203
      %v319 = vunpack.c.l.b16 %v204
      %v320 = vunpack.c.l.b16 %v205
      %v321 = vunpack.c.h.b16 %v205
      %v322 = vunpack.c.l.b16 %v206
      %v323 = vunpack.c.l.b16 %v207
      %v324 = vunpack.c.h.b16 %v207
      %v325 = vunpack.c.l.b16 %v208
      %v326 = vunpack.c.l.b16 %v209
      %v327 = vunpack.c.h.b16 %v209
      %v328 = vunpack.c.l.b16 %v210
      %v329 = vunpack.c.l.b16 %v211
      %v330 = vunpack.c.h.b16 %v211
      %v331 = vunpack.c.l.b16 %v212
      %v332 = vunpack.c.l.b16 %v213
      %v333 = vunpack.c.h.b16 %v213
      %v334 = vunpack.c.l.b16 %v214
      %v335 = vunpack.c.l.b16 %v215
      %v336 = vunpack.c.h.b16 %v215
      %v337 = vunpack.c.l.b16 %v216
      %v338 = vpack.c.b16 %v293, %v290
      %v339 = vpack.c.b16 %v294, %v291
      %v340 = vpack.c.b16 %v295, %v292
      %v341 = vpack.c.b16 %v299, %v296
      %v342 = vpack.c.b16 %v300, %v297
      %v343 = vpack.c.b16 %v301, %v298
      %v344 = vpack.c.b16 %v305, %v302
      %v345 = vpack.c.b16 %v306, %v303
      %v346 = vpack.c.b16 %v307, %v304
      %v347 = vpack.c.b16 %v311, %v308
      %v348 = vpack.c.b16 %v312, %v309
      %v349 = vpack.c.b16 %v313, %v310
      %v350 = vpack.c.b16 %v317, %v314
      %v351 = vpack.c.b16 %v318, %v315
      %v352 = vpack.c.b16 %v319, %v316
      %v353 = vpack.c.b16 %v323, %v320
      %v354 = vpack.c.b16 %v324, %v321
      %v355 = vpack.c.b16 %v325, %v322
      %v356 = vpack.c.b16 %v329, %v326
      %v357 = vpack.c.b16 %v330, %v327
      %v358 = vpack.c.b16 %v331, %v328
      %v359 = vpack.c.b16 %v335, %v332
      %v360 = vpack.c.b16 %v336, %v333
      %v361 = vpack.c.b16 %v337, %v334
      %386 = vmatprep.subr.bf16.mxu0 %v360
      %387 = vmatpush1.bf16.msra.mxu0 %v359
      %388 = vmatprep.subr.bf16.mxu0 %v357
      %389 = vmatpush1.bf16.msra.mxu0 %v356
      %390 = vmatprep.subr.bf16.mxu0 %v354
      %391 = vmatpush1.bf16.msra.mxu0 %v353
      %392 = vmatprep.subr.bf16.mxu0 %v351
      %393 = vmatpush1.bf16.msra.mxu0 %v350
      %394 = vmatprep.subr.bf16.mxu0 %v348
      %395 = vmatpush1.bf16.msra.mxu0 %v347
      %396 = vmatprep.subr.bf16.mxu0 %v345
      %397 = vmatpush1.bf16.msra.mxu0 %v344
      %398 = vmatprep.subr.bf16.mxu0 %v342
      %399 = vmatpush1.bf16.msra.mxu0 %v341
      %400 = vmatprep.subr.bf16.mxu0 %v339
      %401 = vmatpush1.bf16.msra.mxu0 %v338
      %402 = vmatprep.subr.bf16.mxu0 0
      %403 = vmatpush2.bf16.msra.mxu0 0
      %404 = vmatprep.subr.bf16.mxu0 0
      %405 = vmatpush2.bf16.msra.mxu0 0
      %406 = vmatprep.subr.bf16.mxu0 0
      %407 = vmatpush2.bf16.msra.mxu0 0
      %408 = vmatprep.subr.bf16.mxu0 0
      %409 = vmatpush2.bf16.msra.mxu0 0
      %410 = vmatprep.subr.bf16.mxu0 0
      %411 = vmatpush2.bf16.msra.mxu0 0
      %412 = vmatprep.subr.bf16.mxu0 0
      %413 = vmatpush2.bf16.msra.mxu0 0
      %414 = vmatprep.subr.bf16.mxu0 0
      %415 = vmatpush2.bf16.msra.mxu0 0
      %416 = vmatprep.subr.bf16.mxu0 0
      %417 = vmatpush2.bf16.msra.mxu0 0
      %418 = vmatprep.mubr.bf16.mxu0 0
      %419 = vmatmul.mubr.bf16.gmra.mxu0 %v250
      %v420 = vpop.f32.mrf.mxu0
      %v421 = vadd.f32 %v222, %v420
      %v422 = vpop.f32.mrf.mxu0
      %v423 = vadd.f32 %v226, %v422
      %v424 = vpop.f32.mrf.mxu0
      %v425 = vadd.f32 %v222, %v424
      %v426 = vpop.f32.mrf.mxu0
      %v427 = vadd.f32 %v226, %v426
      %428 = vmatprep.mubr.bf16.mxu0 0
      %429 = vmatmul.mubr.bf16.gmra.mxu0 %v251
      %v430 = vpop.f32.mrf.mxu0
      %v431 = vadd.f32 %v222, %v430
      %v432 = vpop.f32.mrf.mxu0
      %v433 = vadd.f32 %v226, %v432
      %v434 = vpop.f32.mrf.mxu0
      %v435 = vadd.f32 %v222, %v434
      %v436 = vpop.f32.mrf.mxu0
      %v437 = vadd.f32 %v226, %v436
      %438 = vmatprep.mubr.bf16.mxu0 0
      %439 = vmatmul.mubr.bf16.gmra.mxu0 %v252
      %v440 = vpop.f32.mrf.mxu0
      %v441 = vadd.f32 %v222, %v440
      %v442 = vpop.f32.mrf.mxu0
      %v443 = vadd.f32 %v226, %v442
      %v444 = vpop.f32.mrf.mxu0
      %v445 = vadd.f32 %v222, %v444
      %v446 = vpop.f32.mrf.mxu0
      %v447 = vadd.f32 %v226, %v446
      %448 = vmatprep.mubr.bf16.mxu0 0
      %449 = vmatmul.mubr.bf16.gmra.mxu0 %v253
      %v450 = vpop.f32.mrf.mxu0
      %v451 = vadd.f32 %v222, %v450
      %v452 = vpop.f32.mrf.mxu0
      %v453 = vadd.f32 %v226, %v452
      %v454 = vpop.f32.mrf.mxu0
      %v455 = vadd.f32 %v222, %v454
      %v456 = vpop.f32.mrf.mxu0
      %v457 = vadd.f32 %v226, %v456
      %458 = vdwg.mxu0
      %459 = vmatprep.subr.bf16.mxu0 0
      %460 = vmatpush1.bf16.msra.mxu0 %v361
      %461 = vmatprep.subr.bf16.mxu0 0
      %462 = vmatpush1.bf16.msra.mxu0 %v358
      %463 = vmatprep.subr.bf16.mxu0 0
      %464 = vmatpush1.bf16.msra.mxu0 %v355
      %465 = vmatprep.subr.bf16.mxu0 0
      %466 = vmatpush1.bf16.msra.mxu0 %v352
      %467 = vmatprep.subr.bf16.mxu0 0
      %468 = vmatpush1.bf16.msra.mxu0 %v349
      %469 = vmatprep.subr.bf16.mxu0 0
      %470 = vmatpush1.bf16.msra.mxu0 %v346
      %471 = vmatprep.subr.bf16.mxu0 0
      %472 = vmatpush1.bf16.msra.mxu0 %v343
      %473 = vmatprep.subr.bf16.mxu0 0
      %474 = vmatpush1.bf16.msra.mxu0 %v340
      %475 = vmatprep.subr.bf16.mxu0 0
      %476 = vmatpush2.bf16.msra.mxu0 0
      %477 = vmatprep.subr.bf16.mxu0 0
      %478 = vmatpush2.bf16.msra.mxu0 0
      %479 = vmatprep.subr.bf16.mxu0 0
      %480 = vmatpush2.bf16.msra.mxu0 0
      %481 = vmatprep.subr.bf16.mxu0 0
      %482 = vmatpush2.bf16.msra.mxu0 0
      %483 = vmatprep.subr.bf16.mxu0 0
      %484 = vmatpush2.bf16.msra.mxu0 0
      %485 = vmatprep.subr.bf16.mxu0 0
      %486 = vmatpush2.bf16.msra.mxu0 0
      %487 = vmatprep.subr.bf16.mxu0 0
      %488 = vmatpush2.bf16.msra.mxu0 0
      %489 = vmatprep.subr.bf16.mxu0 0
      %490 = vmatpush2.bf16.msra.mxu0 0
      %491 = vmatprep.mubr.bf16.mxu0 0
      %492 = vmatmul.mubr.bf16.gmra.mxu0 %v250
      %v493 = vpop.f32.mrf.mxu0
      %v494 = vadd.f32 %v230, %v493
      %v495 = vpop.f32.mrf.mxu0
      %v496 = vpop.f32.mrf.mxu0
      %v497 = vadd.f32 %v230, %v496
      %v498 = vpop.f32.mrf.mxu0
      %499 = vmatprep.mubr.bf16.mxu0 0
      %500 = vmatmul.mubr.bf16.gmra.mxu0 %v251
      %v501 = vpop.f32.mrf.mxu0
      %v502 = vadd.f32 %v230, %v501
      %v503 = vpop.f32.mrf.mxu0
      %v504 = vpop.f32.mrf.mxu0
      %v505 = vadd.f32 %v230, %v504
      %v506 = vpop.f32.mrf.mxu0
      %507 = vmatprep.mubr.bf16.mxu0 0
      %508 = vmatmul.mubr.bf16.gmra.mxu0 %v252
      %v509 = vpop.f32.mrf.mxu0
      %v510 = vadd.f32 %v230, %v509
      %v511 = vpop.f32.mrf.mxu0
      %v512 = vpop.f32.mrf.mxu0
      %v513 = vadd.f32 %v230, %v512
      %v514 = vpop.f32.mrf.mxu0
      %515 = vmatprep.mubr.bf16.mxu0 0
      %516 = vmatmul.mubr.bf16.gmra.mxu0 %v253
      %v517 = vpop.f32.mrf.mxu0
      %v518 = vadd.f32 %v230, %v517
      %v519 = vpop.f32.mrf.mxu0
      %v520 = vpop.f32.mrf.mxu0
      %v521 = vadd.f32 %v230, %v520
      %v522 = vpop.f32.mrf.mxu0
      %523 = vdwg.mxu0
      %524 = vst [vmem:[%s174] sm:$0xff] %v421
      %525 = vst [vmem:[%s174 + $0x8] sm:$0xff] %v423
      %526 = vst [vmem:[%s174 + $0x10] sm:$0xff] %v494
      %527 = vst [vmem:[%s174 + $0x18] sm:$0xff] %v425
      %528 = vst [vmem:[%s174 + $0x20] sm:$0xff] %v427
      %529 = vst [vmem:[%s174 + $0x28] sm:$0xff] %v497
      %530 = vst [vmem:[%s174 + $0x30] sm:$0xff] %v431
      %531 = vst [vmem:[%s174 + $0x38] sm:$0xff] %v433
      %532 = vst [vmem:[%s174 + $0x40] sm:$0xff] %v502
      %533 = vst [vmem:[%s174 + $0x48] sm:$0xff] %v435
      %534 = vst [vmem:[%s174 + $0x50] sm:$0xff] %v437
      %535 = vst [vmem:[%s174 + $0x58] sm:$0xff] %v505
      %536 = vst [vmem:[%s174 + $0x60] sm:$0xff] %v441
      %537 = vst [vmem:[%s174 + $0x68] sm:$0xff] %v443
      %538 = vst [vmem:[%s174 + $0x70] sm:$0xff] %v510
      %539 = vst [vmem:[%s174 + $0x78] sm:$0xff] %v445
      %540 = vst [vmem:[%s174 + $0x80] sm:$0xff] %v447
      %541 = vst [vmem:[%s174 + $0x88] sm:$0xff] %v513
      %542 = vst [vmem:[%s174 + $0x90] sm:$0xff] %v451
      %543 = vst [vmem:[%s174 + $0x98] sm:$0xff] %v453
      %544 = vst [vmem:[%s174 + $0xa0] sm:$0xff] %v518
      %545 = vst [vmem:[%s174 + $0xa8] sm:$0xff] %v455
      %546 = vst [vmem:[%s174 + $0xb0] sm:$0xff] %v457
      %547 = vst [vmem:[%s174 + $0xb8] sm:$0xff] %v521
      %s548 = smul.u32 8, %s14
      %p549 = scmp.lt.s32.totalorder %s548, 15
      %s550 = scalar_select %p549, %s548, 15
      %s551 = smul.addr %s550, 3
      %s552 = smul.addr %s551, 8
      %s553 = scalar_lea.vmem %s3, %s552
      // Predicated region
      $region33: #{_lambda_.18} parent=31 // pred_check
        %p554 = pneg %p100
      $region34: #{_lambda_.18} parent=31 // pred_check_branch
        %556 = sbr.rel (%p554) target = $region36
      $region35: #{_lambda_.18} parent=31 // pred_region
        %s557 = smul.u32 8, %s14
      $region36: #{_lambda_.18} parent=31 // pred_fallthru
        _
    $region32: #{_lambda_.18} parent=5 // pred_fallthru
      _
    %p558 = scmp.le.s32.totalorder 2, %s9
    // Predicated region
    $region37: #{_lambda_.18} parent=5 // pred_check
      %p559 = pneg %p558
    $region38: #{_lambda_.18} parent=5 // pred_check_branch
      %561 = sbr.rel (%p559) target = $region40
    $region39: #{_lambda_.18} parent=5 // pred_region
      %s562 = ssub.s32 %s9, 2
      // Predicated region
      $region41: #{_lambda_.18} parent=39 // pred_check
        %p563 = pneg %p106
      $region42: #{_lambda_.18} parent=39 // pred_check_branch
        %565 = sbr.rel (%p563) target = $region44
      $region43: #{_lambda_.18} parent=39 // pred_region
        %s566 = smul.u32 8, %s15
        %p567 = scmp.lt.s32.totalorder %s566, 15
        %s568 = scalar_select %p567, %s566, 15
        %s569 = smul.addr %s568, 3
        %s570 = smul.addr %s569, 8
        %s571 = scalar_lea.vmem %s3, %s570
      $region44: #{_lambda_.18} parent=39 // pred_fallthru
        _
    $region40: #{_lambda_.18} parent=5 // pred_fallthru
      _
  $region6: #{_lambda_.18} parent=0 // loop_footer
    %s13 = sadd.s32 1, %s9
  $region7: #{_lambda_.18} parent=0 // loop_footer_branch
    %8 = sbr.rel target = $region3
  $region8: #{_lambda_.18} parent=0 // loop_exit
    _

// kernel: _lambda_.14
$region0: #{_lambda_.14}
  #allocation0 [shape = 'u32[]', space=smem, size = 0x4, offset = 0x4, fixed_abs, tag = 'smem constant byte address 0x4 - core index']
  #allocation1 [shape = 'u32[144,128]{1,0:T(1,128)}', space=vmem, size = 0x12000, scoped, tag = 'internal scratch']
  %s0 = inlined_call_operand.vmem [shape: bf16[128,1152], index: 0, kind: input, shape index: {}]
  %s1 = inlined_call_operand.vmem [shape: bf16[1152,128], index: 1, kind: input, shape index: {}]
  %s2 = inlined_call_operand.vmem [shape: f32[1,128], index: 2, kind: input, shape index: {}]
  %s3 = inlined_call_operand.vmem [shape: f32[128,128], index: 3, kind: output, shape index: {}]
  %s4 = sld [smem:[#allocation0]]
  $region45: #{_lambda_.14} parent=0
    _
  %s6 = ssub.s32 1, %s4
  %s7 = scalar_select 0, %s6, %s4
  loop: start=0, step=1, limit=4
  $region2: #{_lambda_.14} parent=0 // loop_pre_header
    _
  $region3: #{_lambda_.14} parent=0 // loop_header
    %s9 = sphi 0, %s13
    %p10 = scmp.ge.s32.totalorder %s9, 4
    %s19 = sphi 0, %s21
    %s22 = sphi 0, %s19
    %s23 = sphi 0, %s22
    %s39 = sphi 0, %s23
    %s43 = sphi 0, %s43
    %s45 = sphi 0, %s43
    %s46 = sphi 0, %s45
    %s60 = sphi 0, %s46
    %s64 = sphi 0, %s64
    %s66 = sphi 0, %s64
    %s67 = sphi 0, %s66
    %s81 = sphi 0, %s67
    %s87 = sphi 0, %s89
    %s90 = sphi 0, %s87
    %s91 = sphi 0, %s90
    %s107 = sphi 0, %s91
  $region4: #{_lambda_.14} parent=0 // loop_header_branch
    %12 = sbr.rel (%p10) target = $region8
  $region5: #{_lambda_.14} parent=0 // loop_body
    %s14 = ssub.s32 %s9, 1
    %s15 = ssub.s32 %s9, 2
    %s16 = sadd.s32 %s9, 1
    %s17 = ssub.s32 %s9, %s16
    %p18 = scmp.eq.s32.totalorder %s17, 0
    %s20 = sadd.s32 %s19, 1
    %s21 = scalar_select %p18, %s19, %s20
    %p24 = pneg %p18
    %p25 = scmp.eq.s32.totalorder %s9, 1
    %p26 = por %p24, %p25
    %p27 = scmp.ne.s32.totalorder %s19, %s22
    %p28 = scmp.eq.s32.totalorder %s9, 0
    %p29 = por %p27, %p28
    %p30 = scmp.ne.s32.totalorder %s19, %s22
    %p31 = scmp.eq.s32.totalorder %s14, 1
    %p32 = por %p30, %p31
    %p33 = scmp.ne.s32.totalorder %s22, %s23
    %p34 = scmp.eq.s32.totalorder %s14, 0
    %p35 = por %p33, %p34
    %p36 = scmp.ne.s32.totalorder %s22, %s23
    %p37 = scmp.eq.s32.totalorder %s15, 1
    %p38 = por %p36, %p37
    %p40 = scmp.ne.s32.totalorder %s23, %s39
    %p41 = scmp.eq.s32.totalorder %s15, 0
    %p42 = por %p40, %p41
    %s44 = sadd.s32 %s43, 1
    %p47 = scmp.eq.s32.totalorder %s9, 1
    %p48 = scmp.ne.s32.totalorder %s43, %s45
    %p49 = scmp.eq.s32.totalorder %s9, 0
    %p50 = por %p48, %p49
    %p51 = scmp.ne.s32.totalorder %s43, %s45
    %p52 = scmp.eq.s32.totalorder %s14, 1
    %p53 = por %p51, %p52
    %p54 = scmp.ne.s32.totalorder %s45, %s46
    %p55 = scmp.eq.s32.totalorder %s14, 0
    %p56 = por %p54, %p55
    %p57 = scmp.ne.s32.totalorder %s45, %s46
    %p58 = scmp.eq.s32.totalorder %s15, 1
    %p59 = por %p57, %p58
    %p61 = scmp.ne.s32.totalorder %s46, %s60
    %p62 = scmp.eq.s32.totalorder %s15, 0
    %p63 = por %p61, %p62
    %s65 = sadd.s32 %s64, 1
    %p68 = scmp.eq.s32.totalorder %s9, 1
    %p69 = scmp.ne.s32.totalorder %s64, %s66
    %p70 = scmp.eq.s32.totalorder %s9, 0
    %p71 = por %p69, %p70
    %p72 = scmp.ne.s32.totalorder %s64, %s66
    %p73 = scmp.eq.s32.totalorder %s14, 1
    %p74 = por %p72, %p73
    %p75 = scmp.ne.s32.totalorder %s66, %s67
    %p76 = scmp.eq.s32.totalorder %s14, 0
    %p77 = por %p75, %p76
    %p78 = scmp.ne.s32.totalorder %s66, %s67
    %p79 = scmp.eq.s32.totalorder %s15, 1
    %p80 = por %p78, %p79
    %p82 = scmp.ne.s32.totalorder %s67, %s81
    %p83 = scmp.eq.s32.totalorder %s15, 0
    %p84 = por %p82, %p83
    %s85 = ssub.s32 %s9, %s16
    %p86 = scmp.eq.s32.totalorder %s85, 0
    %s88 = sadd.s32 %s87, 1
    %s89 = scalar_select %p86, %s87, %s88
    %p92 = pneg %p86
    %p93 = scmp.eq.s32.totalorder %s9, 1
    %p94 = por %p92, %p93
    %p95 = scmp.ne.s32.totalorder %s87, %s90
    %p96 = scmp.eq.s32.totalorder %s9, 0
    %p97 = por %p95, %p96
    %p98 = scmp.ne.s32.totalorder %s87, %s90
    %p99 = scmp.eq.s32.totalorder %s14, 1
    %p100 = por %p98, %p99
    %p101 = scmp.ne.s32.totalorder %s90, %s91
    %p102 = scmp.eq.s32.totalorder %s14, 0
    %p103 = por %p101, %p102
    %p104 = scmp.ne.s32.totalorder %s90, %s91
    %p105 = scmp.eq.s32.totalorder %s15, 1
    %p106 = por %p104, %p105
    %p108 = scmp.ne.s32.totalorder %s91, %s107
    %p109 = scmp.eq.s32.totalorder %s15, 0
    %p110 = por %p108, %p109
    %p111 = scmp.le.s32.totalorder 1, %s9
    %p112 = scmp.lt.s32.totalorder %s9, 3
    %p113 = pnand %p111, %p112
    %p114 = pneg %p113
    // Predicated region
    $region9: #{_lambda_.14} parent=5 // pred_check
      _
    $region10: #{_lambda_.14} parent=5 // pred_check_branch
      %116 = sbr.rel (%p113) target = $region12
    $region11: #{_lambda_.14} parent=5 // pred_region
      %s117 = ssub.s32 %s9, 1
      // Predicated region
      $region13: #{_lambda_.14} parent=11 // pred_check
        %p118 = pneg %p56
      $region14: #{_lambda_.14} parent=11 // pred_check_branch
        %120 = sbr.rel (%p118) target = $region16
      $region15: #{_lambda_.14} parent=11 // pred_region
        _
      $region16: #{_lambda_.14} parent=11 // pred_fallthru
        _
      // Predicated region
      $region17: #{_lambda_.14} parent=11 // pred_check
        %p121 = pneg %p77
      $region18: #{_lambda_.14} parent=11 // pred_check_branch
        %123 = sbr.rel (%p121) target = $region20
      $region19: #{_lambda_.14} parent=11 // pred_region
        _
      $region20: #{_lambda_.14} parent=11 // pred_fallthru
        _
    $region12: #{_lambda_.14} parent=5 // pred_fallthru
      _
    %p124 = scmp.lt.s32.totalorder %s9, 2
    // Predicated region
    $region21: #{_lambda_.14} parent=5 // pred_check
      %p125 = pneg %p124
    $region22: #{_lambda_.14} parent=5 // pred_check_branch
      %127 = sbr.rel (%p125) target = $region24
    $region23: #{_lambda_.14} parent=5 // pred_region
      // Predicated region
      $region25: #{_lambda_.14} parent=23 // pred_check
        %p128 = pneg %p29
      $region26: #{_lambda_.14} parent=23 // pred_check_branch
        %130 = sbr.rel (%p128) target = $region28
      $region27: #{_lambda_.14} parent=23 // pred_region
        %s131 = smul.u32 8, %s9
        %p132 = scmp.lt.s32.totalorder %s131, 15
        %s133 = scalar_select %p132, %s131, 15
        %s134 = smul.addr %s133, 9
        %s135 = smul.addr %s134, 4
        %s136 = scalar_lea.vmem %s0, %s135
        %s137 = smul.u32 8, %s9
      $region28: #{_lambda_.14} parent=23 // pred_fallthru
        _
    $region24: #{_lambda_.14} parent=5 // pred_fallthru
      _
    %p138 = scmp.le.s32.totalorder 1, %s9
    %p139 = scmp.lt.s32.totalorder %s9, 3
    %p140 = pnand %p138, %p139
    %p141 = pneg %p140
    // Predicated region
    $region29: #{_lambda_.14} parent=5 // pred_check
      _
    $region30: #{_lambda_.14} parent=5 // pred_check_branch
      %143 = sbr.rel (%p140) target = $region32
    $region31: #{_lambda_.14} parent=5 // pred_region
      %s144 = ssub.s32 %s9, 1
      %s145 = smul.u32 8, %s14
      %p146 = scmp.lt.s32.totalorder %s145, 15
      %s147 = scalar_select %p146, %s145, 15
      %s148 = smul.addr %s147, 9
      %s149 = smul.addr %s148, 4
      %s150 = scalar_lea.vmem %s0, %s149
      %p151 = pneg %p35
      %p152 = pneg %p32
      %p153 = pneg %p56
      %p154 = pneg %p53
      %p155 = pneg %p77
      %p156 = pneg %p74
      %p157 = pneg %p103
      %p158 = pneg %p100
      %s159 = smul.u32 8, %s14
      %p160 = scmp.lt.s32.totalorder %s159, 15
      %s161 = scalar_select %p160, %s159, 15
      %s162 = smul.addr %s161, 8
      %s163 = scalar_lea.vmem %s3, %s162
      %s164 = smul.u32 8, %s14
      %p165 = scmp.lt.s32.totalorder %s164, 15
      %s166 = scalar_select %p165, %s164, 15
      %s167 = smul.addr %s166, 9
      %s168 = smul.addr %s167, 4
      %s169 = scalar_lea.vmem %s0, %s168
      %s170 = smul.u32 8, %s14
      %s171 = smul.u32 8, %s14
      %p172 = scmp.lt.s32.totalorder %s171, 15
      %s173 = scalar_select %p172, %s171, 15
      %s174 = smul.addr %s173, 8
      %s175 = scalar_lea.vmem %s3, %s174
      %s176 = smul.u32 8, %s14
      %v178 = vld [vmem:[%s169] sm:$0xff]
      %v179 = vld [vmem:[%s169 + $0x8] sm:$0xff]
      %v180 = vld [vmem:[%s169 + $0x10] sm:$0xff]
      %v181 = vld [vmem:[%s169 + $0x18] sm:$0xff]
      %v182 = vld [vmem:[%s169 + $0x20] sm:$0xf]
      %v183 = vld [vmem:[%s169 + $0x24] sm:$0xff]
      %v184 = vld [vmem:[%s169 + $0x2c] sm:$0xff]
      %v185 = vld [vmem:[%s169 + $0x34] sm:$0xff]
      %v186 = vld [vmem:[%s169 + $0x3c] sm:$0xff]
      %v187 = vld [vmem:[%s169 + $0x44] sm:$0xf]
      %v188 = vld [vmem:[%s169 + $0x48] sm:$0xff]
      %v189 = vld [vmem:[%s169 + $0x50] sm:$0xff]
      %v190 = vld [vmem:[%s169 + $0x58] sm:$0xff]
      %v191 = vld [vmem:[%s169 + $0x60] sm:$0xff]
      %v192 = vld [vmem:[%s169 + $0x68] sm:$0xf]
      %v193 = vld [vmem:[%s169 + $0x6c] sm:$0xff]
      %v194 = vld [vmem:[%s169 + $0x74] sm:$0xff]
      %v195 = vld [vmem:[%s169 + $0x7c] sm:$0xff]
      %v196 = vld [vmem:[%s169 + $0x84] sm:$0xff]
      %v197 = vld [vmem:[%s169 + $0x8c] sm:$0xf]
      %v198 = vld [vmem:[%s169 + $0x90] sm:$0xff]
      %v199 = vld [vmem:[%s169 + $0x98] sm:$0xff]
      %v200 = vld [vmem:[%s169 + $0xa0] sm:$0xff]
      %v201 = vld [vmem:[%s169 + $0xa8] sm:$0xff]
      %v202 = vld [vmem:[%s169 + $0xb0] sm:$0xf]
      %v203 = vld [vmem:[%s169 + $0xb4] sm:$0xff]
      %v204 = vld [vmem:[%s169 + $0xbc] sm:$0xff]
      %v205 = vld [vmem:[%s169 + $0xc4] sm:$0xff]
      %v206 = vld [vmem:[%s169 + $0xcc] sm:$0xff]
      %v207 = vld [vmem:[%s169 + $0xd4] sm:$0xf]
      %v208 = vld [vmem:[%s169 + $0xd8] sm:$0xff]
      %v209 = vld [vmem:[%s169 + $0xe0] sm:$0xff]
      %v210 = vld [vmem:[%s169 + $0xe8] sm:$0xff]
      %v211 = vld [vmem:[%s169 + $0xf0] sm:$0xff]
      %v212 = vld [vmem:[%s169 + $0xf8] sm:$0xf]
      %v213 = vld [vmem:[%s169 + $0xfc] sm:$0xff]
      %v214 = vld [vmem:[%s169 + $0x104] sm:$0xff]
      %v215 = vld [vmem:[%s169 + $0x10c] sm:$0xff]
      %v216 = vld [vmem:[%s169 + $0x114] sm:$0xff]
      %v217 = vld [vmem:[%s169 + $0x11c] sm:$0xf]
      %v218 = vld [vmem:[%s1] sm:$0xf]
      %v219 = vld [vmem:[%s1 + $0x4] sm:$0xf]
      %v220 = vld [vmem:[%s1 + $0x8] sm:$0xf]
      %v221 = vld [vmem:[%s1 + $0xc] sm:$0xf]
      %v222 = vld [vmem:[%s1 + $0x10] sm:$0xf]
      %v223 = vld [vmem:[%s1 + $0x14] sm:$0xf]
      %v224 = vld [vmem:[%s1 + $0x18] sm:$0xf]
      %v225 = vld [vmem:[%s1 + $0x1c] sm:$0xf]
      %v226 = vld [vmem:[%s1 + $0x20] sm:$0xf]
      %v227 = vld [vmem:[%s1 + $0x24] sm:$0xf]
      %v228 = vld [vmem:[%s1 + $0x28] sm:$0xf]
      %v229 = vld [vmem:[%s1 + $0x2c] sm:$0xf]
      %v230 = vld [vmem:[%s1 + $0x30] sm:$0xf]
      %v231 = vld [vmem:[%s1 + $0x34] sm:$0xf]
      %v232 = vld [vmem:[%s1 + $0x38] sm:$0xf]
      %v233 = vld [vmem:[%s1 + $0x3c] sm:$0xf]
      %v234 = vld [vmem:[%s1 + $0x40] sm:$0xf]
      %v235 = vld [vmem:[%s1 + $0x44] sm:$0xf]
      %v236 = vld [vmem:[%s1 + $0x48] sm:$0xf]
      %v237 = vld [vmem:[%s1 + $0x4c] sm:$0xf]
      %v238 = vld [vmem:[%s1 + $0x50] sm:$0xf]
      %v239 = vld [vmem:[%s1 + $0x54] sm:$0xf]
      %v240 = vld [vmem:[%s1 + $0x58] sm:$0xf]
      %v241 = vld [vmem:[%s1 + $0x5c] sm:$0xf]
      %v242 = vld [vmem:[%s1 + $0x60] sm:$0xf]
      %v243 = vld [vmem:[%s1 + $0x64] sm:$0xf]
      %v244 = vld [vmem:[%s1 + $0x68] sm:$0xf]
      %v245 = vld [vmem:[%s1 + $0x6c] sm:$0xf]
      %v246 = vld [vmem:[%s1 + $0x70] sm:$0xf]
      %v247 = vld [vmem:[%s1 + $0x74] sm:$0xf]
      %v248 = vld [vmem:[%s1 + $0x78] sm:$0xf]
      %v249 = vld [vmem:[%s1 + $0x7c] sm:$0xf]
      %v250 = vld [vmem:[%s1 + $0x80] sm:$0xf]
      %v251 = vld [vmem:[%s1 + $0x84] sm:$0xf]
      %v252 = vld [vmem:[%s1 + $0x88] sm:$0xf]
      %v253 = vld [vmem:[%s1 + $0x8c] sm:$0xf]
      %v254 = vld [vmem:[%s1 + $0x90] sm:$0xf]
      %v255 = vld [vmem:[%s1 + $0x94] sm:$0xf]
      %v256 = vld [vmem:[%s1 + $0x98] sm:$0xf]
      %v257 = vld [vmem:[%s1 + $0x9c] sm:$0xf]
      %v258 = vld [vmem:[%s1 + $0xa0] sm:$0xf]
      %v259 = vld [vmem:[%s1 + $0xa4] sm:$0xf]
      %v260 = vld [vmem:[%s1 + $0xa8] sm:$0xf]
      %v261 = vld [vmem:[%s1 + $0xac] sm:$0xf]
      %v262 = vld [vmem:[%s1 + $0xb0] sm:$0xf]
      %v263 = vld [vmem:[%s1 + $0xb4] sm:$0xf]
      %v264 = vld [vmem:[%s1 + $0xb8] sm:$0xf]
      %v265 = vld [vmem:[%s1 + $0xbc] sm:$0xf]
      %v266 = vld [vmem:[%s1 + $0xc0] sm:$0xf]
      %v267 = vld [vmem:[%s1 + $0xc4] sm:$0xf]
      %v268 = vld [vmem:[%s1 + $0xc8] sm:$0xf]
      %v269 = vld [vmem:[%s1 + $0xcc] sm:$0xf]
      %v270 = vld [vmem:[%s1 + $0xd0] sm:$0xf]
      %v271 = vld [vmem:[%s1 + $0xd4] sm:$0xf]
      %v272 = vld [vmem:[%s1 + $0xd8] sm:$0xf]
      %v273 = vld [vmem:[%s1 + $0xdc] sm:$0xf]
      %v274 = vld [vmem:[%s1 + $0xe0] sm:$0xf]
      %v275 = vld [vmem:[%s1 + $0xe4] sm:$0xf]
      %v276 = vld [vmem:[%s1 + $0xe8] sm:$0xf]
      %v277 = vld [vmem:[%s1 + $0xec] sm:$0xf]
      %v278 = vld [vmem:[%s1 + $0xf0] sm:$0xf]
      %v279 = vld [vmem:[%s1 + $0xf4] sm:$0xf]
      %v280 = vld [vmem:[%s1 + $0xf8] sm:$0xf]
      %v281 = vld [vmem:[%s1 + $0xfc] sm:$0xf]
      %v282 = vld [vmem:[%s1 + $0x100] sm:$0xf]
      %v283 = vld [vmem:[%s1 + $0x104] sm:$0xf]
      %v284 = vld [vmem:[%s1 + $0x108] sm:$0xf]
      %v285 = vld [vmem:[%s1 + $0x10c] sm:$0xf]
      %v286 = vld [vmem:[%s1 + $0x110] sm:$0xf]
      %v287 = vld [vmem:[%s1 + $0x114] sm:$0xf]
      %v288 = vld [vmem:[%s1 + $0x118] sm:$0xf]
      %v289 = vld [vmem:[%s1 + $0x11c] sm:$0xf]
      %v290 = vld [vmem:[%s1 + $0x120] sm:$0xf]
      %v291 = vld [vmem:[%s1 + $0x124] sm:$0xf]
      %v292 = vld [vmem:[%s1 + $0x128] sm:$0xf]
      %v293 = vld [vmem:[%s1 + $0x12c] sm:$0xf]
      %v294 = vld [vmem:[%s1 + $0x130] sm:$0xf]
      %v295 = vld [vmem:[%s1 + $0x134] sm:$0xf]
      %v296 = vld [vmem:[%s1 + $0x138] sm:$0xf]
      %v297 = vld [vmem:[%s1 + $0x13c] sm:$0xf]
      %v298 = vld [vmem:[%s1 + $0x140] sm:$0xf]
      %v299 = vld [vmem:[%s1 + $0x144] sm:$0xf]
      %v300 = vld [vmem:[%s1 + $0x148] sm:$0xf]
      %v301 = vld [vmem:[%s1 + $0x14c] sm:$0xf]
      %v302 = vld [vmem:[%s1 + $0x150] sm:$0xf]
      %v303 = vld [vmem:[%s1 + $0x154] sm:$0xf]
      %v304 = vld [vmem:[%s1 + $0x158] sm:$0xf]
      %v305 = vld [vmem:[%s1 + $0x15c] sm:$0xf]
      %v306 = vld [vmem:[%s1 + $0x160] sm:$0xf]
      %v307 = vld [vmem:[%s1 + $0x164] sm:$0xf]
      %v308 = vld [vmem:[%s1 + $0x168] sm:$0xf]
      %v309 = vld [vmem:[%s1 + $0x16c] sm:$0xf]
      %v310 = vld [vmem:[%s1 + $0x170] sm:$0xf]
      %v311 = vld [vmem:[%s1 + $0x174] sm:$0xf]
      %v312 = vld [vmem:[%s1 + $0x178] sm:$0xf]
      %v313 = vld [vmem:[%s1 + $0x17c] sm:$0xf]
      %v314 = vld [vmem:[%s1 + $0x180] sm:$0xf]
      %v315 = vld [vmem:[%s1 + $0x184] sm:$0xf]
      %v316 = vld [vmem:[%s1 + $0x188] sm:$0xf]
      %v317 = vld [vmem:[%s1 + $0x18c] sm:$0xf]
      %v318 = vld [vmem:[%s1 + $0x190] sm:$0xf]
      %v319 = vld [vmem:[%s1 + $0x194] sm:$0xf]
      %v320 = vld [vmem:[%s1 + $0x198] sm:$0xf]
      %v321 = vld [vmem:[%s1 + $0x19c] sm:$0xf]
      %v322 = vld [vmem:[%s1 + $0x1a0] sm:$0xf]
      %v323 = vld [vmem:[%s1 + $0x1a4] sm:$0xf]
      %v324 = vld [vmem:[%s1 + $0x1a8] sm:$0xf]
      %v325 = vld [vmem:[%s1 + $0x1ac] sm:$0xf]
      %v326 = vld [vmem:[%s1 + $0x1b0] sm:$0xf]
      %v327 = vld [vmem:[%s1 + $0x1b4] sm:$0xf]
      %v328 = vld [vmem:[%s1 + $0x1b8] sm:$0xf]
      %v329 = vld [vmem:[%s1 + $0x1bc] sm:$0xf]
      %v330 = vld [vmem:[%s1 + $0x1c0] sm:$0xf]
      %v331 = vld [vmem:[%s1 + $0x1c4] sm:$0xf]
      %v332 = vld [vmem:[%s1 + $0x1c8] sm:$0xf]
      %v333 = vld [vmem:[%s1 + $0x1cc] sm:$0xf]
      %v334 = vld [vmem:[%s1 + $0x1d0] sm:$0xf]
      %v335 = vld [vmem:[%s1 + $0x1d4] sm:$0xf]
      %v336 = vld [vmem:[%s1 + $0x1d8] sm:$0xf]
      %v337 = vld [vmem:[%s1 + $0x1dc] sm:$0xf]
      %v338 = vld [vmem:[%s1 + $0x1e0] sm:$0xf]
      %v339 = vld [vmem:[%s1 + $0x1e4] sm:$0xf]
      %v340 = vld [vmem:[%s1 + $0x1e8] sm:$0xf]
      %v341 = vld [vmem:[%s1 + $0x1ec] sm:$0xf]
      %v342 = vld [vmem:[%s1 + $0x1f0] sm:$0xf]
      %v343 = vld [vmem:[%s1 + $0x1f4] sm:$0xf]
      %v344 = vld [vmem:[%s1 + $0x1f8] sm:$0xf]
      %v345 = vld [vmem:[%s1 + $0x1fc] sm:$0xf]
      %v346 = vld [vmem:[%s1 + $0x200] sm:$0xf]
      %v347 = vld [vmem:[%s1 + $0x204] sm:$0xf]
      %v348 = vld [vmem:[%s1 + $0x208] sm:$0xf]
      %v349 = vld [vmem:[%s1 + $0x20c] sm:$0xf]
      %v350 = vld [vmem:[%s1 + $0x210] sm:$0xf]
      %v351 = vld [vmem:[%s1 + $0x214] sm:$0xf]
      %v352 = vld [vmem:[%s1 + $0x218] sm:$0xf]
      %v353 = vld [vmem:[%s1 + $0x21c] sm:$0xf]
      %v354 = vld [vmem:[%s1 + $0x220] sm:$0xf]
      %v355 = vld [vmem:[%s1 + $0x224] sm:$0xf]
      %v356 = vld [vmem:[%s1 + $0x228] sm:$0xf]
      %v357 = vld [vmem:[%s1 + $0x22c] sm:$0xf]
      %v358 = vld [vmem:[%s1 + $0x230] sm:$0xf]
      %v359 = vld [vmem:[%s1 + $0x234] sm:$0xf]
      %v360 = vld [vmem:[%s1 + $0x238] sm:$0xf]
      %v361 = vld [vmem:[%s1 + $0x23c] sm:$0xf]
      %v362 = vld [vmem:[%s2] sm:$0x1]
      %v364 = vlaneseq
      %v365 = vshrl.u32 %v364, 7
      %v366 = vsub.s32 0, %v365
      %v367 = vrot.slane %v362, %v366
      %v409 = vunpack.c.l.b16 %v178
      %v410 = vunpack.c.h.b16 %v178
      %v411 = vunpack.c.l.b16 %v179
      %v412 = vunpack.c.h.b16 %v179
      %v413 = vunpack.c.l.b16 %v180
      %v414 = vunpack.c.h.b16 %v180
      %v415 = vunpack.c.l.b16 %v181
      %v416 = vunpack.c.h.b16 %v181
      %v417 = vunpack.c.l.b16 %v182
      %v418 = vunpack.c.l.b16 %v183
      %v419 = vunpack.c.h.b16 %v183
      %v420 = vunpack.c.l.b16 %v184
      %v421 = vunpack.c.h.b16 %v184
      %v422 = vunpack.c.l.b16 %v185
      %v423 = vunpack.c.h.b16 %v185
      %v424 = vunpack.c.l.b16 %v186
      %v425 = vunpack.c.h.b16 %v186
      %v426 = vunpack.c.l.b16 %v187
      %v427 = vunpack.c.l.b16 %v188
      %v428 = vunpack.c.h.b16 %v188
      %v429 = vunpack.c.l.b16 %v189
      %v430 = vunpack.c.h.b16 %v189
      %v431 = vunpack.c.l.b16 %v190
      %v432 = vunpack.c.h.b16 %v190
      %v433 = vunpack.c.l.b16 %v191
      %v434 = vunpack.c.h.b16 %v191
      %v435 = vunpack.c.l.b16 %v192
      %v436 = vunpack.c.l.b16 %v193
      %v437 = vunpack.c.h.b16 %v193
      %v438 = vunpack.c.l.b16 %v194
      %v439 = vunpack.c.h.b16 %v194
      %v440 = vunpack.c.l.b16 %v195
      %v441 = vunpack.c.h.b16 %v195
      %v442 = vunpack.c.l.b16 %v196
      %v443 = vunpack.c.h.b16 %v196
      %v444 = vunpack.c.l.b16 %v197
      %v445 = vunpack.c.l.b16 %v198
      %v446 = vunpack.c.h.b16 %v198
      %v447 = vunpack.c.l.b16 %v199
      %v448 = vunpack.c.h.b16 %v199
      %v449 = vunpack.c.l.b16 %v200
      %v450 = vunpack.c.h.b16 %v200
      %v451 = vunpack.c.l.b16 %v201
      %v452 = vunpack.c.h.b16 %v201
      %v453 = vunpack.c.l.b16 %v202
      %v454 = vunpack.c.l.b16 %v203
      %v455 = vunpack.c.h.b16 %v203
      %v456 = vunpack.c.l.b16 %v204
      %v457 = vunpack.c.h.b16 %v204
      %v458 = vunpack.c.l.b16 %v205
      %v459 = vunpack.c.h.b16 %v205
      %v460 = vunpack.c.l.b16 %v206
      %v461 = vunpack.c.h.b16 %v206
      %v462 = vunpack.c.l.b16 %v207
      %v463 = vunpack.c.l.b16 %v208
      %v464 = vunpack.c.h.b16 %v208
      %v465 = vunpack.c.l.b16 %v209
      %v466 = vunpack.c.h.b16 %v209
      %v467 = vunpack.c.l.b16 %v210
      %v468 = vunpack.c.h.b16 %v210
      %v469 = vunpack.c.l.b16 %v211
      %v470 = vunpack.c.h.b16 %v211
      %v471 = vunpack.c.l.b16 %v212
      %v472 = vunpack.c.l.b16 %v213
      %v473 = vunpack.c.h.b16 %v213
      %v474 = vunpack.c.l.b16 %v214
      %v475 = vunpack.c.h.b16 %v214
      %v476 = vunpack.c.l.b16 %v215
      %v477 = vunpack.c.h.b16 %v215
      %v478 = vunpack.c.l.b16 %v216
      %v479 = vunpack.c.h.b16 %v216
      %v480 = vunpack.c.l.b16 %v217
      %v481 = vpack.c.b16 %v418, %v409
      %v482 = vpack.c.b16 %v419, %v410
      %v483 = vpack.c.b16 %v420, %v411
      %v484 = vpack.c.b16 %v421, %v412
      %v485 = vpack.c.b16 %v422, %v413
      %v486 = vpack.c.b16 %v423, %v414
      %v487 = vpack.c.b16 %v424, %v415
      %v488 = vpack.c.b16 %v425, %v416
      %v489 = vpack.c.b16 %v426, %v417
      %v490 = vpack.c.b16 %v436, %v427
      %v491 = vpack.c.b16 %v437, %v428
      %v492 = vpack.c.b16 %v438, %v429
      %v493 = vpack.c.b16 %v439, %v430
      %v494 = vpack.c.b16 %v440, %v431
      %v495 = vpack.c.b16 %v441, %v432
      %v496 = vpack.c.b16 %v442, %v433
      %v497 = vpack.c.b16 %v443, %v434
      %v498 = vpack.c.b16 %v444, %v435
      %v499 = vpack.c.b16 %v454, %v445
      %v500 = vpack.c.b16 %v455, %v446
      %v501 = vpack.c.b16 %v456, %v447
      %v502 = vpack.c.b16 %v457, %v448
      %v503 = vpack.c.b16 %v458, %v449
      %v504 = vpack.c.b16 %v459, %v450
      %v505 = vpack.c.b16 %v460, %v451
      %v506 = vpack.c.b16 %v461, %v452
      %v507 = vpack.c.b16 %v462, %v453
      %v508 = vpack.c.b16 %v472, %v463
      %v509 = vpack.c.b16 %v473, %v464
      %v510 = vpack.c.b16 %v474, %v465
      %v511 = vpack.c.b16 %v475, %v466
      %v512 = vpack.c.b16 %v476, %v467
      %v513 = vpack.c.b16 %v477, %v468
      %v514 = vpack.c.b16 %v478, %v469
      %v515 = vpack.c.b16 %v479, %v470
      %v516 = vpack.c.b16 %v480, %v471
      %v697 = vunpack.c.l.b16 %v218
      %v698 = vunpack.c.l.b16 %v219
      %v699 = vunpack.c.l.b16 %v220
      %v700 = vunpack.c.l.b16 %v221
      %v701 = vunpack.c.l.b16 %v222
      %v702 = vunpack.c.l.b16 %v223
      %v703 = vunpack.c.l.b16 %v224
      %v704 = vunpack.c.l.b16 %v225
      %v705 = vunpack.c.l.b16 %v226
      %v706 = vunpack.c.l.b16 %v227
      %v707 = vunpack.c.l.b16 %v228
      %v708 = vunpack.c.l.b16 %v229
      %v709 = vunpack.c.l.b16 %v230
      %v710 = vunpack.c.l.b16 %v231
      %v711 = vunpack.c.l.b16 %v232
      %v712 = vunpack.c.l.b16 %v233
      %v713 = vunpack.c.l.b16 %v234
      %v714 = vunpack.c.l.b16 %v235
      %v715 = vunpack.c.l.b16 %v236
      %v716 = vunpack.c.l.b16 %v237
      %v717 = vunpack.c.l.b16 %v238
      %v718 = vunpack.c.l.b16 %v239
      %v719 = vunpack.c.l.b16 %v240
      %v720 = vunpack.c.l.b16 %v241
      %v721 = vunpack.c.l.b16 %v242
      %v722 = vunpack.c.l.b16 %v243
      %v723 = vunpack.c.l.b16 %v244
      %v724 = vunpack.c.l.b16 %v245
      %v725 = vunpack.c.l.b16 %v246
      %v726 = vunpack.c.l.b16 %v247
      %v727 = vunpack.c.l.b16 %v248
      %v728 = vunpack.c.l.b16 %v249
      %v729 = vunpack.c.l.b16 %v250
      %v730 = vunpack.c.l.b16 %v251
      %v731 = vunpack.c.l.b16 %v252
      %v732 = vunpack.c.l.b16 %v253
      %v733 = vunpack.c.l.b16 %v254
      %v734 = vunpack.c.l.b16 %v255
      %v735 = vunpack.c.l.b16 %v256
      %v736 = vunpack.c.l.b16 %v257
      %v737 = vunpack.c.l.b16 %v258
      %v738 = vunpack.c.l.b16 %v259
      %v739 = vunpack.c.l.b16 %v260
      %v740 = vunpack.c.l.b16 %v261
      %v741 = vunpack.c.l.b16 %v262
      %v742 = vunpack.c.l.b16 %v263
      %v743 = vunpack.c.l.b16 %v264
      %v744 = vunpack.c.l.b16 %v265
      %v745 = vunpack.c.l.b16 %v266
      %v746 = vunpack.c.l.b16 %v267
      %v747 = vunpack.c.l.b16 %v268
      %v748 = vunpack.c.l.b16 %v269
      %v749 = vunpack.c.l.b16 %v270
      %v750 = vunpack.c.l.b16 %v271
      %v751 = vunpack.c.l.b16 %v272
      %v752 = vunpack.c.l.b16 %v273
      %v753 = vunpack.c.l.b16 %v274
      %v754 = vunpack.c.l.b16 %v275
      %v755 = vunpack.c.l.b16 %v276
      %v756 = vunpack.c.l.b16 %v277
      %v757 = vunpack.c.l.b16 %v278
      %v758 = vunpack.c.l.b16 %v279
      %v759 = vunpack.c.l.b16 %v280
      %v760 = vunpack.c.l.b16 %v281
      %v761 = vunpack.c.l.b16 %v282
      %v762 = vunpack.c.l.b16 %v283
      %v763 = vunpack.c.l.b16 %v284
      %v764 = vunpack.c.l.b16 %v285
      %v765 = vunpack.c.l.b16 %v286
      %v766 = vunpack.c.l.b16 %v287
      %v767 = vunpack.c.l.b16 %v288
      %v768 = vunpack.c.l.b16 %v289
      %v769 = vunpack.c.l.b16 %v290
      %v770 = vunpack.c.l.b16 %v291
      %v771 = vunpack.c.l.b16 %v292
      %v772 = vunpack.c.l.b16 %v293
      %v773 = vunpack.c.l.b16 %v294
      %v774 = vunpack.c.l.b16 %v295
      %v775 = vunpack.c.l.b16 %v296
      %v776 = vunpack.c.l.b16 %v297
      %v777 = vunpack.c.l.b16 %v298
      %v778 = vunpack.c.l.b16 %v299
      %v779 = vunpack.c.l.b16 %v300
      %v780 = vunpack.c.l.b16 %v301
      %v781 = vunpack.c.l.b16 %v302
      %v782 = vunpack.c.l.b16 %v303
      %v783 = vunpack.c.l.b16 %v304
      %v784 = vunpack.c.l.b16 %v305
      %v785 = vunpack.c.l.b16 %v306
      %v786 = vunpack.c.l.b16 %v307
      %v787 = vunpack.c.l.b16 %v308
      %v788 = vunpack.c.l.b16 %v309
      %v789 = vunpack.c.l.b16 %v310
      %v790 = vunpack.c.l.b16 %v311
      %v791 = vunpack.c.l.b16 %v312
      %v792 = vunpack.c.l.b16 %v313
      %v793 = vunpack.c.l.b16 %v314
      %v794 = vunpack.c.l.b16 %v315
      %v795 = vunpack.c.l.b16 %v316
      %v796 = vunpack.c.l.b16 %v317
      %v797 = vunpack.c.l.b16 %v318
      %v798 = vunpack.c.l.b16 %v319
      %v799 = vunpack.c.l.b16 %v320
      %v800 = vunpack.c.l.b16 %v321
      %v801 = vunpack.c.l.b16 %v322
      %v802 = vunpack.c.l.b16 %v323
      %v803 = vunpack.c.l.b16 %v324
      %v804 = vunpack.c.l.b16 %v325
      %v805 = vunpack.c.l.b16 %v326
      %v806 = vunpack.c.l.b16 %v327
      %v807 = vunpack.c.l.b16 %v328
      %v808 = vunpack.c.l.b16 %v329
      %v809 = vunpack.c.l.b16 %v330
      %v810 = vunpack.c.l.b16 %v331
      %v811 = vunpack.c.l.b16 %v332
      %v812 = vunpack.c.l.b16 %v333
      %v813 = vunpack.c.l.b16 %v334
      %v814 = vunpack.c.l.b16 %v335
      %v815 = vunpack.c.l.b16 %v336
      %v816 = vunpack.c.l.b16 %v337
      %v817 = vunpack.c.l.b16 %v338
      %v818 = vunpack.c.l.b16 %v339
      %v819 = vunpack.c.l.b16 %v340
      %v820 = vunpack.c.l.b16 %v341
      %v821 = vunpack.c.l.b16 %v342
      %v822 = vunpack.c.l.b16 %v343
      %v823 = vunpack.c.l.b16 %v344
      %v824 = vunpack.c.l.b16 %v345
      %v825 = vunpack.c.l.b16 %v346
      %v826 = vunpack.c.l.b16 %v347
      %v827 = vunpack.c.l.b16 %v348
      %v828 = vunpack.c.l.b16 %v349
      %v829 = vunpack.c.l.b16 %v350
      %v830 = vunpack.c.l.b16 %v351
      %v831 = vunpack.c.l.b16 %v352
      %v832 = vunpack.c.l.b16 %v353
      %v833 = vunpack.c.l.b16 %v354
      %v834 = vunpack.c.l.b16 %v355
      %v835 = vunpack.c.l.b16 %v356
      %v836 = vunpack.c.l.b16 %v357
      %v837 = vunpack.c.l.b16 %v358
      %v838 = vunpack.c.l.b16 %v359
      %v839 = vunpack.c.l.b16 %v360
      %v840 = vunpack.c.l.b16 %v361
      %v841 = vpack.c.b16 %v698, %v697
      %v842 = vpack.c.b16 %v700, %v699
      %v843 = vpack.c.b16 %v702, %v701
      %v844 = vpack.c.b16 %v704, %v703
      %v845 = vpack.c.b16 %v706, %v705
      %v846 = vpack.c.b16 %v708, %v707
      %v847 = vpack.c.b16 %v710, %v709
      %v848 = vpack.c.b16 %v712, %v711
      %v849 = vpack.c.b16 %v714, %v713
      %v850 = vpack.c.b16 %v716, %v715
      %v851 = vpack.c.b16 %v718, %v717
      %v852 = vpack.c.b16 %v720, %v719
      %v853 = vpack.c.b16 %v722, %v721
      %v854 = vpack.c.b16 %v724, %v723
      %v855 = vpack.c.b16 %v726, %v725
      %v856 = vpack.c.b16 %v728, %v727
      %v857 = vpack.c.b16 %v730, %v729
      %v858 = vpack.c.b16 %v732, %v731
      %v859 = vpack.c.b16 %v734, %v733
      %v860 = vpack.c.b16 %v736, %v735
      %v861 = vpack.c.b16 %v738, %v737
      %v862 = vpack.c.b16 %v740, %v739
      %v863 = vpack.c.b16 %v742, %v741
      %v864 = vpack.c.b16 %v744, %v743
      %v865 = vpack.c.b16 %v746, %v745
      %v866 = vpack.c.b16 %v748, %v747
      %v867 = vpack.c.b16 %v750, %v749
      %v868 = vpack.c.b16 %v752, %v751
      %v869 = vpack.c.b16 %v754, %v753
      %v870 = vpack.c.b16 %v756, %v755
      %v871 = vpack.c.b16 %v758, %v757
      %v872 = vpack.c.b16 %v760, %v759
      %v873 = vpack.c.b16 %v762, %v761
      %v874 = vpack.c.b16 %v764, %v763
      %v875 = vpack.c.b16 %v766, %v765
      %v876 = vpack.c.b16 %v768, %v767
      %v877 = vpack.c.b16 %v770, %v769
      %v878 = vpack.c.b16 %v772, %v771
      %v879 = vpack.c.b16 %v774, %v773
      %v880 = vpack.c.b16 %v776, %v775
      %v881 = vpack.c.b16 %v778, %v777
      %v882 = vpack.c.b16 %v780, %v779
      %v883 = vpack.c.b16 %v782, %v781
      %v884 = vpack.c.b16 %v784, %v783
      %v885 = vpack.c.b16 %v786, %v785
      %v886 = vpack.c.b16 %v788, %v787
      %v887 = vpack.c.b16 %v790, %v789
      %v888 = vpack.c.b16 %v792, %v791
      %v889 = vpack.c.b16 %v794, %v793
      %v890 = vpack.c.b16 %v796, %v795
      %v891 = vpack.c.b16 %v798, %v797
      %v892 = vpack.c.b16 %v800, %v799
      %v893 = vpack.c.b16 %v802, %v801
      %v894 = vpack.c.b16 %v804, %v803
      %v895 = vpack.c.b16 %v806, %v805
      %v896 = vpack.c.b16 %v808, %v807
      %v897 = vpack.c.b16 %v810, %v809
      %v898 = vpack.c.b16 %v812, %v811
      %v899 = vpack.c.b16 %v814, %v813
      %v900 = vpack.c.b16 %v816, %v815
      %v901 = vpack.c.b16 %v818, %v817
      %v902 = vpack.c.b16 %v820, %v819
      %v903 = vpack.c.b16 %v822, %v821
      %v904 = vpack.c.b16 %v824, %v823
      %v905 = vpack.c.b16 %v826, %v825
      %v906 = vpack.c.b16 %v828, %v827
      %v907 = vpack.c.b16 %v830, %v829
      %v908 = vpack.c.b16 %v832, %v831
      %v909 = vpack.c.b16 %v834, %v833
      %v910 = vpack.c.b16 %v836, %v835
      %v911 = vpack.c.b16 %v838, %v837
      %v912 = vpack.c.b16 %v840, %v839
      %985 = vmatprep.subr.bf16.mxu0 0
      %986 = vmatpush1.bf16.msra.mxu0 %v848
      %987 = vmatprep.subr.bf16.mxu0 0
      %988 = vmatpush1.bf16.msra.mxu0 %v847
      %989 = vmatprep.subr.bf16.mxu0 0
      %990 = vmatpush1.bf16.msra.mxu0 %v846
      %991 = vmatprep.subr.bf16.mxu0 0
      %992 = vmatpush1.bf16.msra.mxu0 %v845
      %993 = vmatprep.subr.bf16.mxu0 0
      %994 = vmatpush1.bf16.msra.mxu0 %v844
      %995 = vmatprep.subr.bf16.mxu0 0
      %996 = vmatpush1.bf16.msra.mxu0 %v843
      %997 = vmatprep.subr.bf16.mxu0 0
      %998 = vmatpush1.bf16.msra.mxu0 %v842
      %999 = vmatprep.subr.bf16.mxu0 0
      %1000 = vmatpush1.bf16.msra.mxu0 %v841
      %1001 = vmatprep.subr.bf16.mxu0 0
      %1002 = vmatpush2.bf16.msra.mxu0 %v856
      %1003 = vmatprep.subr.bf16.mxu0 0
      %1004 = vmatpush2.bf16.msra.mxu0 %v855
      %1005 = vmatprep.subr.bf16.mxu0 0
      %1006 = vmatpush2.bf16.msra.mxu0 %v854
      %1007 = vmatprep.subr.bf16.mxu0 0
      %1008 = vmatpush2.bf16.msra.mxu0 %v853
      %1009 = vmatprep.subr.bf16.mxu0 0
      %1010 = vmatpush2.bf16.msra.mxu0 %v852
      %1011 = vmatprep.subr.bf16.mxu0 0
      %1012 = vmatpush2.bf16.msra.mxu0 %v851
      %1013 = vmatprep.subr.bf16.mxu0 0
      %1014 = vmatpush2.bf16.msra.mxu0 %v850
      %1015 = vmatprep.subr.bf16.mxu0 0
      %1016 = vmatpush2.bf16.msra.mxu0 %v849
      %1017 = vmatprep.mubr.bf16.mxu0 %v482
      %1018 = vmatmul.mubr.bf16.gmra.mxu0 %v481
      %v1019 = vpop.f32.mrf.mxu0
      %v1020 = vadd.f32 %v367, %v1019
      %v1021 = vpop.f32.mrf.mxu0
      %v1022 = vpop.f32.mrf.mxu0
      %v1023 = vadd.f32 %v367, %v1022
      %v1024 = vpop.f32.mrf.mxu0
      %1025 = vmatprep.mubr.bf16.mxu0 %v491
      %1026 = vmatmul.mubr.bf16.gmra.mxu0 %v490
      %v1027 = vpop.f32.mrf.mxu0
      %v1028 = vadd.f32 %v367, %v1027
      %v1029 = vpop.f32.mrf.mxu0
      %v1030 = vpop.f32.mrf.mxu0
      %v1031 = vadd.f32 %v367, %v1030
      %v1032 = vpop.f32.mrf.mxu0
      %1033 = vmatprep.mubr.bf16.mxu0 %v500
      %1034 = vmatmul.mubr.bf16.gmra.mxu0 %v499
      %v1035 = vpop.f32.mrf.mxu0
      %v1036 = vadd.f32 %v367, %v1035
      %v1037 = vpop.f32.mrf.mxu0
      %v1038 = vpop.f32.mrf.mxu0
      %v1039 = vadd.f32 %v367, %v1038
      %v1040 = vpop.f32.mrf.mxu0
      %1041 = vmatprep.mubr.bf16.mxu0 %v509
      %1042 = vmatmul.mubr.bf16.gmra.mxu0 %v508
      %v1043 = vpop.f32.mrf.mxu0
      %v1044 = vadd.f32 %v367, %v1043
      %v1045 = vpop.f32.mrf.mxu0
      %v1046 = vpop.f32.mrf.mxu0
      %v1047 = vadd.f32 %v367, %v1046
      %v1048 = vpop.f32.mrf.mxu0
      %1049 = vdwg.mxu0
      %1050 = vmatprep.subr.bf16.mxu0 0
      %1051 = vmatpush1.bf16.msra.mxu0 %v864
      %1052 = vmatprep.subr.bf16.mxu0 0
      %1053 = vmatpush1.bf16.msra.mxu0 %v863
      %1054 = vmatprep.subr.bf16.mxu0 0
      %1055 = vmatpush1.bf16.msra.mxu0 %v862
      %1056 = vmatprep.subr.bf16.mxu0 0
      %1057 = vmatpush1.bf16.msra.mxu0 %v861
      %1058 = vmatprep.subr.bf16.mxu0 0
      %1059 = vmatpush1.bf16.msra.mxu0 %v860
      %1060 = vmatprep.subr.bf16.mxu0 0
      %1061 = vmatpush1.bf16.msra.mxu0 %v859
      %1062 = vmatprep.subr.bf16.mxu0 0
      %1063 = vmatpush1.bf16.msra.mxu0 %v858
      %1064 = vmatprep.subr.bf16.mxu0 0
      %1065 = vmatpush1.bf16.msra.mxu0 %v857
      %1066 = vmatprep.subr.bf16.mxu0 0
      %1067 = vmatpush2.bf16.msra.mxu0 %v872
      %1068 = vmatprep.subr.bf16.mxu0 0
      %1069 = vmatpush2.bf16.msra.mxu0 %v871
      %1070 = vmatprep.subr.bf16.mxu0 0
      %1071 = vmatpush2.bf16.msra.mxu0 %v870
      %1072 = vmatprep.subr.bf16.mxu0 0
      %1073 = vmatpush2.bf16.msra.mxu0 %v869
      %1074 = vmatprep.subr.bf16.mxu0 0
      %1075 = vmatpush2.bf16.msra.mxu0 %v868
      %1076 = vmatprep.subr.bf16.mxu0 0
      %1077 = vmatpush2.bf16.msra.mxu0 %v867
      %1078 = vmatprep.subr.bf16.mxu0 0
      %1079 = vmatpush2.bf16.msra.mxu0 %v866
      %1080 = vmatprep.subr.bf16.mxu0 0
      %1081 = vmatpush2.bf16.msra.mxu0 %v865
      %1082 = vmatprep.mubr.bf16.mxu0 %v484
      %1083 = vmatmul.mubr.bf16.gmra.mxu0 %v483
      %v1084 = vpop.f32.mrf.mxu0
      %v1085 = vadd.f32 %v1020, %v1084
      %v1086 = vpop.f32.mrf.mxu0
      %v1087 = vpop.f32.mrf.mxu0
      %v1088 = vadd.f32 %v1023, %v1087
      %v1089 = vpop.f32.mrf.mxu0
      %1090 = vmatprep.mubr.bf16.mxu0 %v493
      %1091 = vmatmul.mubr.bf16.gmra.mxu0 %v492
      %v1092 = vpop.f32.mrf.mxu0
      %v1093 = vadd.f32 %v1028, %v1092
      %v1094 = vpop.f32.mrf.mxu0
      %v1095 = vpop.f32.mrf.mxu0
      %v1096 = vadd.f32 %v1031, %v1095
      %v1097 = vpop.f32.mrf.mxu0
      %1098 = vmatprep.mubr.bf16.mxu0 %v502
      %1099 = vmatmul.mubr.bf16.gmra.mxu0 %v501
      %v1100 = vpop.f32.mrf.mxu0
      %v1101 = vadd.f32 %v1036, %v1100
      %v1102 = vpop.f32.mrf.mxu0
      %v1103 = vpop.f32.mrf.mxu0
      %v1104 = vadd.f32 %v1039, %v1103
      %v1105 = vpop.f32.mrf.mxu0
      %1106 = vmatprep.mubr.bf16.mxu0 %v511
      %1107 = vmatmul.mubr.bf16.gmra.mxu0 %v510
      %v1108 = vpop.f32.mrf.mxu0
      %v1109 = vadd.f32 %v1044, %v1108
      %v1110 = vpop.f32.mrf.mxu0
      %v1111 = vpop.f32.mrf.mxu0
      %v1112 = vadd.f32 %v1047, %v1111
      %v1113 = vpop.f32.mrf.mxu0
      %1114 = vdwg.mxu0
      %1115 = vmatprep.subr.bf16.mxu0 0
      %1116 = vmatpush1.bf16.msra.mxu0 %v880
      %1117 = vmatprep.subr.bf16.mxu0 0
      %1118 = vmatpush1.bf16.msra.mxu0 %v879
      %1119 = vmatprep.subr.bf16.mxu0 0
      %1120 = vmatpush1.bf16.msra.mxu0 %v878
      %1121 = vmatprep.subr.bf16.mxu0 0
      %1122 = vmatpush1.bf16.msra.mxu0 %v877
      %1123 = vmatprep.subr.bf16.mxu0 0
      %1124 = vmatpush1.bf16.msra.mxu0 %v876
      %1125 = vmatprep.subr.bf16.mxu0 0
      %1126 = vmatpush1.bf16.msra.mxu0 %v875
      %1127 = vmatprep.subr.bf16.mxu0 0
      %1128 = vmatpush1.bf16.msra.mxu0 %v874
      %1129 = vmatprep.subr.bf16.mxu0 0
      %1130 = vmatpush1.bf16.msra.mxu0 %v873
      %1131 = vmatprep.subr.bf16.mxu0 0
      %1132 = vmatpush2.bf16.msra.mxu0 %v888
      %1133 = vmatprep.subr.bf16.mxu0 0
      %1134 = vmatpush2.bf16.msra.mxu0 %v887
      %1135 = vmatprep.subr.bf16.mxu0 0
      %1136 = vmatpush2.bf16.msra.mxu0 %v886
      %1137 = vmatprep.subr.bf16.mxu0 0
      %1138 = vmatpush2.bf16.msra.mxu0 %v885
      %1139 = vmatprep.subr.bf16.mxu0 0
      %1140 = vmatpush2.bf16.msra.mxu0 %v884
      %1141 = vmatprep.subr.bf16.mxu0 0
      %1142 = vmatpush2.bf16.msra.mxu0 %v883
      %1143 = vmatprep.subr.bf16.mxu0 0
      %1144 = vmatpush2.bf16.msra.mxu0 %v882
      %1145 = vmatprep.subr.bf16.mxu0 0
      %1146 = vmatpush2.bf16.msra.mxu0 %v881
      %1147 = vmatprep.mubr.bf16.mxu0 %v486
      %1148 = vmatmul.mubr.bf16.gmra.mxu0 %v485
      %v1149 = vpop.f32.mrf.mxu0
      %v1150 = vadd.f32 %v1085, %v1149
      %v1151 = vpop.f32.mrf.mxu0
      %v1152 = vpop.f32.mrf.mxu0
      %v1153 = vadd.f32 %v1088, %v1152
      %v1154 = vpop.f32.mrf.mxu0
      %1155 = vmatprep.mubr.bf16.mxu0 %v495
      %1156 = vmatmul.mubr.bf16.gmra.mxu0 %v494
      %v1157 = vpop.f32.mrf.mxu0
      %v1158 = vadd.f32 %v1093, %v1157
      %v1159 = vpop.f32.mrf.mxu0
      %v1160 = vpop.f32.mrf.mxu0
      %v1161 = vadd.f32 %v1096, %v1160
      %v1162 = vpop.f32.mrf.mxu0
      %1163 = vmatprep.mubr.bf16.mxu0 %v504
      %1164 = vmatmul.mubr.bf16.gmra.mxu0 %v503
      %v1165 = vpop.f32.mrf.mxu0
      %v1166 = vadd.f32 %v1101, %v1165
      %v1167 = vpop.f32.mrf.mxu0
      %v1168 = vpop.f32.mrf.mxu0
      %v1169 = vadd.f32 %v1104, %v1168
      %v1170 = vpop.f32.mrf.mxu0
      %1171 = vmatprep.mubr.bf16.mxu0 %v513
      %1172 = vmatmul.mubr.bf16.gmra.mxu0 %v512
      %v1173 = vpop.f32.mrf.mxu0
      %v1174 = vadd.f32 %v1109, %v1173
      %v1175 = vpop.f32.mrf.mxu0
      %v1176 = vpop.f32.mrf.mxu0
      %v1177 = vadd.f32 %v1112, %v1176
      %v1178 = vpop.f32.mrf.mxu0
      %1179 = vdwg.mxu0
      %1180 = vmatprep.subr.bf16.mxu0 0
      %1181 = vmatpush1.bf16.msra.mxu0 %v896
      %1182 = vmatprep.subr.bf16.mxu0 0
      %1183 = vmatpush1.bf16.msra.mxu0 %v895
      %1184 = vmatprep.subr.bf16.mxu0 0
      %1185 = vmatpush1.bf16.msra.mxu0 %v894
      %1186 = vmatprep.subr.bf16.mxu0 0
      %1187 = vmatpush1.bf16.msra.mxu0 %v893
      %1188 = vmatprep.subr.bf16.mxu0 0
      %1189 = vmatpush1.bf16.msra.mxu0 %v892
      %1190 = vmatprep.subr.bf16.mxu0 0
      %1191 = vmatpush1.bf16.msra.mxu0 %v891
      %1192 = vmatprep.subr.bf16.mxu0 0
      %1193 = vmatpush1.bf16.msra.mxu0 %v890
      %1194 = vmatprep.subr.bf16.mxu0 0
      %1195 = vmatpush1.bf16.msra.mxu0 %v889
      %1196 = vmatprep.subr.bf16.mxu0 0
      %1197 = vmatpush2.bf16.msra.mxu0 %v904
      %1198 = vmatprep.subr.bf16.mxu0 0
      %1199 = vmatpush2.bf16.msra.mxu0 %v903
      %1200 = vmatprep.subr.bf16.mxu0 0
      %1201 = vmatpush2.bf16.msra.mxu0 %v902
      %1202 = vmatprep.subr.bf16.mxu0 0
      %1203 = vmatpush2.bf16.msra.mxu0 %v901
      %1204 = vmatprep.subr.bf16.mxu0 0
      %1205 = vmatpush2.bf16.msra.mxu0 %v900
      %1206 = vmatprep.subr.bf16.mxu0 0
      %1207 = vmatpush2.bf16.msra.mxu0 %v899
      %1208 = vmatprep.subr.bf16.mxu0 0
      %1209 = vmatpush2.bf16.msra.mxu0 %v898
      %1210 = vmatprep.subr.bf16.mxu0 0
      %1211 = vmatpush2.bf16.msra.mxu0 %v897
      %1212 = vmatprep.mubr.bf16.mxu0 %v488
      %1213 = vmatmul.mubr.bf16.gmra.mxu0 %v487
      %v1214 = vpop.f32.mrf.mxu0
      %v1215 = vadd.f32 %v1150, %v1214
      %v1216 = vpop.f32.mrf.mxu0
      %v1217 = vpop.f32.mrf.mxu0
      %v1218 = vadd.f32 %v1153, %v1217
      %v1219 = vpop.f32.mrf.mxu0
      %1220 = vmatprep.mubr.bf16.mxu0 %v497
      %1221 = vmatmul.mubr.bf16.gmra.mxu0 %v496
      %v1222 = vpop.f32.mrf.mxu0
      %v1223 = vadd.f32 %v1158, %v1222
      %v1224 = vpop.f32.mrf.mxu0
      %v1225 = vpop.f32.mrf.mxu0
      %v1226 = vadd.f32 %v1161, %v1225
      %v1227 = vpop.f32.mrf.mxu0
      %1228 = vmatprep.mubr.bf16.mxu0 %v506
      %1229 = vmatmul.mubr.bf16.gmra.mxu0 %v505
      %v1230 = vpop.f32.mrf.mxu0
      %v1231 = vadd.f32 %v1166, %v1230
      %v1232 = vpop.f32.mrf.mxu0
      %v1233 = vpop.f32.mrf.mxu0
      %v1234 = vadd.f32 %v1169, %v1233
      %v1235 = vpop.f32.mrf.mxu0
      %1236 = vmatprep.mubr.bf16.mxu0 %v515
      %1237 = vmatmul.mubr.bf16.gmra.mxu0 %v514
      %v1238 = vpop.f32.mrf.mxu0
      %v1239 = vadd.f32 %v1174, %v1238
      %v1240 = vpop.f32.mrf.mxu0
      %v1241 = vpop.f32.mrf.mxu0
      %v1242 = vadd.f32 %v1177, %v1241
      %v1243 = vpop.f32.mrf.mxu0
      %1244 = vdwg.mxu0
      %1245 = vmatprep.subr.bf16.mxu0 0
      %1246 = vmatpush1.bf16.msra.mxu0 %v912
      %1247 = vmatprep.subr.bf16.mxu0 0
      %1248 = vmatpush1.bf16.msra.mxu0 %v911
      %1249 = vmatprep.subr.bf16.mxu0 0
      %1250 = vmatpush1.bf16.msra.mxu0 %v910
      %1251 = vmatprep.subr.bf16.mxu0 0
      %1252 = vmatpush1.bf16.msra.mxu0 %v909
      %1253 = vmatprep.subr.bf16.mxu0 0
      %1254 = vmatpush1.bf16.msra.mxu0 %v908
      %1255 = vmatprep.subr.bf16.mxu0 0
      %1256 = vmatpush1.bf16.msra.mxu0 %v907
      %1257 = vmatprep.subr.bf16.mxu0 0
      %1258 = vmatpush1.bf16.msra.mxu0 %v906
      %1259 = vmatprep.subr.bf16.mxu0 0
      %1260 = vmatpush1.bf16.msra.mxu0 %v905
      %1261 = vmatprep.subr.bf16.mxu0 0
      %1262 = vmatpush2.bf16.msra.mxu0 0
      %1263 = vmatprep.subr.bf16.mxu0 0
      %1264 = vmatpush2.bf16.msra.mxu0 0
      %1265 = vmatprep.subr.bf16.mxu0 0
      %1266 = vmatpush2.bf16.msra.mxu0 0
      %1267 = vmatprep.subr.bf16.mxu0 0
      %1268 = vmatpush2.bf16.msra.mxu0 0
      %1269 = vmatprep.subr.bf16.mxu0 0
      %1270 = vmatpush2.bf16.msra.mxu0 0
      %1271 = vmatprep.subr.bf16.mxu0 0
      %1272 = vmatpush2.bf16.msra.mxu0 0
      %1273 = vmatprep.subr.bf16.mxu0 0
      %1274 = vmatpush2.bf16.msra.mxu0 0
      %1275 = vmatprep.subr.bf16.mxu0 0
      %1276 = vmatpush2.bf16.msra.mxu0 0
      %1277 = vmatprep.mubr.bf16.mxu0 0
      %1278 = vmatmul.mubr.bf16.gmra.mxu0 %v489
      %v1279 = vpop.f32.mrf.mxu0
      %v1280 = vadd.f32 %v1215, %v1279
      %v1281 = vpop.f32.mrf.mxu0
      %v1282 = vpop.f32.mrf.mxu0
      %v1283 = vadd.f32 %v1218, %v1282
      %v1284 = vpop.f32.mrf.mxu0
      %1285 = vmatprep.mubr.bf16.mxu0 0
      %1286 = vmatmul.mubr.bf16.gmra.mxu0 %v498
      %v1287 = vpop.f32.mrf.mxu0
      %v1288 = vadd.f32 %v1223, %v1287
      %v1289 = vpop.f32.mrf.mxu0
      %v1290 = vpop.f32.mrf.mxu0
      %v1291 = vadd.f32 %v1226, %v1290
      %v1292 = vpop.f32.mrf.mxu0
      %1293 = vmatprep.mubr.bf16.mxu0 0
      %1294 = vmatmul.mubr.bf16.gmra.mxu0 %v507
      %v1295 = vpop.f32.mrf.mxu0
      %v1296 = vadd.f32 %v1231, %v1295
      %v1297 = vpop.f32.mrf.mxu0
      %v1298 = vpop.f32.mrf.mxu0
      %v1299 = vadd.f32 %v1234, %v1298
      %v1300 = vpop.f32.mrf.mxu0
      %1301 = vmatprep.mubr.bf16.mxu0 0
      %1302 = vmatmul.mubr.bf16.gmra.mxu0 %v516
      %v1303 = vpop.f32.mrf.mxu0
      %v1304 = vadd.f32 %v1239, %v1303
      %v1305 = vpop.f32.mrf.mxu0
      %v1306 = vpop.f32.mrf.mxu0
      %v1307 = vadd.f32 %v1242, %v1306
      %v1308 = vpop.f32.mrf.mxu0
      %1309 = vdwg.mxu0
      %1310 = vst [vmem:[%s175] sm:$0xff] %v1280
      %1311 = vst [vmem:[%s175 + $0x8] sm:$0xff] %v1283
      %1312 = vst [vmem:[%s175 + $0x10] sm:$0xff] %v1288
      %1313 = vst [vmem:[%s175 + $0x18] sm:$0xff] %v1291
      %1314 = vst [vmem:[%s175 + $0x20] sm:$0xff] %v1296
      %1315 = vst [vmem:[%s175 + $0x28] sm:$0xff] %v1299
      %1316 = vst [vmem:[%s175 + $0x30] sm:$0xff] %v1304
      %1317 = vst [vmem:[%s175 + $0x38] sm:$0xff] %v1307
      %s1318 = smul.u32 8, %s14
      %p1319 = scmp.lt.s32.totalorder %s1318, 15
      %s1320 = scalar_select %p1319, %s1318, 15
      %s1321 = smul.addr %s1320, 8
      %s1322 = scalar_lea.vmem %s3, %s1321
      // Predicated region
      $region33: #{_lambda_.14} parent=31 // pred_check
        %p1323 = pneg %p100
      $region34: #{_lambda_.14} parent=31 // pred_check_branch
        %1325 = sbr.rel (%p1323) target = $region36
      $region35: #{_lambda_.14} parent=31 // pred_region
        %s1326 = smul.u32 8, %s14
      $region36: #{_lambda_.14} parent=31 // pred_fallthru
        _
    $region32: #{_lambda_.14} parent=5 // pred_fallthru
      _
    %p1327 = scmp.le.s32.totalorder 2, %s9
    // Predicated region
    $region37: #{_lambda_.14} parent=5 // pred_check
      %p1328 = pneg %p1327
    $region38: #{_lambda_.14} parent=5 // pred_check_branch
      %1330 = sbr.rel (%p1328) target = $region40
    $region39: #{_lambda_.14} parent=5 // pred_region
      %s1331 = ssub.s32 %s9, 2
      // Predicated region
      $region41: #{_lambda_.14} parent=39 // pred_check
        %p1332 = pneg %p106
      $region42: #{_lambda_.14} parent=39 // pred_check_branch
        %1334 = sbr.rel (%p1332) target = $region44
      $region43: #{_lambda_.14} parent=39 // pred_region
        %s1335 = smul.u32 8, %s15
        %p1336 = scmp.lt.s32.totalorder %s1335, 15
        %s1337 = scalar_select %p1336, %s1335, 15
        %s1338 = smul.addr %s1337, 8
        %s1339 = scalar_lea.vmem %s3, %s1338
      $region44: #{_lambda_.14} parent=39 // pred_fallthru
        _
    $region40: #{_lambda_.14} parent=5 // pred_fallthru
      _
  $region6: #{_lambda_.14} parent=0 // loop_footer
    %s13 = sadd.s32 1, %s9
  $region7: #{_lambda_.14} parent=0 // loop_footer_branch
    %8 = sbr.rel target = $region3
  $region8: #{_lambda_.14} parent=0 // loop_exit
    _

// kernel: _lambda_.17
$region0: #{_lambda_.17}
  #allocation0 [shape = 'u32[]', space=smem, size = 0x4, offset = 0x4, fixed_abs, tag = 'smem constant byte address 0x4 - core index']
  #allocation1 [shape = 'u32[144,128]{1,0:T(1,128)}', space=vmem, size = 0x12000, scoped, tag = 'internal scratch']
  %s0 = inlined_call_operand.vmem [shape: bf16[128,1152], index: 0, kind: input, shape index: {}]
  %s1 = inlined_call_operand.vmem [shape: bf16[1152,128], index: 1, kind: input, shape index: {}]
  %s2 = inlined_call_operand.vmem [shape: f32[1,128], index: 2, kind: input, shape index: {}]
  %s3 = inlined_call_operand.vmem [shape: f32[128,128], index: 3, kind: input, shape index: {}]
  %s4 = inlined_call_operand.vmem [shape: f32[128,128], index: 4, kind: output, shape index: {}]
  %s5 = sld [smem:[#allocation0]]
  $region49: #{_lambda_.17} parent=0
    _
  %s7 = ssub.s32 1, %s5
  %s8 = scalar_select 0, %s7, %s5
  loop: start=0, step=1, limit=4
  $region2: #{_lambda_.17} parent=0 // loop_pre_header
    _
  $region3: #{_lambda_.17} parent=0 // loop_header
    %s10 = sphi 0, %s14
    %p11 = scmp.ge.s32.totalorder %s10, 4
    %s20 = sphi 0, %s22
    %s23 = sphi 0, %s20
    %s24 = sphi 0, %s23
    %s40 = sphi 0, %s24
    %s44 = sphi 0, %s44
    %s46 = sphi 0, %s44
    %s47 = sphi 0, %s46
    %s61 = sphi 0, %s47
    %s65 = sphi 0, %s65
    %s67 = sphi 0, %s65
    %s68 = sphi 0, %s67
    %s82 = sphi 0, %s68
    %s88 = sphi 0, %s90
    %s91 = sphi 0, %s88
    %s92 = sphi 0, %s91
    %s108 = sphi 0, %s92
    %s114 = sphi 0, %s116
    %s117 = sphi 0, %s114
    %s118 = sphi 0, %s117
    %s134 = sphi 0, %s118
  $region4: #{_lambda_.17} parent=0 // loop_header_branch
    %13 = sbr.rel (%p11) target = $region8
  $region5: #{_lambda_.17} parent=0 // loop_body
    %s15 = ssub.s32 %s10, 1
    %s16 = ssub.s32 %s10, 2
    %s17 = sadd.s32 %s10, 1
    %s18 = ssub.s32 %s10, %s17
    %p19 = scmp.eq.s32.totalorder %s18, 0
    %s21 = sadd.s32 %s20, 1
    %s22 = scalar_select %p19, %s20, %s21
    %p25 = pneg %p19
    %p26 = scmp.eq.s32.totalorder %s10, 1
    %p27 = por %p25, %p26
    %p28 = scmp.ne.s32.totalorder %s20, %s23
    %p29 = scmp.eq.s32.totalorder %s10, 0
    %p30 = por %p28, %p29
    %p31 = scmp.ne.s32.totalorder %s20, %s23
    %p32 = scmp.eq.s32.totalorder %s15, 1
    %p33 = por %p31, %p32
    %p34 = scmp.ne.s32.totalorder %s23, %s24
    %p35 = scmp.eq.s32.totalorder %s15, 0
    %p36 = por %p34, %p35
    %p37 = scmp.ne.s32.totalorder %s23, %s24
    %p38 = scmp.eq.s32.totalorder %s16, 1
    %p39 = por %p37, %p38
    %p41 = scmp.ne.s32.totalorder %s24, %s40
    %p42 = scmp.eq.s32.totalorder %s16, 0
    %p43 = por %p41, %p42
    %s45 = sadd.s32 %s44, 1
    %p48 = scmp.eq.s32.totalorder %s10, 1
    %p49 = scmp.ne.s32.totalorder %s44, %s46
    %p50 = scmp.eq.s32.totalorder %s10, 0
    %p51 = por %p49, %p50
    %p52 = scmp.ne.s32.totalorder %s44, %s46
    %p53 = scmp.eq.s32.totalorder %s15, 1
    %p54 = por %p52, %p53
    %p55 = scmp.ne.s32.totalorder %s46, %s47
    %p56 = scmp.eq.s32.totalorder %s15, 0
    %p57 = por %p55, %p56
    %p58 = scmp.ne.s32.totalorder %s46, %s47
    %p59 = scmp.eq.s32.totalorder %s16, 1
    %p60 = por %p58, %p59
    %p62 = scmp.ne.s32.totalorder %s47, %s61
    %p63 = scmp.eq.s32.totalorder %s16, 0
    %p64 = por %p62, %p63
    %s66 = sadd.s32 %s65, 1
    %p69 = scmp.eq.s32.totalorder %s10, 1
    %p70 = scmp.ne.s32.totalorder %s65, %s67
    %p71 = scmp.eq.s32.totalorder %s10, 0
    %p72 = por %p70, %p71
    %p73 = scmp.ne.s32.totalorder %s65, %s67
    %p74 = scmp.eq.s32.totalorder %s15, 1
    %p75 = por %p73, %p74
    %p76 = scmp.ne.s32.totalorder %s67, %s68
    %p77 = scmp.eq.s32.totalorder %s15, 0
    %p78 = por %p76, %p77
    %p79 = scmp.ne.s32.totalorder %s67, %s68
    %p80 = scmp.eq.s32.totalorder %s16, 1
    %p81 = por %p79, %p80
    %p83 = scmp.ne.s32.totalorder %s68, %s82
    %p84 = scmp.eq.s32.totalorder %s16, 0
    %p85 = por %p83, %p84
    %s86 = ssub.s32 %s10, %s17
    %p87 = scmp.eq.s32.totalorder %s86, 0
    %s89 = sadd.s32 %s88, 1
    %s90 = scalar_select %p87, %s88, %s89
    %p93 = pneg %p87
    %p94 = scmp.eq.s32.totalorder %s10, 1
    %p95 = por %p93, %p94
    %p96 = scmp.ne.s32.totalorder %s88, %s91
    %p97 = scmp.eq.s32.totalorder %s10, 0
    %p98 = por %p96, %p97
    %p99 = scmp.ne.s32.totalorder %s88, %s91
    %p100 = scmp.eq.s32.totalorder %s15, 1
    %p101 = por %p99, %p100
    %p102 = scmp.ne.s32.totalorder %s91, %s92
    %p103 = scmp.eq.s32.totalorder %s15, 0
    %p104 = por %p102, %p103
    %p105 = scmp.ne.s32.totalorder %s91, %s92
    %p106 = scmp.eq.s32.totalorder %s16, 1
    %p107 = por %p105, %p106
    %p109 = scmp.ne.s32.totalorder %s92, %s108
    %p110 = scmp.eq.s32.totalorder %s16, 0
    %p111 = por %p109, %p110
    %s112 = ssub.s32 %s10, %s17
    %p113 = scmp.eq.s32.totalorder %s112, 0
    %s115 = sadd.s32 %s114, 1
    %s116 = scalar_select %p113, %s114, %s115
    %p119 = pneg %p113
    %p120 = scmp.eq.s32.totalorder %s10, 1
    %p121 = por %p119, %p120
    %p122 = scmp.ne.s32.totalorder %s114, %s117
    %p123 = scmp.eq.s32.totalorder %s10, 0
    %p124 = por %p122, %p123
    %p125 = scmp.ne.s32.totalorder %s114, %s117
    %p126 = scmp.eq.s32.totalorder %s15, 1
    %p127 = por %p125, %p126
    %p128 = scmp.ne.s32.totalorder %s117, %s118
    %p129 = scmp.eq.s32.totalorder %s15, 0
    %p130 = por %p128, %p129
    %p131 = scmp.ne.s32.totalorder %s117, %s118
    %p132 = scmp.eq.s32.totalorder %s16, 1
    %p133 = por %p131, %p132
    %p135 = scmp.ne.s32.totalorder %s118, %s134
    %p136 = scmp.eq.s32.totalorder %s16, 0
    %p137 = por %p135, %p136
    %p138 = scmp.le.s32.totalorder 1, %s10
    %p139 = scmp.lt.s32.totalorder %s10, 3
    %p140 = pnand %p138, %p139
    %p141 = pneg %p140
    // Predicated region
    $region9: #{_lambda_.17} parent=5 // pred_check
      _
    $region10: #{_lambda_.17} parent=5 // pred_check_branch
      %143 = sbr.rel (%p140) target = $region12
    $region11: #{_lambda_.17} parent=5 // pred_region
      %s144 = ssub.s32 %s10, 1
      // Predicated region
      $region13: #{_lambda_.17} parent=11 // pred_check
        %p145 = pneg %p57
      $region14: #{_lambda_.17} parent=11 // pred_check_branch
        %147 = sbr.rel (%p145) target = $region16
      $region15: #{_lambda_.17} parent=11 // pred_region
        _
      $region16: #{_lambda_.17} parent=11 // pred_fallthru
        _
      // Predicated region
      $region17: #{_lambda_.17} parent=11 // pred_check
        %p148 = pneg %p78
      $region18: #{_lambda_.17} parent=11 // pred_check_branch
        %150 = sbr.rel (%p148) target = $region20
      $region19: #{_lambda_.17} parent=11 // pred_region
        _
      $region20: #{_lambda_.17} parent=11 // pred_fallthru
        _
    $region12: #{_lambda_.17} parent=5 // pred_fallthru
      _
    %p151 = scmp.lt.s32.totalorder %s10, 2
    // Predicated region
    $region21: #{_lambda_.17} parent=5 // pred_check
      %p152 = pneg %p151
    $region22: #{_lambda_.17} parent=5 // pred_check_branch
      %154 = sbr.rel (%p152) target = $region24
    $region23: #{_lambda_.17} parent=5 // pred_region
      // Predicated region
      $region25: #{_lambda_.17} parent=23 // pred_check
        %p155 = pneg %p30
      $region26: #{_lambda_.17} parent=23 // pred_check_branch
        %157 = sbr.rel (%p155) target = $region28
      $region27: #{_lambda_.17} parent=23 // pred_region
        %s158 = smul.u32 8, %s10
        %p159 = scmp.lt.s32.totalorder %s158, 15
        %s160 = scalar_select %p159, %s158, 15
        %s161 = smul.addr %s160, 9
        %s162 = smul.addr %s161, 4
        %s163 = scalar_lea.vmem %s0, %s162
        %s164 = smul.u32 8, %s10
      $region28: #{_lambda_.17} parent=23 // pred_fallthru
        _
      // Predicated region
      $region29: #{_lambda_.17} parent=23 // pred_check
        %p165 = pneg %p98
      $region30: #{_lambda_.17} parent=23 // pred_check_branch
        %167 = sbr.rel (%p165) target = $region32
      $region31: #{_lambda_.17} parent=23 // pred_region
        %s168 = smul.u32 8, %s10
        %p169 = scmp.lt.s32.totalorder %s168, 15
        %s170 = scalar_select %p169, %s168, 15
        %s171 = smul.addr %s170, 8
        %s172 = scalar_lea.vmem %s3, %s171
        %s173 = smul.u32 8, %s10
      $region32: #{_lambda_.17} parent=23 // pred_fallthru
        _
    $region24: #{_lambda_.17} parent=5 // pred_fallthru
      _
    %p174 = scmp.le.s32.totalorder 1, %s10
    %p175 = scmp.lt.s32.totalorder %s10, 3
    %p176 = pnand %p174, %p175
    %p177 = pneg %p176
    // Predicated region
    $region33: #{_lambda_.17} parent=5 // pred_check
      _
    $region34: #{_lambda_.17} parent=5 // pred_check_branch
      %179 = sbr.rel (%p176) target = $region36
    $region35: #{_lambda_.17} parent=5 // pred_region
      %s180 = ssub.s32 %s10, 1
      %s181 = smul.u32 8, %s15
      %p182 = scmp.lt.s32.totalorder %s181, 15
      %s183 = scalar_select %p182, %s181, 15
      %s184 = smul.addr %s183, 9
      %s185 = smul.addr %s184, 4
      %s186 = scalar_lea.vmem %s0, %s185
      %p187 = pneg %p36
      %p188 = pneg %p33
      %p189 = pneg %p57
      %p190 = pneg %p54
      %p191 = pneg %p78
      %p192 = pneg %p75
      %s193 = smul.u32 8, %s15
      %p194 = scmp.lt.s32.totalorder %s193, 15
      %s195 = scalar_select %p194, %s193, 15
      %s196 = smul.addr %s195, 8
      %s197 = scalar_lea.vmem %s3, %s196
      %p198 = pneg %p104
      %p199 = pneg %p101
      %p200 = pneg %p130
      %p201 = pneg %p127
      %s202 = smul.u32 8, %s15
      %p203 = scmp.lt.s32.totalorder %s202, 15
      %s204 = scalar_select %p203, %s202, 15
      %s205 = smul.addr %s204, 8
      %s206 = scalar_lea.vmem %s4, %s205
      %s207 = smul.u32 8, %s15
      %p208 = scmp.lt.s32.totalorder %s207, 15
      %s209 = scalar_select %p208, %s207, 15
      %s210 = smul.addr %s209, 9
      %s211 = smul.addr %s210, 4
      %s212 = scalar_lea.vmem %s0, %s211
      %s213 = smul.u32 8, %s15
      %s214 = smul.u32 8, %s15
      %p215 = scmp.lt.s32.totalorder %s214, 15
      %s216 = scalar_select %p215, %s214, 15
      %s217 = smul.addr %s216, 8
      %s218 = scalar_lea.vmem %s3, %s217
      %s219 = smul.u32 8, %s15
      %s220 = smul.u32 8, %s15
      %p221 = scmp.lt.s32.totalorder %s220, 15
      %s222 = scalar_select %p221, %s220, 15
      %s223 = smul.addr %s222, 8
      %s224 = scalar_lea.vmem %s4, %s223
      %s225 = smul.u32 8, %s15
      %v227 = vld [vmem:[%s212] sm:$0xff]
      %v228 = vld [vmem:[%s212 + $0x8] sm:$0xff]
      %v229 = vld [vmem:[%s212 + $0x10] sm:$0xff]
      %v230 = vld [vmem:[%s212 + $0x18] sm:$0xff]
      %v231 = vld [vmem:[%s212 + $0x20] sm:$0xf]
      %v232 = vld [vmem:[%s212 + $0x24] sm:$0xff]
      %v233 = vld [vmem:[%s212 + $0x2c] sm:$0xff]
      %v234 = vld [vmem:[%s212 + $0x34] sm:$0xff]
      %v235 = vld [vmem:[%s212 + $0x3c] sm:$0xff]
      %v236 = vld [vmem:[%s212 + $0x44] sm:$0xf]
      %v237 = vld [vmem:[%s212 + $0x48] sm:$0xff]
      %v238 = vld [vmem:[%s212 + $0x50] sm:$0xff]
      %v239 = vld [vmem:[%s212 + $0x58] sm:$0xff]
      %v240 = vld [vmem:[%s212 + $0x60] sm:$0xff]
      %v241 = vld [vmem:[%s212 + $0x68] sm:$0xf]
      %v242 = vld [vmem:[%s212 + $0x6c] sm:$0xff]
      %v243 = vld [vmem:[%s212 + $0x74] sm:$0xff]
      %v244 = vld [vmem:[%s212 + $0x7c] sm:$0xff]
      %v245 = vld [vmem:[%s212 + $0x84] sm:$0xff]
      %v246 = vld [vmem:[%s212 + $0x8c] sm:$0xf]
      %v247 = vld [vmem:[%s212 + $0x90] sm:$0xff]
      %v248 = vld [vmem:[%s212 + $0x98] sm:$0xff]
      %v249 = vld [vmem:[%s212 + $0xa0] sm:$0xff]
      %v250 = vld [vmem:[%s212 + $0xa8] sm:$0xff]
      %v251 = vld [vmem:[%s212 + $0xb0] sm:$0xf]
      %v252 = vld [vmem:[%s212 + $0xb4] sm:$0xff]
      %v253 = vld [vmem:[%s212 + $0xbc] sm:$0xff]
      %v254 = vld [vmem:[%s212 + $0xc4] sm:$0xff]
      %v255 = vld [vmem:[%s212 + $0xcc] sm:$0xff]
      %v256 = vld [vmem:[%s212 + $0xd4] sm:$0xf]
      %v257 = vld [vmem:[%s212 + $0xd8] sm:$0xff]
      %v258 = vld [vmem:[%s212 + $0xe0] sm:$0xff]
      %v259 = vld [vmem:[%s212 + $0xe8] sm:$0xff]
      %v260 = vld [vmem:[%s212 + $0xf0] sm:$0xff]
      %v261 = vld [vmem:[%s212 + $0xf8] sm:$0xf]
      %v262 = vld [vmem:[%s212 + $0xfc] sm:$0xff]
      %v263 = vld [vmem:[%s212 + $0x104] sm:$0xff]
      %v264 = vld [vmem:[%s212 + $0x10c] sm:$0xff]
      %v265 = vld [vmem:[%s212 + $0x114] sm:$0xff]
      %v266 = vld [vmem:[%s212 + $0x11c] sm:$0xf]
      %v267 = vld [vmem:[%s1] sm:$0xf]
      %v268 = vld [vmem:[%s1 + $0x4] sm:$0xf]
      %v269 = vld [vmem:[%s1 + $0x8] sm:$0xf]
      %v270 = vld [vmem:[%s1 + $0xc] sm:$0xf]
      %v271 = vld [vmem:[%s1 + $0x10] sm:$0xf]
      %v272 = vld [vmem:[%s1 + $0x14] sm:$0xf]
      %v273 = vld [vmem:[%s1 + $0x18] sm:$0xf]
      %v274 = vld [vmem:[%s1 + $0x1c] sm:$0xf]
      %v275 = vld [vmem:[%s1 + $0x20] sm:$0xf]
      %v276 = vld [vmem:[%s1 + $0x24] sm:$0xf]
      %v277 = vld [vmem:[%s1 + $0x28] sm:$0xf]
      %v278 = vld [vmem:[%s1 + $0x2c] sm:$0xf]
      %v279 = vld [vmem:[%s1 + $0x30] sm:$0xf]
      %v280 = vld [vmem:[%s1 + $0x34] sm:$0xf]
      %v281 = vld [vmem:[%s1 + $0x38] sm:$0xf]
      %v282 = vld [vmem:[%s1 + $0x3c] sm:$0xf]
      %v283 = vld [vmem:[%s1 + $0x40] sm:$0xf]
      %v284 = vld [vmem:[%s1 + $0x44] sm:$0xf]
      %v285 = vld [vmem:[%s1 + $0x48] sm:$0xf]
      %v286 = vld [vmem:[%s1 + $0x4c] sm:$0xf]
      %v287 = vld [vmem:[%s1 + $0x50] sm:$0xf]
      %v288 = vld [vmem:[%s1 + $0x54] sm:$0xf]
      %v289 = vld [vmem:[%s1 + $0x58] sm:$0xf]
      %v290 = vld [vmem:[%s1 + $0x5c] sm:$0xf]
      %v291 = vld [vmem:[%s1 + $0x60] sm:$0xf]
      %v292 = vld [vmem:[%s1 + $0x64] sm:$0xf]
      %v293 = vld [vmem:[%s1 + $0x68] sm:$0xf]
      %v294 = vld [vmem:[%s1 + $0x6c] sm:$0xf]
      %v295 = vld [vmem:[%s1 + $0x70] sm:$0xf]
      %v296 = vld [vmem:[%s1 + $0x74] sm:$0xf]
      %v297 = vld [vmem:[%s1 + $0x78] sm:$0xf]
      %v298 = vld [vmem:[%s1 + $0x7c] sm:$0xf]
      %v299 = vld [vmem:[%s1 + $0x80] sm:$0xf]
      %v300 = vld [vmem:[%s1 + $0x84] sm:$0xf]
      %v301 = vld [vmem:[%s1 + $0x88] sm:$0xf]
      %v302 = vld [vmem:[%s1 + $0x8c] sm:$0xf]
      %v303 = vld [vmem:[%s1 + $0x90] sm:$0xf]
      %v304 = vld [vmem:[%s1 + $0x94] sm:$0xf]
      %v305 = vld [vmem:[%s1 + $0x98] sm:$0xf]
      %v306 = vld [vmem:[%s1 + $0x9c] sm:$0xf]
      %v307 = vld [vmem:[%s1 + $0xa0] sm:$0xf]
      %v308 = vld [vmem:[%s1 + $0xa4] sm:$0xf]
      %v309 = vld [vmem:[%s1 + $0xa8] sm:$0xf]
      %v310 = vld [vmem:[%s1 + $0xac] sm:$0xf]
      %v311 = vld [vmem:[%s1 + $0xb0] sm:$0xf]
      %v312 = vld [vmem:[%s1 + $0xb4] sm:$0xf]
      %v313 = vld [vmem:[%s1 + $0xb8] sm:$0xf]
      %v314 = vld [vmem:[%s1 + $0xbc] sm:$0xf]
      %v315 = vld [vmem:[%s1 + $0xc0] sm:$0xf]
      %v316 = vld [vmem:[%s1 + $0xc4] sm:$0xf]
      %v317 = vld [vmem:[%s1 + $0xc8] sm:$0xf]
      %v318 = vld [vmem:[%s1 + $0xcc] sm:$0xf]
      %v319 = vld [vmem:[%s1 + $0xd0] sm:$0xf]
      %v320 = vld [vmem:[%s1 + $0xd4] sm:$0xf]
      %v321 = vld [vmem:[%s1 + $0xd8] sm:$0xf]
      %v322 = vld [vmem:[%s1 + $0xdc] sm:$0xf]
      %v323 = vld [vmem:[%s1 + $0xe0] sm:$0xf]
      %v324 = vld [vmem:[%s1 + $0xe4] sm:$0xf]
      %v325 = vld [vmem:[%s1 + $0xe8] sm:$0xf]
      %v326 = vld [vmem:[%s1 + $0xec] sm:$0xf]
      %v327 = vld [vmem:[%s1 + $0xf0] sm:$0xf]
      %v328 = vld [vmem:[%s1 + $0xf4] sm:$0xf]
      %v329 = vld [vmem:[%s1 + $0xf8] sm:$0xf]
      %v330 = vld [vmem:[%s1 + $0xfc] sm:$0xf]
      %v331 = vld [vmem:[%s1 + $0x100] sm:$0xf]
      %v332 = vld [vmem:[%s1 + $0x104] sm:$0xf]
      %v333 = vld [vmem:[%s1 + $0x108] sm:$0xf]
      %v334 = vld [vmem:[%s1 + $0x10c] sm:$0xf]
      %v335 = vld [vmem:[%s1 + $0x110] sm:$0xf]
      %v336 = vld [vmem:[%s1 + $0x114] sm:$0xf]
      %v337 = vld [vmem:[%s1 + $0x118] sm:$0xf]
      %v338 = vld [vmem:[%s1 + $0x11c] sm:$0xf]
      %v339 = vld [vmem:[%s1 + $0x120] sm:$0xf]
      %v340 = vld [vmem:[%s1 + $0x124] sm:$0xf]
      %v341 = vld [vmem:[%s1 + $0x128] sm:$0xf]
      %v342 = vld [vmem:[%s1 + $0x12c] sm:$0xf]
      %v343 = vld [vmem:[%s1 + $0x130] sm:$0xf]
      %v344 = vld [vmem:[%s1 + $0x134] sm:$0xf]
      %v345 = vld [vmem:[%s1 + $0x138] sm:$0xf]
      %v346 = vld [vmem:[%s1 + $0x13c] sm:$0xf]
      %v347 = vld [vmem:[%s1 + $0x140] sm:$0xf]
      %v348 = vld [vmem:[%s1 + $0x144] sm:$0xf]
      %v349 = vld [vmem:[%s1 + $0x148] sm:$0xf]
      %v350 = vld [vmem:[%s1 + $0x14c] sm:$0xf]
      %v351 = vld [vmem:[%s1 + $0x150] sm:$0xf]
      %v352 = vld [vmem:[%s1 + $0x154] sm:$0xf]
      %v353 = vld [vmem:[%s1 + $0x158] sm:$0xf]
      %v354 = vld [vmem:[%s1 + $0x15c] sm:$0xf]
      %v355 = vld [vmem:[%s1 + $0x160] sm:$0xf]
      %v356 = vld [vmem:[%s1 + $0x164] sm:$0xf]
      %v357 = vld [vmem:[%s1 + $0x168] sm:$0xf]
      %v358 = vld [vmem:[%s1 + $0x16c] sm:$0xf]
      %v359 = vld [vmem:[%s1 + $0x170] sm:$0xf]
      %v360 = vld [vmem:[%s1 + $0x174] sm:$0xf]
      %v361 = vld [vmem:[%s1 + $0x178] sm:$0xf]
      %v362 = vld [vmem:[%s1 + $0x17c] sm:$0xf]
      %v363 = vld [vmem:[%s1 + $0x180] sm:$0xf]
      %v364 = vld [vmem:[%s1 + $0x184] sm:$0xf]
      %v365 = vld [vmem:[%s1 + $0x188] sm:$0xf]
      %v366 = vld [vmem:[%s1 + $0x18c] sm:$0xf]
      %v367 = vld [vmem:[%s1 + $0x190] sm:$0xf]
      %v368 = vld [vmem:[%s1 + $0x194] sm:$0xf]
      %v369 = vld [vmem:[%s1 + $0x198] sm:$0xf]
      %v370 = vld [vmem:[%s1 + $0x19c] sm:$0xf]
      %v371 = vld [vmem:[%s1 + $0x1a0] sm:$0xf]
      %v372 = vld [vmem:[%s1 + $0x1a4] sm:$0xf]
      %v373 = vld [vmem:[%s1 + $0x1a8] sm:$0xf]
      %v374 = vld [vmem:[%s1 + $0x1ac] sm:$0xf]
      %v375 = vld [vmem:[%s1 + $0x1b0] sm:$0xf]
      %v376 = vld [vmem:[%s1 + $0x1b4] sm:$0xf]
      %v377 = vld [vmem:[%s1 + $0x1b8] sm:$0xf]
      %v378 = vld [vmem:[%s1 + $0x1bc] sm:$0xf]
      %v379 = vld [vmem:[%s1 + $0x1c0] sm:$0xf]
      %v380 = vld [vmem:[%s1 + $0x1c4] sm:$0xf]
      %v381 = vld [vmem:[%s1 + $0x1c8] sm:$0xf]
      %v382 = vld [vmem:[%s1 + $0x1cc] sm:$0xf]
      %v383 = vld [vmem:[%s1 + $0x1d0] sm:$0xf]
      %v384 = vld [vmem:[%s1 + $0x1d4] sm:$0xf]
      %v385 = vld [vmem:[%s1 + $0x1d8] sm:$0xf]
      %v386 = vld [vmem:[%s1 + $0x1dc] sm:$0xf]
      %v387 = vld [vmem:[%s1 + $0x1e0] sm:$0xf]
      %v388 = vld [vmem:[%s1 + $0x1e4] sm:$0xf]
      %v389 = vld [vmem:[%s1 + $0x1e8] sm:$0xf]
      %v390 = vld [vmem:[%s1 + $0x1ec] sm:$0xf]
      %v391 = vld [vmem:[%s1 + $0x1f0] sm:$0xf]
      %v392 = vld [vmem:[%s1 + $0x1f4] sm:$0xf]
      %v393 = vld [vmem:[%s1 + $0x1f8] sm:$0xf]
      %v394 = vld [vmem:[%s1 + $0x1fc] sm:$0xf]
      %v395 = vld [vmem:[%s1 + $0x200] sm:$0xf]
      %v396 = vld [vmem:[%s1 + $0x204] sm:$0xf]
      %v397 = vld [vmem:[%s1 + $0x208] sm:$0xf]
      %v398 = vld [vmem:[%s1 + $0x20c] sm:$0xf]
      %v399 = vld [vmem:[%s1 + $0x210] sm:$0xf]
      %v400 = vld [vmem:[%s1 + $0x214] sm:$0xf]
      %v401 = vld [vmem:[%s1 + $0x218] sm:$0xf]
      %v402 = vld [vmem:[%s1 + $0x21c] sm:$0xf]
      %v403 = vld [vmem:[%s1 + $0x220] sm:$0xf]
      %v404 = vld [vmem:[%s1 + $0x224] sm:$0xf]
      %v405 = vld [vmem:[%s1 + $0x228] sm:$0xf]
      %v406 = vld [vmem:[%s1 + $0x22c] sm:$0xf]
      %v407 = vld [vmem:[%s1 + $0x230] sm:$0xf]
      %v408 = vld [vmem:[%s1 + $0x234] sm:$0xf]
      %v409 = vld [vmem:[%s1 + $0x238] sm:$0xf]
      %v410 = vld [vmem:[%s1 + $0x23c] sm:$0xf]
      %v411 = vld [vmem:[%s2] sm:$0x1]
      %v413 = vlaneseq
      %v414 = vshrl.u32 %v413, 7
      %v415 = vsub.s32 0, %v414
      %v416 = vrot.slane %v411, %v415
      %v458 = vunpack.c.l.b16 %v227
      %v459 = vunpack.c.h.b16 %v227
      %v460 = vunpack.c.l.b16 %v228
      %v461 = vunpack.c.h.b16 %v228
      %v462 = vunpack.c.l.b16 %v229
      %v463 = vunpack.c.h.b16 %v229
      %v464 = vunpack.c.l.b16 %v230
      %v465 = vunpack.c.h.b16 %v230
      %v466 = vunpack.c.l.b16 %v231
      %v467 = vunpack.c.l.b16 %v232
      %v468 = vunpack.c.h.b16 %v232
      %v469 = vunpack.c.l.b16 %v233
      %v470 = vunpack.c.h.b16 %v233
      %v471 = vunpack.c.l.b16 %v234
      %v472 = vunpack.c.h.b16 %v234
      %v473 = vunpack.c.l.b16 %v235
      %v474 = vunpack.c.h.b16 %v235
      %v475 = vunpack.c.l.b16 %v236
      %v476 = vunpack.c.l.b16 %v237
      %v477 = vunpack.c.h.b16 %v237
      %v478 = vunpack.c.l.b16 %v238
      %v479 = vunpack.c.h.b16 %v238
      %v480 = vunpack.c.l.b16 %v239
      %v481 = vunpack.c.h.b16 %v239
      %v482 = vunpack.c.l.b16 %v240
      %v483 = vunpack.c.h.b16 %v240
      %v484 = vunpack.c.l.b16 %v241
      %v485 = vunpack.c.l.b16 %v242
      %v486 = vunpack.c.h.b16 %v242
      %v487 = vunpack.c.l.b16 %v243
      %v488 = vunpack.c.h.b16 %v243
      %v489 = vunpack.c.l.b16 %v244
      %v490 = vunpack.c.h.b16 %v244
      %v491 = vunpack.c.l.b16 %v245
      %v492 = vunpack.c.h.b16 %v245
      %v493 = vunpack.c.l.b16 %v246
      %v494 = vunpack.c.l.b16 %v247
      %v495 = vunpack.c.h.b16 %v247
      %v496 = vunpack.c.l.b16 %v248
      %v497 = vunpack.c.h.b16 %v248
      %v498 = vunpack.c.l.b16 %v249
      %v499 = vunpack.c.h.b16 %v249
      %v500 = vunpack.c.l.b16 %v250
      %v501 = vunpack.c.h.b16 %v250
      %v502 = vunpack.c.l.b16 %v251
      %v503 = vunpack.c.l.b16 %v252
      %v504 = vunpack.c.h.b16 %v252
      %v505 = vunpack.c.l.b16 %v253
      %v506 = vunpack.c.h.b16 %v253
      %v507 = vunpack.c.l.b16 %v254
      %v508 = vunpack.c.h.b16 %v254
      %v509 = vunpack.c.l.b16 %v255
      %v510 = vunpack.c.h.b16 %v255
      %v511 = vunpack.c.l.b16 %v256
      %v512 = vunpack.c.l.b16 %v257
      %v513 = vunpack.c.h.b16 %v257
      %v514 = vunpack.c.l.b16 %v258
      %v515 = vunpack.c.h.b16 %v258
      %v516 = vunpack.c.l.b16 %v259
      %v517 = vunpack.c.h.b16 %v259
      %v518 = vunpack.c.l.b16 %v260
      %v519 = vunpack.c.h.b16 %v260
      %v520 = vunpack.c.l.b16 %v261
      %v521 = vunpack.c.l.b16 %v262
      %v522 = vunpack.c.h.b16 %v262
      %v523 = vunpack.c.l.b16 %v263
      %v524 = vunpack.c.h.b16 %v263
      %v525 = vunpack.c.l.b16 %v264
      %v526 = vunpack.c.h.b16 %v264
      %v527 = vunpack.c.l.b16 %v265
      %v528 = vunpack.c.h.b16 %v265
      %v529 = vunpack.c.l.b16 %v266
      %v530 = vpack.c.b16 %v467, %v458
      %v531 = vpack.c.b16 %v468, %v459
      %v532 = vpack.c.b16 %v469, %v460
      %v533 = vpack.c.b16 %v470, %v461
      %v534 = vpack.c.b16 %v471, %v462
      %v535 = vpack.c.b16 %v472, %v463
      %v536 = vpack.c.b16 %v473, %v464
      %v537 = vpack.c.b16 %v474, %v465
      %v538 = vpack.c.b16 %v475, %v466
      %v539 = vpack.c.b16 %v485, %v476
      %v540 = vpack.c.b16 %v486, %v477
      %v541 = vpack.c.b16 %v487, %v478
      %v542 = vpack.c.b16 %v488, %v479
      %v543 = vpack.c.b16 %v489, %v480
      %v544 = vpack.c.b16 %v490, %v481
      %v545 = vpack.c.b16 %v491, %v482
      %v546 = vpack.c.b16 %v492, %v483
      %v547 = vpack.c.b16 %v493, %v484
      %v548 = vpack.c.b16 %v503, %v494
      %v549 = vpack.c.b16 %v504, %v495
      %v550 = vpack.c.b16 %v505, %v496
      %v551 = vpack.c.b16 %v506, %v497
      %v552 = vpack.c.b16 %v507, %v498
      %v553 = vpack.c.b16 %v508, %v499
      %v554 = vpack.c.b16 %v509, %v500
      %v555 = vpack.c.b16 %v510, %v501
      %v556 = vpack.c.b16 %v511, %v502
      %v557 = vpack.c.b16 %v521, %v512
      %v558 = vpack.c.b16 %v522, %v513
      %v559 = vpack.c.b16 %v523, %v514
      %v560 = vpack.c.b16 %v524, %v515
      %v561 = vpack.c.b16 %v525, %v516
      %v562 = vpack.c.b16 %v526, %v517
      %v563 = vpack.c.b16 %v527, %v518
      %v564 = vpack.c.b16 %v528, %v519
      %v565 = vpack.c.b16 %v529, %v520
      %v746 = vunpack.c.l.b16 %v267
      %v747 = vunpack.c.l.b16 %v268
      %v748 = vunpack.c.l.b16 %v269
      %v749 = vunpack.c.l.b16 %v270
      %v750 = vunpack.c.l.b16 %v271
      %v751 = vunpack.c.l.b16 %v272
      %v752 = vunpack.c.l.b16 %v273
      %v753 = vunpack.c.l.b16 %v274
      %v754 = vunpack.c.l.b16 %v275
      %v755 = vunpack.c.l.b16 %v276
      %v756 = vunpack.c.l.b16 %v277
      %v757 = vunpack.c.l.b16 %v278
      %v758 = vunpack.c.l.b16 %v279
      %v759 = vunpack.c.l.b16 %v280
      %v760 = vunpack.c.l.b16 %v281
      %v761 = vunpack.c.l.b16 %v282
      %v762 = vunpack.c.l.b16 %v283
      %v763 = vunpack.c.l.b16 %v284
      %v764 = vunpack.c.l.b16 %v285
      %v765 = vunpack.c.l.b16 %v286
      %v766 = vunpack.c.l.b16 %v287
      %v767 = vunpack.c.l.b16 %v288
      %v768 = vunpack.c.l.b16 %v289
      %v769 = vunpack.c.l.b16 %v290
      %v770 = vunpack.c.l.b16 %v291
      %v771 = vunpack.c.l.b16 %v292
      %v772 = vunpack.c.l.b16 %v293
      %v773 = vunpack.c.l.b16 %v294
      %v774 = vunpack.c.l.b16 %v295
      %v775 = vunpack.c.l.b16 %v296
      %v776 = vunpack.c.l.b16 %v297
      %v777 = vunpack.c.l.b16 %v298
      %v778 = vunpack.c.l.b16 %v299
      %v779 = vunpack.c.l.b16 %v300
      %v780 = vunpack.c.l.b16 %v301
      %v781 = vunpack.c.l.b16 %v302
      %v782 = vunpack.c.l.b16 %v303
      %v783 = vunpack.c.l.b16 %v304
      %v784 = vunpack.c.l.b16 %v305
      %v785 = vunpack.c.l.b16 %v306
      %v786 = vunpack.c.l.b16 %v307
      %v787 = vunpack.c.l.b16 %v308
      %v788 = vunpack.c.l.b16 %v309
      %v789 = vunpack.c.l.b16 %v310
      %v790 = vunpack.c.l.b16 %v311
      %v791 = vunpack.c.l.b16 %v312
      %v792 = vunpack.c.l.b16 %v313
      %v793 = vunpack.c.l.b16 %v314
      %v794 = vunpack.c.l.b16 %v315
      %v795 = vunpack.c.l.b16 %v316
      %v796 = vunpack.c.l.b16 %v317
      %v797 = vunpack.c.l.b16 %v318
      %v798 = vunpack.c.l.b16 %v319
      %v799 = vunpack.c.l.b16 %v320
      %v800 = vunpack.c.l.b16 %v321
      %v801 = vunpack.c.l.b16 %v322
      %v802 = vunpack.c.l.b16 %v323
      %v803 = vunpack.c.l.b16 %v324
      %v804 = vunpack.c.l.b16 %v325
      %v805 = vunpack.c.l.b16 %v326
      %v806 = vunpack.c.l.b16 %v327
      %v807 = vunpack.c.l.b16 %v328
      %v808 = vunpack.c.l.b16 %v329
      %v809 = vunpack.c.l.b16 %v330
      %v810 = vunpack.c.l.b16 %v331
      %v811 = vunpack.c.l.b16 %v332
      %v812 = vunpack.c.l.b16 %v333
      %v813 = vunpack.c.l.b16 %v334
      %v814 = vunpack.c.l.b16 %v335
      %v815 = vunpack.c.l.b16 %v336
      %v816 = vunpack.c.l.b16 %v337
      %v817 = vunpack.c.l.b16 %v338
      %v818 = vunpack.c.l.b16 %v339
      %v819 = vunpack.c.l.b16 %v340
      %v820 = vunpack.c.l.b16 %v341
      %v821 = vunpack.c.l.b16 %v342
      %v822 = vunpack.c.l.b16 %v343
      %v823 = vunpack.c.l.b16 %v344
      %v824 = vunpack.c.l.b16 %v345
      %v825 = vunpack.c.l.b16 %v346
      %v826 = vunpack.c.l.b16 %v347
      %v827 = vunpack.c.l.b16 %v348
      %v828 = vunpack.c.l.b16 %v349
      %v829 = vunpack.c.l.b16 %v350
      %v830 = vunpack.c.l.b16 %v351
      %v831 = vunpack.c.l.b16 %v352
      %v832 = vunpack.c.l.b16 %v353
      %v833 = vunpack.c.l.b16 %v354
      %v834 = vunpack.c.l.b16 %v355
      %v835 = vunpack.c.l.b16 %v356
      %v836 = vunpack.c.l.b16 %v357
      %v837 = vunpack.c.l.b16 %v358
      %v838 = vunpack.c.l.b16 %v359
      %v839 = vunpack.c.l.b16 %v360
      %v840 = vunpack.c.l.b16 %v361
      %v841 = vunpack.c.l.b16 %v362
      %v842 = vunpack.c.l.b16 %v363
      %v843 = vunpack.c.l.b16 %v364
      %v844 = vunpack.c.l.b16 %v365
      %v845 = vunpack.c.l.b16 %v366
      %v846 = vunpack.c.l.b16 %v367
      %v847 = vunpack.c.l.b16 %v368
      %v848 = vunpack.c.l.b16 %v369
      %v849 = vunpack.c.l.b16 %v370
      %v850 = vunpack.c.l.b16 %v371
      %v851 = vunpack.c.l.b16 %v372
      %v852 = vunpack.c.l.b16 %v373
      %v853 = vunpack.c.l.b16 %v374
      %v854 = vunpack.c.l.b16 %v375
      %v855 = vunpack.c.l.b16 %v376
      %v856 = vunpack.c.l.b16 %v377
      %v857 = vunpack.c.l.b16 %v378
      %v858 = vunpack.c.l.b16 %v379
      %v859 = vunpack.c.l.b16 %v380
      %v860 = vunpack.c.l.b16 %v381
      %v861 = vunpack.c.l.b16 %v382
      %v862 = vunpack.c.l.b16 %v383
      %v863 = vunpack.c.l.b16 %v384
      %v864 = vunpack.c.l.b16 %v385
      %v865 = vunpack.c.l.b16 %v386
      %v866 = vunpack.c.l.b16 %v387
      %v867 = vunpack.c.l.b16 %v388
      %v868 = vunpack.c.l.b16 %v389
      %v869 = vunpack.c.l.b16 %v390
      %v870 = vunpack.c.l.b16 %v391
      %v871 = vunpack.c.l.b16 %v392
      %v872 = vunpack.c.l.b16 %v393
      %v873 = vunpack.c.l.b16 %v394
      %v874 = vunpack.c.l.b16 %v395
      %v875 = vunpack.c.l.b16 %v396
      %v876 = vunpack.c.l.b16 %v397
      %v877 = vunpack.c.l.b16 %v398
      %v878 = vunpack.c.l.b16 %v399
      %v879 = vunpack.c.l.b16 %v400
      %v880 = vunpack.c.l.b16 %v401
      %v881 = vunpack.c.l.b16 %v402
      %v882 = vunpack.c.l.b16 %v403
      %v883 = vunpack.c.l.b16 %v404
      %v884 = vunpack.c.l.b16 %v405
      %v885 = vunpack.c.l.b16 %v406
      %v886 = vunpack.c.l.b16 %v407
      %v887 = vunpack.c.l.b16 %v408
      %v888 = vunpack.c.l.b16 %v409
      %v889 = vunpack.c.l.b16 %v410
      %v890 = vpack.c.b16 %v747, %v746
      %v891 = vpack.c.b16 %v749, %v748
      %v892 = vpack.c.b16 %v751, %v750
      %v893 = vpack.c.b16 %v753, %v752
      %v894 = vpack.c.b16 %v755, %v754
      %v895 = vpack.c.b16 %v757, %v756
      %v896 = vpack.c.b16 %v759, %v758
      %v897 = vpack.c.b16 %v761, %v760
      %v898 = vpack.c.b16 %v763, %v762
      %v899 = vpack.c.b16 %v765, %v764
      %v900 = vpack.c.b16 %v767, %v766
      %v901 = vpack.c.b16 %v769, %v768
      %v902 = vpack.c.b16 %v771, %v770
      %v903 = vpack.c.b16 %v773, %v772
      %v904 = vpack.c.b16 %v775, %v774
      %v905 = vpack.c.b16 %v777, %v776
      %v906 = vpack.c.b16 %v779, %v778
      %v907 = vpack.c.b16 %v781, %v780
      %v908 = vpack.c.b16 %v783, %v782
      %v909 = vpack.c.b16 %v785, %v784
      %v910 = vpack.c.b16 %v787, %v786
      %v911 = vpack.c.b16 %v789, %v788
      %v912 = vpack.c.b16 %v791, %v790
      %v913 = vpack.c.b16 %v793, %v792
      %v914 = vpack.c.b16 %v795, %v794
      %v915 = vpack.c.b16 %v797, %v796
      %v916 = vpack.c.b16 %v799, %v798
      %v917 = vpack.c.b16 %v801, %v800
      %v918 = vpack.c.b16 %v803, %v802
      %v919 = vpack.c.b16 %v805, %v804
      %v920 = vpack.c.b16 %v807, %v806
      %v921 = vpack.c.b16 %v809, %v808
      %v922 = vpack.c.b16 %v811, %v810
      %v923 = vpack.c.b16 %v813, %v812
      %v924 = vpack.c.b16 %v815, %v814
      %v925 = vpack.c.b16 %v817, %v816
      %v926 = vpack.c.b16 %v819, %v818
      %v927 = vpack.c.b16 %v821, %v820
      %v928 = vpack.c.b16 %v823, %v822
      %v929 = vpack.c.b16 %v825, %v824
      %v930 = vpack.c.b16 %v827, %v826
      %v931 = vpack.c.b16 %v829, %v828
      %v932 = vpack.c.b16 %v831, %v830
      %v933 = vpack.c.b16 %v833, %v832
      %v934 = vpack.c.b16 %v835, %v834
      %v935 = vpack.c.b16 %v837, %v836
      %v936 = vpack.c.b16 %v839, %v838
      %v937 = vpack.c.b16 %v841, %v840
      %v938 = vpack.c.b16 %v843, %v842
      %v939 = vpack.c.b16 %v845, %v844
      %v940 = vpack.c.b16 %v847, %v846
      %v941 = vpack.c.b16 %v849, %v848
      %v942 = vpack.c.b16 %v851, %v850
      %v943 = vpack.c.b16 %v853, %v852
      %v944 = vpack.c.b16 %v855, %v854
      %v945 = vpack.c.b16 %v857, %v856
      %v946 = vpack.c.b16 %v859, %v858
      %v947 = vpack.c.b16 %v861, %v860
      %v948 = vpack.c.b16 %v863, %v862
      %v949 = vpack.c.b16 %v865, %v864
      %v950 = vpack.c.b16 %v867, %v866
      %v951 = vpack.c.b16 %v869, %v868
      %v952 = vpack.c.b16 %v871, %v870
      %v953 = vpack.c.b16 %v873, %v872
      %v954 = vpack.c.b16 %v875, %v874
      %v955 = vpack.c.b16 %v877, %v876
      %v956 = vpack.c.b16 %v879, %v878
      %v957 = vpack.c.b16 %v881, %v880
      %v958 = vpack.c.b16 %v883, %v882
      %v959 = vpack.c.b16 %v885, %v884
      %v960 = vpack.c.b16 %v887, %v886
      %v961 = vpack.c.b16 %v889, %v888
      %1034 = vmatprep.subr.bf16.mxu0 0
      %1035 = vmatpush1.bf16.msra.mxu0 %v897
      %1036 = vmatprep.subr.bf16.mxu0 0
      %1037 = vmatpush1.bf16.msra.mxu0 %v896
      %1038 = vmatprep.subr.bf16.mxu0 0
      %1039 = vmatpush1.bf16.msra.mxu0 %v895
      %1040 = vmatprep.subr.bf16.mxu0 0
      %1041 = vmatpush1.bf16.msra.mxu0 %v894
      %1042 = vmatprep.subr.bf16.mxu0 0
      %1043 = vmatpush1.bf16.msra.mxu0 %v893
      %1044 = vmatprep.subr.bf16.mxu0 0
      %1045 = vmatpush1.bf16.msra.mxu0 %v892
      %1046 = vmatprep.subr.bf16.mxu0 0
      %1047 = vmatpush1.bf16.msra.mxu0 %v891
      %1048 = vmatprep.subr.bf16.mxu0 0
      %1049 = vmatpush1.bf16.msra.mxu0 %v890
      %1050 = vmatprep.subr.bf16.mxu0 0
      %1051 = vmatpush2.bf16.msra.mxu0 %v905
      %1052 = vmatprep.subr.bf16.mxu0 0
      %1053 = vmatpush2.bf16.msra.mxu0 %v904
      %1054 = vmatprep.subr.bf16.mxu0 0
      %1055 = vmatpush2.bf16.msra.mxu0 %v903
      %1056 = vmatprep.subr.bf16.mxu0 0
      %1057 = vmatpush2.bf16.msra.mxu0 %v902
      %1058 = vmatprep.subr.bf16.mxu0 0
      %1059 = vmatpush2.bf16.msra.mxu0 %v901
      %1060 = vmatprep.subr.bf16.mxu0 0
      %1061 = vmatpush2.bf16.msra.mxu0 %v900
      %1062 = vmatprep.subr.bf16.mxu0 0
      %1063 = vmatpush2.bf16.msra.mxu0 %v899
      %1064 = vmatprep.subr.bf16.mxu0 0
      %1065 = vmatpush2.bf16.msra.mxu0 %v898
      %1066 = vmatprep.mubr.bf16.mxu0 %v531
      %1067 = vmatmul.mubr.bf16.gmra.mxu0 %v530
      %v1068 = vpop.f32.mrf.mxu0
      %v1069 = vadd.f32 %v416, %v1068
      %v1070 = vpop.f32.mrf.mxu0
      %v1071 = vpop.f32.mrf.mxu0
      %v1072 = vadd.f32 %v416, %v1071
      %v1073 = vpop.f32.mrf.mxu0
      %1074 = vmatprep.mubr.bf16.mxu0 %v540
      %1075 = vmatmul.mubr.bf16.gmra.mxu0 %v539
      %v1076 = vpop.f32.mrf.mxu0
      %v1077 = vadd.f32 %v416, %v1076
      %v1078 = vpop.f32.mrf.mxu0
      %v1079 = vpop.f32.mrf.mxu0
      %v1080 = vadd.f32 %v416, %v1079
      %v1081 = vpop.f32.mrf.mxu0
      %1082 = vmatprep.mubr.bf16.mxu0 %v549
      %1083 = vmatmul.mubr.bf16.gmra.mxu0 %v548
      %v1084 = vpop.f32.mrf.mxu0
      %v1085 = vadd.f32 %v416, %v1084
      %v1086 = vpop.f32.mrf.mxu0
      %v1087 = vpop.f32.mrf.mxu0
      %v1088 = vadd.f32 %v416, %v1087
      %v1089 = vpop.f32.mrf.mxu0
      %1090 = vmatprep.mubr.bf16.mxu0 %v558
      %1091 = vmatmul.mubr.bf16.gmra.mxu0 %v557
      %v1092 = vpop.f32.mrf.mxu0
      %v1093 = vadd.f32 %v416, %v1092
      %v1094 = vpop.f32.mrf.mxu0
      %v1095 = vpop.f32.mrf.mxu0
      %v1096 = vadd.f32 %v416, %v1095
      %v1097 = vpop.f32.mrf.mxu0
      %1098 = vdwg.mxu0
      %1099 = vmatprep.subr.bf16.mxu0 0
      %1100 = vmatpush1.bf16.msra.mxu0 %v913
      %1101 = vmatprep.subr.bf16.mxu0 0
      %1102 = vmatpush1.bf16.msra.mxu0 %v912
      %1103 = vmatprep.subr.bf16.mxu0 0
      %1104 = vmatpush1.bf16.msra.mxu0 %v911
      %1105 = vmatprep.subr.bf16.mxu0 0
      %1106 = vmatpush1.bf16.msra.mxu0 %v910
      %1107 = vmatprep.subr.bf16.mxu0 0
      %1108 = vmatpush1.bf16.msra.mxu0 %v909
      %1109 = vmatprep.subr.bf16.mxu0 0
      %1110 = vmatpush1.bf16.msra.mxu0 %v908
      %1111 = vmatprep.subr.bf16.mxu0 0
      %1112 = vmatpush1.bf16.msra.mxu0 %v907
      %1113 = vmatprep.subr.bf16.mxu0 0
      %1114 = vmatpush1.bf16.msra.mxu0 %v906
      %1115 = vmatprep.subr.bf16.mxu0 0
      %1116 = vmatpush2.bf16.msra.mxu0 %v921
      %1117 = vmatprep.subr.bf16.mxu0 0
      %1118 = vmatpush2.bf16.msra.mxu0 %v920
      %1119 = vmatprep.subr.bf16.mxu0 0
      %1120 = vmatpush2.bf16.msra.mxu0 %v919
      %1121 = vmatprep.subr.bf16.mxu0 0
      %1122 = vmatpush2.bf16.msra.mxu0 %v918
      %1123 = vmatprep.subr.bf16.mxu0 0
      %1124 = vmatpush2.bf16.msra.mxu0 %v917
      %1125 = vmatprep.subr.bf16.mxu0 0
      %1126 = vmatpush2.bf16.msra.mxu0 %v916
      %1127 = vmatprep.subr.bf16.mxu0 0
      %1128 = vmatpush2.bf16.msra.mxu0 %v915
      %1129 = vmatprep.subr.bf16.mxu0 0
      %1130 = vmatpush2.bf16.msra.mxu0 %v914
      %1131 = vmatprep.mubr.bf16.mxu0 %v533
      %1132 = vmatmul.mubr.bf16.gmra.mxu0 %v532
      %v1133 = vpop.f32.mrf.mxu0
      %v1134 = vadd.f32 %v1069, %v1133
      %v1135 = vpop.f32.mrf.mxu0
      %v1136 = vpop.f32.mrf.mxu0
      %v1137 = vadd.f32 %v1072, %v1136
      %v1138 = vpop.f32.mrf.mxu0
      %1139 = vmatprep.mubr.bf16.mxu0 %v542
      %1140 = vmatmul.mubr.bf16.gmra.mxu0 %v541
      %v1141 = vpop.f32.mrf.mxu0
      %v1142 = vadd.f32 %v1077, %v1141
      %v1143 = vpop.f32.mrf.mxu0
      %v1144 = vpop.f32.mrf.mxu0
      %v1145 = vadd.f32 %v1080, %v1144
      %v1146 = vpop.f32.mrf.mxu0
      %1147 = vmatprep.mubr.bf16.mxu0 %v551
      %1148 = vmatmul.mubr.bf16.gmra.mxu0 %v550
      %v1149 = vpop.f32.mrf.mxu0
      %v1150 = vadd.f32 %v1085, %v1149
      %v1151 = vpop.f32.mrf.mxu0
      %v1152 = vpop.f32.mrf.mxu0
      %v1153 = vadd.f32 %v1088, %v1152
      %v1154 = vpop.f32.mrf.mxu0
      %1155 = vmatprep.mubr.bf16.mxu0 %v560
      %1156 = vmatmul.mubr.bf16.gmra.mxu0 %v559
      %v1157 = vpop.f32.mrf.mxu0
      %v1158 = vadd.f32 %v1093, %v1157
      %v1159 = vpop.f32.mrf.mxu0
      %v1160 = vpop.f32.mrf.mxu0
      %v1161 = vadd.f32 %v1096, %v1160
      %v1162 = vpop.f32.mrf.mxu0
      %1163 = vdwg.mxu0
      %1164 = vmatprep.subr.bf16.mxu0 0
      %1165 = vmatpush1.bf16.msra.mxu0 %v929
      %1166 = vmatprep.subr.bf16.mxu0 0
      %1167 = vmatpush1.bf16.msra.mxu0 %v928
      %1168 = vmatprep.subr.bf16.mxu0 0
      %1169 = vmatpush1.bf16.msra.mxu0 %v927
      %1170 = vmatprep.subr.bf16.mxu0 0
      %1171 = vmatpush1.bf16.msra.mxu0 %v926
      %1172 = vmatprep.subr.bf16.mxu0 0
      %1173 = vmatpush1.bf16.msra.mxu0 %v925
      %1174 = vmatprep.subr.bf16.mxu0 0
      %1175 = vmatpush1.bf16.msra.mxu0 %v924
      %1176 = vmatprep.subr.bf16.mxu0 0
      %1177 = vmatpush1.bf16.msra.mxu0 %v923
      %1178 = vmatprep.subr.bf16.mxu0 0
      %1179 = vmatpush1.bf16.msra.mxu0 %v922
      %1180 = vmatprep.subr.bf16.mxu0 0
      %1181 = vmatpush2.bf16.msra.mxu0 %v937
      %1182 = vmatprep.subr.bf16.mxu0 0
      %1183 = vmatpush2.bf16.msra.mxu0 %v936
      %1184 = vmatprep.subr.bf16.mxu0 0
      %1185 = vmatpush2.bf16.msra.mxu0 %v935
      %1186 = vmatprep.subr.bf16.mxu0 0
      %1187 = vmatpush2.bf16.msra.mxu0 %v934
      %1188 = vmatprep.subr.bf16.mxu0 0
      %1189 = vmatpush2.bf16.msra.mxu0 %v933
      %1190 = vmatprep.subr.bf16.mxu0 0
      %1191 = vmatpush2.bf16.msra.mxu0 %v932
      %1192 = vmatprep.subr.bf16.mxu0 0
      %1193 = vmatpush2.bf16.msra.mxu0 %v931
      %1194 = vmatprep.subr.bf16.mxu0 0
      %1195 = vmatpush2.bf16.msra.mxu0 %v930
      %1196 = vmatprep.mubr.bf16.mxu0 %v535
      %1197 = vmatmul.mubr.bf16.gmra.mxu0 %v534
      %v1198 = vpop.f32.mrf.mxu0
      %v1199 = vadd.f32 %v1134, %v1198
      %v1200 = vpop.f32.mrf.mxu0
      %v1201 = vpop.f32.mrf.mxu0
      %v1202 = vadd.f32 %v1137, %v1201
      %v1203 = vpop.f32.mrf.mxu0
      %1204 = vmatprep.mubr.bf16.mxu0 %v544
      %1205 = vmatmul.mubr.bf16.gmra.mxu0 %v543
      %v1206 = vpop.f32.mrf.mxu0
      %v1207 = vadd.f32 %v1142, %v1206
      %v1208 = vpop.f32.mrf.mxu0
      %v1209 = vpop.f32.mrf.mxu0
      %v1210 = vadd.f32 %v1145, %v1209
      %v1211 = vpop.f32.mrf.mxu0
      %1212 = vmatprep.mubr.bf16.mxu0 %v553
      %1213 = vmatmul.mubr.bf16.gmra.mxu0 %v552
      %v1214 = vpop.f32.mrf.mxu0
      %v1215 = vadd.f32 %v1150, %v1214
      %v1216 = vpop.f32.mrf.mxu0
      %v1217 = vpop.f32.mrf.mxu0
      %v1218 = vadd.f32 %v1153, %v1217
      %v1219 = vpop.f32.mrf.mxu0
      %1220 = vmatprep.mubr.bf16.mxu0 %v562
      %1221 = vmatmul.mubr.bf16.gmra.mxu0 %v561
      %v1222 = vpop.f32.mrf.mxu0
      %v1223 = vadd.f32 %v1158, %v1222
      %v1224 = vpop.f32.mrf.mxu0
      %v1225 = vpop.f32.mrf.mxu0
      %v1226 = vadd.f32 %v1161, %v1225
      %v1227 = vpop.f32.mrf.mxu0
      %1228 = vdwg.mxu0
      %1229 = vmatprep.subr.bf16.mxu0 0
      %1230 = vmatpush1.bf16.msra.mxu0 %v945
      %1231 = vmatprep.subr.bf16.mxu0 0
      %1232 = vmatpush1.bf16.msra.mxu0 %v944
      %1233 = vmatprep.subr.bf16.mxu0 0
      %1234 = vmatpush1.bf16.msra.mxu0 %v943
      %1235 = vmatprep.subr.bf16.mxu0 0
      %1236 = vmatpush1.bf16.msra.mxu0 %v942
      %1237 = vmatprep.subr.bf16.mxu0 0
      %1238 = vmatpush1.bf16.msra.mxu0 %v941
      %1239 = vmatprep.subr.bf16.mxu0 0
      %1240 = vmatpush1.bf16.msra.mxu0 %v940
      %1241 = vmatprep.subr.bf16.mxu0 0
      %1242 = vmatpush1.bf16.msra.mxu0 %v939
      %1243 = vmatprep.subr.bf16.mxu0 0
      %1244 = vmatpush1.bf16.msra.mxu0 %v938
      %1245 = vmatprep.subr.bf16.mxu0 0
      %1246 = vmatpush2.bf16.msra.mxu0 %v953
      %1247 = vmatprep.subr.bf16.mxu0 0
      %1248 = vmatpush2.bf16.msra.mxu0 %v952
      %1249 = vmatprep.subr.bf16.mxu0 0
      %1250 = vmatpush2.bf16.msra.mxu0 %v951
      %1251 = vmatprep.subr.bf16.mxu0 0
      %1252 = vmatpush2.bf16.msra.mxu0 %v950
      %1253 = vmatprep.subr.bf16.mxu0 0
      %1254 = vmatpush2.bf16.msra.mxu0 %v949
      %1255 = vmatprep.subr.bf16.mxu0 0
      %1256 = vmatpush2.bf16.msra.mxu0 %v948
      %1257 = vmatprep.subr.bf16.mxu0 0
      %1258 = vmatpush2.bf16.msra.mxu0 %v947
      %1259 = vmatprep.subr.bf16.mxu0 0
      %1260 = vmatpush2.bf16.msra.mxu0 %v946
      %1261 = vmatprep.mubr.bf16.mxu0 %v537
      %1262 = vmatmul.mubr.bf16.gmra.mxu0 %v536
      %v1263 = vpop.f32.mrf.mxu0
      %v1264 = vadd.f32 %v1199, %v1263
      %v1265 = vpop.f32.mrf.mxu0
      %v1266 = vpop.f32.mrf.mxu0
      %v1267 = vadd.f32 %v1202, %v1266
      %v1268 = vpop.f32.mrf.mxu0
      %1269 = vmatprep.mubr.bf16.mxu0 %v546
      %1270 = vmatmul.mubr.bf16.gmra.mxu0 %v545
      %v1271 = vpop.f32.mrf.mxu0
      %v1272 = vadd.f32 %v1207, %v1271
      %v1273 = vpop.f32.mrf.mxu0
      %v1274 = vpop.f32.mrf.mxu0
      %v1275 = vadd.f32 %v1210, %v1274
      %v1276 = vpop.f32.mrf.mxu0
      %1277 = vmatprep.mubr.bf16.mxu0 %v555
      %1278 = vmatmul.mubr.bf16.gmra.mxu0 %v554
      %v1279 = vpop.f32.mrf.mxu0
      %v1280 = vadd.f32 %v1215, %v1279
      %v1281 = vpop.f32.mrf.mxu0
      %v1282 = vpop.f32.mrf.mxu0
      %v1283 = vadd.f32 %v1218, %v1282
      %v1284 = vpop.f32.mrf.mxu0
      %1285 = vmatprep.mubr.bf16.mxu0 %v564
      %1286 = vmatmul.mubr.bf16.gmra.mxu0 %v563
      %v1287 = vpop.f32.mrf.mxu0
      %v1288 = vadd.f32 %v1223, %v1287
      %v1289 = vpop.f32.mrf.mxu0
      %v1290 = vpop.f32.mrf.mxu0
      %v1291 = vadd.f32 %v1226, %v1290
      %v1292 = vpop.f32.mrf.mxu0
      %1293 = vdwg.mxu0
      %1294 = vmatprep.subr.bf16.mxu0 0
      %1295 = vmatpush1.bf16.msra.mxu0 %v961
      %1296 = vmatprep.subr.bf16.mxu0 0
      %1297 = vmatpush1.bf16.msra.mxu0 %v960
      %1298 = vmatprep.subr.bf16.mxu0 0
      %1299 = vmatpush1.bf16.msra.mxu0 %v959
      %1300 = vmatprep.subr.bf16.mxu0 0
      %1301 = vmatpush1.bf16.msra.mxu0 %v958
      %1302 = vmatprep.subr.bf16.mxu0 0
      %1303 = vmatpush1.bf16.msra.mxu0 %v957
      %1304 = vmatprep.subr.bf16.mxu0 0
      %1305 = vmatpush1.bf16.msra.mxu0 %v956
      %1306 = vmatprep.subr.bf16.mxu0 0
      %1307 = vmatpush1.bf16.msra.mxu0 %v955
      %1308 = vmatprep.subr.bf16.mxu0 0
      %1309 = vmatpush1.bf16.msra.mxu0 %v954
      %1310 = vmatprep.subr.bf16.mxu0 0
      %1311 = vmatpush2.bf16.msra.mxu0 0
      %1312 = vmatprep.subr.bf16.mxu0 0
      %1313 = vmatpush2.bf16.msra.mxu0 0
      %1314 = vmatprep.subr.bf16.mxu0 0
      %1315 = vmatpush2.bf16.msra.mxu0 0
      %1316 = vmatprep.subr.bf16.mxu0 0
      %1317 = vmatpush2.bf16.msra.mxu0 0
      %1318 = vmatprep.subr.bf16.mxu0 0
      %1319 = vmatpush2.bf16.msra.mxu0 0
      %1320 = vmatprep.subr.bf16.mxu0 0
      %1321 = vmatpush2.bf16.msra.mxu0 0
      %1322 = vmatprep.subr.bf16.mxu0 0
      %1323 = vmatpush2.bf16.msra.mxu0 0
      %1324 = vmatprep.subr.bf16.mxu0 0
      %1325 = vmatpush2.bf16.msra.mxu0 0
      %1326 = vmatprep.mubr.bf16.mxu0 0
      %1327 = vmatmul.mubr.bf16.gmra.mxu0 %v538
      %v1328 = vpop.f32.mrf.mxu0
      %v1329 = vadd.f32 %v1264, %v1328
      %v1330 = vpop.f32.mrf.mxu0
      %v1331 = vpop.f32.mrf.mxu0
      %v1332 = vadd.f32 %v1267, %v1331
      %v1333 = vpop.f32.mrf.mxu0
      %1334 = vmatprep.mubr.bf16.mxu0 0
      %1335 = vmatmul.mubr.bf16.gmra.mxu0 %v547
      %v1336 = vpop.f32.mrf.mxu0
      %v1337 = vadd.f32 %v1272, %v1336
      %v1338 = vpop.f32.mrf.mxu0
      %v1339 = vpop.f32.mrf.mxu0
      %v1340 = vadd.f32 %v1275, %v1339
      %v1341 = vpop.f32.mrf.mxu0
      %1342 = vmatprep.mubr.bf16.mxu0 0
      %1343 = vmatmul.mubr.bf16.gmra.mxu0 %v556
      %v1344 = vpop.f32.mrf.mxu0
      %v1345 = vadd.f32 %v1280, %v1344
      %v1346 = vpop.f32.mrf.mxu0
      %v1347 = vpop.f32.mrf.mxu0
      %v1348 = vadd.f32 %v1283, %v1347
      %v1349 = vpop.f32.mrf.mxu0
      %1350 = vmatprep.mubr.bf16.mxu0 0
      %1351 = vmatmul.mubr.bf16.gmra.mxu0 %v565
      %v1352 = vpop.f32.mrf.mxu0
      %v1353 = vadd.f32 %v1288, %v1352
      %v1354 = vpop.f32.mrf.mxu0
      %v1355 = vpop.f32.mrf.mxu0
      %v1356 = vadd.f32 %v1291, %v1355
      %v1357 = vpop.f32.mrf.mxu0
      %1358 = vdwg.mxu0
      %v1359 = vld [vmem:[%s218] sm:$0xff]
      %v1360 = vld [vmem:[%s218 + $0x8] sm:$0xff]
      %v1361 = vld [vmem:[%s218 + $0x10] sm:$0xff]
      %v1362 = vld [vmem:[%s218 + $0x18] sm:$0xff]
      %v1363 = vld [vmem:[%s218 + $0x20] sm:$0xff]
      %v1364 = vld [vmem:[%s218 + $0x28] sm:$0xff]
      %v1365 = vld [vmem:[%s218 + $0x30] sm:$0xff]
      %v1366 = vld [vmem:[%s218 + $0x38] sm:$0xff]
      %v1367 = vadd.f32 %v1329, %v1359
      %v1368 = vadd.f32 %v1332, %v1360
      %v1369 = vadd.f32 %v1337, %v1361
      %v1370 = vadd.f32 %v1340, %v1362
      %v1371 = vadd.f32 %v1345, %v1363
      %v1372 = vadd.f32 %v1348, %v1364
      %v1373 = vadd.f32 %v1353, %v1365
      %v1374 = vadd.f32 %v1356, %v1366
      %1375 = vst [vmem:[%s224] sm:$0xff] %v1367
      %1376 = vst [vmem:[%s224 + $0x8] sm:$0xff] %v1368
      %1377 = vst [vmem:[%s224 + $0x10] sm:$0xff] %v1369
      %1378 = vst [vmem:[%s224 + $0x18] sm:$0xff] %v1370
      %1379 = vst [vmem:[%s224 + $0x20] sm:$0xff] %v1371
      %1380 = vst [vmem:[%s224 + $0x28] sm:$0xff] %v1372
      %1381 = vst [vmem:[%s224 + $0x30] sm:$0xff] %v1373
      %1382 = vst [vmem:[%s224 + $0x38] sm:$0xff] %v1374
      %s1383 = smul.u32 8, %s15
      %p1384 = scmp.lt.s32.totalorder %s1383, 15
      %s1385 = scalar_select %p1384, %s1383, 15
      %s1386 = smul.addr %s1385, 8
      %s1387 = scalar_lea.vmem %s4, %s1386
      // Predicated region
      $region37: #{_lambda_.17} parent=35 // pred_check
        %p1388 = pneg %p127
      $region38: #{_lambda_.17} parent=35 // pred_check_branch
        %1390 = sbr.rel (%p1388) target = $region40
      $region39: #{_lambda_.17} parent=35 // pred_region
        %s1391 = smul.u32 8, %s15
      $region40: #{_lambda_.17} parent=35 // pred_fallthru
        _
    $region36: #{_lambda_.17} parent=5 // pred_fallthru
      _
    %p1392 = scmp.le.s32.totalorder 2, %s10
    // Predicated region
    $region41: #{_lambda_.17} parent=5 // pred_check
      %p1393 = pneg %p1392
    $region42: #{_lambda_.17} parent=5 // pred_check_branch
      %1395 = sbr.rel (%p1393) target = $region44
    $region43: #{_lambda_.17} parent=5 // pred_region
      %s1396 = ssub.s32 %s10, 2
      // Predicated region
      $region45: #{_lambda_.17} parent=43 // pred_check
        %p1397 = pneg %p133
      $region46: #{_lambda_.17} parent=43 // pred_check_branch
        %1399 = sbr.rel (%p1397) target = $region48
      $region47: #{_lambda_.17} parent=43 // pred_region
        %s1400 = smul.u32 8, %s16
        %p1401 = scmp.lt.s32.totalorder %s1400, 15
        %s1402 = scalar_select %p1401, %s1400, 15
        %s1403 = smul.addr %s1402, 8
        %s1404 = scalar_lea.vmem %s4, %s1403
      $region48: #{_lambda_.17} parent=43 // pred_fallthru
        _
    $region44: #{_lambda_.17} parent=5 // pred_fallthru
      _
  $region6: #{_lambda_.17} parent=0 // loop_footer
    %s14 = sadd.s32 1, %s10
  $region7: #{_lambda_.17} parent=0 // loop_footer_branch
    %9 = sbr.rel target = $region3
  $region8: #{_lambda_.17} parent=0 // loop_exit
    _

// kernel: _lambda_.20
$region0: #{_lambda_.20}
  #allocation0 [shape = 'u32[]', space=smem, size = 0x4, offset = 0x4, fixed_abs, tag = 'smem constant byte address 0x4 - core index']
  #allocation1 [shape = 'u32[144,128]{1,0:T(1,128)}', space=vmem, size = 0x12000, scoped, tag = 'internal scratch']
  %s0 = inlined_call_operand.vmem [shape: bf16[128,128], index: 0, kind: input, shape index: {}]
  %s1 = inlined_call_operand.vmem [shape: bf16[128,128], index: 1, kind: input, shape index: {}]
  %s2 = inlined_call_operand.vmem [shape: f32[1,128], index: 2, kind: input, shape index: {}]
  %s3 = inlined_call_operand.vmem [shape: f32[128,128], index: 3, kind: input, shape index: {}]
  %s4 = inlined_call_operand.vmem [shape: f32[128,128], index: 4, kind: output, shape index: {}]
  %s5 = sld [smem:[#allocation0]]
  $region49: #{_lambda_.20} parent=0
    _
  %s7 = ssub.s32 1, %s5
  %s8 = scalar_select 0, %s7, %s5
  loop: start=0, step=1, limit=4
  $region2: #{_lambda_.20} parent=0 // loop_pre_header
    _
  $region3: #{_lambda_.20} parent=0 // loop_header
    %s10 = sphi 0, %s14
    %p11 = scmp.ge.s32.totalorder %s10, 4
    %s20 = sphi 0, %s22
    %s23 = sphi 0, %s20
    %s24 = sphi 0, %s23
    %s40 = sphi 0, %s24
    %s44 = sphi 0, %s44
    %s46 = sphi 0, %s44
    %s47 = sphi 0, %s46
    %s61 = sphi 0, %s47
    %s65 = sphi 0, %s65
    %s67 = sphi 0, %s65
    %s68 = sphi 0, %s67
    %s82 = sphi 0, %s68
    %s88 = sphi 0, %s90
    %s91 = sphi 0, %s88
    %s92 = sphi 0, %s91
    %s108 = sphi 0, %s92
    %s114 = sphi 0, %s116
    %s117 = sphi 0, %s114
    %s118 = sphi 0, %s117
    %s134 = sphi 0, %s118
  $region4: #{_lambda_.20} parent=0 // loop_header_branch
    %13 = sbr.rel (%p11) target = $region8
  $region5: #{_lambda_.20} parent=0 // loop_body
    %s15 = ssub.s32 %s10, 1
    %s16 = ssub.s32 %s10, 2
    %s17 = sadd.s32 %s10, 1
    %s18 = ssub.s32 %s10, %s17
    %p19 = scmp.eq.s32.totalorder %s18, 0
    %s21 = sadd.s32 %s20, 1
    %s22 = scalar_select %p19, %s20, %s21
    %p25 = pneg %p19
    %p26 = scmp.eq.s32.totalorder %s10, 1
    %p27 = por %p25, %p26
    %p28 = scmp.ne.s32.totalorder %s20, %s23
    %p29 = scmp.eq.s32.totalorder %s10, 0
    %p30 = por %p28, %p29
    %p31 = scmp.ne.s32.totalorder %s20, %s23
    %p32 = scmp.eq.s32.totalorder %s15, 1
    %p33 = por %p31, %p32
    %p34 = scmp.ne.s32.totalorder %s23, %s24
    %p35 = scmp.eq.s32.totalorder %s15, 0
    %p36 = por %p34, %p35
    %p37 = scmp.ne.s32.totalorder %s23, %s24
    %p38 = scmp.eq.s32.totalorder %s16, 1
    %p39 = por %p37, %p38
    %p41 = scmp.ne.s32.totalorder %s24, %s40
    %p42 = scmp.eq.s32.totalorder %s16, 0
    %p43 = por %p41, %p42
    %s45 = sadd.s32 %s44, 1
    %p48 = scmp.eq.s32.totalorder %s10, 1
    %p49 = scmp.ne.s32.totalorder %s44, %s46
    %p50 = scmp.eq.s32.totalorder %s10, 0
    %p51 = por %p49, %p50
    %p52 = scmp.ne.s32.totalorder %s44, %s46
    %p53 = scmp.eq.s32.totalorder %s15, 1
    %p54 = por %p52, %p53
    %p55 = scmp.ne.s32.totalorder %s46, %s47
    %p56 = scmp.eq.s32.totalorder %s15, 0
    %p57 = por %p55, %p56
    %p58 = scmp.ne.s32.totalorder %s46, %s47
    %p59 = scmp.eq.s32.totalorder %s16, 1
    %p60 = por %p58, %p59
    %p62 = scmp.ne.s32.totalorder %s47, %s61
    %p63 = scmp.eq.s32.totalorder %s16, 0
    %p64 = por %p62, %p63
    %s66 = sadd.s32 %s65, 1
    %p69 = scmp.eq.s32.totalorder %s10, 1
    %p70 = scmp.ne.s32.totalorder %s65, %s67
    %p71 = scmp.eq.s32.totalorder %s10, 0
    %p72 = por %p70, %p71
    %p73 = scmp.ne.s32.totalorder %s65, %s67
    %p74 = scmp.eq.s32.totalorder %s15, 1
    %p75 = por %p73, %p74
    %p76 = scmp.ne.s32.totalorder %s67, %s68
    %p77 = scmp.eq.s32.totalorder %s15, 0
    %p78 = por %p76, %p77
    %p79 = scmp.ne.s32.totalorder %s67, %s68
    %p80 = scmp.eq.s32.totalorder %s16, 1
    %p81 = por %p79, %p80
    %p83 = scmp.ne.s32.totalorder %s68, %s82
    %p84 = scmp.eq.s32.totalorder %s16, 0
    %p85 = por %p83, %p84
    %s86 = ssub.s32 %s10, %s17
    %p87 = scmp.eq.s32.totalorder %s86, 0
    %s89 = sadd.s32 %s88, 1
    %s90 = scalar_select %p87, %s88, %s89
    %p93 = pneg %p87
    %p94 = scmp.eq.s32.totalorder %s10, 1
    %p95 = por %p93, %p94
    %p96 = scmp.ne.s32.totalorder %s88, %s91
    %p97 = scmp.eq.s32.totalorder %s10, 0
    %p98 = por %p96, %p97
    %p99 = scmp.ne.s32.totalorder %s88, %s91
    %p100 = scmp.eq.s32.totalorder %s15, 1
    %p101 = por %p99, %p100
    %p102 = scmp.ne.s32.totalorder %s91, %s92
    %p103 = scmp.eq.s32.totalorder %s15, 0
    %p104 = por %p102, %p103
    %p105 = scmp.ne.s32.totalorder %s91, %s92
    %p106 = scmp.eq.s32.totalorder %s16, 1
    %p107 = por %p105, %p106
    %p109 = scmp.ne.s32.totalorder %s92, %s108
    %p110 = scmp.eq.s32.totalorder %s16, 0
    %p111 = por %p109, %p110
    %s112 = ssub.s32 %s10, %s17
    %p113 = scmp.eq.s32.totalorder %s112, 0
    %s115 = sadd.s32 %s114, 1
    %s116 = scalar_select %p113, %s114, %s115
    %p119 = pneg %p113
    %p120 = scmp.eq.s32.totalorder %s10, 1
    %p121 = por %p119, %p120
    %p122 = scmp.ne.s32.totalorder %s114, %s117
    %p123 = scmp.eq.s32.totalorder %s10, 0
    %p124 = por %p122, %p123
    %p125 = scmp.ne.s32.totalorder %s114, %s117
    %p126 = scmp.eq.s32.totalorder %s15, 1
    %p127 = por %p125, %p126
    %p128 = scmp.ne.s32.totalorder %s117, %s118
    %p129 = scmp.eq.s32.totalorder %s15, 0
    %p130 = por %p128, %p129
    %p131 = scmp.ne.s32.totalorder %s117, %s118
    %p132 = scmp.eq.s32.totalorder %s16, 1
    %p133 = por %p131, %p132
    %p135 = scmp.ne.s32.totalorder %s118, %s134
    %p136 = scmp.eq.s32.totalorder %s16, 0
    %p137 = por %p135, %p136
    %p138 = scmp.le.s32.totalorder 1, %s10
    %p139 = scmp.lt.s32.totalorder %s10, 3
    %p140 = pnand %p138, %p139
    %p141 = pneg %p140
    // Predicated region
    $region9: #{_lambda_.20} parent=5 // pred_check
      _
    $region10: #{_lambda_.20} parent=5 // pred_check_branch
      %143 = sbr.rel (%p140) target = $region12
    $region11: #{_lambda_.20} parent=5 // pred_region
      %s144 = ssub.s32 %s10, 1
      // Predicated region
      $region13: #{_lambda_.20} parent=11 // pred_check
        %p145 = pneg %p57
      $region14: #{_lambda_.20} parent=11 // pred_check_branch
        %147 = sbr.rel (%p145) target = $region16
      $region15: #{_lambda_.20} parent=11 // pred_region
        _
      $region16: #{_lambda_.20} parent=11 // pred_fallthru
        _
      // Predicated region
      $region17: #{_lambda_.20} parent=11 // pred_check
        %p148 = pneg %p78
      $region18: #{_lambda_.20} parent=11 // pred_check_branch
        %150 = sbr.rel (%p148) target = $region20
      $region19: #{_lambda_.20} parent=11 // pred_region
        _
      $region20: #{_lambda_.20} parent=11 // pred_fallthru
        _
    $region12: #{_lambda_.20} parent=5 // pred_fallthru
      _
    %p151 = scmp.lt.s32.totalorder %s10, 2
    // Predicated region
    $region21: #{_lambda_.20} parent=5 // pred_check
      %p152 = pneg %p151
    $region22: #{_lambda_.20} parent=5 // pred_check_branch
      %154 = sbr.rel (%p152) target = $region24
    $region23: #{_lambda_.20} parent=5 // pred_region
      // Predicated region
      $region25: #{_lambda_.20} parent=23 // pred_check
        %p155 = pneg %p30
      $region26: #{_lambda_.20} parent=23 // pred_check_branch
        %157 = sbr.rel (%p155) target = $region28
      $region27: #{_lambda_.20} parent=23 // pred_region
        %s158 = smul.u32 8, %s10
        %p159 = scmp.lt.s32.totalorder %s158, 15
        %s160 = scalar_select %p159, %s158, 15
        %s161 = smul.addr %s160, 4
        %s162 = scalar_lea.vmem %s0, %s161
        %s163 = smul.u32 8, %s10
      $region28: #{_lambda_.20} parent=23 // pred_fallthru
        _
      // Predicated region
      $region29: #{_lambda_.20} parent=23 // pred_check
        %p164 = pneg %p98
      $region30: #{_lambda_.20} parent=23 // pred_check_branch
        %166 = sbr.rel (%p164) target = $region32
      $region31: #{_lambda_.20} parent=23 // pred_region
        %s167 = smul.u32 8, %s10
        %p168 = scmp.lt.s32.totalorder %s167, 15
        %s169 = scalar_select %p168, %s167, 15
        %s170 = smul.addr %s169, 8
        %s171 = scalar_lea.vmem %s3, %s170
        %s172 = smul.u32 8, %s10
      $region32: #{_lambda_.20} parent=23 // pred_fallthru
        _
    $region24: #{_lambda_.20} parent=5 // pred_fallthru
      _
    %p173 = scmp.le.s32.totalorder 1, %s10
    %p174 = scmp.lt.s32.totalorder %s10, 3
    %p175 = pnand %p173, %p174
    %p176 = pneg %p175
    // Predicated region
    $region33: #{_lambda_.20} parent=5 // pred_check
      _
    $region34: #{_lambda_.20} parent=5 // pred_check_branch
      %178 = sbr.rel (%p175) target = $region36
    $region35: #{_lambda_.20} parent=5 // pred_region
      %s179 = ssub.s32 %s10, 1
      %s180 = smul.u32 8, %s15
      %p181 = scmp.lt.s32.totalorder %s180, 15
      %s182 = scalar_select %p181, %s180, 15
      %s183 = smul.addr %s182, 4
      %s184 = scalar_lea.vmem %s0, %s183
      %p185 = pneg %p36
      %p186 = pneg %p33
      %p187 = pneg %p57
      %p188 = pneg %p54
      %p189 = pneg %p78
      %p190 = pneg %p75
      %s191 = smul.u32 8, %s15
      %p192 = scmp.lt.s32.totalorder %s191, 15
      %s193 = scalar_select %p192, %s191, 15
      %s194 = smul.addr %s193, 8
      %s195 = scalar_lea.vmem %s3, %s194
      %p196 = pneg %p104
      %p197 = pneg %p101
      %p198 = pneg %p130
      %p199 = pneg %p127
      %s200 = smul.u32 8, %s15
      %p201 = scmp.lt.s32.totalorder %s200, 15
      %s202 = scalar_select %p201, %s200, 15
      %s203 = smul.addr %s202, 8
      %s204 = scalar_lea.vmem %s4, %s203
      %s205 = smul.u32 8, %s15
      %p206 = scmp.lt.s32.totalorder %s205, 15
      %s207 = scalar_select %p206, %s205, 15
      %s208 = smul.addr %s207, 4
      %s209 = scalar_lea.vmem %s0, %s208
      %s210 = smul.u32 8, %s15
      %s211 = smul.u32 8, %s15
      %p212 = scmp.lt.s32.totalorder %s211, 15
      %s213 = scalar_select %p212, %s211, 15
      %s214 = smul.addr %s213, 8
      %s215 = scalar_lea.vmem %s3, %s214
      %s216 = smul.u32 8, %s15
      %s217 = smul.u32 8, %s15
      %p218 = scmp.lt.s32.totalorder %s217, 15
      %s219 = scalar_select %p218, %s217, 15
      %s220 = smul.addr %s219, 8
      %s221 = scalar_lea.vmem %s4, %s220
      %s222 = smul.u32 8, %s15
      %v224 = vld [vmem:[%s209] sm:$0xf]
      %v225 = vld [vmem:[%s209 + $0x4] sm:$0xf]
      %v226 = vld [vmem:[%s209 + $0x8] sm:$0xf]
      %v227 = vld [vmem:[%s209 + $0xc] sm:$0xf]
      %v228 = vld [vmem:[%s209 + $0x10] sm:$0xf]
      %v229 = vld [vmem:[%s209 + $0x14] sm:$0xf]
      %v230 = vld [vmem:[%s209 + $0x18] sm:$0xf]
      %v231 = vld [vmem:[%s209 + $0x1c] sm:$0xf]
      %v232 = vld [vmem:[%s1] sm:$0xf]
      %v233 = vld [vmem:[%s1 + $0x4] sm:$0xf]
      %v234 = vld [vmem:[%s1 + $0x8] sm:$0xf]
      %v235 = vld [vmem:[%s1 + $0xc] sm:$0xf]
      %v236 = vld [vmem:[%s1 + $0x10] sm:$0xf]
      %v237 = vld [vmem:[%s1 + $0x14] sm:$0xf]
      %v238 = vld [vmem:[%s1 + $0x18] sm:$0xf]
      %v239 = vld [vmem:[%s1 + $0x1c] sm:$0xf]
      %v240 = vld [vmem:[%s1 + $0x20] sm:$0xf]
      %v241 = vld [vmem:[%s1 + $0x24] sm:$0xf]
      %v242 = vld [vmem:[%s1 + $0x28] sm:$0xf]
      %v243 = vld [vmem:[%s1 + $0x2c] sm:$0xf]
      %v244 = vld [vmem:[%s1 + $0x30] sm:$0xf]
      %v245 = vld [vmem:[%s1 + $0x34] sm:$0xf]
      %v246 = vld [vmem:[%s1 + $0x38] sm:$0xf]
      %v247 = vld [vmem:[%s1 + $0x3c] sm:$0xf]
      %v248 = vld [vmem:[%s2] sm:$0x1]
      %v250 = vlaneseq
      %v251 = vshrl.u32 %v250, 7
      %v252 = vsub.s32 0, %v251
      %v253 = vrot.slane %v248, %v252
      %v263 = vunpack.c.l.b16 %v224
      %v264 = vunpack.c.l.b16 %v225
      %v265 = vunpack.c.l.b16 %v226
      %v266 = vunpack.c.l.b16 %v227
      %v267 = vunpack.c.l.b16 %v228
      %v268 = vunpack.c.l.b16 %v229
      %v269 = vunpack.c.l.b16 %v230
      %v270 = vunpack.c.l.b16 %v231
      %v271 = vpack.c.b16 %v264, %v263
      %v272 = vpack.c.b16 %v266, %v265
      %v273 = vpack.c.b16 %v268, %v267
      %v274 = vpack.c.b16 %v270, %v269
      %v295 = vunpack.c.l.b16 %v232
      %v296 = vunpack.c.l.b16 %v233
      %v297 = vunpack.c.l.b16 %v234
      %v298 = vunpack.c.l.b16 %v235
      %v299 = vunpack.c.l.b16 %v236
      %v300 = vunpack.c.l.b16 %v237
      %v301 = vunpack.c.l.b16 %v238
      %v302 = vunpack.c.l.b16 %v239
      %v303 = vunpack.c.l.b16 %v240
      %v304 = vunpack.c.l.b16 %v241
      %v305 = vunpack.c.l.b16 %v242
      %v306 = vunpack.c.l.b16 %v243
      %v307 = vunpack.c.l.b16 %v244
      %v308 = vunpack.c.l.b16 %v245
      %v309 = vunpack.c.l.b16 %v246
      %v310 = vunpack.c.l.b16 %v247
      %v311 = vpack.c.b16 %v296, %v295
      %v312 = vpack.c.b16 %v298, %v297
      %v313 = vpack.c.b16 %v300, %v299
      %v314 = vpack.c.b16 %v302, %v301
      %v315 = vpack.c.b16 %v304, %v303
      %v316 = vpack.c.b16 %v306, %v305
      %v317 = vpack.c.b16 %v308, %v307
      %v318 = vpack.c.b16 %v310, %v309
      %327 = vmatprep.subr.bf16.mxu0 0
      %328 = vmatpush1.bf16.msra.mxu0 %v318
      %329 = vmatprep.subr.bf16.mxu0 0
      %330 = vmatpush1.bf16.msra.mxu0 %v317
      %331 = vmatprep.subr.bf16.mxu0 0
      %332 = vmatpush1.bf16.msra.mxu0 %v316
      %333 = vmatprep.subr.bf16.mxu0 0
      %334 = vmatpush1.bf16.msra.mxu0 %v315
      %335 = vmatprep.subr.bf16.mxu0 0
      %336 = vmatpush1.bf16.msra.mxu0 %v314
      %337 = vmatprep.subr.bf16.mxu0 0
      %338 = vmatpush1.bf16.msra.mxu0 %v313
      %339 = vmatprep.subr.bf16.mxu0 0
      %340 = vmatpush1.bf16.msra.mxu0 %v312
      %341 = vmatprep.subr.bf16.mxu0 0
      %342 = vmatpush1.bf16.msra.mxu0 %v311
      %343 = vmatprep.subr.bf16.mxu0 0
      %344 = vmatpush2.bf16.msra.mxu0 0
      %345 = vmatprep.subr.bf16.mxu0 0
      %346 = vmatpush2.bf16.msra.mxu0 0
      %347 = vmatprep.subr.bf16.mxu0 0
      %348 = vmatpush2.bf16.msra.mxu0 0
      %349 = vmatprep.subr.bf16.mxu0 0
      %350 = vmatpush2.bf16.msra.mxu0 0
      %351 = vmatprep.subr.bf16.mxu0 0
      %352 = vmatpush2.bf16.msra.mxu0 0
      %353 = vmatprep.subr.bf16.mxu0 0
      %354 = vmatpush2.bf16.msra.mxu0 0
      %355 = vmatprep.subr.bf16.mxu0 0
      %356 = vmatpush2.bf16.msra.mxu0 0
      %357 = vmatprep.subr.bf16.mxu0 0
      %358 = vmatpush2.bf16.msra.mxu0 0
      %359 = vmatprep.mubr.bf16.mxu0 0
      %360 = vmatmul.mubr.bf16.gmra.mxu0 %v271
      %v361 = vpop.f32.mrf.mxu0
      %v362 = vadd.f32 %v253, %v361
      %v363 = vpop.f32.mrf.mxu0
      %v364 = vpop.f32.mrf.mxu0
      %v365 = vadd.f32 %v253, %v364
      %v366 = vpop.f32.mrf.mxu0
      %367 = vmatprep.mubr.bf16.mxu0 0
      %368 = vmatmul.mubr.bf16.gmra.mxu0 %v272
      %v369 = vpop.f32.mrf.mxu0
      %v370 = vadd.f32 %v253, %v369
      %v371 = vpop.f32.mrf.mxu0
      %v372 = vpop.f32.mrf.mxu0
      %v373 = vadd.f32 %v253, %v372
      %v374 = vpop.f32.mrf.mxu0
      %375 = vmatprep.mubr.bf16.mxu0 0
      %376 = vmatmul.mubr.bf16.gmra.mxu0 %v273
      %v377 = vpop.f32.mrf.mxu0
      %v378 = vadd.f32 %v253, %v377
      %v379 = vpop.f32.mrf.mxu0
      %v380 = vpop.f32.mrf.mxu0
      %v381 = vadd.f32 %v253, %v380
      %v382 = vpop.f32.mrf.mxu0
      %383 = vmatprep.mubr.bf16.mxu0 0
      %384 = vmatmul.mubr.bf16.gmra.mxu0 %v274
      %v385 = vpop.f32.mrf.mxu0
      %v386 = vadd.f32 %v253, %v385
      %v387 = vpop.f32.mrf.mxu0
      %v388 = vpop.f32.mrf.mxu0
      %v389 = vadd.f32 %v253, %v388
      %v390 = vpop.f32.mrf.mxu0
      %391 = vdwg.mxu0
      %v392 = vld [vmem:[%s215] sm:$0xff]
      %v393 = vld [vmem:[%s215 + $0x8] sm:$0xff]
      %v394 = vld [vmem:[%s215 + $0x10] sm:$0xff]
      %v395 = vld [vmem:[%s215 + $0x18] sm:$0xff]
      %v396 = vld [vmem:[%s215 + $0x20] sm:$0xff]
      %v397 = vld [vmem:[%s215 + $0x28] sm:$0xff]
      %v398 = vld [vmem:[%s215 + $0x30] sm:$0xff]
      %v399 = vld [vmem:[%s215 + $0x38] sm:$0xff]
      %v400 = vadd.f32 %v362, %v392
      %v401 = vadd.f32 %v365, %v393
      %v402 = vadd.f32 %v370, %v394
      %v403 = vadd.f32 %v373, %v395
      %v404 = vadd.f32 %v378, %v396
      %v405 = vadd.f32 %v381, %v397
      %v406 = vadd.f32 %v386, %v398
      %v407 = vadd.f32 %v389, %v399
      %408 = vst [vmem:[%s221] sm:$0xff] %v400
      %409 = vst [vmem:[%s221 + $0x8] sm:$0xff] %v401
      %410 = vst [vmem:[%s221 + $0x10] sm:$0xff] %v402
      %411 = vst [vmem:[%s221 + $0x18] sm:$0xff] %v403
      %412 = vst [vmem:[%s221 + $0x20] sm:$0xff] %v404
      %413 = vst [vmem:[%s221 + $0x28] sm:$0xff] %v405
      %414 = vst [vmem:[%s221 + $0x30] sm:$0xff] %v406
      %415 = vst [vmem:[%s221 + $0x38] sm:$0xff] %v407
      %s416 = smul.u32 8, %s15
      %p417 = scmp.lt.s32.totalorder %s416, 15
      %s418 = scalar_select %p417, %s416, 15
      %s419 = smul.addr %s418, 8
      %s420 = scalar_lea.vmem %s4, %s419
      // Predicated region
      $region37: #{_lambda_.20} parent=35 // pred_check
        %p421 = pneg %p127
      $region38: #{_lambda_.20} parent=35 // pred_check_branch
        %423 = sbr.rel (%p421) target = $region40
      $region39: #{_lambda_.20} parent=35 // pred_region
        %s424 = smul.u32 8, %s15
      $region40: #{_lambda_.20} parent=35 // pred_fallthru
        _
    $region36: #{_lambda_.20} parent=5 // pred_fallthru
      _
    %p425 = scmp.le.s32.totalorder 2, %s10
    // Predicated region
    $region41: #{_lambda_.20} parent=5 // pred_check
      %p426 = pneg %p425
    $region42: #{_lambda_.20} parent=5 // pred_check_branch
      %428 = sbr.rel (%p426) target = $region44
    $region43: #{_lambda_.20} parent=5 // pred_region
      %s429 = ssub.s32 %s10, 2
      // Predicated region
      $region45: #{_lambda_.20} parent=43 // pred_check
        %p430 = pneg %p133
      $region46: #{_lambda_.20} parent=43 // pred_check_branch
        %432 = sbr.rel (%p430) target = $region48
      $region47: #{_lambda_.20} parent=43 // pred_region
        %s433 = smul.u32 8, %s16
        %p434 = scmp.lt.s32.totalorder %s433, 15
        %s435 = scalar_select %p434, %s433, 15
        %s436 = smul.addr %s435, 8
        %s437 = scalar_lea.vmem %s4, %s436
      $region48: #{_lambda_.20} parent=43 // pred_fallthru
        _
    $region44: #{_lambda_.20} parent=5 // pred_fallthru
      _
  $region6: #{_lambda_.20} parent=0 // loop_footer
    %s14 = sadd.s32 1, %s10
  $region7: #{_lambda_.20} parent=0 // loop_footer_branch
    %9 = sbr.rel target = $region3
  $region8: #{_lambda_.20} parent=0 // loop_exit
    _

// kernel: _lambda_.19
$region0: #{_lambda_.19}
  #allocation0 [shape = 'u32[]', space=smem, size = 0x4, offset = 0x4, fixed_abs, tag = 'smem constant byte address 0x4 - core index']
  #allocation1 [shape = 'u32[144,128]{1,0:T(1,128)}', space=vmem, size = 0x12000, scoped, tag = 'internal scratch']
  %s0 = inlined_call_operand.vmem [shape: f32[2,64,128], index: 0, kind: input, shape index: {}]
  %s1 = inlined_call_operand.vmem [shape: f32[2,64,128], index: 1, kind: input, shape index: {}]
  %s2 = inlined_call_operand.vmem [shape: f32[2,64,128], index: 2, kind: input, shape index: {}]
  %s3 = inlined_call_operand.vmem [shape: f32[2,64,128], index: 3, kind: output, shape index: {}]
  %s4 = sld [smem:[#allocation0]]
  $region45: #{_lambda_.19} parent=0
    _
  %s6 = ssub.s32 1, %s4
  %s7 = scalar_select 0, %s6, %s4
  loop: start=0, step=1, limit=4
  $region2: #{_lambda_.19} parent=0 // loop_pre_header
    _
  $region3: #{_lambda_.19} parent=0 // loop_header
    %s9 = sphi 0, %s13
    %p10 = scmp.ge.s32.totalorder %s9, 4
    %s19 = sphi 0, %s21
    %s22 = sphi 0, %s19
    %s23 = sphi 0, %s22
    %s39 = sphi 0, %s23
    %s45 = sphi 0, %s47
    %s48 = sphi 0, %s45
    %s49 = sphi 0, %s48
    %s65 = sphi 0, %s49
    %s71 = sphi 0, %s73
    %s74 = sphi 0, %s71
    %s75 = sphi 0, %s74
    %s91 = sphi 0, %s75
    %s97 = sphi 0, %s99
    %s100 = sphi 0, %s97
    %s101 = sphi 0, %s100
    %s117 = sphi 0, %s101
  $region4: #{_lambda_.19} parent=0 // loop_header_branch
    %12 = sbr.rel (%p10) target = $region8
  $region5: #{_lambda_.19} parent=0 // loop_body
    %s14 = ssub.s32 %s9, 1
    %s15 = ssub.s32 %s9, 2
    %s16 = sadd.s32 %s9, 1
    %s17 = ssub.s32 %s9, %s16
    %p18 = scmp.eq.s32.totalorder %s17, 0
    %s20 = sadd.s32 %s19, 1
    %s21 = scalar_select %p18, %s19, %s20
    %p24 = pneg %p18
    %p25 = scmp.eq.s32.totalorder %s9, 1
    %p26 = por %p24, %p25
    %p27 = scmp.ne.s32.totalorder %s19, %s22
    %p28 = scmp.eq.s32.totalorder %s9, 0
    %p29 = por %p27, %p28
    %p30 = scmp.ne.s32.totalorder %s19, %s22
    %p31 = scmp.eq.s32.totalorder %s14, 1
    %p32 = por %p30, %p31
    %p33 = scmp.ne.s32.totalorder %s22, %s23
    %p34 = scmp.eq.s32.totalorder %s14, 0
    %p35 = por %p33, %p34
    %p36 = scmp.ne.s32.totalorder %s22, %s23
    %p37 = scmp.eq.s32.totalorder %s15, 1
    %p38 = por %p36, %p37
    %p40 = scmp.ne.s32.totalorder %s23, %s39
    %p41 = scmp.eq.s32.totalorder %s15, 0
    %p42 = por %p40, %p41
    %s43 = ssub.s32 %s9, %s16
    %p44 = scmp.eq.s32.totalorder %s43, 0
    %s46 = sadd.s32 %s45, 1
    %s47 = scalar_select %p44, %s45, %s46
    %p50 = pneg %p44
    %p51 = scmp.eq.s32.totalorder %s9, 1
    %p52 = por %p50, %p51
    %p53 = scmp.ne.s32.totalorder %s45, %s48
    %p54 = scmp.eq.s32.totalorder %s9, 0
    %p55 = por %p53, %p54
    %p56 = scmp.ne.s32.totalorder %s45, %s48
    %p57 = scmp.eq.s32.totalorder %s14, 1
    %p58 = por %p56, %p57
    %p59 = scmp.ne.s32.totalorder %s48, %s49
    %p60 = scmp.eq.s32.totalorder %s14, 0
    %p61 = por %p59, %p60
    %p62 = scmp.ne.s32.totalorder %s48, %s49
    %p63 = scmp.eq.s32.totalorder %s15, 1
    %p64 = por %p62, %p63
    %p66 = scmp.ne.s32.totalorder %s49, %s65
    %p67 = scmp.eq.s32.totalorder %s15, 0
    %p68 = por %p66, %p67
    %s69 = ssub.s32 %s9, %s16
    %p70 = scmp.eq.s32.totalorder %s69, 0
    %s72 = sadd.s32 %s71, 1
    %s73 = scalar_select %p70, %s71, %s72
    %p76 = pneg %p70
    %p77 = scmp.eq.s32.totalorder %s9, 1
    %p78 = por %p76, %p77
    %p79 = scmp.ne.s32.totalorder %s71, %s74
    %p80 = scmp.eq.s32.totalorder %s9, 0
    %p81 = por %p79, %p80
    %p82 = scmp.ne.s32.totalorder %s71, %s74
    %p83 = scmp.eq.s32.totalorder %s14, 1
    %p84 = por %p82, %p83
    %p85 = scmp.ne.s32.totalorder %s74, %s75
    %p86 = scmp.eq.s32.totalorder %s14, 0
    %p87 = por %p85, %p86
    %p88 = scmp.ne.s32.totalorder %s74, %s75
    %p89 = scmp.eq.s32.totalorder %s15, 1
    %p90 = por %p88, %p89
    %p92 = scmp.ne.s32.totalorder %s75, %s91
    %p93 = scmp.eq.s32.totalorder %s15, 0
    %p94 = por %p92, %p93
    %s95 = ssub.s32 %s9, %s16
    %p96 = scmp.eq.s32.totalorder %s95, 0
    %s98 = sadd.s32 %s97, 1
    %s99 = scalar_select %p96, %s97, %s98
    %p102 = pneg %p96
    %p103 = scmp.eq.s32.totalorder %s9, 1
    %p104 = por %p102, %p103
    %p105 = scmp.ne.s32.totalorder %s97, %s100
    %p106 = scmp.eq.s32.totalorder %s9, 0
    %p107 = por %p105, %p106
    %p108 = scmp.ne.s32.totalorder %s97, %s100
    %p109 = scmp.eq.s32.totalorder %s14, 1
    %p110 = por %p108, %p109
    %p111 = scmp.ne.s32.totalorder %s100, %s101
    %p112 = scmp.eq.s32.totalorder %s14, 0
    %p113 = por %p111, %p112
    %p114 = scmp.ne.s32.totalorder %s100, %s101
    %p115 = scmp.eq.s32.totalorder %s15, 1
    %p116 = por %p114, %p115
    %p118 = scmp.ne.s32.totalorder %s101, %s117
    %p119 = scmp.eq.s32.totalorder %s15, 0
    %p120 = por %p118, %p119
    %p121 = scmp.le.s32.totalorder 1, %s9
    %p122 = scmp.lt.s32.totalorder %s9, 3
    %p123 = pnand %p121, %p122
    %p124 = pneg %p123
    // Predicated region
    $region9: #{_lambda_.19} parent=5 // pred_check
      _
    $region10: #{_lambda_.19} parent=5 // pred_check_branch
      %126 = sbr.rel (%p123) target = $region12
    $region11: #{_lambda_.19} parent=5 // pred_region
      %s127 = ssub.s32 %s9, 1
    $region12: #{_lambda_.19} parent=5 // pred_fallthru
      _
    %p128 = scmp.lt.s32.totalorder %s9, 2
    // Predicated region
    $region13: #{_lambda_.19} parent=5 // pred_check
      %p129 = pneg %p128
    $region14: #{_lambda_.19} parent=5 // pred_check_branch
      %131 = sbr.rel (%p129) target = $region16
    $region15: #{_lambda_.19} parent=5 // pred_region
      // Predicated region
      $region17: #{_lambda_.19} parent=15 // pred_check
        %p132 = pneg %p29
      $region18: #{_lambda_.19} parent=15 // pred_check_branch
        %134 = sbr.rel (%p132) target = $region20
      $region19: #{_lambda_.19} parent=15 // pred_region
        %p135 = scmp.lt.s32.totalorder %s9, 1
        %s136 = scalar_select %p135, %s9, 1
        %s137 = smul.addr %s136, 8
        %s138 = smul.addr %s137, 8
        %s139 = scalar_lea.vmem %s0, %s138
      $region20: #{_lambda_.19} parent=15 // pred_fallthru
        _
      // Predicated region
      $region21: #{_lambda_.19} parent=15 // pred_check
        %p140 = pneg %p55
      $region22: #{_lambda_.19} parent=15 // pred_check_branch
        %142 = sbr.rel (%p140) target = $region24
      $region23: #{_lambda_.19} parent=15 // pred_region
        %p143 = scmp.lt.s32.totalorder %s9, 1
        %s144 = scalar_select %p143, %s9, 1
        %s145 = smul.addr %s144, 8
        %s146 = smul.addr %s145, 8
        %s147 = scalar_lea.vmem %s1, %s146
      $region24: #{_lambda_.19} parent=15 // pred_fallthru
        _
      // Predicated region
      $region25: #{_lambda_.19} parent=15 // pred_check
        %p148 = pneg %p81
      $region26: #{_lambda_.19} parent=15 // pred_check_branch
        %150 = sbr.rel (%p148) target = $region28
      $region27: #{_lambda_.19} parent=15 // pred_region
        %p151 = scmp.lt.s32.totalorder %s9, 1
        %s152 = scalar_select %p151, %s9, 1
        %s153 = smul.addr %s152, 8
        %s154 = smul.addr %s153, 8
        %s155 = scalar_lea.vmem %s2, %s154
      $region28: #{_lambda_.19} parent=15 // pred_fallthru
        _
    $region16: #{_lambda_.19} parent=5 // pred_fallthru
      _
    %p156 = scmp.le.s32.totalorder 1, %s9
    %p157 = scmp.lt.s32.totalorder %s9, 3
    %p158 = pnand %p156, %p157
    %p159 = pneg %p158
    // Predicated region
    $region29: #{_lambda_.19} parent=5 // pred_check
      _
    $region30: #{_lambda_.19} parent=5 // pred_check_branch
      %161 = sbr.rel (%p158) target = $region32
    $region31: #{_lambda_.19} parent=5 // pred_region
      %s162 = ssub.s32 %s9, 1
      %p163 = scmp.lt.s32.totalorder %s14, 1
      %s164 = scalar_select %p163, %s14, 1
      %s165 = smul.addr %s164, 8
      %s166 = smul.addr %s165, 8
      %s167 = scalar_lea.vmem %s0, %s166
      %p168 = pneg %p35
      %p169 = pneg %p32
      %p170 = scmp.lt.s32.totalorder %s14, 1
      %s171 = scalar_select %p170, %s14, 1
      %s172 = smul.addr %s171, 8
      %s173 = smul.addr %s172, 8
      %s174 = scalar_lea.vmem %s1, %s173
      %p175 = pneg %p61
      %p176 = pneg %p58
      %p177 = scmp.lt.s32.totalorder %s14, 1
      %s178 = scalar_select %p177, %s14, 1
      %s179 = smul.addr %s178, 8
      %s180 = smul.addr %s179, 8
      %s181 = scalar_lea.vmem %s2, %s180
      %p182 = pneg %p87
      %p183 = pneg %p84
      %p184 = pneg %p113
      %p185 = pneg %p110
      %p186 = scmp.lt.s32.totalorder %s14, 1
      %s187 = scalar_select %p186, %s14, 1
      %s188 = smul.addr %s187, 8
      %s189 = smul.addr %s188, 8
      %s190 = scalar_lea.vmem %s3, %s189
      %p191 = scmp.lt.s32.totalorder %s14, 1
      %s192 = scalar_select %p191, %s14, 1
      %s193 = smul.addr %s192, 8
      %s194 = smul.addr %s193, 8
      %s195 = scalar_lea.vmem %s0, %s194
      %p196 = scmp.lt.s32.totalorder %s14, 1
      %s197 = scalar_select %p196, %s14, 1
      %s198 = smul.addr %s197, 8
      %s199 = smul.addr %s198, 8
      %s200 = scalar_lea.vmem %s1, %s199
      %p201 = scmp.lt.s32.totalorder %s14, 1
      %s202 = scalar_select %p201, %s14, 1
      %s203 = smul.addr %s202, 8
      %s204 = smul.addr %s203, 8
      %s205 = scalar_lea.vmem %s2, %s204
      %p206 = scmp.lt.s32.totalorder %s14, 1
      %s207 = scalar_select %p206, %s14, 1
      %s208 = smul.addr %s207, 8
      %s209 = smul.addr %s208, 8
      %s210 = scalar_lea.vmem %s3, %s209
      %v212 = vld [vmem:[%s195] sm:$0xff]
      %v213 = vld [vmem:[%s195 + $0x8] sm:$0xff]
      %v214 = vld [vmem:[%s195 + $0x10] sm:$0xff]
      %v215 = vld [vmem:[%s195 + $0x18] sm:$0xff]
      %v216 = vld [vmem:[%s195 + $0x20] sm:$0xff]
      %v217 = vld [vmem:[%s195 + $0x28] sm:$0xff]
      %v218 = vld [vmem:[%s195 + $0x30] sm:$0xff]
      %v219 = vld [vmem:[%s195 + $0x38] sm:$0xff]
      %v220 = vpack.c.bf16 %v213, %v212
      %v221 = vpack.c.bf16 %v215, %v214
      %v222 = vpack.c.bf16 %v217, %v216
      %v223 = vpack.c.bf16 %v219, %v218
      %v224 = vld [vmem:[%s200] sm:$0xff]
      %v225 = vld [vmem:[%s200 + $0x8] sm:$0xff]
      %v226 = vld [vmem:[%s200 + $0x10] sm:$0xff]
      %v227 = vld [vmem:[%s200 + $0x18] sm:$0xff]
      %v228 = vld [vmem:[%s200 + $0x20] sm:$0xff]
      %v229 = vld [vmem:[%s200 + $0x28] sm:$0xff]
      %v230 = vld [vmem:[%s200 + $0x30] sm:$0xff]
      %v231 = vld [vmem:[%s200 + $0x38] sm:$0xff]
      %v232 = vpack.c.bf16 %v225, %v224
      %v233 = vpack.c.bf16 %v227, %v226
      %v234 = vpack.c.bf16 %v229, %v228
      %v235 = vpack.c.bf16 %v231, %v230
      %236 = vmatprep.subr.bf16.mxu0 0
      %237 = vmatpush1.bf16.xpose.msra.mxu0 0
      %238 = vmatprep.subr.bf16.mxu0 0
      %239 = vmatpush1.bf16.xpose.msra.mxu0 0
      %240 = vmatprep.subr.bf16.mxu0 0
      %241 = vmatpush1.bf16.xpose.msra.mxu0 0
      %242 = vmatprep.subr.bf16.mxu0 0
      %243 = vmatpush1.bf16.xpose.msra.mxu0 0
      %244 = vmatprep.subr.bf16.mxu0 0
      %245 = vmatpush1.bf16.xpose.msra.mxu0 %v235
      %246 = vmatprep.subr.bf16.mxu0 0
      %247 = vmatpush1.bf16.xpose.msra.mxu0 %v234
      %248 = vmatprep.subr.bf16.mxu0 0
      %249 = vmatpush1.bf16.xpose.msra.mxu0 %v233
      %250 = vmatprep.subr.bf16.mxu0 0
      %251 = vmatpush1.bf16.xpose.msra.mxu0 %v232
      %252 = vmatprep.subr.bf16.mxu0 0
      %253 = vmatpush2.bf16.xpose.msra.mxu0 0
      %254 = vmatprep.subr.bf16.mxu0 0
      %255 = vmatpush2.bf16.xpose.msra.mxu0 0
      %256 = vmatprep.subr.bf16.mxu0 0
      %257 = vmatpush2.bf16.xpose.msra.mxu0 0
      %258 = vmatprep.subr.bf16.mxu0 0
      %259 = vmatpush2.bf16.xpose.msra.mxu0 0
      %260 = vmatprep.subr.bf16.mxu0 0
      %261 = vmatpush2.bf16.xpose.msra.mxu0 0
      %262 = vmatprep.subr.bf16.mxu0 0
      %263 = vmatpush2.bf16.xpose.msra.mxu0 0
      %264 = vmatprep.subr.bf16.mxu0 0
      %265 = vmatpush2.bf16.xpose.msra.mxu0 0
      %266 = vmatprep.subr.bf16.mxu0 0
      %267 = vmatpush2.bf16.xpose.msra.mxu0 0
      %268 = vmatprep.mubr.bf16.mxu0 0
      %269 = vmatmul.mubr.bf16.gmra.mxu0 %v220
      %v270 = vpop.f32.mrf.mxu0
      %v271 = vadd.f32 0.0, %v270
      %v272 = vpop.f32.mrf.mxu0
      %v273 = vpop.f32.mrf.mxu0
      %v274 = vadd.f32 0.0, %v273
      %v275 = vpop.f32.mrf.mxu0
      %276 = vmatprep.mubr.bf16.mxu0 0
      %277 = vmatmul.mubr.bf16.gmra.mxu0 %v221
      %v278 = vpop.f32.mrf.mxu0
      %v279 = vadd.f32 0.0, %v278
      %v280 = vpop.f32.mrf.mxu0
      %v281 = vpop.f32.mrf.mxu0
      %v282 = vadd.f32 0.0, %v281
      %v283 = vpop.f32.mrf.mxu0
      %284 = vmatprep.mubr.bf16.mxu0 0
      %285 = vmatmul.mubr.bf16.gmra.mxu0 %v222
      %v286 = vpop.f32.mrf.mxu0
      %v287 = vadd.f32 0.0, %v286
      %v288 = vpop.f32.mrf.mxu0
      %v289 = vpop.f32.mrf.mxu0
      %v290 = vadd.f32 0.0, %v289
      %v291 = vpop.f32.mrf.mxu0
      %292 = vmatprep.mubr.bf16.mxu0 0
      %293 = vmatmul.mubr.bf16.gmra.mxu0 %v223
      %v294 = vpop.f32.mrf.mxu0
      %v295 = vadd.f32 0.0, %v294
      %v296 = vpop.f32.mrf.mxu0
      %v297 = vpop.f32.mrf.mxu0
      %v298 = vadd.f32 0.0, %v297
      %v299 = vpop.f32.mrf.mxu0
      %300 = vdwg.mxu0
      %v301 = vmul.f32 %v271, 0.088388346
      %v302 = vmul.f32 %v274, 0.088388346
      %v303 = vmul.f32 %v279, 0.088388346
      %v304 = vmul.f32 %v282, 0.088388346
      %v305 = vmul.f32 %v287, 0.088388346
      %v306 = vmul.f32 %v290, 0.088388346
      %v307 = vmul.f32 %v295, 0.088388346
      %v308 = vmul.f32 %v298, 0.088388346
      %vm309 = vcmask 523264
      %v310 = vsel %vm309, %v301, -inf
      %311 = vmax.xlane.f32.xlu0 %v310
      %v312 = vpop.xlane.xlu0 %311
      %v313 = vsel %vm309, %v302, -inf
      %314 = vmax.xlane.f32.xlu0 %v313
      %v315 = vpop.xlane.xlu0 %314
      %v316 = vsel %vm309, %v303, -inf
      %317 = vmax.xlane.f32.xlu0 %v316
      %v318 = vpop.xlane.xlu0 %317
      %v319 = vsel %vm309, %v304, -inf
      %320 = vmax.xlane.f32.xlu0 %v319
      %v321 = vpop.xlane.xlu0 %320
      %v322 = vsel %vm309, %v305, -inf
      %323 = vmax.xlane.f32.xlu0 %v322
      %v324 = vpop.xlane.xlu0 %323
      %v325 = vsel %vm309, %v306, -inf
      %326 = vmax.xlane.f32.xlu0 %v325
      %v327 = vpop.xlane.xlu0 %326
      %v328 = vsel %vm309, %v307, -inf
      %329 = vmax.xlane.f32.xlu0 %v328
      %v330 = vpop.xlane.xlu0 %329
      %v331 = vsel %vm309, %v308, -inf
      %332 = vmax.xlane.f32.xlu0 %v331
      %v333 = vpop.xlane.xlu0 %332
      %v334 = vsub.f32 %v301, %v312
      %v335 = vsub.f32 %v302, %v315
      %v336 = vsub.f32 %v303, %v318
      %v337 = vsub.f32 %v304, %v321
      %v338 = vsub.f32 %v305, %v324
      %v339 = vsub.f32 %v306, %v327
      %v340 = vsub.f32 %v307, %v330
      %v341 = vsub.f32 %v308, %v333
      %v342 = vmul.f32 %v334, 1.442695
      %v343 = vpow.pop %v342
      %v344 = vmul.f32 %v335, 1.442695
      %v345 = vpow.pop %v344
      %v346 = vmul.f32 %v336, 1.442695
      %v347 = vpow.pop %v346
      %v348 = vmul.f32 %v337, 1.442695
      %v349 = vpow.pop %v348
      %v350 = vmul.f32 %v338, 1.442695
      %v351 = vpow.pop %v350
      %v352 = vmul.f32 %v339, 1.442695
      %v353 = vpow.pop %v352
      %v354 = vmul.f32 %v340, 1.442695
      %v355 = vpow.pop %v354
      %v356 = vmul.f32 %v341, 1.442695
      %v357 = vpow.pop %v356
      %v358 = vsel %vm309, %v343, 0.0
      %359 = vadd.xlane.f32.xlu0 %v358
      %v360 = vpop.xlane.xlu0 %359
      %v361 = vsel %vm309, %v345, 0.0
      %362 = vadd.xlane.f32.xlu0 %v361
      %v363 = vpop.xlane.xlu0 %362
      %v364 = vsel %vm309, %v347, 0.0
      %365 = vadd.xlane.f32.xlu0 %v364
      %v366 = vpop.xlane.xlu0 %365
      %v367 = vsel %vm309, %v349, 0.0
      %368 = vadd.xlane.f32.xlu0 %v367
      %v369 = vpop.xlane.xlu0 %368
      %v370 = vsel %vm309, %v351, 0.0
      %371 = vadd.xlane.f32.xlu0 %v370
      %v372 = vpop.xlane.xlu0 %371
      %v373 = vsel %vm309, %v353, 0.0
      %374 = vadd.xlane.f32.xlu0 %v373
      %v375 = vpop.xlane.xlu0 %374
      %v376 = vsel %vm309, %v355, 0.0
      %377 = vadd.xlane.f32.xlu0 %v376
      %v378 = vpop.xlane.xlu0 %377
      %v379 = vsel %vm309, %v357, 0.0
      %380 = vadd.xlane.f32.xlu0 %v379
      %v381 = vpop.xlane.xlu0 %380
      %v382 = vrcp.pop %v360
      %v383 = vmul.f32 %v343, %v382
      %v384 = vrcp.pop %v363
      %v385 = vmul.f32 %v345, %v384
      %v386 = vrcp.pop %v366
      %v387 = vmul.f32 %v347, %v386
      %v388 = vrcp.pop %v369
      %v389 = vmul.f32 %v349, %v388
      %v390 = vrcp.pop %v372
      %v391 = vmul.f32 %v351, %v390
      %v392 = vrcp.pop %v375
      %v393 = vmul.f32 %v353, %v392
      %v394 = vrcp.pop %v378
      %v395 = vmul.f32 %v355, %v394
      %v396 = vrcp.pop %v381
      %v397 = vmul.f32 %v357, %v396
      %v398 = vpack.c.bf16 %v385, %v383
      %v399 = vpack.c.bf16 %v389, %v387
      %v400 = vpack.c.bf16 %v393, %v391
      %v401 = vpack.c.bf16 %v397, %v395
      %v402 = vld [vmem:[%s205] sm:$0xff]
      %v403 = vld [vmem:[%s205 + $0x8] sm:$0xff]
      %v404 = vld [vmem:[%s205 + $0x10] sm:$0xff]
      %v405 = vld [vmem:[%s205 + $0x18] sm:$0xff]
      %v406 = vld [vmem:[%s205 + $0x20] sm:$0xff]
      %v407 = vld [vmem:[%s205 + $0x28] sm:$0xff]
      %v408 = vld [vmem:[%s205 + $0x30] sm:$0xff]
      %v409 = vld [vmem:[%s205 + $0x38] sm:$0xff]
      %v410 = vpack.c.bf16 %v403, %v402
      %v411 = vpack.c.bf16 %v405, %v404
      %v412 = vpack.c.bf16 %v407, %v406
      %v413 = vpack.c.bf16 %v409, %v408
      %v415 = vsel %vm309, %v398, 0
      %v418 = vsel %vm309, %v399, 0
      %v421 = vsel %vm309, %v400, 0
      %v424 = vsel %vm309, %v401, 0
      %426 = vmatprep.subr.bf16.mxu0 0
      %427 = vmatpush1.bf16.msra.mxu0 0
      %428 = vmatprep.subr.bf16.mxu0 0
      %429 = vmatpush1.bf16.msra.mxu0 0
      %430 = vmatprep.subr.bf16.mxu0 0
      %431 = vmatpush1.bf16.msra.mxu0 0
      %432 = vmatprep.subr.bf16.mxu0 0
      %433 = vmatpush1.bf16.msra.mxu0 0
      %434 = vmatprep.subr.bf16.mxu0 0
      %435 = vmatpush1.bf16.msra.mxu0 %v413
      %436 = vmatprep.subr.bf16.mxu0 0
      %437 = vmatpush1.bf16.msra.mxu0 %v412
      %438 = vmatprep.subr.bf16.mxu0 0
      %439 = vmatpush1.bf16.msra.mxu0 %v411
      %440 = vmatprep.subr.bf16.mxu0 0
      %441 = vmatpush1.bf16.msra.mxu0 %v410
      %442 = vmatprep.subr.bf16.mxu0 0
      %443 = vmatpush2.bf16.msra.mxu0 0
      %444 = vmatprep.subr.bf16.mxu0 0
      %445 = vmatpush2.bf16.msra.mxu0 0
      %446 = vmatprep.subr.bf16.mxu0 0
      %447 = vmatpush2.bf16.msra.mxu0 0
      %448 = vmatprep.subr.bf16.mxu0 0
      %449 = vmatpush2.bf16.msra.mxu0 0
      %450 = vmatprep.subr.bf16.mxu0 0
      %451 = vmatpush2.bf16.msra.mxu0 0
      %452 = vmatprep.subr.bf16.mxu0 0
      %453 = vmatpush2.bf16.msra.mxu0 0
      %454 = vmatprep.subr.bf16.mxu0 0
      %455 = vmatpush2.bf16.msra.mxu0 0
      %456 = vmatprep.subr.bf16.mxu0 0
      %457 = vmatpush2.bf16.msra.mxu0 0
      %458 = vmatprep.mubr.bf16.mxu0 0
      %459 = vmatmul.mubr.bf16.gmra.mxu0 %v415
      %v460 = vpop.f32.mrf.mxu0
      %v461 = vadd.f32 0.0, %v460
      %v462 = vpop.f32.mrf.mxu0
      %v463 = vpop.f32.mrf.mxu0
      %v464 = vadd.f32 0.0, %v463
      %v465 = vpop.f32.mrf.mxu0
      %466 = vmatprep.mubr.bf16.mxu0 0
      %467 = vmatmul.mubr.bf16.gmra.mxu0 %v418
      %v468 = vpop.f32.mrf.mxu0
      %v469 = vadd.f32 0.0, %v468
      %v470 = vpop.f32.mrf.mxu0
      %v471 = vpop.f32.mrf.mxu0
      %v472 = vadd.f32 0.0, %v471
      %v473 = vpop.f32.mrf.mxu0
      %474 = vmatprep.mubr.bf16.mxu0 0
      %475 = vmatmul.mubr.bf16.gmra.mxu0 %v421
      %v476 = vpop.f32.mrf.mxu0
      %v477 = vadd.f32 0.0, %v476
      %v478 = vpop.f32.mrf.mxu0
      %v479 = vpop.f32.mrf.mxu0
      %v480 = vadd.f32 0.0, %v479
      %v481 = vpop.f32.mrf.mxu0
      %482 = vmatprep.mubr.bf16.mxu0 0
      %483 = vmatmul.mubr.bf16.gmra.mxu0 %v424
      %v484 = vpop.f32.mrf.mxu0
      %v485 = vadd.f32 0.0, %v484
      %v486 = vpop.f32.mrf.mxu0
      %v487 = vpop.f32.mrf.mxu0
      %v488 = vadd.f32 0.0, %v487
      %v489 = vpop.f32.mrf.mxu0
      %490 = vdwg.mxu0
      %491 = vst [vmem:[%s210] sm:$0xff] %v461
      %492 = vst [vmem:[%s210 + $0x8] sm:$0xff] %v464
      %493 = vst [vmem:[%s210 + $0x10] sm:$0xff] %v469
      %494 = vst [vmem:[%s210 + $0x18] sm:$0xff] %v472
      %495 = vst [vmem:[%s210 + $0x20] sm:$0xff] %v477
      %496 = vst [vmem:[%s210 + $0x28] sm:$0xff] %v480
      %497 = vst [vmem:[%s210 + $0x30] sm:$0xff] %v485
      %498 = vst [vmem:[%s210 + $0x38] sm:$0xff] %v488
      %p499 = scmp.lt.s32.totalorder %s14, 1
      %s500 = scalar_select %p499, %s14, 1
      %s501 = smul.addr %s500, 8
      %s502 = smul.addr %s501, 8
      %s503 = scalar_lea.vmem %s3, %s502
      // Predicated region
      $region33: #{_lambda_.19} parent=31 // pred_check
        %p504 = pneg %p110
      $region34: #{_lambda_.19} parent=31 // pred_check_branch
        %506 = sbr.rel (%p504) target = $region36
      $region35: #{_lambda_.19} parent=31 // pred_region
        _
      $region36: #{_lambda_.19} parent=31 // pred_fallthru
        _
    $region32: #{_lambda_.19} parent=5 // pred_fallthru
      _
    %p507 = scmp.le.s32.totalorder 2, %s9
    // Predicated region
    $region37: #{_lambda_.19} parent=5 // pred_check
      %p508 = pneg %p507
    $region38: #{_lambda_.19} parent=5 // pred_check_branch
      %510 = sbr.rel (%p508) target = $region40
    $region39: #{_lambda_.19} parent=5 // pred_region
      %s511 = ssub.s32 %s9, 2
      // Predicated region
      $region41: #{_lambda_.19} parent=39 // pred_check
        %p512 = pneg %p116
      $region42: #{_lambda_.19} parent=39 // pred_check_branch
        %514 = sbr.rel (%p512) target = $region44
      $region43: #{_lambda_.19} parent=39 // pred_region
        %p515 = scmp.lt.s32.totalorder %s15, 1
        %s516 = scalar_select %p515, %s15, 1
        %s517 = smul.addr %s516, 8
        %s518 = smul.addr %s517, 8
        %s519 = scalar_lea.vmem %s3, %s518
      $region44: #{_lambda_.19} parent=39 // pred_fallthru
        _
    $region40: #{_lambda_.19} parent=5 // pred_fallthru
      _
  $region6: #{_lambda_.19} parent=0 // loop_footer
    %s13 = sadd.s32 1, %s9
  $region7: #{_lambda_.19} parent=0 // loop_footer_branch
    %8 = sbr.rel target = $region3
  $region8: #{_lambda_.19} parent=0 // loop_exit
    _

// kernel: _lambda_.25
$region0: #{_lambda_.25}
  #allocation0 [shape = 'u32[]', space=smem, size = 0x4, offset = 0x4, fixed_abs, tag = 'smem constant byte address 0x4 - core index']
  #allocation1 [shape = 'u32[144,128]{1,0:T(1,128)}', space=vmem, size = 0x12000, scoped, tag = 'internal scratch']
  %s0 = inlined_call_operand.vmem [shape: bf16[128,1152], index: 0, kind: input, shape index: {}]
  %s1 = inlined_call_operand.vmem [shape: bf16[1152,128], index: 1, kind: input, shape index: {}]
  %s2 = inlined_call_operand.vmem [shape: f32[1,128], index: 2, kind: input, shape index: {}]
  %s3 = inlined_call_operand.vmem [shape: f32[128,128], index: 3, kind: input, shape index: {}]
  %s4 = inlined_call_operand.hbm [shape: f32[128,128], index: 4, kind: output, shape index: {}]
  %s5 = sld [smem:[#allocation0]]
  $region49: #{_lambda_.25} parent=0
    _
  %s7 = ssub.s32 1, %s5
  %s8 = scalar_select 0, %s7, %s5
  $region1: #{_lambda_.25} parent=0
    #allocation2 [shape = 'u8[65536]{0}', space=vmem, size = 0x10000, scoped, tag = 'output window, operand 0']
    #allocation3 [shape = 's32[2]{0}', space=sflag, size = 0x8, scoped, tag = 'scoped memory for _lambda_.25']
    %9 = vsyncpa [#allocation3], 0
    %s10 = scalar_lea.sflag [#allocation3], 1
    %11 = vsyncpa %s10, 0
    loop: start=0, step=1, limit=4
    $region2: #{_lambda_.25} parent=1 // loop_pre_header
      _
    $region3: #{_lambda_.25} parent=1 // loop_header
      %s13 = sphi 0, %s17
      %p14 = scmp.ge.s32.totalorder %s13, 4
      %s23 = sphi 0, %s25
      %s26 = sphi 0, %s23
      %s27 = sphi 0, %s26
      %s43 = sphi 0, %s27
      %s47 = sphi 0, %s47
      %s49 = sphi 0, %s47
      %s50 = sphi 0, %s49
      %s64 = sphi 0, %s50
      %s68 = sphi 0, %s68
      %s70 = sphi 0, %s68
      %s71 = sphi 0, %s70
      %s85 = sphi 0, %s71
      %s91 = sphi 0, %s93
      %s94 = sphi 0, %s91
      %s95 = sphi 0, %s94
      %s111 = sphi 0, %s95
      %s117 = sphi 0, %s119
      %s120 = sphi 0, %s117
      %s121 = sphi 0, %s120
      %s137 = sphi 0, %s121
    $region4: #{_lambda_.25} parent=1 // loop_header_branch
      %16 = sbr.rel (%p14) target = $region8
    $region5: #{_lambda_.25} parent=1 // loop_body
      %s18 = ssub.s32 %s13, 1
      %s19 = ssub.s32 %s13, 2
      %s20 = sadd.s32 %s13, 1
      %s21 = ssub.s32 %s13, %s20
      %p22 = scmp.eq.s32.totalorder %s21, 0
      %s24 = sadd.s32 %s23, 1
      %s25 = scalar_select %p22, %s23, %s24
      %p28 = pneg %p22
      %p29 = scmp.eq.s32.totalorder %s13, 1
      %p30 = por %p28, %p29
      %p31 = scmp.ne.s32.totalorder %s23, %s26
      %p32 = scmp.eq.s32.totalorder %s13, 0
      %p33 = por %p31, %p32
      %p34 = scmp.ne.s32.totalorder %s23, %s26
      %p35 = scmp.eq.s32.totalorder %s18, 1
      %p36 = por %p34, %p35
      %p37 = scmp.ne.s32.totalorder %s26, %s27
      %p38 = scmp.eq.s32.totalorder %s18, 0
      %p39 = por %p37, %p38
      %p40 = scmp.ne.s32.totalorder %s26, %s27
      %p41 = scmp.eq.s32.totalorder %s19, 1
      %p42 = por %p40, %p41
      %p44 = scmp.ne.s32.totalorder %s27, %s43
      %p45 = scmp.eq.s32.totalorder %s19, 0
      %p46 = por %p44, %p45
      %s48 = sadd.s32 %s47, 1
      %p51 = scmp.eq.s32.totalorder %s13, 1
      %p52 = scmp.ne.s32.totalorder %s47, %s49
      %p53 = scmp.eq.s32.totalorder %s13, 0
      %p54 = por %p52, %p53
      %p55 = scmp.ne.s32.totalorder %s47, %s49
      %p56 = scmp.eq.s32.totalorder %s18, 1
      %p57 = por %p55, %p56
      %p58 = scmp.ne.s32.totalorder %s49, %s50
      %p59 = scmp.eq.s32.totalorder %s18, 0
      %p60 = por %p58, %p59
      %p61 = scmp.ne.s32.totalorder %s49, %s50
      %p62 = scmp.eq.s32.totalorder %s19, 1
      %p63 = por %p61, %p62
      %p65 = scmp.ne.s32.totalorder %s50, %s64
      %p66 = scmp.eq.s32.totalorder %s19, 0
      %p67 = por %p65, %p66
      %s69 = sadd.s32 %s68, 1
      %p72 = scmp.eq.s32.totalorder %s13, 1
      %p73 = scmp.ne.s32.totalorder %s68, %s70
      %p74 = scmp.eq.s32.totalorder %s13, 0
      %p75 = por %p73, %p74
      %p76 = scmp.ne.s32.totalorder %s68, %s70
      %p77 = scmp.eq.s32.totalorder %s18, 1
      %p78 = por %p76, %p77
      %p79 = scmp.ne.s32.totalorder %s70, %s71
      %p80 = scmp.eq.s32.totalorder %s18, 0
      %p81 = por %p79, %p80
      %p82 = scmp.ne.s32.totalorder %s70, %s71
      %p83 = scmp.eq.s32.totalorder %s19, 1
      %p84 = por %p82, %p83
      %p86 = scmp.ne.s32.totalorder %s71, %s85
      %p87 = scmp.eq.s32.totalorder %s19, 0
      %p88 = por %p86, %p87
      %s89 = ssub.s32 %s13, %s20
      %p90 = scmp.eq.s32.totalorder %s89, 0
      %s92 = sadd.s32 %s91, 1
      %s93 = scalar_select %p90, %s91, %s92
      %p96 = pneg %p90
      %p97 = scmp.eq.s32.totalorder %s13, 1
      %p98 = por %p96, %p97
      %p99 = scmp.ne.s32.totalorder %s91, %s94
      %p100 = scmp.eq.s32.totalorder %s13, 0
      %p101 = por %p99, %p100
      %p102 = scmp.ne.s32.totalorder %s91, %s94
      %p103 = scmp.eq.s32.totalorder %s18, 1
      %p104 = por %p102, %p103
      %p105 = scmp.ne.s32.totalorder %s94, %s95
      %p106 = scmp.eq.s32.totalorder %s18, 0
      %p107 = por %p105, %p106
      %p108 = scmp.ne.s32.totalorder %s94, %s95
      %p109 = scmp.eq.s32.totalorder %s19, 1
      %p110 = por %p108, %p109
      %p112 = scmp.ne.s32.totalorder %s95, %s111
      %p113 = scmp.eq.s32.totalorder %s19, 0
      %p114 = por %p112, %p113
      %s115 = ssub.s32 %s13, %s20
      %p116 = scmp.eq.s32.totalorder %s115, 0
      %s118 = sadd.s32 %s117, 1
      %s119 = scalar_select %p116, %s117, %s118
      %p122 = pneg %p116
      %p123 = scmp.eq.s32.totalorder %s13, 1
      %p124 = por %p122, %p123
      %p125 = scmp.ne.s32.totalorder %s117, %s120
      %p126 = scmp.eq.s32.totalorder %s13, 0
      %p127 = por %p125, %p126
      %p128 = scmp.ne.s32.totalorder %s117, %s120
      %p129 = scmp.eq.s32.totalorder %s18, 1
      %p130 = por %p128, %p129
      %p131 = scmp.ne.s32.totalorder %s120, %s121
      %p132 = scmp.eq.s32.totalorder %s18, 0
      %p133 = por %p131, %p132
      %p134 = scmp.ne.s32.totalorder %s120, %s121
      %p135 = scmp.eq.s32.totalorder %s19, 1
      %p136 = por %p134, %p135
      %p138 = scmp.ne.s32.totalorder %s121, %s137
      %p139 = scmp.eq.s32.totalorder %s19, 0
      %p140 = por %p138, %p139
      %p141 = scmp.le.s32.totalorder 1, %s13
      %p142 = scmp.lt.s32.totalorder %s13, 3
      %p143 = pnand %p141, %p142
      %p144 = pneg %p143
      // Predicated region
      $region9: #{_lambda_.25} parent=5 // pred_check
        _
      $region10: #{_lambda_.25} parent=5 // pred_check_branch
        %146 = sbr.rel (%p143) target = $region12
      $region11: #{_lambda_.25} parent=5 // pred_region
        %s147 = ssub.s32 %s13, 1
        // Predicated region
        $region13: #{_lambda_.25} parent=11 // pred_check
          %p148 = pneg %p60
        $region14: #{_lambda_.25} parent=11 // pred_check_branch
          %150 = sbr.rel (%p148) target = $region16
        $region15: #{_lambda_.25} parent=11 // pred_region
          _
        $region16: #{_lambda_.25} parent=11 // pred_fallthru
          _
        // Predicated region
        $region17: #{_lambda_.25} parent=11 // pred_check
          %p151 = pneg %p81
        $region18: #{_lambda_.25} parent=11 // pred_check_branch
          %153 = sbr.rel (%p151) target = $region20
        $region19: #{_lambda_.25} parent=11 // pred_region
          _
        $region20: #{_lambda_.25} parent=11 // pred_fallthru
          _
      $region12: #{_lambda_.25} parent=5 // pred_fallthru
        _
      %p154 = scmp.lt.s32.totalorder %s13, 2
      // Predicated region
      $region21: #{_lambda_.25} parent=5 // pred_check
        %p155 = pneg %p154
      $region22: #{_lambda_.25} parent=5 // pred_check_branch
        %157 = sbr.rel (%p155) target = $region24
      $region23: #{_lambda_.25} parent=5 // pred_region
        // Predicated region
        $region25: #{_lambda_.25} parent=23 // pred_check
          %p158 = pneg %p33
        $region26: #{_lambda_.25} parent=23 // pred_check_branch
          %160 = sbr.rel (%p158) target = $region28
        $region27: #{_lambda_.25} parent=23 // pred_region
          %s161 = smul.u32 8, %s13
          %p162 = scmp.lt.s32.totalorder %s161, 15
          %s163 = scalar_select %p162, %s161, 15
          %s164 = smul.addr %s163, 9
          %s165 = smul.addr %s164, 4
          %s166 = scalar_lea.vmem %s0, %s165
          %s167 = smul.u32 8, %s13
        $region28: #{_lambda_.25} parent=23 // pred_fallthru
          _
        // Predicated region
        $region29: #{_lambda_.25} parent=23 // pred_check
          %p168 = pneg %p101
        $region30: #{_lambda_.25} parent=23 // pred_check_branch
          %170 = sbr.rel (%p168) target = $region32
        $region31: #{_lambda_.25} parent=23 // pred_region
          %s171 = smul.u32 8, %s13
          %p172 = scmp.lt.s32.totalorder %s171, 15
          %s173 = scalar_select %p172, %s171, 15
          %s174 = smul.addr %s173, 8
          %s175 = scalar_lea.vmem %s3, %s174
          %s176 = smul.u32 8, %s13
        $region32: #{_lambda_.25} parent=23 // pred_fallthru
          _
      $region24: #{_lambda_.25} parent=5 // pred_fallthru
        _
      %p177 = scmp.le.s32.totalorder 1, %s13
      %p178 = scmp.lt.s32.totalorder %s13, 3
      %p179 = pnand %p177, %p178
      %p180 = pneg %p179
      // Predicated region
      $region33: #{_lambda_.25} parent=5 // pred_check
        _
      $region34: #{_lambda_.25} parent=5 // pred_check_branch
        %182 = sbr.rel (%p179) target = $region36
      $region35: #{_lambda_.25} parent=5 // pred_region
        %s183 = ssub.s32 %s13, 1
        %s184 = smul.u32 8, %s18
        %p185 = scmp.lt.s32.totalorder %s184, 15
        %s186 = scalar_select %p185, %s184, 15
        %s187 = smul.addr %s186, 9
        %s188 = smul.addr %s187, 4
        %s189 = scalar_lea.vmem %s0, %s188
        %p190 = pneg %p39
        %p191 = pneg %p36
        %p192 = pneg %p60
        %p193 = pneg %p57
        %p194 = pneg %p81
        %p195 = pneg %p78
        %s196 = smul.u32 8, %s18
        %p197 = scmp.lt.s32.totalorder %s196, 15
        %s198 = scalar_select %p197, %s196, 15
        %s199 = smul.addr %s198, 8
        %s200 = scalar_lea.vmem %s3, %s199
        %p201 = pneg %p107
        %p202 = pneg %p104
        %p203 = pneg %p133
        %p204 = pneg %p130
        %s205 = sand.u32 %s120, 1
        %s206 = scalar_lea.sflag [#allocation3], %s205
        %s207 = sand.u32 %s120, 1
        %s208 = smul.addr %s207, 64
        %s209 = scalar_lea.vmem [#allocation2], %s208
        %s210 = smul.u32 8, %s18
        %p211 = scmp.lt.s32.totalorder %s210, 15
        %s212 = scalar_select %p211, %s210, 15
        %s213 = smul.addr %s212, 9
        %s214 = smul.addr %s213, 4
        %s215 = scalar_lea.vmem %s0, %s214
        %s216 = smul.u32 8, %s18
        %s217 = smul.u32 8, %s18
        %p218 = scmp.lt.s32.totalorder %s217, 15
        %s219 = scalar_select %p218, %s217, 15
        %s220 = smul.addr %s219, 8
        %s221 = scalar_lea.vmem %s3, %s220
        %s222 = smul.u32 8, %s18
        %s223 = smul.u32 8, %s18
        %v225 = vld [vmem:[%s215] sm:$0xff]
        %v226 = vld [vmem:[%s215 + $0x8] sm:$0xff]
        %v227 = vld [vmem:[%s215 + $0x10] sm:$0xff]
        %v228 = vld [vmem:[%s215 + $0x18] sm:$0xff]
        %v229 = vld [vmem:[%s215 + $0x20] sm:$0xf]
        %v230 = vld [vmem:[%s215 + $0x24] sm:$0xff]
        %v231 = vld [vmem:[%s215 + $0x2c] sm:$0xff]
        %v232 = vld [vmem:[%s215 + $0x34] sm:$0xff]
        %v233 = vld [vmem:[%s215 + $0x3c] sm:$0xff]
        %v234 = vld [vmem:[%s215 + $0x44] sm:$0xf]
        %v235 = vld [vmem:[%s215 + $0x48] sm:$0xff]
        %v236 = vld [vmem:[%s215 + $0x50] sm:$0xff]
        %v237 = vld [vmem:[%s215 + $0x58] sm:$0xff]
        %v238 = vld [vmem:[%s215 + $0x60] sm:$0xff]
        %v239 = vld [vmem:[%s215 + $0x68] sm:$0xf]
        %v240 = vld [vmem:[%s215 + $0x6c] sm:$0xff]
        %v241 = vld [vmem:[%s215 + $0x74] sm:$0xff]
        %v242 = vld [vmem:[%s215 + $0x7c] sm:$0xff]
        %v243 = vld [vmem:[%s215 + $0x84] sm:$0xff]
        %v244 = vld [vmem:[%s215 + $0x8c] sm:$0xf]
        %v245 = vld [vmem:[%s215 + $0x90] sm:$0xff]
        %v246 = vld [vmem:[%s215 + $0x98] sm:$0xff]
        %v247 = vld [vmem:[%s215 + $0xa0] sm:$0xff]
        %v248 = vld [vmem:[%s215 + $0xa8] sm:$0xff]
        %v249 = vld [vmem:[%s215 + $0xb0] sm:$0xf]
        %v250 = vld [vmem:[%s215 + $0xb4] sm:$0xff]
        %v251 = vld [vmem:[%s215 + $0xbc] sm:$0xff]
        %v252 = vld [vmem:[%s215 + $0xc4] sm:$0xff]
        %v253 = vld [vmem:[%s215 + $0xcc] sm:$0xff]
        %v254 = vld [vmem:[%s215 + $0xd4] sm:$0xf]
        %v255 = vld [vmem:[%s215 + $0xd8] sm:$0xff]
        %v256 = vld [vmem:[%s215 + $0xe0] sm:$0xff]
        %v257 = vld [vmem:[%s215 + $0xe8] sm:$0xff]
        %v258 = vld [vmem:[%s215 + $0xf0] sm:$0xff]
        %v259 = vld [vmem:[%s215 + $0xf8] sm:$0xf]
        %v260 = vld [vmem:[%s215 + $0xfc] sm:$0xff]
        %v261 = vld [vmem:[%s215 + $0x104] sm:$0xff]
        %v262 = vld [vmem:[%s215 + $0x10c] sm:$0xff]
        %v263 = vld [vmem:[%s215 + $0x114] sm:$0xff]
        %v264 = vld [vmem:[%s215 + $0x11c] sm:$0xf]
        %v265 = vld [vmem:[%s1] sm:$0xf]
        %v266 = vld [vmem:[%s1 + $0x4] sm:$0xf]
        %v267 = vld [vmem:[%s1 + $0x8] sm:$0xf]
        %v268 = vld [vmem:[%s1 + $0xc] sm:$0xf]
        %v269 = vld [vmem:[%s1 + $0x10] sm:$0xf]
        %v270 = vld [vmem:[%s1 + $0x14] sm:$0xf]
        %v271 = vld [vmem:[%s1 + $0x18] sm:$0xf]
        %v272 = vld [vmem:[%s1 + $0x1c] sm:$0xf]
        %v273 = vld [vmem:[%s1 + $0x20] sm:$0xf]
        %v274 = vld [vmem:[%s1 + $0x24] sm:$0xf]
        %v275 = vld [vmem:[%s1 + $0x28] sm:$0xf]
        %v276 = vld [vmem:[%s1 + $0x2c] sm:$0xf]
        %v277 = vld [vmem:[%s1 + $0x30] sm:$0xf]
        %v278 = vld [vmem:[%s1 + $0x34] sm:$0xf]
        %v279 = vld [vmem:[%s1 + $0x38] sm:$0xf]
        %v280 = vld [vmem:[%s1 + $0x3c] sm:$0xf]
        %v281 = vld [vmem:[%s1 + $0x40] sm:$0xf]
        %v282 = vld [vmem:[%s1 + $0x44] sm:$0xf]
        %v283 = vld [vmem:[%s1 + $0x48] sm:$0xf]
        %v284 = vld [vmem:[%s1 + $0x4c] sm:$0xf]
        %v285 = vld [vmem:[%s1 + $0x50] sm:$0xf]
        %v286 = vld [vmem:[%s1 + $0x54] sm:$0xf]
        %v287 = vld [vmem:[%s1 + $0x58] sm:$0xf]
        %v288 = vld [vmem:[%s1 + $0x5c] sm:$0xf]
        %v289 = vld [vmem:[%s1 + $0x60] sm:$0xf]
        %v290 = vld [vmem:[%s1 + $0x64] sm:$0xf]
        %v291 = vld [vmem:[%s1 + $0x68] sm:$0xf]
        %v292 = vld [vmem:[%s1 + $0x6c] sm:$0xf]
        %v293 = vld [vmem:[%s1 + $0x70] sm:$0xf]
        %v294 = vld [vmem:[%s1 + $0x74] sm:$0xf]
        %v295 = vld [vmem:[%s1 + $0x78] sm:$0xf]
        %v296 = vld [vmem:[%s1 + $0x7c] sm:$0xf]
        %v297 = vld [vmem:[%s1 + $0x80] sm:$0xf]
        %v298 = vld [vmem:[%s1 + $0x84] sm:$0xf]
        %v299 = vld [vmem:[%s1 + $0x88] sm:$0xf]
        %v300 = vld [vmem:[%s1 + $0x8c] sm:$0xf]
        %v301 = vld [vmem:[%s1 + $0x90] sm:$0xf]
        %v302 = vld [vmem:[%s1 + $0x94] sm:$0xf]
        %v303 = vld [vmem:[%s1 + $0x98] sm:$0xf]
        %v304 = vld [vmem:[%s1 + $0x9c] sm:$0xf]
        %v305 = vld [vmem:[%s1 + $0xa0] sm:$0xf]
        %v306 = vld [vmem:[%s1 + $0xa4] sm:$0xf]
        %v307 = vld [vmem:[%s1 + $0xa8] sm:$0xf]
        %v308 = vld [vmem:[%s1 + $0xac] sm:$0xf]
        %v309 = vld [vmem:[%s1 + $0xb0] sm:$0xf]
        %v310 = vld [vmem:[%s1 + $0xb4] sm:$0xf]
        %v311 = vld [vmem:[%s1 + $0xb8] sm:$0xf]
        %v312 = vld [vmem:[%s1 + $0xbc] sm:$0xf]
        %v313 = vld [vmem:[%s1 + $0xc0] sm:$0xf]
        %v314 = vld [vmem:[%s1 + $0xc4] sm:$0xf]
        %v315 = vld [vmem:[%s1 + $0xc8] sm:$0xf]
        %v316 = vld [vmem:[%s1 + $0xcc] sm:$0xf]
        %v317 = vld [vmem:[%s1 + $0xd0] sm:$0xf]
        %v318 = vld [vmem:[%s1 + $0xd4] sm:$0xf]
        %v319 = vld [vmem:[%s1 + $0xd8] sm:$0xf]
        %v320 = vld [vmem:[%s1 + $0xdc] sm:$0xf]
        %v321 = vld [vmem:[%s1 + $0xe0] sm:$0xf]
        %v322 = vld [vmem:[%s1 + $0xe4] sm:$0xf]
        %v323 = vld [vmem:[%s1 + $0xe8] sm:$0xf]
        %v324 = vld [vmem:[%s1 + $0xec] sm:$0xf]
        %v325 = vld [vmem:[%s1 + $0xf0] sm:$0xf]
        %v326 = vld [vmem:[%s1 + $0xf4] sm:$0xf]
        %v327 = vld [vmem:[%s1 + $0xf8] sm:$0xf]
        %v328 = vld [vmem:[%s1 + $0xfc] sm:$0xf]
        %v329 = vld [vmem:[%s1 + $0x100] sm:$0xf]
        %v330 = vld [vmem:[%s1 + $0x104] sm:$0xf]
        %v331 = vld [vmem:[%s1 + $0x108] sm:$0xf]
        %v332 = vld [vmem:[%s1 + $0x10c] sm:$0xf]
        %v333 = vld [vmem:[%s1 + $0x110] sm:$0xf]
        %v334 = vld [vmem:[%s1 + $0x114] sm:$0xf]
        %v335 = vld [vmem:[%s1 + $0x118] sm:$0xf]
        %v336 = vld [vmem:[%s1 + $0x11c] sm:$0xf]
        %v337 = vld [vmem:[%s1 + $0x120] sm:$0xf]
        %v338 = vld [vmem:[%s1 + $0x124] sm:$0xf]
        %v339 = vld [vmem:[%s1 + $0x128] sm:$0xf]
        %v340 = vld [vmem:[%s1 + $0x12c] sm:$0xf]
        %v341 = vld [vmem:[%s1 + $0x130] sm:$0xf]
        %v342 = vld [vmem:[%s1 + $0x134] sm:$0xf]
        %v343 = vld [vmem:[%s1 + $0x138] sm:$0xf]
        %v344 = vld [vmem:[%s1 + $0x13c] sm:$0xf]
        %v345 = vld [vmem:[%s1 + $0x140] sm:$0xf]
        %v346 = vld [vmem:[%s1 + $0x144] sm:$0xf]
        %v347 = vld [vmem:[%s1 + $0x148] sm:$0xf]
        %v348 = vld [vmem:[%s1 + $0x14c] sm:$0xf]
        %v349 = vld [vmem:[%s1 + $0x150] sm:$0xf]
        %v350 = vld [vmem:[%s1 + $0x154] sm:$0xf]
        %v351 = vld [vmem:[%s1 + $0x158] sm:$0xf]
        %v352 = vld [vmem:[%s1 + $0x15c] sm:$0xf]
        %v353 = vld [vmem:[%s1 + $0x160] sm:$0xf]
        %v354 = vld [vmem:[%s1 + $0x164] sm:$0xf]
        %v355 = vld [vmem:[%s1 + $0x168] sm:$0xf]
        %v356 = vld [vmem:[%s1 + $0x16c] sm:$0xf]
        %v357 = vld [vmem:[%s1 + $0x170] sm:$0xf]
        %v358 = vld [vmem:[%s1 + $0x174] sm:$0xf]
        %v359 = vld [vmem:[%s1 + $0x178] sm:$0xf]
        %v360 = vld [vmem:[%s1 + $0x17c] sm:$0xf]
        %v361 = vld [vmem:[%s1 + $0x180] sm:$0xf]
        %v362 = vld [vmem:[%s1 + $0x184] sm:$0xf]
        %v363 = vld [vmem:[%s1 + $0x188] sm:$0xf]
        %v364 = vld [vmem:[%s1 + $0x18c] sm:$0xf]
        %v365 = vld [vmem:[%s1 + $0x190] sm:$0xf]
        %v366 = vld [vmem:[%s1 + $0x194] sm:$0xf]
        %v367 = vld [vmem:[%s1 + $0x198] sm:$0xf]
        %v368 = vld [vmem:[%s1 + $0x19c] sm:$0xf]
        %v369 = vld [vmem:[%s1 + $0x1a0] sm:$0xf]
        %v370 = vld [vmem:[%s1 + $0x1a4] sm:$0xf]
        %v371 = vld [vmem:[%s1 + $0x1a8] sm:$0xf]
        %v372 = vld [vmem:[%s1 + $0x1ac] sm:$0xf]
        %v373 = vld [vmem:[%s1 + $0x1b0] sm:$0xf]
        %v374 = vld [vmem:[%s1 + $0x1b4] sm:$0xf]
        %v375 = vld [vmem:[%s1 + $0x1b8] sm:$0xf]
        %v376 = vld [vmem:[%s1 + $0x1bc] sm:$0xf]
        %v377 = vld [vmem:[%s1 + $0x1c0] sm:$0xf]
        %v378 = vld [vmem:[%s1 + $0x1c4] sm:$0xf]
        %v379 = vld [vmem:[%s1 + $0x1c8] sm:$0xf]
        %v380 = vld [vmem:[%s1 + $0x1cc] sm:$0xf]
        %v381 = vld [vmem:[%s1 + $0x1d0] sm:$0xf]
        %v382 = vld [vmem:[%s1 + $0x1d4] sm:$0xf]
        %v383 = vld [vmem:[%s1 + $0x1d8] sm:$0xf]
        %v384 = vld [vmem:[%s1 + $0x1dc] sm:$0xf]
        %v385 = vld [vmem:[%s1 + $0x1e0] sm:$0xf]
        %v386 = vld [vmem:[%s1 + $0x1e4] sm:$0xf]
        %v387 = vld [vmem:[%s1 + $0x1e8] sm:$0xf]
        %v388 = vld [vmem:[%s1 + $0x1ec] sm:$0xf]
        %v389 = vld [vmem:[%s1 + $0x1f0] sm:$0xf]
        %v390 = vld [vmem:[%s1 + $0x1f4] sm:$0xf]
        %v391 = vld [vmem:[%s1 + $0x1f8] sm:$0xf]
        %v392 = vld [vmem:[%s1 + $0x1fc] sm:$0xf]
        %v393 = vld [vmem:[%s1 + $0x200] sm:$0xf]
        %v394 = vld [vmem:[%s1 + $0x204] sm:$0xf]
        %v395 = vld [vmem:[%s1 + $0x208] sm:$0xf]
        %v396 = vld [vmem:[%s1 + $0x20c] sm:$0xf]
        %v397 = vld [vmem:[%s1 + $0x210] sm:$0xf]
        %v398 = vld [vmem:[%s1 + $0x214] sm:$0xf]
        %v399 = vld [vmem:[%s1 + $0x218] sm:$0xf]
        %v400 = vld [vmem:[%s1 + $0x21c] sm:$0xf]
        %v401 = vld [vmem:[%s1 + $0x220] sm:$0xf]
        %v402 = vld [vmem:[%s1 + $0x224] sm:$0xf]
        %v403 = vld [vmem:[%s1 + $0x228] sm:$0xf]
        %v404 = vld [vmem:[%s1 + $0x22c] sm:$0xf]
        %v405 = vld [vmem:[%s1 + $0x230] sm:$0xf]
        %v406 = vld [vmem:[%s1 + $0x234] sm:$0xf]
        %v407 = vld [vmem:[%s1 + $0x238] sm:$0xf]
        %v408 = vld [vmem:[%s1 + $0x23c] sm:$0xf]
        %v409 = vld [vmem:[%s2] sm:$0x1]
        %v411 = vlaneseq
        %v412 = vshrl.u32 %v411, 7
        %v413 = vsub.s32 0, %v412
        %v414 = vrot.slane %v409, %v413
        %v456 = vunpack.c.l.b16 %v225
        %v457 = vunpack.c.h.b16 %v225
        %v458 = vunpack.c.l.b16 %v226
        %v459 = vunpack.c.h.b16 %v226
        %v460 = vunpack.c.l.b16 %v227
        %v461 = vunpack.c.h.b16 %v227
        %v462 = vunpack.c.l.b16 %v228
        %v463 = vunpack.c.h.b16 %v228
        %v464 = vunpack.c.l.b16 %v229
        %v465 = vunpack.c.l.b16 %v230
        %v466 = vunpack.c.h.b16 %v230
        %v467 = vunpack.c.l.b16 %v231
        %v468 = vunpack.c.h.b16 %v231
        %v469 = vunpack.c.l.b16 %v232
        %v470 = vunpack.c.h.b16 %v232
        %v471 = vunpack.c.l.b16 %v233
        %v472 = vunpack.c.h.b16 %v233
        %v473 = vunpack.c.l.b16 %v234
        %v474 = vunpack.c.l.b16 %v235
        %v475 = vunpack.c.h.b16 %v235
        %v476 = vunpack.c.l.b16 %v236
        %v477 = vunpack.c.h.b16 %v236
        %v478 = vunpack.c.l.b16 %v237
        %v479 = vunpack.c.h.b16 %v237
        %v480 = vunpack.c.l.b16 %v238
        %v481 = vunpack.c.h.b16 %v238
        %v482 = vunpack.c.l.b16 %v239
        %v483 = vunpack.c.l.b16 %v240
        %v484 = vunpack.c.h.b16 %v240
        %v485 = vunpack.c.l.b16 %v241
        %v486 = vunpack.c.h.b16 %v241
        %v487 = vunpack.c.l.b16 %v242
        %v488 = vunpack.c.h.b16 %v242
        %v489 = vunpack.c.l.b16 %v243
        %v490 = vunpack.c.h.b16 %v243
        %v491 = vunpack.c.l.b16 %v244
        %v492 = vunpack.c.l.b16 %v245
        %v493 = vunpack.c.h.b16 %v245
        %v494 = vunpack.c.l.b16 %v246
        %v495 = vunpack.c.h.b16 %v246
        %v496 = vunpack.c.l.b16 %v247
        %v497 = vunpack.c.h.b16 %v247
        %v498 = vunpack.c.l.b16 %v248
        %v499 = vunpack.c.h.b16 %v248
        %v500 = vunpack.c.l.b16 %v249
        %v501 = vunpack.c.l.b16 %v250
        %v502 = vunpack.c.h.b16 %v250
        %v503 = vunpack.c.l.b16 %v251
        %v504 = vunpack.c.h.b16 %v251
        %v505 = vunpack.c.l.b16 %v252
        %v506 = vunpack.c.h.b16 %v252
        %v507 = vunpack.c.l.b16 %v253
        %v508 = vunpack.c.h.b16 %v253
        %v509 = vunpack.c.l.b16 %v254
        %v510 = vunpack.c.l.b16 %v255
        %v511 = vunpack.c.h.b16 %v255
        %v512 = vunpack.c.l.b16 %v256
        %v513 = vunpack.c.h.b16 %v256
        %v514 = vunpack.c.l.b16 %v257
        %v515 = vunpack.c.h.b16 %v257
        %v516 = vunpack.c.l.b16 %v258
        %v517 = vunpack.c.h.b16 %v258
        %v518 = vunpack.c.l.b16 %v259
        %v519 = vunpack.c.l.b16 %v260
        %v520 = vunpack.c.h.b16 %v260
        %v521 = vunpack.c.l.b16 %v261
        %v522 = vunpack.c.h.b16 %v261
        %v523 = vunpack.c.l.b16 %v262
        %v524 = vunpack.c.h.b16 %v262
        %v525 = vunpack.c.l.b16 %v263
        %v526 = vunpack.c.h.b16 %v263
        %v527 = vunpack.c.l.b16 %v264
        %v528 = vpack.c.b16 %v465, %v456
        %v529 = vpack.c.b16 %v466, %v457
        %v530 = vpack.c.b16 %v467, %v458
        %v531 = vpack.c.b16 %v468, %v459
        %v532 = vpack.c.b16 %v469, %v460
        %v533 = vpack.c.b16 %v470, %v461
        %v534 = vpack.c.b16 %v471, %v462
        %v535 = vpack.c.b16 %v472, %v463
        %v536 = vpack.c.b16 %v473, %v464
        %v537 = vpack.c.b16 %v483, %v474
        %v538 = vpack.c.b16 %v484, %v475
        %v539 = vpack.c.b16 %v485, %v476
        %v540 = vpack.c.b16 %v486, %v477
        %v541 = vpack.c.b16 %v487, %v478
        %v542 = vpack.c.b16 %v488, %v479
        %v543 = vpack.c.b16 %v489, %v480
        %v544 = vpack.c.b16 %v490, %v481
        %v545 = vpack.c.b16 %v491, %v482
        %v546 = vpack.c.b16 %v501, %v492
        %v547 = vpack.c.b16 %v502, %v493
        %v548 = vpack.c.b16 %v503, %v494
        %v549 = vpack.c.b16 %v504, %v495
        %v550 = vpack.c.b16 %v505, %v496
        %v551 = vpack.c.b16 %v506, %v497
        %v552 = vpack.c.b16 %v507, %v498
        %v553 = vpack.c.b16 %v508, %v499
        %v554 = vpack.c.b16 %v509, %v500
        %v555 = vpack.c.b16 %v519, %v510
        %v556 = vpack.c.b16 %v520, %v511
        %v557 = vpack.c.b16 %v521, %v512
        %v558 = vpack.c.b16 %v522, %v513
        %v559 = vpack.c.b16 %v523, %v514
        %v560 = vpack.c.b16 %v524, %v515
        %v561 = vpack.c.b16 %v525, %v516
        %v562 = vpack.c.b16 %v526, %v517
        %v563 = vpack.c.b16 %v527, %v518
        %v744 = vunpack.c.l.b16 %v265
        %v745 = vunpack.c.l.b16 %v266
        %v746 = vunpack.c.l.b16 %v267
        %v747 = vunpack.c.l.b16 %v268
        %v748 = vunpack.c.l.b16 %v269
        %v749 = vunpack.c.l.b16 %v270
        %v750 = vunpack.c.l.b16 %v271
        %v751 = vunpack.c.l.b16 %v272
        %v752 = vunpack.c.l.b16 %v273
        %v753 = vunpack.c.l.b16 %v274
        %v754 = vunpack.c.l.b16 %v275
        %v755 = vunpack.c.l.b16 %v276
        %v756 = vunpack.c.l.b16 %v277
        %v757 = vunpack.c.l.b16 %v278
        %v758 = vunpack.c.l.b16 %v279
        %v759 = vunpack.c.l.b16 %v280
        %v760 = vunpack.c.l.b16 %v281
        %v761 = vunpack.c.l.b16 %v282
        %v762 = vunpack.c.l.b16 %v283
        %v763 = vunpack.c.l.b16 %v284
        %v764 = vunpack.c.l.b16 %v285
        %v765 = vunpack.c.l.b16 %v286
        %v766 = vunpack.c.l.b16 %v287
        %v767 = vunpack.c.l.b16 %v288
        %v768 = vunpack.c.l.b16 %v289
        %v769 = vunpack.c.l.b16 %v290
        %v770 = vunpack.c.l.b16 %v291
        %v771 = vunpack.c.l.b16 %v292
        %v772 = vunpack.c.l.b16 %v293
        %v773 = vunpack.c.l.b16 %v294
        %v774 = vunpack.c.l.b16 %v295
        %v775 = vunpack.c.l.b16 %v296
        %v776 = vunpack.c.l.b16 %v297
        %v777 = vunpack.c.l.b16 %v298
        %v778 = vunpack.c.l.b16 %v299
        %v779 = vunpack.c.l.b16 %v300
        %v780 = vunpack.c.l.b16 %v301
        %v781 = vunpack.c.l.b16 %v302
        %v782 = vunpack.c.l.b16 %v303
        %v783 = vunpack.c.l.b16 %v304
        %v784 = vunpack.c.l.b16 %v305
        %v785 = vunpack.c.l.b16 %v306
        %v786 = vunpack.c.l.b16 %v307
        %v787 = vunpack.c.l.b16 %v308
        %v788 = vunpack.c.l.b16 %v309
        %v789 = vunpack.c.l.b16 %v310
        %v790 = vunpack.c.l.b16 %v311
        %v791 = vunpack.c.l.b16 %v312
        %v792 = vunpack.c.l.b16 %v313
        %v793 = vunpack.c.l.b16 %v314
        %v794 = vunpack.c.l.b16 %v315
        %v795 = vunpack.c.l.b16 %v316
        %v796 = vunpack.c.l.b16 %v317
        %v797 = vunpack.c.l.b16 %v318
        %v798 = vunpack.c.l.b16 %v319
        %v799 = vunpack.c.l.b16 %v320
        %v800 = vunpack.c.l.b16 %v321
        %v801 = vunpack.c.l.b16 %v322
        %v802 = vunpack.c.l.b16 %v323
        %v803 = vunpack.c.l.b16 %v324
        %v804 = vunpack.c.l.b16 %v325
        %v805 = vunpack.c.l.b16 %v326
        %v806 = vunpack.c.l.b16 %v327
        %v807 = vunpack.c.l.b16 %v328
        %v808 = vunpack.c.l.b16 %v329
        %v809 = vunpack.c.l.b16 %v330
        %v810 = vunpack.c.l.b16 %v331
        %v811 = vunpack.c.l.b16 %v332
        %v812 = vunpack.c.l.b16 %v333
        %v813 = vunpack.c.l.b16 %v334
        %v814 = vunpack.c.l.b16 %v335
        %v815 = vunpack.c.l.b16 %v336
        %v816 = vunpack.c.l.b16 %v337
        %v817 = vunpack.c.l.b16 %v338
        %v818 = vunpack.c.l.b16 %v339
        %v819 = vunpack.c.l.b16 %v340
        %v820 = vunpack.c.l.b16 %v341
        %v821 = vunpack.c.l.b16 %v342
        %v822 = vunpack.c.l.b16 %v343
        %v823 = vunpack.c.l.b16 %v344
        %v824 = vunpack.c.l.b16 %v345
        %v825 = vunpack.c.l.b16 %v346
        %v826 = vunpack.c.l.b16 %v347
        %v827 = vunpack.c.l.b16 %v348
        %v828 = vunpack.c.l.b16 %v349
        %v829 = vunpack.c.l.b16 %v350
        %v830 = vunpack.c.l.b16 %v351
        %v831 = vunpack.c.l.b16 %v352
        %v832 = vunpack.c.l.b16 %v353
        %v833 = vunpack.c.l.b16 %v354
        %v834 = vunpack.c.l.b16 %v355
        %v835 = vunpack.c.l.b16 %v356
        %v836 = vunpack.c.l.b16 %v357
        %v837 = vunpack.c.l.b16 %v358
        %v838 = vunpack.c.l.b16 %v359
        %v839 = vunpack.c.l.b16 %v360
        %v840 = vunpack.c.l.b16 %v361
        %v841 = vunpack.c.l.b16 %v362
        %v842 = vunpack.c.l.b16 %v363
        %v843 = vunpack.c.l.b16 %v364
        %v844 = vunpack.c.l.b16 %v365
        %v845 = vunpack.c.l.b16 %v366
        %v846 = vunpack.c.l.b16 %v367
        %v847 = vunpack.c.l.b16 %v368
        %v848 = vunpack.c.l.b16 %v369
        %v849 = vunpack.c.l.b16 %v370
        %v850 = vunpack.c.l.b16 %v371
        %v851 = vunpack.c.l.b16 %v372
        %v852 = vunpack.c.l.b16 %v373
        %v853 = vunpack.c.l.b16 %v374
        %v854 = vunpack.c.l.b16 %v375
        %v855 = vunpack.c.l.b16 %v376
        %v856 = vunpack.c.l.b16 %v377
        %v857 = vunpack.c.l.b16 %v378
        %v858 = vunpack.c.l.b16 %v379
        %v859 = vunpack.c.l.b16 %v380
        %v860 = vunpack.c.l.b16 %v381
        %v861 = vunpack.c.l.b16 %v382
        %v862 = vunpack.c.l.b16 %v383
        %v863 = vunpack.c.l.b16 %v384
        %v864 = vunpack.c.l.b16 %v385
        %v865 = vunpack.c.l.b16 %v386
        %v866 = vunpack.c.l.b16 %v387
        %v867 = vunpack.c.l.b16 %v388
        %v868 = vunpack.c.l.b16 %v389
        %v869 = vunpack.c.l.b16 %v390
        %v870 = vunpack.c.l.b16 %v391
        %v871 = vunpack.c.l.b16 %v392
        %v872 = vunpack.c.l.b16 %v393
        %v873 = vunpack.c.l.b16 %v394
        %v874 = vunpack.c.l.b16 %v395
        %v875 = vunpack.c.l.b16 %v396
        %v876 = vunpack.c.l.b16 %v397
        %v877 = vunpack.c.l.b16 %v398
        %v878 = vunpack.c.l.b16 %v399
        %v879 = vunpack.c.l.b16 %v400
        %v880 = vunpack.c.l.b16 %v401
        %v881 = vunpack.c.l.b16 %v402
        %v882 = vunpack.c.l.b16 %v403
        %v883 = vunpack.c.l.b16 %v404
        %v884 = vunpack.c.l.b16 %v405
        %v885 = vunpack.c.l.b16 %v406
        %v886 = vunpack.c.l.b16 %v407
        %v887 = vunpack.c.l.b16 %v408
        %v888 = vpack.c.b16 %v745, %v744
        %v889 = vpack.c.b16 %v747, %v746
        %v890 = vpack.c.b16 %v749, %v748
        %v891 = vpack.c.b16 %v751, %v750
        %v892 = vpack.c.b16 %v753, %v752
        %v893 = vpack.c.b16 %v755, %v754
        %v894 = vpack.c.b16 %v757, %v756
        %v895 = vpack.c.b16 %v759, %v758
        %v896 = vpack.c.b16 %v761, %v760
        %v897 = vpack.c.b16 %v763, %v762
        %v898 = vpack.c.b16 %v765, %v764
        %v899 = vpack.c.b16 %v767, %v766
        %v900 = vpack.c.b16 %v769, %v768
        %v901 = vpack.c.b16 %v771, %v770
        %v902 = vpack.c.b16 %v773, %v772
        %v903 = vpack.c.b16 %v775, %v774
        %v904 = vpack.c.b16 %v777, %v776
        %v905 = vpack.c.b16 %v779, %v778
        %v906 = vpack.c.b16 %v781, %v780
        %v907 = vpack.c.b16 %v783, %v782
        %v908 = vpack.c.b16 %v785, %v784
        %v909 = vpack.c.b16 %v787, %v786
        %v910 = vpack.c.b16 %v789, %v788
        %v911 = vpack.c.b16 %v791, %v790
        %v912 = vpack.c.b16 %v793, %v792
        %v913 = vpack.c.b16 %v795, %v794
        %v914 = vpack.c.b16 %v797, %v796
        %v915 = vpack.c.b16 %v799, %v798
        %v916 = vpack.c.b16 %v801, %v800
        %v917 = vpack.c.b16 %v803, %v802
        %v918 = vpack.c.b16 %v805, %v804
        %v919 = vpack.c.b16 %v807, %v806
        %v920 = vpack.c.b16 %v809, %v808
        %v921 = vpack.c.b16 %v811, %v810
        %v922 = vpack.c.b16 %v813, %v812
        %v923 = vpack.c.b16 %v815, %v814
        %v924 = vpack.c.b16 %v817, %v816
        %v925 = vpack.c.b16 %v819, %v818
        %v926 = vpack.c.b16 %v821, %v820
        %v927 = vpack.c.b16 %v823, %v822
        %v928 = vpack.c.b16 %v825, %v824
        %v929 = vpack.c.b16 %v827, %v826
        %v930 = vpack.c.b16 %v829, %v828
        %v931 = vpack.c.b16 %v831, %v830
        %v932 = vpack.c.b16 %v833, %v832
        %v933 = vpack.c.b16 %v835, %v834
        %v934 = vpack.c.b16 %v837, %v836
        %v935 = vpack.c.b16 %v839, %v838
        %v936 = vpack.c.b16 %v841, %v840
        %v937 = vpack.c.b16 %v843, %v842
        %v938 = vpack.c.b16 %v845, %v844
        %v939 = vpack.c.b16 %v847, %v846
        %v940 = vpack.c.b16 %v849, %v848
        %v941 = vpack.c.b16 %v851, %v850
        %v942 = vpack.c.b16 %v853, %v852
        %v943 = vpack.c.b16 %v855, %v854
        %v944 = vpack.c.b16 %v857, %v856
        %v945 = vpack.c.b16 %v859, %v858
        %v946 = vpack.c.b16 %v861, %v860
        %v947 = vpack.c.b16 %v863, %v862
        %v948 = vpack.c.b16 %v865, %v864
        %v949 = vpack.c.b16 %v867, %v866
        %v950 = vpack.c.b16 %v869, %v868
        %v951 = vpack.c.b16 %v871, %v870
        %v952 = vpack.c.b16 %v873, %v872
        %v953 = vpack.c.b16 %v875, %v874
        %v954 = vpack.c.b16 %v877, %v876
        %v955 = vpack.c.b16 %v879, %v878
        %v956 = vpack.c.b16 %v881, %v880
        %v957 = vpack.c.b16 %v883, %v882
        %v958 = vpack.c.b16 %v885, %v884
        %v959 = vpack.c.b16 %v887, %v886
        %1032 = vmatprep.subr.bf16.mxu0 0
        %1033 = vmatpush1.bf16.msra.mxu0 %v895
        %1034 = vmatprep.subr.bf16.mxu0 0
        %1035 = vmatpush1.bf16.msra.mxu0 %v894
        %1036 = vmatprep.subr.bf16.mxu0 0
        %1037 = vmatpush1.bf16.msra.mxu0 %v893
        %1038 = vmatprep.subr.bf16.mxu0 0
        %1039 = vmatpush1.bf16.msra.mxu0 %v892
        %1040 = vmatprep.subr.bf16.mxu0 0
        %1041 = vmatpush1.bf16.msra.mxu0 %v891
        %1042 = vmatprep.subr.bf16.mxu0 0
        %1043 = vmatpush1.bf16.msra.mxu0 %v890
        %1044 = vmatprep.subr.bf16.mxu0 0
        %1045 = vmatpush1.bf16.msra.mxu0 %v889
        %1046 = vmatprep.subr.bf16.mxu0 0
        %1047 = vmatpush1.bf16.msra.mxu0 %v888
        %1048 = vmatprep.subr.bf16.mxu0 0
        %1049 = vmatpush2.bf16.msra.mxu0 %v903
        %1050 = vmatprep.subr.bf16.mxu0 0
        %1051 = vmatpush2.bf16.msra.mxu0 %v902
        %1052 = vmatprep.subr.bf16.mxu0 0
        %1053 = vmatpush2.bf16.msra.mxu0 %v901
        %1054 = vmatprep.subr.bf16.mxu0 0
        %1055 = vmatpush2.bf16.msra.mxu0 %v900
        %1056 = vmatprep.subr.bf16.mxu0 0
        %1057 = vmatpush2.bf16.msra.mxu0 %v899
        %1058 = vmatprep.subr.bf16.mxu0 0
        %1059 = vmatpush2.bf16.msra.mxu0 %v898
        %1060 = vmatprep.subr.bf16.mxu0 0
        %1061 = vmatpush2.bf16.msra.mxu0 %v897
        %1062 = vmatprep.subr.bf16.mxu0 0
        %1063 = vmatpush2.bf16.msra.mxu0 %v896
        %1064 = vmatprep.mubr.bf16.mxu0 %v529
        %1065 = vmatmul.mubr.bf16.gmra.mxu0 %v528
        %v1066 = vpop.f32.mrf.mxu0
        %v1067 = vadd.f32 %v414, %v1066
        %v1068 = vpop.f32.mrf.mxu0
        %v1069 = vpop.f32.mrf.mxu0
        %v1070 = vadd.f32 %v414, %v1069
        %v1071 = vpop.f32.mrf.mxu0
        %1072 = vmatprep.mubr.bf16.mxu0 %v538
        %1073 = vmatmul.mubr.bf16.gmra.mxu0 %v537
        %v1074 = vpop.f32.mrf.mxu0
        %v1075 = vadd.f32 %v414, %v1074
        %v1076 = vpop.f32.mrf.mxu0
        %v1077 = vpop.f32.mrf.mxu0
        %v1078 = vadd.f32 %v414, %v1077
        %v1079 = vpop.f32.mrf.mxu0
        %1080 = vmatprep.mubr.bf16.mxu0 %v547
        %1081 = vmatmul.mubr.bf16.gmra.mxu0 %v546
        %v1082 = vpop.f32.mrf.mxu0
        %v1083 = vadd.f32 %v414, %v1082
        %v1084 = vpop.f32.mrf.mxu0
        %v1085 = vpop.f32.mrf.mxu0
        %v1086 = vadd.f32 %v414, %v1085
        %v1087 = vpop.f32.mrf.mxu0
        %1088 = vmatprep.mubr.bf16.mxu0 %v556
        %1089 = vmatmul.mubr.bf16.gmra.mxu0 %v555
        %v1090 = vpop.f32.mrf.mxu0
        %v1091 = vadd.f32 %v414, %v1090
        %v1092 = vpop.f32.mrf.mxu0
        %v1093 = vpop.f32.mrf.mxu0
        %v1094 = vadd.f32 %v414, %v1093
        %v1095 = vpop.f32.mrf.mxu0
        %1096 = vdwg.mxu0
        %1097 = vmatprep.subr.bf16.mxu0 0
        %1098 = vmatpush1.bf16.msra.mxu0 %v911
        %1099 = vmatprep.subr.bf16.mxu0 0
        %1100 = vmatpush1.bf16.msra.mxu0 %v910
        %1101 = vmatprep.subr.bf16.mxu0 0
        %1102 = vmatpush1.bf16.msra.mxu0 %v909
        %1103 = vmatprep.subr.bf16.mxu0 0
        %1104 = vmatpush1.bf16.msra.mxu0 %v908
        %1105 = vmatprep.subr.bf16.mxu0 0
        %1106 = vmatpush1.bf16.msra.mxu0 %v907
        %1107 = vmatprep.subr.bf16.mxu0 0
        %1108 = vmatpush1.bf16.msra.mxu0 %v906
        %1109 = vmatprep.subr.bf16.mxu0 0
        %1110 = vmatpush1.bf16.msra.mxu0 %v905
        %1111 = vmatprep.subr.bf16.mxu0 0
        %1112 = vmatpush1.bf16.msra.mxu0 %v904
        %1113 = vmatprep.subr.bf16.mxu0 0
        %1114 = vmatpush2.bf16.msra.mxu0 %v919
        %1115 = vmatprep.subr.bf16.mxu0 0
        %1116 = vmatpush2.bf16.msra.mxu0 %v918
        %1117 = vmatprep.subr.bf16.mxu0 0
        %1118 = vmatpush2.bf16.msra.mxu0 %v917
        %1119 = vmatprep.subr.bf16.mxu0 0
        %1120 = vmatpush2.bf16.msra.mxu0 %v916
        %1121 = vmatprep.subr.bf16.mxu0 0
        %1122 = vmatpush2.bf16.msra.mxu0 %v915
        %1123 = vmatprep.subr.bf16.mxu0 0
        %1124 = vmatpush2.bf16.msra.mxu0 %v914
        %1125 = vmatprep.subr.bf16.mxu0 0
        %1126 = vmatpush2.bf16.msra.mxu0 %v913
        %1127 = vmatprep.subr.bf16.mxu0 0
        %1128 = vmatpush2.bf16.msra.mxu0 %v912
        %1129 = vmatprep.mubr.bf16.mxu0 %v531
        %1130 = vmatmul.mubr.bf16.gmra.mxu0 %v530
        %v1131 = vpop.f32.mrf.mxu0
        %v1132 = vadd.f32 %v1067, %v1131
        %v1133 = vpop.f32.mrf.mxu0
        %v1134 = vpop.f32.mrf.mxu0
        %v1135 = vadd.f32 %v1070, %v1134
        %v1136 = vpop.f32.mrf.mxu0
        %1137 = vmatprep.mubr.bf16.mxu0 %v540
        %1138 = vmatmul.mubr.bf16.gmra.mxu0 %v539
        %v1139 = vpop.f32.mrf.mxu0
        %v1140 = vadd.f32 %v1075, %v1139
        %v1141 = vpop.f32.mrf.mxu0
        %v1142 = vpop.f32.mrf.mxu0
        %v1143 = vadd.f32 %v1078, %v1142
        %v1144 = vpop.f32.mrf.mxu0
        %1145 = vmatprep.mubr.bf16.mxu0 %v549
        %1146 = vmatmul.mubr.bf16.gmra.mxu0 %v548
        %v1147 = vpop.f32.mrf.mxu0
        %v1148 = vadd.f32 %v1083, %v1147
        %v1149 = vpop.f32.mrf.mxu0
        %v1150 = vpop.f32.mrf.mxu0
        %v1151 = vadd.f32 %v1086, %v1150
        %v1152 = vpop.f32.mrf.mxu0
        %1153 = vmatprep.mubr.bf16.mxu0 %v558
        %1154 = vmatmul.mubr.bf16.gmra.mxu0 %v557
        %v1155 = vpop.f32.mrf.mxu0
        %v1156 = vadd.f32 %v1091, %v1155
        %v1157 = vpop.f32.mrf.mxu0
        %v1158 = vpop.f32.mrf.mxu0
        %v1159 = vadd.f32 %v1094, %v1158
        %v1160 = vpop.f32.mrf.mxu0
        %1161 = vdwg.mxu0
        %1162 = vmatprep.subr.bf16.mxu0 0
        %1163 = vmatpush1.bf16.msra.mxu0 %v927
        %1164 = vmatprep.subr.bf16.mxu0 0
        %1165 = vmatpush1.bf16.msra.mxu0 %v926
        %1166 = vmatprep.subr.bf16.mxu0 0
        %1167 = vmatpush1.bf16.msra.mxu0 %v925
        %1168 = vmatprep.subr.bf16.mxu0 0
        %1169 = vmatpush1.bf16.msra.mxu0 %v924
        %1170 = vmatprep.subr.bf16.mxu0 0
        %1171 = vmatpush1.bf16.msra.mxu0 %v923
        %1172 = vmatprep.subr.bf16.mxu0 0
        %1173 = vmatpush1.bf16.msra.mxu0 %v922
        %1174 = vmatprep.subr.bf16.mxu0 0
        %1175 = vmatpush1.bf16.msra.mxu0 %v921
        %1176 = vmatprep.subr.bf16.mxu0 0
        %1177 = vmatpush1.bf16.msra.mxu0 %v920
        %1178 = vmatprep.subr.bf16.mxu0 0
        %1179 = vmatpush2.bf16.msra.mxu0 %v935
        %1180 = vmatprep.subr.bf16.mxu0 0
        %1181 = vmatpush2.bf16.msra.mxu0 %v934
        %1182 = vmatprep.subr.bf16.mxu0 0
        %1183 = vmatpush2.bf16.msra.mxu0 %v933
        %1184 = vmatprep.subr.bf16.mxu0 0
        %1185 = vmatpush2.bf16.msra.mxu0 %v932
        %1186 = vmatprep.subr.bf16.mxu0 0
        %1187 = vmatpush2.bf16.msra.mxu0 %v931
        %1188 = vmatprep.subr.bf16.mxu0 0
        %1189 = vmatpush2.bf16.msra.mxu0 %v930
        %1190 = vmatprep.subr.bf16.mxu0 0
        %1191 = vmatpush2.bf16.msra.mxu0 %v929
        %1192 = vmatprep.subr.bf16.mxu0 0
        %1193 = vmatpush2.bf16.msra.mxu0 %v928
        %1194 = vmatprep.mubr.bf16.mxu0 %v533
        %1195 = vmatmul.mubr.bf16.gmra.mxu0 %v532
        %v1196 = vpop.f32.mrf.mxu0
        %v1197 = vadd.f32 %v1132, %v1196
        %v1198 = vpop.f32.mrf.mxu0
        %v1199 = vpop.f32.mrf.mxu0
        %v1200 = vadd.f32 %v1135, %v1199
        %v1201 = vpop.f32.mrf.mxu0
        %1202 = vmatprep.mubr.bf16.mxu0 %v542
        %1203 = vmatmul.mubr.bf16.gmra.mxu0 %v541
        %v1204 = vpop.f32.mrf.mxu0
        %v1205 = vadd.f32 %v1140, %v1204
        %v1206 = vpop.f32.mrf.mxu0
        %v1207 = vpop.f32.mrf.mxu0
        %v1208 = vadd.f32 %v1143, %v1207
        %v1209 = vpop.f32.mrf.mxu0
        %1210 = vmatprep.mubr.bf16.mxu0 %v551
        %1211 = vmatmul.mubr.bf16.gmra.mxu0 %v550
        %v1212 = vpop.f32.mrf.mxu0
        %v1213 = vadd.f32 %v1148, %v1212
        %v1214 = vpop.f32.mrf.mxu0
        %v1215 = vpop.f32.mrf.mxu0
        %v1216 = vadd.f32 %v1151, %v1215
        %v1217 = vpop.f32.mrf.mxu0
        %1218 = vmatprep.mubr.bf16.mxu0 %v560
        %1219 = vmatmul.mubr.bf16.gmra.mxu0 %v559
        %v1220 = vpop.f32.mrf.mxu0
        %v1221 = vadd.f32 %v1156, %v1220
        %v1222 = vpop.f32.mrf.mxu0
        %v1223 = vpop.f32.mrf.mxu0
        %v1224 = vadd.f32 %v1159, %v1223
        %v1225 = vpop.f32.mrf.mxu0
        %1226 = vdwg.mxu0
        %1227 = vmatprep.subr.bf16.mxu0 0
        %1228 = vmatpush1.bf16.msra.mxu0 %v943
        %1229 = vmatprep.subr.bf16.mxu0 0
        %1230 = vmatpush1.bf16.msra.mxu0 %v942
        %1231 = vmatprep.subr.bf16.mxu0 0
        %1232 = vmatpush1.bf16.msra.mxu0 %v941
        %1233 = vmatprep.subr.bf16.mxu0 0
        %1234 = vmatpush1.bf16.msra.mxu0 %v940
        %1235 = vmatprep.subr.bf16.mxu0 0
        %1236 = vmatpush1.bf16.msra.mxu0 %v939
        %1237 = vmatprep.subr.bf16.mxu0 0
        %1238 = vmatpush1.bf16.msra.mxu0 %v938
        %1239 = vmatprep.subr.bf16.mxu0 0
        %1240 = vmatpush1.bf16.msra.mxu0 %v937
        %1241 = vmatprep.subr.bf16.mxu0 0
        %1242 = vmatpush1.bf16.msra.mxu0 %v936
        %1243 = vmatprep.subr.bf16.mxu0 0
        %1244 = vmatpush2.bf16.msra.mxu0 %v951
        %1245 = vmatprep.subr.bf16.mxu0 0
        %1246 = vmatpush2.bf16.msra.mxu0 %v950
        %1247 = vmatprep.subr.bf16.mxu0 0
        %1248 = vmatpush2.bf16.msra.mxu0 %v949
        %1249 = vmatprep.subr.bf16.mxu0 0
        %1250 = vmatpush2.bf16.msra.mxu0 %v948
        %1251 = vmatprep.subr.bf16.mxu0 0
        %1252 = vmatpush2.bf16.msra.mxu0 %v947
        %1253 = vmatprep.subr.bf16.mxu0 0
        %1254 = vmatpush2.bf16.msra.mxu0 %v946
        %1255 = vmatprep.subr.bf16.mxu0 0
        %1256 = vmatpush2.bf16.msra.mxu0 %v945
        %1257 = vmatprep.subr.bf16.mxu0 0
        %1258 = vmatpush2.bf16.msra.mxu0 %v944
        %1259 = vmatprep.mubr.bf16.mxu0 %v535
        %1260 = vmatmul.mubr.bf16.gmra.mxu0 %v534
        %v1261 = vpop.f32.mrf.mxu0
        %v1262 = vadd.f32 %v1197, %v1261
        %v1263 = vpop.f32.mrf.mxu0
        %v1264 = vpop.f32.mrf.mxu0
        %v1265 = vadd.f32 %v1200, %v1264
        %v1266 = vpop.f32.mrf.mxu0
        %1267 = vmatprep.mubr.bf16.mxu0 %v544
        %1268 = vmatmul.mubr.bf16.gmra.mxu0 %v543
        %v1269 = vpop.f32.mrf.mxu0
        %v1270 = vadd.f32 %v1205, %v1269
        %v1271 = vpop.f32.mrf.mxu0
        %v1272 = vpop.f32.mrf.mxu0
        %v1273 = vadd.f32 %v1208, %v1272
        %v1274 = vpop.f32.mrf.mxu0
        %1275 = vmatprep.mubr.bf16.mxu0 %v553
        %1276 = vmatmul.mubr.bf16.gmra.mxu0 %v552
        %v1277 = vpop.f32.mrf.mxu0
        %v1278 = vadd.f32 %v1213, %v1277
        %v1279 = vpop.f32.mrf.mxu0
        %v1280 = vpop.f32.mrf.mxu0
        %v1281 = vadd.f32 %v1216, %v1280
        %v1282 = vpop.f32.mrf.mxu0
        %1283 = vmatprep.mubr.bf16.mxu0 %v562
        %1284 = vmatmul.mubr.bf16.gmra.mxu0 %v561
        %v1285 = vpop.f32.mrf.mxu0
        %v1286 = vadd.f32 %v1221, %v1285
        %v1287 = vpop.f32.mrf.mxu0
        %v1288 = vpop.f32.mrf.mxu0
        %v1289 = vadd.f32 %v1224, %v1288
        %v1290 = vpop.f32.mrf.mxu0
        %1291 = vdwg.mxu0
        %1292 = vmatprep.subr.bf16.mxu0 0
        %1293 = vmatpush1.bf16.msra.mxu0 %v959
        %1294 = vmatprep.subr.bf16.mxu0 0
        %1295 = vmatpush1.bf16.msra.mxu0 %v958
        %1296 = vmatprep.subr.bf16.mxu0 0
        %1297 = vmatpush1.bf16.msra.mxu0 %v957
        %1298 = vmatprep.subr.bf16.mxu0 0
        %1299 = vmatpush1.bf16.msra.mxu0 %v956
        %1300 = vmatprep.subr.bf16.mxu0 0
        %1301 = vmatpush1.bf16.msra.mxu0 %v955
        %1302 = vmatprep.subr.bf16.mxu0 0
        %1303 = vmatpush1.bf16.msra.mxu0 %v954
        %1304 = vmatprep.subr.bf16.mxu0 0
        %1305 = vmatpush1.bf16.msra.mxu0 %v953
        %1306 = vmatprep.subr.bf16.mxu0 0
        %1307 = vmatpush1.bf16.msra.mxu0 %v952
        %1308 = vmatprep.subr.bf16.mxu0 0
        %1309 = vmatpush2.bf16.msra.mxu0 0
        %1310 = vmatprep.subr.bf16.mxu0 0
        %1311 = vmatpush2.bf16.msra.mxu0 0
        %1312 = vmatprep.subr.bf16.mxu0 0
        %1313 = vmatpush2.bf16.msra.mxu0 0
        %1314 = vmatprep.subr.bf16.mxu0 0
        %1315 = vmatpush2.bf16.msra.mxu0 0
        %1316 = vmatprep.subr.bf16.mxu0 0
        %1317 = vmatpush2.bf16.msra.mxu0 0
        %1318 = vmatprep.subr.bf16.mxu0 0
        %1319 = vmatpush2.bf16.msra.mxu0 0
        %1320 = vmatprep.subr.bf16.mxu0 0
        %1321 = vmatpush2.bf16.msra.mxu0 0
        %1322 = vmatprep.subr.bf16.mxu0 0
        %1323 = vmatpush2.bf16.msra.mxu0 0
        %1324 = vmatprep.mubr.bf16.mxu0 0
        %1325 = vmatmul.mubr.bf16.gmra.mxu0 %v536
        %v1326 = vpop.f32.mrf.mxu0
        %v1327 = vadd.f32 %v1262, %v1326
        %v1328 = vpop.f32.mrf.mxu0
        %v1329 = vpop.f32.mrf.mxu0
        %v1330 = vadd.f32 %v1265, %v1329
        %v1331 = vpop.f32.mrf.mxu0
        %1332 = vmatprep.mubr.bf16.mxu0 0
        %1333 = vmatmul.mubr.bf16.gmra.mxu0 %v545
        %v1334 = vpop.f32.mrf.mxu0
        %v1335 = vadd.f32 %v1270, %v1334
        %v1336 = vpop.f32.mrf.mxu0
        %v1337 = vpop.f32.mrf.mxu0
        %v1338 = vadd.f32 %v1273, %v1337
        %v1339 = vpop.f32.mrf.mxu0
        %1340 = vmatprep.mubr.bf16.mxu0 0
        %1341 = vmatmul.mubr.bf16.gmra.mxu0 %v554
        %v1342 = vpop.f32.mrf.mxu0
        %v1343 = vadd.f32 %v1278, %v1342
        %v1344 = vpop.f32.mrf.mxu0
        %v1345 = vpop.f32.mrf.mxu0
        %v1346 = vadd.f32 %v1281, %v1345
        %v1347 = vpop.f32.mrf.mxu0
        %1348 = vmatprep.mubr.bf16.mxu0 0
        %1349 = vmatmul.mubr.bf16.gmra.mxu0 %v563
        %v1350 = vpop.f32.mrf.mxu0
        %v1351 = vadd.f32 %v1286, %v1350
        %v1352 = vpop.f32.mrf.mxu0
        %v1353 = vpop.f32.mrf.mxu0
        %v1354 = vadd.f32 %v1289, %v1353
        %v1355 = vpop.f32.mrf.mxu0
        %1356 = vdwg.mxu0
        %v1357 = vld [vmem:[%s221] sm:$0xff]
        %v1358 = vld [vmem:[%s221 + $0x8] sm:$0xff]
        %v1359 = vld [vmem:[%s221 + $0x10] sm:$0xff]
        %v1360 = vld [vmem:[%s221 + $0x18] sm:$0xff]
        %v1361 = vld [vmem:[%s221 + $0x20] sm:$0xff]
        %v1362 = vld [vmem:[%s221 + $0x28] sm:$0xff]
        %v1363 = vld [vmem:[%s221 + $0x30] sm:$0xff]
        %v1364 = vld [vmem:[%s221 + $0x38] sm:$0xff]
        %v1365 = vadd.f32 %v1327, %v1357
        %v1366 = vadd.f32 %v1330, %v1358
        %v1367 = vadd.f32 %v1335, %v1359
        %v1368 = vadd.f32 %v1338, %v1360
        %v1369 = vadd.f32 %v1343, %v1361
        %v1370 = vadd.f32 %v1346, %v1362
        %v1371 = vadd.f32 %v1351, %v1363
        %v1372 = vadd.f32 %v1354, %v1364
        %1373 = vst [vmem:[%s209] sm:$0xff] %v1365
        %1374 = vst [vmem:[%s209 + $0x8] sm:$0xff] %v1366
        %1375 = vst [vmem:[%s209 + $0x10] sm:$0xff] %v1367
        %1376 = vst [vmem:[%s209 + $0x18] sm:$0xff] %v1368
        %1377 = vst [vmem:[%s209 + $0x20] sm:$0xff] %v1369
        %1378 = vst [vmem:[%s209 + $0x28] sm:$0xff] %v1370
        %1379 = vst [vmem:[%s209 + $0x30] sm:$0xff] %v1371
        %1380 = vst [vmem:[%s209 + $0x38] sm:$0xff] %v1372
        %s1381 = sand.u32 %s120, 1
        %s1382 = scalar_lea.sflag [#allocation3], %s1381
        %s1383 = sand.u32 %s120, 1
        %s1384 = smul.addr %s1383, 64
        %s1385 = scalar_lea.vmem [#allocation2], %s1384
        // Predicated region
        $region37: #{_lambda_.25} parent=35 // pred_check
          %p1386 = pneg %p130
        $region38: #{_lambda_.25} parent=35 // pred_check_branch
          %1388 = sbr.rel (%p1386) target = $region40
        $region39: #{_lambda_.25} parent=35 // pred_region
          %s1389 = smul.u32 8, %s18
          %s1391 = ssub.s32 1024, 1024
          %1392 = vsyncadd %s1382, %s1391
          %s1393 = smul.addr %s1389, 128
          %s1394 = scalar_lea.hbm %s4, %s1393
          %s1395 = sshll.u32 %s1385, 4
          %s1396 = int_to_ptr.vmem [resolvable:$true] %s1395
          %1401 = dma.vmem_to_hbm [thread:$0]  %s1396, 1024, %s1394, %s1382, 128, 128, 8
        $region40: #{_lambda_.25} parent=35 // pred_fallthru
          _
      $region36: #{_lambda_.25} parent=5 // pred_fallthru
        _
      %p1402 = scmp.le.s32.totalorder 2, %s13
      // Predicated region
      $region41: #{_lambda_.25} parent=5 // pred_check
        %p1403 = pneg %p1402
      $region42: #{_lambda_.25} parent=5 // pred_check_branch
        %1405 = sbr.rel (%p1403) target = $region44
      $region43: #{_lambda_.25} parent=5 // pred_region
        %s1406 = ssub.s32 %s13, 2
        // Predicated region
        $region45: #{_lambda_.25} parent=43 // pred_check
          %p1407 = pneg %p136
        $region46: #{_lambda_.25} parent=43 // pred_check_branch
          %1409 = sbr.rel (%p1407) target = $region48
        $region47: #{_lambda_.25} parent=43 // pred_region
          %s1410 = sand.u32 %s121, 1
          %s1411 = scalar_lea.sflag [#allocation3], %s1410
          %s1412 = sand.u32 %s121, 1
          %s1413 = smul.addr %s1412, 64
          %s1414 = scalar_lea.vmem [#allocation2], %s1413
          %1415 = dma.done %s1411, 1024
        $region48: #{_lambda_.25} parent=43 // pred_fallthru
          _
      $region44: #{_lambda_.25} parent=5 // pred_fallthru
        _
    $region6: #{_lambda_.25} parent=1 // loop_footer
      %s17 = sadd.s32 1, %s13
    $region7: #{_lambda_.25} parent=1 // loop_footer_branch
      %12 = sbr.rel target = $region3
    $region8: #{_lambda_.25} parent=1 // loop_exit
      _
    %1416 = vsyncpa [#allocation3], 1
    %s1417 = scalar_lea.sflag [#allocation3], 1
    %1418 = vsyncpa %s1417, 1

</llo_original>
